<compile_context>
chip_gen: v6e
topology: v6e:2x2x1
jax: 0.10.0
libtpu: 0.0.40
codegen_flags: <defaults>
</compile_context>

<pallas_src>
import functools
import math

import jax
import jax.numpy as jnp
from jax.experimental import pallas as pl
from jax.experimental.pallas import tpu as pltpu


# ----------------------------- in-kernel helpers -----------------------------

def _dot(a, b):
    """MXU matmul: bf16 operands, f32 accumulation."""
    return jnp.dot(a.astype(jnp.bfloat16), b.astype(jnp.bfloat16),
                   preferred_element_type=jnp.float32)


def _layer_norm(x, g, b, eps):
    mu = jnp.mean(x, axis=-1, keepdims=True)
    var = jnp.mean(jnp.square(x - mu), axis=-1, keepdims=True)
    return (x - mu) * jax.lax.rsqrt(var + eps) * g + b


def _mha(q, k, v, wo, bo, bias, nhead):
    """q: (Lq, D), k/v: (Lk, D), bias: (Lq, Lk) additive. Returns (Lq, D).

    Heads are a static unrolled loop over 2-D lane slices (no 3-D transposes /
    relayouts); each head's context is folded straight into the output projection by
    slicing W_o along its sublane (row) range and accumulating the partial products.
    """
    Lq, D = q.shape
    Dh = D // nhead
    scale = 1.0 / math.sqrt(Dh)
    out = None
    for h in range(nhead):
        lo, hi = h * Dh, (h + 1) * Dh
        qh = (q[:, lo:hi] * scale).astype(jnp.bfloat16)
        kh = k[:, lo:hi].astype(jnp.bfloat16)
        vh = v[:, lo:hi].astype(jnp.bfloat16)
        # q @ k^T without materializing a transpose.
        s = jax.lax.dot_general(qh, kh, (((1,), (1,)), ((), ())),
                                preferred_element_type=jnp.float32)
        s = s + bias
        s = s - jnp.max(s, axis=-1, keepdims=True)
        p = jnp.exp(s)
        p = p * pl.reciprocal(jnp.sum(p, axis=-1, keepdims=True), approx=True)
        oh = _dot(p, vh)                       # (Lq, Dh)
        contrib = _dot(oh, wo[lo:hi, :])       # fold head h into the out-projection
        out = contrib if out is None else out + contrib
    return out + bo


# ----------------------------- fused forward kernel -----------------------------

def _seq2seq_kernel(
    x_ref, ids_ref, enc_bias_ref, self_bias_ref, cross_bias_ref,
    e_wqkv, e_bqkv, e_wo, e_bo, e_ln1_g, e_ln1_b,
    e_w1, e_b1, e_w2, e_b2, e_ln2_g, e_ln2_b,
    fcl_w, fcl_b,
    emb_ref,
    d_wqkv, d_bqkv, d_wo, d_bo, d_ln1_g, d_ln1_b,
    d_cwq, d_cbq, d_cwkv, d_cbkv, d_cwo, d_cbo, d_ln2_g, d_ln2_b,
    d_w1, d_b1, d_w2, d_b2, d_ln3_g, d_ln3_b,
    fcm_w, fcm_b,
    en_ref, de_ref,
    *, nhead, eps,
):
    # ------------------------------ encoder ------------------------------
    x = x_ref[...].astype(jnp.float32)                 # (S*B, D) seq-major folded batch
    D = x.shape[1]
    enc_bias = enc_bias_ref[...]                       # block-diagonal batch mask (constant)

    qkv = _dot(x, e_wqkv[...]) + e_bqkv[...]           # fused QKV projection
    sa = _mha(qkv[:, :D], qkv[:, D:2 * D], qkv[:, 2 * D:],
              e_wo[...], e_bo[...], enc_bias, nhead)
    x = _layer_norm(x + sa, e_ln1_g[...], e_ln1_b[...], eps)
    h = jnp.maximum(_dot(x, e_w1[...]) + e_b1[...], 0.0)
    ff = _dot(h, e_w2[...]) + e_b2[...]
    mem = _layer_norm(x + ff, e_ln2_g[...], e_ln2_b[...], eps)   # en_hi: stays on-chip

    # fc_lyric epilogue (lane-padded vocab -> unmasked lane-dense stores)
    en_ref[...] = (_dot(mem, fcl_w[...]) + fcl_b[...]).astype(en_ref.dtype)

    # -------------------------- music embedding --------------------------
    # one-hot @ table on the MXU; replaces a separate XLA gather launch + transpose.
    ids = ids_ref[...]                                  # (T*B, 1) int32
    TB = ids.shape[0]
    mv_pad = emb_ref.shape[0]
    one_hot = jnp.where(
        ids == jax.lax.broadcasted_iota(jnp.int32, (TB, mv_pad), 1), 1.0, 0.0)
    y = _dot(one_hot, emb_ref[...])                     # (T*B, D)

    # ------------------------------ decoder ------------------------------
    self_bias = self_bias_ref[...]
    cross_bias = cross_bias_ref[...]

    # TODO(synk): no causal tgt mask (the reference forward calls transformer_model(src, tgt)
    # without masks); add a causal term to self_bias if the original model applies one.
    qkv = _dot(y, d_wqkv[...]) + d_bqkv[...]
    sa = _mha(qkv[:, :D], qkv[:, D:2 * D], qkv[:, 2 * D:],
              d_wo[...], d_bo[...], self_bias, nhead)
    y = _layer_norm(y + sa, d_ln1_g[...], d_ln1_b[...], eps)

    qc = _dot(y, d_cwq[...]) + d_cbq[...]
    kv = _dot(mem, d_cwkv[...]) + d_cbkv[...]           # fused cross K/V projection
    ca = _mha(qc, kv[:, :D], kv[:, D:],
              d_cwo[...], d_cbo[...], cross_bias, nhead)
    y = _layer_norm(y + ca, d_ln2_g[...], d_ln2_b[...], eps)

    h = jnp.maximum(_dot(y, d_w1[...]) + d_b1[...], 0.0)
    ff = _dot(h, d_w2[...]) + d_b2[...]
    y = _layer_norm(y + ff, d_ln3_g[...], d_ln3_b[...], eps)

    # fc_music epilogue
    de_ref[...] = (_dot(y, fcm_w[...]) + fcm_b[...]).astype(de_ref.dtype)


# ----------------------------- pallas_call wrapper -----------------------------

def _vmem_spec(shape):
    """Full-array VMEM block for a single-step grid."""
    nd = len(shape)
    return pl.BlockSpec(shape, lambda i, _nd=nd: (0,) * _nd)


def _block_diag_bias(nq, nk, batch):
    """Additive attention bias for seq-major folded rows: row r belongs to batch r % B,
    so attention is only allowed where (i % B) == (j % B).  Pure function of static shapes
    -> constant-folded under jit, DMA'd once as a tiny f32 input."""
    qb = (jnp.arange(nq, dtype=jnp.int32) % batch)[:, None]
    kb = (jnp.arange(nk, dtype=jnp.int32) % batch)[None, :]
    return jnp.where(qb == kb, 0.0, -1e30).astype(jnp.float32)


def transformer_seq2seq_forward(params, src, tgt, *, nhead, lyric_vocab, music_vocab):
    """src: (S, B, D) f32, tgt: (T, B) int32 -> (en_output (S,B,Lv), de_output (T,B,Mv))."""
    S, B, D = src.shape
    T = tgt.shape[0]

    # Seq-major batch folding: free row-major reshapes (no transpose / HBM round trip).
    x = src.reshape(S * B, D)
    ids = tgt.reshape(T * B, 1).astype(jnp.int32)

    enc_bias = _block_diag_bias(S * B, S * B, B)
    self_bias = _block_diag_bias(T * B, T * B, B)
    cross_bias = _block_diag_bias(T * B, S * B, B)

    enc, dec = params["encoder"], params["decoder"]
    lv_pad = params["fc_lyric_w"].shape[1]
    mv_pad = params["fc_music_w"].shape[1]

    inputs = (
        x, ids, enc_bias, self_bias, cross_bias,
        enc["wqkv"], enc["bqkv"], enc["wo"], enc["bo"], enc["ln1_g"], enc["ln1_b"],
        enc["w1"], enc["b1"], enc["w2"], enc["b2"], enc["ln2_g"], enc["ln2_b"],
        params["fc_lyric_w"], params["fc_lyric_b"],
        params["music_embedding"],
        dec["sa_wqkv"], dec["sa_bqkv"], dec["sa_wo"], dec["sa_bo"],
        dec["ln1_g"], dec["ln1_b"],
        dec["ca_wq"], dec["ca_bq"], dec["ca_wkv"], dec["ca_bkv"],
        dec["ca_wo"], dec["ca_bo"], dec["ln2_g"], dec["ln2_b"],
        dec["w1"], dec["b1"], dec["w2"], dec["b2"], dec["ln3_g"], dec["ln3_b"],
        params["fc_music_w"], params["fc_music_b"],
    )

    en_flat, de_flat = pl.pallas_call(
        functools.partial(_seq2seq_kernel, nhead=nhead, eps=1e-5),
        # Single grid step: the whole (tiny) problem fits in VMEM, so there is no per-step
        # overhead and weight blocks are not needlessly multi-buffered across steps.
        grid=(1,),
        in_specs=[_vmem_spec(a.shape) for a in inputs],
        out_specs=[_vmem_spec((S * B, lv_pad)), _vmem_spec((T * B, mv_pad))],
        out_shape=[jax.ShapeDtypeStruct((S * B, lv_pad), jnp.float32),
                   jax.ShapeDtypeStruct((T * B, mv_pad), jnp.float32)],
        compiler_params=pltpu.CompilerParams(
            dimension_semantics=("arbitrary",),
            vmem_limit_bytes=32 * 1024 * 1024,
        ),
    )(*inputs)

    # Free reshapes back to seq-first, then drop the 128-lane vocab padding (tiny slice).
    en_output = en_flat.reshape(S, B, lv_pad)[..., :lyric_vocab]
    de_output = de_flat.reshape(T, B, mv_pad)[..., :music_vocab]
    return en_output, de_output


# ----------------------------- parameter init -----------------------------

def _round_up(n, m):
    return ((n + m - 1) // m) * m


def _init_params(key, dim, dff, lyric_vocab, music_vocab):
    keys = iter(jax.random.split(key, 64))

    def mat(shape, scale=0.02):
        # Matmul weights stored in bf16 (MXU-native, halves the HBM->VMEM weight DMA).
        return (scale * jax.random.normal(next(keys), shape)).astype(jnp.bfloat16)

    def zeros(*shape):
        return jnp.zeros(shape, jnp.float32)

    def ones(*shape):
        return jnp.ones(shape, jnp.float32)

    enc = {
        "wqkv": mat((dim, 3 * dim)), "bqkv": zeros(1, 3 * dim),       # fused QKV projection
        "wo": mat((dim, dim)), "bo": zeros(1, dim),
        "ln1_g": ones(1, dim), "ln1_b": zeros(1, dim),
        "w1": mat((dim, dff)), "b1": zeros(1, dff),
        "w2": mat((dff, dim)), "b2": zeros(1, dim),
        "ln2_g": ones(1, dim), "ln2_b": zeros(1, dim),
    }
    dec = {
        "sa_wqkv": mat((dim, 3 * dim)), "sa_bqkv": zeros(1, 3 * dim),
        "sa_wo": mat((dim, dim)), "sa_bo": zeros(1, dim),
        "ln1_g": ones(1, dim), "ln1_b": zeros(1, dim),
        "ca_wq": mat((dim, dim)), "ca_bq": zeros(1, dim),
        "ca_wkv": mat((dim, 2 * dim)), "ca_bkv": zeros(1, 2 * dim),   # fused cross K/V
        "ca_wo": mat((dim, dim)), "ca_bo": zeros(1, dim),
        "ln2_g": ones(1, dim), "ln2_b": zeros(1, dim),
        "w1": mat((dim, dff)), "b1": zeros(1, dff),
        "w2": mat((dff, dim)), "b2": zeros(1, dim),
        "ln3_g": ones(1, dim), "ln3_b": zeros(1, dim),
    }

    # fc_lyric / fc_music weights: vocab (lane) dim zero-padded to 128 for lane-dense output
    # stores; music embedding table: vocab (sublane) dim padded to 128 so the in-kernel
    # one-hot matmul has a clean contraction dim.
    lv_pad = _round_up(lyric_vocab, 128)
    mv_pad = _round_up(music_vocab, 128)
    fc_lyric_w = jnp.zeros((dim, lv_pad), jnp.bfloat16).at[:, :lyric_vocab].set(
        mat((dim, lyric_vocab)))
    fc_music_w = jnp.zeros((dim, mv_pad), jnp.bfloat16).at[:, :music_vocab].set(
        mat((dim, music_vocab)))
    music_emb = jnp.zeros((mv_pad, dim), jnp.bfloat16).at[:music_vocab, :].set(
        mat((music_vocab, dim), scale=1.0))

    return {
        "music_embedding": music_emb,
        "encoder": enc,
        "decoder": dec,
        "fc_lyric_w": fc_lyric_w, "fc_lyric_b": zeros(1, lv_pad),
        "fc_music_w": fc_music_w, "fc_music_b": zeros(1, mv_pad),
    }


# ----------------------------- main -----------------------------

if __name__ == "__main__":
    # Small shapes consistent with the module's forward; D/DFF chosen lane-dense (128/256).
    S, T, B = 8, 16, 2            # src length, tgt length, batch
    D, H, DFF = 128, 4, 256       # model dim, heads, ffn dim
    LYRIC_VOCAB, MUSIC_VOCAB = 40, 48

    key = jax.random.PRNGKey(0)
    k_params, k_src, k_tgt = jax.random.split(key, 3)

    params = _init_params(k_params, D, DFF, LYRIC_VOCAB, MUSIC_VOCAB)
    src = jax.random.normal(k_src, (S, B, D), dtype=jnp.float32)
    tgt = jax.random.randint(k_tgt, (T, B), 0, MUSIC_VOCAB, dtype=jnp.int32)

    # TODO(synk): transformer_model is an external module; modeled here as ONE encoder layer +
    # ONE decoder layer (nn.Transformer default is 6+6), no positional encoding, no dropout.
    fwd = jax.jit(functools.partial(
        transformer_seq2seq_forward,
        nhead=H, lyric_vocab=LYRIC_VOCAB, music_vocab=MUSIC_VOCAB))

    en_output, de_output = fwd(params, src, tgt)
    jax.block_until_ready((en_output, de_output))

    assert en_output.shape == (S, B, LYRIC_VOCAB), en_output.shape
    assert de_output.shape == (T, B, MUSIC_VOCAB), de_output.shape
    assert bool(jnp.all(jnp.isfinite(en_output))) and bool(jnp.all(jnp.isfinite(de_output)))
    print("KERNEL_OK")
</pallas_src>

<mosaic_0001>
module attributes {stable_mosaic.version = 11 : i64} {
  func.func @_seq2seq_kernel(%arg0: i32, %arg1: memref<16x128xf32, #tpu.memory_space<vmem>>, %arg2: memref<32x1xi32, #tpu.memory_space<vmem>>, %arg3: memref<16x16xf32, #tpu.memory_space<vmem>>, %arg4: memref<32x32xf32, #tpu.memory_space<vmem>>, %arg5: memref<32x16xf32, #tpu.memory_space<vmem>>, %arg6: memref<128x384xbf16, #tpu.memory_space<vmem>>, %arg7: memref<1x384xf32, #tpu.memory_space<vmem>>, %arg8: memref<128x128xbf16, #tpu.memory_space<vmem>>, %arg9: memref<1x128xf32, #tpu.memory_space<vmem>>, %arg10: memref<1x128xf32, #tpu.memory_space<vmem>>, %arg11: memref<1x128xf32, #tpu.memory_space<vmem>>, %arg12: memref<128x256xbf16, #tpu.memory_space<vmem>>, %arg13: memref<1x256xf32, #tpu.memory_space<vmem>>, %arg14: memref<256x128xbf16, #tpu.memory_space<vmem>>, %arg15: memref<1x128xf32, #tpu.memory_space<vmem>>, %arg16: memref<1x128xf32, #tpu.memory_space<vmem>>, %arg17: memref<1x128xf32, #tpu.memory_space<vmem>>, %arg18: memref<128x128xbf16, #tpu.memory_space<vmem>>, %arg19: memref<1x128xf32, #tpu.memory_space<vmem>>, %arg20: memref<128x128xbf16, #tpu.memory_space<vmem>>, %arg21: memref<128x384xbf16, #tpu.memory_space<vmem>>, %arg22: memref<1x384xf32, #tpu.memory_space<vmem>>, %arg23: memref<128x128xbf16, #tpu.memory_space<vmem>>, %arg24: memref<1x128xf32, #tpu.memory_space<vmem>>, %arg25: memref<1x128xf32, #tpu.memory_space<vmem>>, %arg26: memref<1x128xf32, #tpu.memory_space<vmem>>, %arg27: memref<128x128xbf16, #tpu.memory_space<vmem>>, %arg28: memref<1x128xf32, #tpu.memory_space<vmem>>, %arg29: memref<128x256xbf16, #tpu.memory_space<vmem>>, %arg30: memref<1x256xf32, #tpu.memory_space<vmem>>, %arg31: memref<128x128xbf16, #tpu.memory_space<vmem>>, %arg32: memref<1x128xf32, #tpu.memory_space<vmem>>, %arg33: memref<1x128xf32, #tpu.memory_space<vmem>>, %arg34: memref<1x128xf32, #tpu.memory_space<vmem>>, %arg35: memref<128x256xbf16, #tpu.memory_space<vmem>>, %arg36: memref<1x256xf32, #tpu.memory_space<vmem>>, %arg37: memref<256x128xbf16, #tpu.memory_space<vmem>>, %arg38: memref<1x128xf32, #tpu.memory_space<vmem>>, %arg39: memref<1x128xf32, #tpu.memory_space<vmem>>, %arg40: memref<1x128xf32, #tpu.memory_space<vmem>>, %arg41: memref<128x128xbf16, #tpu.memory_space<vmem>>, %arg42: memref<1x128xf32, #tpu.memory_space<vmem>>, %arg43: memref<16x128xf32, #tpu.memory_space<vmem>>, %arg44: memref<32x128xf32, #tpu.memory_space<vmem>>) attributes {dimension_semantics = [#tpu.dimension_semantics<arbitrary>], iteration_bounds = array<i64: 1>, scalar_prefetch = 0 : i64, scratch_operands = 0 : i64, tpu.core_type = #tpu.core_type<tc>, window_params = [{pipeline_mode = #tpu.pipeline_mode<synchronous>, transform_indices = @transform_0, window_bounds = array<i64: 16, 128>}, {pipeline_mode = #tpu.pipeline_mode<synchronous>, transform_indices = @transform_1, window_bounds = array<i64: 32, 1>}, {pipeline_mode = #tpu.pipeline_mode<synchronous>, transform_indices = @transform_2, window_bounds = array<i64: 16, 16>}, {pipeline_mode = #tpu.pipeline_mode<synchronous>, transform_indices = @transform_3, window_bounds = array<i64: 32, 32>}, {pipeline_mode = #tpu.pipeline_mode<synchronous>, transform_indices = @transform_4, window_bounds = array<i64: 32, 16>}, {pipeline_mode = #tpu.pipeline_mode<synchronous>, transform_indices = @transform_5, window_bounds = array<i64: 128, 384>}, {pipeline_mode = #tpu.pipeline_mode<synchronous>, transform_indices = @transform_6, window_bounds = array<i64: 1, 384>}, {pipeline_mode = #tpu.pipeline_mode<synchronous>, transform_indices = @transform_7, window_bounds = array<i64: 128, 128>}, {pipeline_mode = #tpu.pipeline_mode<synchronous>, transform_indices = @transform_8, window_bounds = array<i64: 1, 128>}, {pipeline_mode = #tpu.pipeline_mode<synchronous>, transform_indices = @transform_9, window_bounds = array<i64: 1, 128>}, {pipeline_mode = #tpu.pipeline_mode<synchronous>, transform_indices = @transform_10, window_bounds = array<i64: 1, 128>}, {pipeline_mode = #tpu.pipeline_mode<synchronous>, transform_indices = @transform_11, window_bounds = array<i64: 128, 256>}, {pipeline_mode = #tpu.pipeline_mode<synchronous>, transform_indices = @transform_12, window_bounds = array<i64: 1, 256>}, {pipeline_mode = #tpu.pipeline_mode<synchronous>, transform_indices = @transform_13, window_bounds = array<i64: 256, 128>}, {pipeline_mode = #tpu.pipeline_mode<synchronous>, transform_indices = @transform_14, window_bounds = array<i64: 1, 128>}, {pipeline_mode = #tpu.pipeline_mode<synchronous>, transform_indices = @transform_15, window_bounds = array<i64: 1, 128>}, {pipeline_mode = #tpu.pipeline_mode<synchronous>, transform_indices = @transform_16, window_bounds = array<i64: 1, 128>}, {pipeline_mode = #tpu.pipeline_mode<synchronous>, transform_indices = @transform_17, window_bounds = array<i64: 128, 128>}, {pipeline_mode = #tpu.pipeline_mode<synchronous>, transform_indices = @transform_18, window_bounds = array<i64: 1, 128>}, {pipeline_mode = #tpu.pipeline_mode<synchronous>, transform_indices = @transform_19, window_bounds = array<i64: 128, 128>}, {pipeline_mode = #tpu.pipeline_mode<synchronous>, transform_indices = @transform_20, window_bounds = array<i64: 128, 384>}, {pipeline_mode = #tpu.pipeline_mode<synchronous>, transform_indices = @transform_21, window_bounds = array<i64: 1, 384>}, {pipeline_mode = #tpu.pipeline_mode<synchronous>, transform_indices = @transform_22, window_bounds = array<i64: 128, 128>}, {pipeline_mode = #tpu.pipeline_mode<synchronous>, transform_indices = @transform_23, window_bounds = array<i64: 1, 128>}, {pipeline_mode = #tpu.pipeline_mode<synchronous>, transform_indices = @transform_24, window_bounds = array<i64: 1, 128>}, {pipeline_mode = #tpu.pipeline_mode<synchronous>, transform_indices = @transform_25, window_bounds = array<i64: 1, 128>}, {pipeline_mode = #tpu.pipeline_mode<synchronous>, transform_indices = @transform_26, window_bounds = array<i64: 128, 128>}, {pipeline_mode = #tpu.pipeline_mode<synchronous>, transform_indices = @transform_27, window_bounds = array<i64: 1, 128>}, {pipeline_mode = #tpu.pipeline_mode<synchronous>, transform_indices = @transform_28, window_bounds = array<i64: 128, 256>}, {pipeline_mode = #tpu.pipeline_mode<synchronous>, transform_indices = @transform_29, window_bounds = array<i64: 1, 256>}, {pipeline_mode = #tpu.pipeline_mode<synchronous>, transform_indices = @transform_30, window_bounds = array<i64: 128, 128>}, {pipeline_mode = #tpu.pipeline_mode<synchronous>, transform_indices = @transform_31, window_bounds = array<i64: 1, 128>}, {pipeline_mode = #tpu.pipeline_mode<synchronous>, transform_indices = @transform_32, window_bounds = array<i64: 1, 128>}, {pipeline_mode = #tpu.pipeline_mode<synchronous>, transform_indices = @transform_33, window_bounds = array<i64: 1, 128>}, {pipeline_mode = #tpu.pipeline_mode<synchronous>, transform_indices = @transform_34, window_bounds = array<i64: 128, 256>}, {pipeline_mode = #tpu.pipeline_mode<synchronous>, transform_indices = @transform_35, window_bounds = array<i64: 1, 256>}, {pipeline_mode = #tpu.pipeline_mode<synchronous>, transform_indices = @transform_36, window_bounds = array<i64: 256, 128>}, {pipeline_mode = #tpu.pipeline_mode<synchronous>, transform_indices = @transform_37, window_bounds = array<i64: 1, 128>}, {pipeline_mode = #tpu.pipeline_mode<synchronous>, transform_indices = @transform_38, window_bounds = array<i64: 1, 128>}, {pipeline_mode = #tpu.pipeline_mode<synchronous>, transform_indices = @transform_39, window_bounds = array<i64: 1, 128>}, {pipeline_mode = #tpu.pipeline_mode<synchronous>, transform_indices = @transform_40, window_bounds = array<i64: 128, 128>}, {pipeline_mode = #tpu.pipeline_mode<synchronous>, transform_indices = @transform_41, window_bounds = array<i64: 1, 128>}, {pipeline_mode = #tpu.pipeline_mode<synchronous>, transform_indices = @transform_42, window_bounds = array<i64: 16, 128>}, {pipeline_mode = #tpu.pipeline_mode<synchronous>, transform_indices = @transform_43, window_bounds = array<i64: 32, 128>}]} {
    %c0 = arith.constant 0 : index
    %c0_0 = arith.constant 0 : index
    %0 = vector.load %arg1[%c0, %c0_0] : memref<16x128xf32, #tpu.memory_space<vmem>>, vector<16x128xf32>
    %c0_1 = arith.constant 0 : index
    %c0_2 = arith.constant 0 : index
    %1 = vector.load %arg3[%c0_1, %c0_2] : memref<16x16xf32, #tpu.memory_space<vmem>>, vector<16x16xf32>
    %c0_3 = arith.constant 0 : index
    %c0_4 = arith.constant 0 : index
    %2 = vector.load %arg6[%c0_3, %c0_4] : memref<128x384xbf16, #tpu.memory_space<vmem>>, vector<128x384xbf16>
    %3 = arith.truncf %0 : vector<16x128xf32> to vector<16x128xbf16>
    %cst = arith.constant dense<0.000000e+00> : vector<16x384xf32>
    %4 = tpu.matmul %3, %2, %cst {dimension_numbers = #tpu.dot_dimension_numbers<[1], [0], [0], [1], [0, 0, 1, 1], [], []>} : vector<16x128xbf16>, vector<128x384xbf16>, vector<16x384xf32> -> vector<16x384xf32>
    %c0_5 = arith.constant 0 : index
    %c0_6 = arith.constant 0 : index
    %5 = vector.load %arg7[%c0_5, %c0_6] : memref<1x384xf32, #tpu.memory_space<vmem>>, vector<1x384xf32>
    %6 = vector.broadcast %5 : vector<1x384xf32> to vector<16x384xf32>
    %7 = arith.addf %4, %6 : vector<16x384xf32>
    %8 = vector.extract_strided_slice %7 {offsets = [0, 0], sizes = [16, 128], strides = [1, 1]} : vector<16x384xf32> to vector<16x128xf32>
    %9 = vector.extract_strided_slice %7 {offsets = [0, 128], sizes = [16, 128], strides = [1, 1]} : vector<16x384xf32> to vector<16x128xf32>
    %10 = vector.extract_strided_slice %7 {offsets = [0, 256], sizes = [16, 128], strides = [1, 1]} : vector<16x384xf32> to vector<16x128xf32>
    %c0_7 = arith.constant 0 : index
    %c0_8 = arith.constant 0 : index
    %11 = vector.load %arg8[%c0_7, %c0_8] : memref<128x128xbf16, #tpu.memory_space<vmem>>, vector<128x128xbf16>
    %c0_9 = arith.constant 0 : index
    %c0_10 = arith.constant 0 : index
    %12 = vector.load %arg9[%c0_9, %c0_10] : memref<1x128xf32, #tpu.memory_space<vmem>>, vector<1x128xf32>
    %13 = vector.extract_strided_slice %8 {offsets = [0, 0], sizes = [16, 32], strides = [1, 1]} : vector<16x128xf32> to vector<16x32xf32>
    %cst_11 = arith.constant 0.176776692 : f32
    %14 = vector.broadcast %cst_11 : f32 to vector<16x32xf32>
    %15 = arith.mulf %13, %14 : vector<16x32xf32>
    %16 = arith.truncf %15 : vector<16x32xf32> to vector<16x32xbf16>
    %17 = vector.extract_strided_slice %9 {offsets = [0, 0], sizes = [16, 32], strides = [1, 1]} : vector<16x128xf32> to vector<16x32xf32>
    %18 = arith.truncf %17 : vector<16x32xf32> to vector<16x32xbf16>
    %19 = vector.extract_strided_slice %10 {offsets = [0, 0], sizes = [16, 32], strides = [1, 1]} : vector<16x128xf32> to vector<16x32xf32>
    %20 = arith.truncf %19 : vector<16x32xf32> to vector<16x32xbf16>
    %cst_12 = arith.constant dense<0.000000e+00> : vector<16x16xf32>
    %21 = tpu.matmul %16, %18, %cst_12 {dimension_numbers = #tpu.dot_dimension_numbers<[1], [1], [0], [0], [0, 0, 1, 0], [], []>} : vector<16x32xbf16>, vector<16x32xbf16>, vector<16x16xf32> -> vector<16x16xf32>
    %22 = arith.addf %21, %1 : vector<16x16xf32>
    %cst_13 = arith.constant dense<0xFF800000> : vector<16xf32>
    %23 = vector.multi_reduction <maximumf>, %22, %cst_13 [1] : vector<16x16xf32> to vector<16xf32>
    %24 = vector.shape_cast %23 : vector<16xf32> to vector<16x1xf32>
    %25 = vector.broadcast %24 : vector<16x1xf32> to vector<16x16xf32>
    %26 = arith.subf %22, %25 : vector<16x16xf32>
    %27 = math.exp %26 : vector<16x16xf32>
    %cst_14 = arith.constant dense<0.000000e+00> : vector<16xf32>
    %28 = vector.multi_reduction <add>, %27, %cst_14 [1] : vector<16x16xf32> to vector<16xf32>
    %29 = vector.shape_cast %28 : vector<16xf32> to vector<16x1xf32>
    %30 = tpu.reciprocal %29 {approx = true} : vector<16x1xf32> -> vector<16x1xf32>
    %31 = vector.broadcast %30 : vector<16x1xf32> to vector<16x16xf32>
    %32 = arith.mulf %27, %31 : vector<16x16xf32>
    %33 = arith.truncf %32 : vector<16x16xf32> to vector<16x16xbf16>
    %cst_15 = arith.constant dense<0.000000e+00> : vector<16x32xf32>
    %34 = tpu.matmul %33, %20, %cst_15 {dimension_numbers = #tpu.dot_dimension_numbers<[1], [0], [0], [1], [0, 0, 1, 1], [], []>} : vector<16x16xbf16>, vector<16x32xbf16>, vector<16x32xf32> -> vector<16x32xf32>
    %35 = vector.extract_strided_slice %11 {offsets = [0, 0], sizes = [32, 128], strides = [1, 1]} : vector<128x128xbf16> to vector<32x128xbf16>
    %36 = arith.truncf %34 : vector<16x32xf32> to vector<16x32xbf16>
    %cst_16 = arith.constant dense<0.000000e+00> : vector<16x128xf32>
    %37 = tpu.matmul %36, %35, %cst_16 {dimension_numbers = #tpu.dot_dimension_numbers<[1], [0], [0], [1], [0, 0, 1, 1], [], []>} : vector<16x32xbf16>, vector<32x128xbf16>, vector<16x128xf32> -> vector<16x128xf32>
    %38 = vector.extract_strided_slice %8 {offsets = [0, 32], sizes = [16, 32], strides = [1, 1]} : vector<16x128xf32> to vector<16x32xf32>
    %cst_17 = arith.constant 0.176776692 : f32
    %39 = vector.broadcast %cst_17 : f32 to vector<16x32xf32>
    %40 = arith.mulf %38, %39 : vector<16x32xf32>
    %41 = arith.truncf %40 : vector<16x32xf32> to vector<16x32xbf16>
    %42 = vector.extract_strided_slice %9 {offsets = [0, 32], sizes = [16, 32], strides = [1, 1]} : vector<16x128xf32> to vector<16x32xf32>
    %43 = arith.truncf %42 : vector<16x32xf32> to vector<16x32xbf16>
    %44 = vector.extract_strided_slice %10 {offsets = [0, 32], sizes = [16, 32], strides = [1, 1]} : vector<16x128xf32> to vector<16x32xf32>
    %45 = arith.truncf %44 : vector<16x32xf32> to vector<16x32xbf16>
    %cst_18 = arith.constant dense<0.000000e+00> : vector<16x16xf32>
    %46 = tpu.matmul %41, %43, %cst_18 {dimension_numbers = #tpu.dot_dimension_numbers<[1], [1], [0], [0], [0, 0, 1, 0], [], []>} : vector<16x32xbf16>, vector<16x32xbf16>, vector<16x16xf32> -> vector<16x16xf32>
    %47 = arith.addf %46, %1 : vector<16x16xf32>
    %cst_19 = arith.constant dense<0xFF800000> : vector<16xf32>
    %48 = vector.multi_reduction <maximumf>, %47, %cst_19 [1] : vector<16x16xf32> to vector<16xf32>
    %49 = vector.shape_cast %48 : vector<16xf32> to vector<16x1xf32>
    %50 = vector.broadcast %49 : vector<16x1xf32> to vector<16x16xf32>
    %51 = arith.subf %47, %50 : vector<16x16xf32>
    %52 = math.exp %51 : vector<16x16xf32>
    %cst_20 = arith.constant dense<0.000000e+00> : vector<16xf32>
    %53 = vector.multi_reduction <add>, %52, %cst_20 [1] : vector<16x16xf32> to vector<16xf32>
    %54 = vector.shape_cast %53 : vector<16xf32> to vector<16x1xf32>
    %55 = tpu.reciprocal %54 {approx = true} : vector<16x1xf32> -> vector<16x1xf32>
    %56 = vector.broadcast %55 : vector<16x1xf32> to vector<16x16xf32>
    %57 = arith.mulf %52, %56 : vector<16x16xf32>
    %58 = arith.truncf %57 : vector<16x16xf32> to vector<16x16xbf16>
    %cst_21 = arith.constant dense<0.000000e+00> : vector<16x32xf32>
    %59 = tpu.matmul %58, %45, %cst_21 {dimension_numbers = #tpu.dot_dimension_numbers<[1], [0], [0], [1], [0, 0, 1, 1], [], []>} : vector<16x16xbf16>, vector<16x32xbf16>, vector<16x32xf32> -> vector<16x32xf32>
    %60 = vector.extract_strided_slice %11 {offsets = [32, 0], sizes = [32, 128], strides = [1, 1]} : vector<128x128xbf16> to vector<32x128xbf16>
    %61 = arith.truncf %59 : vector<16x32xf32> to vector<16x32xbf16>
    %cst_22 = arith.constant dense<0.000000e+00> : vector<16x128xf32>
    %62 = tpu.matmul %61, %60, %cst_22 {dimension_numbers = #tpu.dot_dimension_numbers<[1], [0], [0], [1], [0, 0, 1, 1], [], []>} : vector<16x32xbf16>, vector<32x128xbf16>, vector<16x128xf32> -> vector<16x128xf32>
    %63 = arith.addf %37, %62 : vector<16x128xf32>
    %64 = vector.extract_strided_slice %8 {offsets = [0, 64], sizes = [16, 32], strides = [1, 1]} : vector<16x128xf32> to vector<16x32xf32>
    %cst_23 = arith.constant 0.176776692 : f32
    %65 = vector.broadcast %cst_23 : f32 to vector<16x32xf32>
    %66 = arith.mulf %64, %65 : vector<16x32xf32>
    %67 = arith.truncf %66 : vector<16x32xf32> to vector<16x32xbf16>
    %68 = vector.extract_strided_slice %9 {offsets = [0, 64], sizes = [16, 32], strides = [1, 1]} : vector<16x128xf32> to vector<16x32xf32>
    %69 = arith.truncf %68 : vector<16x32xf32> to vector<16x32xbf16>
    %70 = vector.extract_strided_slice %10 {offsets = [0, 64], sizes = [16, 32], strides = [1, 1]} : vector<16x128xf32> to vector<16x32xf32>
    %71 = arith.truncf %70 : vector<16x32xf32> to vector<16x32xbf16>
    %cst_24 = arith.constant dense<0.000000e+00> : vector<16x16xf32>
    %72 = tpu.matmul %67, %69, %cst_24 {dimension_numbers = #tpu.dot_dimension_numbers<[1], [1], [0], [0], [0, 0, 1, 0], [], []>} : vector<16x32xbf16>, vector<16x32xbf16>, vector<16x16xf32> -> vector<16x16xf32>
    %73 = arith.addf %72, %1 : vector<16x16xf32>
    %cst_25 = arith.constant dense<0xFF800000> : vector<16xf32>
    %74 = vector.multi_reduction <maximumf>, %73, %cst_25 [1] : vector<16x16xf32> to vector<16xf32>
    %75 = vector.shape_cast %74 : vector<16xf32> to vector<16x1xf32>
    %76 = vector.broadcast %75 : vector<16x1xf32> to vector<16x16xf32>
    %77 = arith.subf %73, %76 : vector<16x16xf32>
    %78 = math.exp %77 : vector<16x16xf32>
    %cst_26 = arith.constant dense<0.000000e+00> : vector<16xf32>
    %79 = vector.multi_reduction <add>, %78, %cst_26 [1] : vector<16x16xf32> to vector<16xf32>
    %80 = vector.shape_cast %79 : vector<16xf32> to vector<16x1xf32>
    %81 = tpu.reciprocal %80 {approx = true} : vector<16x1xf32> -> vector<16x1xf32>
    %82 = vector.broadcast %81 : vector<16x1xf32> to vector<16x16xf32>
    %83 = arith.mulf %78, %82 : vector<16x16xf32>
    %84 = arith.truncf %83 : vector<16x16xf32> to vector<16x16xbf16>
    %cst_27 = arith.constant dense<0.000000e+00> : vector<16x32xf32>
    %85 = tpu.matmul %84, %71, %cst_27 {dimension_numbers = #tpu.dot_dimension_numbers<[1], [0], [0], [1], [0, 0, 1, 1], [], []>} : vector<16x16xbf16>, vector<16x32xbf16>, vector<16x32xf32> -> vector<16x32xf32>
    %86 = vector.extract_strided_slice %11 {offsets = [64, 0], sizes = [32, 128], strides = [1, 1]} : vector<128x128xbf16> to vector<32x128xbf16>
    %87 = arith.truncf %85 : vector<16x32xf32> to vector<16x32xbf16>
    %cst_28 = arith.constant dense<0.000000e+00> : vector<16x128xf32>
    %88 = tpu.matmul %87, %86, %cst_28 {dimension_numbers = #tpu.dot_dimension_numbers<[1], [0], [0], [1], [0, 0, 1, 1], [], []>} : vector<16x32xbf16>, vector<32x128xbf16>, vector<16x128xf32> -> vector<16x128xf32>
    %89 = arith.addf %63, %88 : vector<16x128xf32>
    %90 = vector.extract_strided_slice %8 {offsets = [0, 96], sizes = [16, 32], strides = [1, 1]} : vector<16x128xf32> to vector<16x32xf32>
    %cst_29 = arith.constant 0.176776692 : f32
    %91 = vector.broadcast %cst_29 : f32 to vector<16x32xf32>
    %92 = arith.mulf %90, %91 : vector<16x32xf32>
    %93 = arith.truncf %92 : vector<16x32xf32> to vector<16x32xbf16>
    %94 = vector.extract_strided_slice %9 {offsets = [0, 96], sizes = [16, 32], strides = [1, 1]} : vector<16x128xf32> to vector<16x32xf32>
    %95 = arith.truncf %94 : vector<16x32xf32> to vector<16x32xbf16>
    %96 = vector.extract_strided_slice %10 {offsets = [0, 96], sizes = [16, 32], strides = [1, 1]} : vector<16x128xf32> to vector<16x32xf32>
    %97 = arith.truncf %96 : vector<16x32xf32> to vector<16x32xbf16>
    %cst_30 = arith.constant dense<0.000000e+00> : vector<16x16xf32>
    %98 = tpu.matmul %93, %95, %cst_30 {dimension_numbers = #tpu.dot_dimension_numbers<[1], [1], [0], [0], [0, 0, 1, 0], [], []>} : vector<16x32xbf16>, vector<16x32xbf16>, vector<16x16xf32> -> vector<16x16xf32>
    %99 = arith.addf %98, %1 : vector<16x16xf32>
    %cst_31 = arith.constant dense<0xFF800000> : vector<16xf32>
    %100 = vector.multi_reduction <maximumf>, %99, %cst_31 [1] : vector<16x16xf32> to vector<16xf32>
    %101 = vector.shape_cast %100 : vector<16xf32> to vector<16x1xf32>
    %102 = vector.broadcast %101 : vector<16x1xf32> to vector<16x16xf32>
    %103 = arith.subf %99, %102 : vector<16x16xf32>
    %104 = math.exp %103 : vector<16x16xf32>
    %cst_32 = arith.constant dense<0.000000e+00> : vector<16xf32>
    %105 = vector.multi_reduction <add>, %104, %cst_32 [1] : vector<16x16xf32> to vector<16xf32>
    %106 = vector.shape_cast %105 : vector<16xf32> to vector<16x1xf32>
    %107 = tpu.reciprocal %106 {approx = true} : vector<16x1xf32> -> vector<16x1xf32>
    %108 = vector.broadcast %107 : vector<16x1xf32> to vector<16x16xf32>
    %109 = arith.mulf %104, %108 : vector<16x16xf32>
    %110 = arith.truncf %109 : vector<16x16xf32> to vector<16x16xbf16>
    %cst_33 = arith.constant dense<0.000000e+00> : vector<16x32xf32>
    %111 = tpu.matmul %110, %97, %cst_33 {dimension_numbers = #tpu.dot_dimension_numbers<[1], [0], [0], [1], [0, 0, 1, 1], [], []>} : vector<16x16xbf16>, vector<16x32xbf16>, vector<16x32xf32> -> vector<16x32xf32>
    %112 = vector.extract_strided_slice %11 {offsets = [96, 0], sizes = [32, 128], strides = [1, 1]} : vector<128x128xbf16> to vector<32x128xbf16>
    %113 = arith.truncf %111 : vector<16x32xf32> to vector<16x32xbf16>
    %cst_34 = arith.constant dense<0.000000e+00> : vector<16x128xf32>
    %114 = tpu.matmul %113, %112, %cst_34 {dimension_numbers = #tpu.dot_dimension_numbers<[1], [0], [0], [1], [0, 0, 1, 1], [], []>} : vector<16x32xbf16>, vector<32x128xbf16>, vector<16x128xf32> -> vector<16x128xf32>
    %115 = arith.addf %89, %114 : vector<16x128xf32>
    %116 = vector.broadcast %12 : vector<1x128xf32> to vector<16x128xf32>
    %117 = arith.addf %115, %116 : vector<16x128xf32>
    %118 = arith.addf %0, %117 : vector<16x128xf32>
    %c0_35 = arith.constant 0 : index
    %c0_36 = arith.constant 0 : index
    %119 = vector.load %arg10[%c0_35, %c0_36] : memref<1x128xf32, #tpu.memory_space<vmem>>, vector<1x128xf32>
    %c0_37 = arith.constant 0 : index
    %c0_38 = arith.constant 0 : index
    %120 = vector.load %arg11[%c0_37, %c0_38] : memref<1x128xf32, #tpu.memory_space<vmem>>, vector<1x128xf32>
    %cst_39 = arith.constant dense<0.000000e+00> : vector<16xf32>
    %121 = vector.multi_reduction <add>, %118, %cst_39 [1] : vector<16x128xf32> to vector<16xf32>
    %122 = vector.shape_cast %121 : vector<16xf32> to vector<16x1xf32>
    %cst_40 = arith.constant 1.280000e+02 : f32
    %123 = vector.broadcast %cst_40 : f32 to vector<16x1xf32>
    %124 = arith.divf %122, %123 : vector<16x1xf32>
    %125 = vector.broadcast %124 : vector<16x1xf32> to vector<16x128xf32>
    %126 = arith.subf %118, %125 : vector<16x128xf32>
    %127 = arith.mulf %126, %126 : vector<16x128xf32>
    %cst_41 = arith.constant dense<0.000000e+00> : vector<16xf32>
    %128 = vector.multi_reduction <add>, %127, %cst_41 [1] : vector<16x128xf32> to vector<16xf32>
    %129 = vector.shape_cast %128 : vector<16xf32> to vector<16x1xf32>
    %cst_42 = arith.constant 1.280000e+02 : f32
    %130 = vector.broadcast %cst_42 : f32 to vector<16x1xf32>
    %131 = arith.divf %129, %130 : vector<16x1xf32>
    %132 = vector.broadcast %124 : vector<16x1xf32> to vector<16x128xf32>
    %133 = arith.subf %118, %132 : vector<16x128xf32>
    %cst_43 = arith.constant 9.99999974E-6 : f32
    %134 = vector.broadcast %cst_43 : f32 to vector<16x1xf32>
    %135 = arith.addf %131, %134 : vector<16x1xf32>
    %136 = math.rsqrt %135 : vector<16x1xf32>
    %137 = vector.broadcast %136 : vector<16x1xf32> to vector<16x128xf32>
    %138 = arith.mulf %133, %137 : vector<16x128xf32>
    %139 = vector.broadcast %119 : vector<1x128xf32> to vector<16x128xf32>
    %140 = arith.mulf %138, %139 : vector<16x128xf32>
    %141 = vector.broadcast %120 : vector<1x128xf32> to vector<16x128xf32>
    %142 = arith.addf %140, %141 : vector<16x128xf32>
    %c0_44 = arith.constant 0 : index
    %c0_45 = arith.constant 0 : index
    %143 = vector.load %arg12[%c0_44, %c0_45] : memref<128x256xbf16, #tpu.memory_space<vmem>>, vector<128x256xbf16>
    %144 = arith.truncf %142 : vector<16x128xf32> to vector<16x128xbf16>
    %cst_46 = arith.constant dense<0.000000e+00> : vector<16x256xf32>
    %145 = tpu.matmul %144, %143, %cst_46 {dimension_numbers = #tpu.dot_dimension_numbers<[1], [0], [0], [1], [0, 0, 1, 1], [], []>} : vector<16x128xbf16>, vector<128x256xbf16>, vector<16x256xf32> -> vector<16x256xf32>
    %c0_47 = arith.constant 0 : index
    %c0_48 = arith.constant 0 : index
    %146 = vector.load %arg13[%c0_47, %c0_48] : memref<1x256xf32, #tpu.memory_space<vmem>>, vector<1x256xf32>
    %147 = vector.broadcast %146 : vector<1x256xf32> to vector<16x256xf32>
    %148 = arith.addf %145, %147 : vector<16x256xf32>
    %cst_49 = arith.constant 0.000000e+00 : f32
    %149 = vector.broadcast %cst_49 : f32 to vector<16x256xf32>
    %150 = arith.maximumf %148, %149 : vector<16x256xf32>
    %c0_50 = arith.constant 0 : index
    %c0_51 = arith.constant 0 : index
    %151 = vector.load %arg14[%c0_50, %c0_51] : memref<256x128xbf16, #tpu.memory_space<vmem>>, vector<256x128xbf16>
    %152 = arith.truncf %150 : vector<16x256xf32> to vector<16x256xbf16>
    %cst_52 = arith.constant dense<0.000000e+00> : vector<16x128xf32>
    %153 = tpu.matmul %152, %151, %cst_52 {dimension_numbers = #tpu.dot_dimension_numbers<[1], [0], [0], [1], [0, 0, 1, 1], [], []>} : vector<16x256xbf16>, vector<256x128xbf16>, vector<16x128xf32> -> vector<16x128xf32>
    %c0_53 = arith.constant 0 : index
    %c0_54 = arith.constant 0 : index
    %154 = vector.load %arg15[%c0_53, %c0_54] : memref<1x128xf32, #tpu.memory_space<vmem>>, vector<1x128xf32>
    %155 = vector.broadcast %154 : vector<1x128xf32> to vector<16x128xf32>
    %156 = arith.addf %153, %155 : vector<16x128xf32>
    %157 = arith.addf %142, %156 : vector<16x128xf32>
    %c0_55 = arith.constant 0 : index
    %c0_56 = arith.constant 0 : index
    %158 = vector.load %arg16[%c0_55, %c0_56] : memref<1x128xf32, #tpu.memory_space<vmem>>, vector<1x128xf32>
    %c0_57 = arith.constant 0 : index
    %c0_58 = arith.constant 0 : index
    %159 = vector.load %arg17[%c0_57, %c0_58] : memref<1x128xf32, #tpu.memory_space<vmem>>, vector<1x128xf32>
    %cst_59 = arith.constant dense<0.000000e+00> : vector<16xf32>
    %160 = vector.multi_reduction <add>, %157, %cst_59 [1] : vector<16x128xf32> to vector<16xf32>
    %161 = vector.shape_cast %160 : vector<16xf32> to vector<16x1xf32>
    %cst_60 = arith.constant 1.280000e+02 : f32
    %162 = vector.broadcast %cst_60 : f32 to vector<16x1xf32>
    %163 = arith.divf %161, %162 : vector<16x1xf32>
    %164 = vector.broadcast %163 : vector<16x1xf32> to vector<16x128xf32>
    %165 = arith.subf %157, %164 : vector<16x128xf32>
    %166 = arith.mulf %165, %165 : vector<16x128xf32>
    %cst_61 = arith.constant dense<0.000000e+00> : vector<16xf32>
    %167 = vector.multi_reduction <add>, %166, %cst_61 [1] : vector<16x128xf32> to vector<16xf32>
    %168 = vector.shape_cast %167 : vector<16xf32> to vector<16x1xf32>
    %cst_62 = arith.constant 1.280000e+02 : f32
    %169 = vector.broadcast %cst_62 : f32 to vector<16x1xf32>
    %170 = arith.divf %168, %169 : vector<16x1xf32>
    %171 = vector.broadcast %163 : vector<16x1xf32> to vector<16x128xf32>
    %172 = arith.subf %157, %171 : vector<16x128xf32>
    %cst_63 = arith.constant 9.99999974E-6 : f32
    %173 = vector.broadcast %cst_63 : f32 to vector<16x1xf32>
    %174 = arith.addf %170, %173 : vector<16x1xf32>
    %175 = math.rsqrt %174 : vector<16x1xf32>
    %176 = vector.broadcast %175 : vector<16x1xf32> to vector<16x128xf32>
    %177 = arith.mulf %172, %176 : vector<16x128xf32>
    %178 = vector.broadcast %158 : vector<1x128xf32> to vector<16x128xf32>
    %179 = arith.mulf %177, %178 : vector<16x128xf32>
    %180 = vector.broadcast %159 : vector<1x128xf32> to vector<16x128xf32>
    %181 = arith.addf %179, %180 : vector<16x128xf32>
    %c0_64 = arith.constant 0 : index
    %c0_65 = arith.constant 0 : index
    %182 = vector.load %arg18[%c0_64, %c0_65] : memref<128x128xbf16, #tpu.memory_space<vmem>>, vector<128x128xbf16>
    %183 = arith.truncf %181 : vector<16x128xf32> to vector<16x128xbf16>
    %cst_66 = arith.constant dense<0.000000e+00> : vector<16x128xf32>
    %184 = tpu.matmul %183, %182, %cst_66 {dimension_numbers = #tpu.dot_dimension_numbers<[1], [0], [0], [1], [0, 0, 1, 1], [], []>} : vector<16x128xbf16>, vector<128x128xbf16>, vector<16x128xf32> -> vector<16x128xf32>
    %c0_67 = arith.constant 0 : index
    %c0_68 = arith.constant 0 : index
    %185 = vector.load %arg19[%c0_67, %c0_68] : memref<1x128xf32, #tpu.memory_space<vmem>>, vector<1x128xf32>
    %186 = vector.broadcast %185 : vector<1x128xf32> to vector<16x128xf32>
    %187 = arith.addf %184, %186 : vector<16x128xf32>
    %c0_69 = arith.constant 0 : index
    %c0_70 = arith.constant 0 : index
    %188 = vector.load %arg43[%c0_69, %c0_70] : memref<16x128xf32, #tpu.memory_space<vmem>>, vector<16x128xf32>
    tpu.vector_store %arg43[%c0_69, %c0_70], %187 {strides = array<i32>} : memref<16x128xf32, #tpu.memory_space<vmem>>, vector<16x128xf32>,
    %c0_71 = arith.constant 0 : index
    %c0_72 = arith.constant 0 : index
    %189 = vector.load %arg2[%c0_71, %c0_72] : memref<32x1xi32, #tpu.memory_space<vmem>>, vector<32x1xi32>
    %190 = tpu.iota {dimensions = array<i32: 1>} : vector<32x128xi32>
    %191 = vector.broadcast %189 : vector<32x1xi32> to vector<32x128xi32>
    %192 = arith.cmpi eq, %191, %190 : vector<32x128xi32>
    %cst_73 = arith.constant 1.000000e+00 : f32
    %cst_74 = arith.constant 0.000000e+00 : f32
    %193 = vector.broadcast %cst_73 : f32 to vector<32x128xf32>
    %194 = vector.broadcast %cst_74 : f32 to vector<32x128xf32>
    %195 = arith.select %192, %193, %194 : vector<32x128xi1>, vector<32x128xf32>
    %c0_75 = arith.constant 0 : index
    %c0_76 = arith.constant 0 : index
    %196 = vector.load %arg20[%c0_75, %c0_76] : memref<128x128xbf16, #tpu.memory_space<vmem>>, vector<128x128xbf16>
    %197 = arith.truncf %195 : vector<32x128xf32> to vector<32x128xbf16>
    %cst_77 = arith.constant dense<0.000000e+00> : vector<32x128xf32>
    %198 = tpu.matmul %197, %196, %cst_77 {dimension_numbers = #tpu.dot_dimension_numbers<[1], [0], [0], [1], [0, 0, 1, 1], [], []>} : vector<32x128xbf16>, vector<128x128xbf16>, vector<32x128xf32> -> vector<32x128xf32>
    %c0_78 = arith.constant 0 : index
    %c0_79 = arith.constant 0 : index
    %199 = vector.load %arg4[%c0_78, %c0_79] : memref<32x32xf32, #tpu.memory_space<vmem>>, vector<32x32xf32>
    %c0_80 = arith.constant 0 : index
    %c0_81 = arith.constant 0 : index
    %200 = vector.load %arg5[%c0_80, %c0_81] : memref<32x16xf32, #tpu.memory_space<vmem>>, vector<32x16xf32>
    %c0_82 = arith.constant 0 : index
    %c0_83 = arith.constant 0 : index
    %201 = vector.load %arg21[%c0_82, %c0_83] : memref<128x384xbf16, #tpu.memory_space<vmem>>, vector<128x384xbf16>
    %202 = arith.truncf %198 : vector<32x128xf32> to vector<32x128xbf16>
    %cst_84 = arith.constant dense<0.000000e+00> : vector<32x384xf32>
    %203 = tpu.matmul %202, %201, %cst_84 {dimension_numbers = #tpu.dot_dimension_numbers<[1], [0], [0], [1], [0, 0, 1, 1], [], []>} : vector<32x128xbf16>, vector<128x384xbf16>, vector<32x384xf32> -> vector<32x384xf32>
    %c0_85 = arith.constant 0 : index
    %c0_86 = arith.constant 0 : index
    %204 = vector.load %arg22[%c0_85, %c0_86] : memref<1x384xf32, #tpu.memory_space<vmem>>, vector<1x384xf32>
    %205 = vector.broadcast %204 : vector<1x384xf32> to vector<32x384xf32>
    %206 = arith.addf %203, %205 : vector<32x384xf32>
    %207 = vector.extract_strided_slice %206 {offsets = [0, 0], sizes = [32, 128], strides = [1, 1]} : vector<32x384xf32> to vector<32x128xf32>
    %208 = vector.extract_strided_slice %206 {offsets = [0, 128], sizes = [32, 128], strides = [1, 1]} : vector<32x384xf32> to vector<32x128xf32>
    %209 = vector.extract_strided_slice %206 {offsets = [0, 256], sizes = [32, 128], strides = [1, 1]} : vector<32x384xf32> to vector<32x128xf32>
    %c0_87 = arith.constant 0 : index
    %c0_88 = arith.constant 0 : index
    %210 = vector.load %arg23[%c0_87, %c0_88] : memref<128x128xbf16, #tpu.memory_space<vmem>>, vector<128x128xbf16>
    %c0_89 = arith.constant 0 : index
    %c0_90 = arith.constant 0 : index
    %211 = vector.load %arg24[%c0_89, %c0_90] : memref<1x128xf32, #tpu.memory_space<vmem>>, vector<1x128xf32>
    %212 = vector.extract_strided_slice %207 {offsets = [0, 0], sizes = [32, 32], strides = [1, 1]} : vector<32x128xf32> to vector<32x32xf32>
    %cst_91 = arith.constant 0.176776692 : f32
    %213 = vector.broadcast %cst_91 : f32 to vector<32x32xf32>
    %214 = arith.mulf %212, %213 : vector<32x32xf32>
    %215 = arith.truncf %214 : vector<32x32xf32> to vector<32x32xbf16>
    %216 = vector.extract_strided_slice %208 {offsets = [0, 0], sizes = [32, 32], strides = [1, 1]} : vector<32x128xf32> to vector<32x32xf32>
    %217 = arith.truncf %216 : vector<32x32xf32> to vector<32x32xbf16>
    %218 = vector.extract_strided_slice %209 {offsets = [0, 0], sizes = [32, 32], strides = [1, 1]} : vector<32x128xf32> to vector<32x32xf32>
    %219 = arith.truncf %218 : vector<32x32xf32> to vector<32x32xbf16>
    %cst_92 = arith.constant dense<0.000000e+00> : vector<32x32xf32>
    %220 = tpu.matmul %215, %217, %cst_92 {dimension_numbers = #tpu.dot_dimension_numbers<[1], [1], [0], [0], [0, 0, 1, 0], [], []>} : vector<32x32xbf16>, vector<32x32xbf16>, vector<32x32xf32> -> vector<32x32xf32>
    %221 = arith.addf %220, %199 : vector<32x32xf32>
    %cst_93 = arith.constant dense<0xFF800000> : vector<32xf32>
    %222 = vector.multi_reduction <maximumf>, %221, %cst_93 [1] : vector<32x32xf32> to vector<32xf32>
    %223 = vector.shape_cast %222 : vector<32xf32> to vector<32x1xf32>
    %224 = vector.broadcast %223 : vector<32x1xf32> to vector<32x32xf32>
    %225 = arith.subf %221, %224 : vector<32x32xf32>
    %226 = math.exp %225 : vector<32x32xf32>
    %cst_94 = arith.constant dense<0.000000e+00> : vector<32xf32>
    %227 = vector.multi_reduction <add>, %226, %cst_94 [1] : vector<32x32xf32> to vector<32xf32>
    %228 = vector.shape_cast %227 : vector<32xf32> to vector<32x1xf32>
    %229 = tpu.reciprocal %228 {approx = true} : vector<32x1xf32> -> vector<32x1xf32>
    %230 = vector.broadcast %229 : vector<32x1xf32> to vector<32x32xf32>
    %231 = arith.mulf %226, %230 : vector<32x32xf32>
    %232 = arith.truncf %231 : vector<32x32xf32> to vector<32x32xbf16>
    %cst_95 = arith.constant dense<0.000000e+00> : vector<32x32xf32>
    %233 = tpu.matmul %232, %219, %cst_95 {dimension_numbers = #tpu.dot_dimension_numbers<[1], [0], [0], [1], [0, 0, 1, 1], [], []>} : vector<32x32xbf16>, vector<32x32xbf16>, vector<32x32xf32> -> vector<32x32xf32>
    %234 = vector.extract_strided_slice %210 {offsets = [0, 0], sizes = [32, 128], strides = [1, 1]} : vector<128x128xbf16> to vector<32x128xbf16>
    %235 = arith.truncf %233 : vector<32x32xf32> to vector<32x32xbf16>
    %cst_96 = arith.constant dense<0.000000e+00> : vector<32x128xf32>
    %236 = tpu.matmul %235, %234, %cst_96 {dimension_numbers = #tpu.dot_dimension_numbers<[1], [0], [0], [1], [0, 0, 1, 1], [], []>} : vector<32x32xbf16>, vector<32x128xbf16>, vector<32x128xf32> -> vector<32x128xf32>
    %237 = vector.extract_strided_slice %207 {offsets = [0, 32], sizes = [32, 32], strides = [1, 1]} : vector<32x128xf32> to vector<32x32xf32>
    %cst_97 = arith.constant 0.176776692 : f32
    %238 = vector.broadcast %cst_97 : f32 to vector<32x32xf32>
    %239 = arith.mulf %237, %238 : vector<32x32xf32>
    %240 = arith.truncf %239 : vector<32x32xf32> to vector<32x32xbf16>
    %241 = vector.extract_strided_slice %208 {offsets = [0, 32], sizes = [32, 32], strides = [1, 1]} : vector<32x128xf32> to vector<32x32xf32>
    %242 = arith.truncf %241 : vector<32x32xf32> to vector<32x32xbf16>
    %243 = vector.extract_strided_slice %209 {offsets = [0, 32], sizes = [32, 32], strides = [1, 1]} : vector<32x128xf32> to vector<32x32xf32>
    %244 = arith.truncf %243 : vector<32x32xf32> to vector<32x32xbf16>
    %cst_98 = arith.constant dense<0.000000e+00> : vector<32x32xf32>
    %245 = tpu.matmul %240, %242, %cst_98 {dimension_numbers = #tpu.dot_dimension_numbers<[1], [1], [0], [0], [0, 0, 1, 0], [], []>} : vector<32x32xbf16>, vector<32x32xbf16>, vector<32x32xf32> -> vector<32x32xf32>
    %246 = arith.addf %245, %199 : vector<32x32xf32>
    %cst_99 = arith.constant dense<0xFF800000> : vector<32xf32>
    %247 = vector.multi_reduction <maximumf>, %246, %cst_99 [1] : vector<32x32xf32> to vector<32xf32>
    %248 = vector.shape_cast %247 : vector<32xf32> to vector<32x1xf32>
    %249 = vector.broadcast %248 : vector<32x1xf32> to vector<32x32xf32>
    %250 = arith.subf %246, %249 : vector<32x32xf32>
    %251 = math.exp %250 : vector<32x32xf32>
    %cst_100 = arith.constant dense<0.000000e+00> : vector<32xf32>
    %252 = vector.multi_reduction <add>, %251, %cst_100 [1] : vector<32x32xf32> to vector<32xf32>
    %253 = vector.shape_cast %252 : vector<32xf32> to vector<32x1xf32>
    %254 = tpu.reciprocal %253 {approx = true} : vector<32x1xf32> -> vector<32x1xf32>
    %255 = vector.broadcast %254 : vector<32x1xf32> to vector<32x32xf32>
    %256 = arith.mulf %251, %255 : vector<32x32xf32>
    %257 = arith.truncf %256 : vector<32x32xf32> to vector<32x32xbf16>
    %cst_101 = arith.constant dense<0.000000e+00> : vector<32x32xf32>
    %258 = tpu.matmul %257, %244, %cst_101 {dimension_numbers = #tpu.dot_dimension_numbers<[1], [0], [0], [1], [0, 0, 1, 1], [], []>} : vector<32x32xbf16>, vector<32x32xbf16>, vector<32x32xf32> -> vector<32x32xf32>
    %259 = vector.extract_strided_slice %210 {offsets = [32, 0], sizes = [32, 128], strides = [1, 1]} : vector<128x128xbf16> to vector<32x128xbf16>
    %260 = arith.truncf %258 : vector<32x32xf32> to vector<32x32xbf16>
    %cst_102 = arith.constant dense<0.000000e+00> : vector<32x128xf32>
    %261 = tpu.matmul %260, %259, %cst_102 {dimension_numbers = #tpu.dot_dimension_numbers<[1], [0], [0], [1], [0, 0, 1, 1], [], []>} : vector<32x32xbf16>, vector<32x128xbf16>, vector<32x128xf32> -> vector<32x128xf32>
    %262 = arith.addf %236, %261 : vector<32x128xf32>
    %263 = vector.extract_strided_slice %207 {offsets = [0, 64], sizes = [32, 32], strides = [1, 1]} : vector<32x128xf32> to vector<32x32xf32>
    %cst_103 = arith.constant 0.176776692 : f32
    %264 = vector.broadcast %cst_103 : f32 to vector<32x32xf32>
    %265 = arith.mulf %263, %264 : vector<32x32xf32>
    %266 = arith.truncf %265 : vector<32x32xf32> to vector<32x32xbf16>
    %267 = vector.extract_strided_slice %208 {offsets = [0, 64], sizes = [32, 32], strides = [1, 1]} : vector<32x128xf32> to vector<32x32xf32>
    %268 = arith.truncf %267 : vector<32x32xf32> to vector<32x32xbf16>
    %269 = vector.extract_strided_slice %209 {offsets = [0, 64], sizes = [32, 32], strides = [1, 1]} : vector<32x128xf32> to vector<32x32xf32>
    %270 = arith.truncf %269 : vector<32x32xf32> to vector<32x32xbf16>
    %cst_104 = arith.constant dense<0.000000e+00> : vector<32x32xf32>
    %271 = tpu.matmul %266, %268, %cst_104 {dimension_numbers = #tpu.dot_dimension_numbers<[1], [1], [0], [0], [0, 0, 1, 0], [], []>} : vector<32x32xbf16>, vector<32x32xbf16>, vector<32x32xf32> -> vector<32x32xf32>
    %272 = arith.addf %271, %199 : vector<32x32xf32>
    %cst_105 = arith.constant dense<0xFF800000> : vector<32xf32>
    %273 = vector.multi_reduction <maximumf>, %272, %cst_105 [1] : vector<32x32xf32> to vector<32xf32>
    %274 = vector.shape_cast %273 : vector<32xf32> to vector<32x1xf32>
    %275 = vector.broadcast %274 : vector<32x1xf32> to vector<32x32xf32>
    %276 = arith.subf %272, %275 : vector<32x32xf32>
    %277 = math.exp %276 : vector<32x32xf32>
    %cst_106 = arith.constant dense<0.000000e+00> : vector<32xf32>
    %278 = vector.multi_reduction <add>, %277, %cst_106 [1] : vector<32x32xf32> to vector<32xf32>
    %279 = vector.shape_cast %278 : vector<32xf32> to vector<32x1xf32>
    %280 = tpu.reciprocal %279 {approx = true} : vector<32x1xf32> -> vector<32x1xf32>
    %281 = vector.broadcast %280 : vector<32x1xf32> to vector<32x32xf32>
    %282 = arith.mulf %277, %281 : vector<32x32xf32>
    %283 = arith.truncf %282 : vector<32x32xf32> to vector<32x32xbf16>
    %cst_107 = arith.constant dense<0.000000e+00> : vector<32x32xf32>
    %284 = tpu.matmul %283, %270, %cst_107 {dimension_numbers = #tpu.dot_dimension_numbers<[1], [0], [0], [1], [0, 0, 1, 1], [], []>} : vector<32x32xbf16>, vector<32x32xbf16>, vector<32x32xf32> -> vector<32x32xf32>
    %285 = vector.extract_strided_slice %210 {offsets = [64, 0], sizes = [32, 128], strides = [1, 1]} : vector<128x128xbf16> to vector<32x128xbf16>
    %286 = arith.truncf %284 : vector<32x32xf32> to vector<32x32xbf16>
    %cst_108 = arith.constant dense<0.000000e+00> : vector<32x128xf32>
    %287 = tpu.matmul %286, %285, %cst_108 {dimension_numbers = #tpu.dot_dimension_numbers<[1], [0], [0], [1], [0, 0, 1, 1], [], []>} : vector<32x32xbf16>, vector<32x128xbf16>, vector<32x128xf32> -> vector<32x128xf32>
    %288 = arith.addf %262, %287 : vector<32x128xf32>
    %289 = vector.extract_strided_slice %207 {offsets = [0, 96], sizes = [32, 32], strides = [1, 1]} : vector<32x128xf32> to vector<32x32xf32>
    %cst_109 = arith.constant 0.176776692 : f32
    %290 = vector.broadcast %cst_109 : f32 to vector<32x32xf32>
    %291 = arith.mulf %289, %290 : vector<32x32xf32>
    %292 = arith.truncf %291 : vector<32x32xf32> to vector<32x32xbf16>
    %293 = vector.extract_strided_slice %208 {offsets = [0, 96], sizes = [32, 32], strides = [1, 1]} : vector<32x128xf32> to vector<32x32xf32>
    %294 = arith.truncf %293 : vector<32x32xf32> to vector<32x32xbf16>
    %295 = vector.extract_strided_slice %209 {offsets = [0, 96], sizes = [32, 32], strides = [1, 1]} : vector<32x128xf32> to vector<32x32xf32>
    %296 = arith.truncf %295 : vector<32x32xf32> to vector<32x32xbf16>
    %cst_110 = arith.constant dense<0.000000e+00> : vector<32x32xf32>
    %297 = tpu.matmul %292, %294, %cst_110 {dimension_numbers = #tpu.dot_dimension_numbers<[1], [1], [0], [0], [0, 0, 1, 0], [], []>} : vector<32x32xbf16>, vector<32x32xbf16>, vector<32x32xf32> -> vector<32x32xf32>
    %298 = arith.addf %297, %199 : vector<32x32xf32>
    %cst_111 = arith.constant dense<0xFF800000> : vector<32xf32>
    %299 = vector.multi_reduction <maximumf>, %298, %cst_111 [1] : vector<32x32xf32> to vector<32xf32>
    %300 = vector.shape_cast %299 : vector<32xf32> to vector<32x1xf32>
    %301 = vector.broadcast %300 : vector<32x1xf32> to vector<32x32xf32>
    %302 = arith.subf %298, %301 : vector<32x32xf32>
    %303 = math.exp %302 : vector<32x32xf32>
    %cst_112 = arith.constant dense<0.000000e+00> : vector<32xf32>
    %304 = vector.multi_reduction <add>, %303, %cst_112 [1] : vector<32x32xf32> to vector<32xf32>
    %305 = vector.shape_cast %304 : vector<32xf32> to vector<32x1xf32>
    %306 = tpu.reciprocal %305 {approx = true} : vector<32x1xf32> -> vector<32x1xf32>
    %307 = vector.broadcast %306 : vector<32x1xf32> to vector<32x32xf32>
    %308 = arith.mulf %303, %307 : vector<32x32xf32>
    %309 = arith.truncf %308 : vector<32x32xf32> to vector<32x32xbf16>
    %cst_113 = arith.constant dense<0.000000e+00> : vector<32x32xf32>
    %310 = tpu.matmul %309, %296, %cst_113 {dimension_numbers = #tpu.dot_dimension_numbers<[1], [0], [0], [1], [0, 0, 1, 1], [], []>} : vector<32x32xbf16>, vector<32x32xbf16>, vector<32x32xf32> -> vector<32x32xf32>
    %311 = vector.extract_strided_slice %210 {offsets = [96, 0], sizes = [32, 128], strides = [1, 1]} : vector<128x128xbf16> to vector<32x128xbf16>
    %312 = arith.truncf %310 : vector<32x32xf32> to vector<32x32xbf16>
    %cst_114 = arith.constant dense<0.000000e+00> : vector<32x128xf32>
    %313 = tpu.matmul %312, %311, %cst_114 {dimension_numbers = #tpu.dot_dimension_numbers<[1], [0], [0], [1], [0, 0, 1, 1], [], []>} : vector<32x32xbf16>, vector<32x128xbf16>, vector<32x128xf32> -> vector<32x128xf32>
    %314 = arith.addf %288, %313 : vector<32x128xf32>
    %315 = vector.broadcast %211 : vector<1x128xf32> to vector<32x128xf32>
    %316 = arith.addf %314, %315 : vector<32x128xf32>
    %317 = arith.addf %198, %316 : vector<32x128xf32>
    %c0_115 = arith.constant 0 : index
    %c0_116 = arith.constant 0 : index
    %318 = vector.load %arg25[%c0_115, %c0_116] : memref<1x128xf32, #tpu.memory_space<vmem>>, vector<1x128xf32>
    %c0_117 = arith.constant 0 : index
    %c0_118 = arith.constant 0 : index
    %319 = vector.load %arg26[%c0_117, %c0_118] : memref<1x128xf32, #tpu.memory_space<vmem>>, vector<1x128xf32>
    %cst_119 = arith.constant dense<0.000000e+00> : vector<32xf32>
    %320 = vector.multi_reduction <add>, %317, %cst_119 [1] : vector<32x128xf32> to vector<32xf32>
    %321 = vector.shape_cast %320 : vector<32xf32> to vector<32x1xf32>
    %cst_120 = arith.constant 1.280000e+02 : f32
    %322 = vector.broadcast %cst_120 : f32 to vector<32x1xf32>
    %323 = arith.divf %321, %322 : vector<32x1xf32>
    %324 = vector.broadcast %323 : vector<32x1xf32> to vector<32x128xf32>
    %325 = arith.subf %317, %324 : vector<32x128xf32>
    %326 = arith.mulf %325, %325 : vector<32x128xf32>
    %cst_121 = arith.constant dense<0.000000e+00> : vector<32xf32>
    %327 = vector.multi_reduction <add>, %326, %cst_121 [1] : vector<32x128xf32> to vector<32xf32>
    %328 = vector.shape_cast %327 : vector<32xf32> to vector<32x1xf32>
    %cst_122 = arith.constant 1.280000e+02 : f32
    %329 = vector.broadcast %cst_122 : f32 to vector<32x1xf32>
    %330 = arith.divf %328, %329 : vector<32x1xf32>
    %331 = vector.broadcast %323 : vector<32x1xf32> to vector<32x128xf32>
    %332 = arith.subf %317, %331 : vector<32x128xf32>
    %cst_123 = arith.constant 9.99999974E-6 : f32
    %333 = vector.broadcast %cst_123 : f32 to vector<32x1xf32>
    %334 = arith.addf %330, %333 : vector<32x1xf32>
    %335 = math.rsqrt %334 : vector<32x1xf32>
    %336 = vector.broadcast %335 : vector<32x1xf32> to vector<32x128xf32>
    %337 = arith.mulf %332, %336 : vector<32x128xf32>
    %338 = vector.broadcast %318 : vector<1x128xf32> to vector<32x128xf32>
    %339 = arith.mulf %337, %338 : vector<32x128xf32>
    %340 = vector.broadcast %319 : vector<1x128xf32> to vector<32x128xf32>
    %341 = arith.addf %339, %340 : vector<32x128xf32>
    %c0_124 = arith.constant 0 : index
    %c0_125 = arith.constant 0 : index
    %342 = vector.load %arg27[%c0_124, %c0_125] : memref<128x128xbf16, #tpu.memory_space<vmem>>, vector<128x128xbf16>
    %343 = arith.truncf %341 : vector<32x128xf32> to vector<32x128xbf16>
    %cst_126 = arith.constant dense<0.000000e+00> : vector<32x128xf32>
    %344 = tpu.matmul %343, %342, %cst_126 {dimension_numbers = #tpu.dot_dimension_numbers<[1], [0], [0], [1], [0, 0, 1, 1], [], []>} : vector<32x128xbf16>, vector<128x128xbf16>, vector<32x128xf32> -> vector<32x128xf32>
    %c0_127 = arith.constant 0 : index
    %c0_128 = arith.constant 0 : index
    %345 = vector.load %arg28[%c0_127, %c0_128] : memref<1x128xf32, #tpu.memory_space<vmem>>, vector<1x128xf32>
    %346 = vector.broadcast %345 : vector<1x128xf32> to vector<32x128xf32>
    %347 = arith.addf %344, %346 : vector<32x128xf32>
    %c0_129 = arith.constant 0 : index
    %c0_130 = arith.constant 0 : index
    %348 = vector.load %arg29[%c0_129, %c0_130] : memref<128x256xbf16, #tpu.memory_space<vmem>>, vector<128x256xbf16>
    %349 = arith.truncf %181 : vector<16x128xf32> to vector<16x128xbf16>
    %cst_131 = arith.constant dense<0.000000e+00> : vector<16x256xf32>
    %350 = tpu.matmul %349, %348, %cst_131 {dimension_numbers = #tpu.dot_dimension_numbers<[1], [0], [0], [1], [0, 0, 1, 1], [], []>} : vector<16x128xbf16>, vector<128x256xbf16>, vector<16x256xf32> -> vector<16x256xf32>
    %c0_132 = arith.constant 0 : index
    %c0_133 = arith.constant 0 : index
    %351 = vector.load %arg30[%c0_132, %c0_133] : memref<1x256xf32, #tpu.memory_space<vmem>>, vector<1x256xf32>
    %352 = vector.broadcast %351 : vector<1x256xf32> to vector<16x256xf32>
    %353 = arith.addf %350, %352 : vector<16x256xf32>
    %354 = vector.extract_strided_slice %353 {offsets = [0, 0], sizes = [16, 128], strides = [1, 1]} : vector<16x256xf32> to vector<16x128xf32>
    %355 = vector.extract_strided_slice %353 {offsets = [0, 128], sizes = [16, 128], strides = [1, 1]} : vector<16x256xf32> to vector<16x128xf32>
    %c0_134 = arith.constant 0 : index
    %c0_135 = arith.constant 0 : index
    %356 = vector.load %arg31[%c0_134, %c0_135] : memref<128x128xbf16, #tpu.memory_space<vmem>>, vector<128x128xbf16>
    %c0_136 = arith.constant 0 : index
    %c0_137 = arith.constant 0 : index
    %357 = vector.load %arg32[%c0_136, %c0_137] : memref<1x128xf32, #tpu.memory_space<vmem>>, vector<1x128xf32>
    %358 = vector.extract_strided_slice %347 {offsets = [0, 0], sizes = [32, 32], strides = [1, 1]} : vector<32x128xf32> to vector<32x32xf32>
    %cst_138 = arith.constant 0.176776692 : f32
    %359 = vector.broadcast %cst_138 : f32 to vector<32x32xf32>
    %360 = arith.mulf %358, %359 : vector<32x32xf32>
    %361 = arith.truncf %360 : vector<32x32xf32> to vector<32x32xbf16>
    %362 = vector.extract_strided_slice %354 {offsets = [0, 0], sizes = [16, 32], strides = [1, 1]} : vector<16x128xf32> to vector<16x32xf32>
    %363 = arith.truncf %362 : vector<16x32xf32> to vector<16x32xbf16>
    %364 = vector.extract_strided_slice %355 {offsets = [0, 0], sizes = [16, 32], strides = [1, 1]} : vector<16x128xf32> to vector<16x32xf32>
    %365 = arith.truncf %364 : vector<16x32xf32> to vector<16x32xbf16>
    %cst_139 = arith.constant dense<0.000000e+00> : vector<32x16xf32>
    %366 = tpu.matmul %361, %363, %cst_139 {dimension_numbers = #tpu.dot_dimension_numbers<[1], [1], [0], [0], [0, 0, 1, 0], [], []>} : vector<32x32xbf16>, vector<16x32xbf16>, vector<32x16xf32> -> vector<32x16xf32>
    %367 = arith.addf %366, %200 : vector<32x16xf32>
    %cst_140 = arith.constant dense<0xFF800000> : vector<32xf32>
    %368 = vector.multi_reduction <maximumf>, %367, %cst_140 [1] : vector<32x16xf32> to vector<32xf32>
    %369 = vector.shape_cast %368 : vector<32xf32> to vector<32x1xf32>
    %370 = vector.broadcast %369 : vector<32x1xf32> to vector<32x16xf32>
    %371 = arith.subf %367, %370 : vector<32x16xf32>
    %372 = math.exp %371 : vector<32x16xf32>
    %cst_141 = arith.constant dense<0.000000e+00> : vector<32xf32>
    %373 = vector.multi_reduction <add>, %372, %cst_141 [1] : vector<32x16xf32> to vector<32xf32>
    %374 = vector.shape_cast %373 : vector<32xf32> to vector<32x1xf32>
    %375 = tpu.reciprocal %374 {approx = true} : vector<32x1xf32> -> vector<32x1xf32>
    %376 = vector.broadcast %375 : vector<32x1xf32> to vector<32x16xf32>
    %377 = arith.mulf %372, %376 : vector<32x16xf32>
    %378 = arith.truncf %377 : vector<32x16xf32> to vector<32x16xbf16>
    %cst_142 = arith.constant dense<0.000000e+00> : vector<32x32xf32>
    %379 = tpu.matmul %378, %365, %cst_142 {dimension_numbers = #tpu.dot_dimension_numbers<[1], [0], [0], [1], [0, 0, 1, 1], [], []>} : vector<32x16xbf16>, vector<16x32xbf16>, vector<32x32xf32> -> vector<32x32xf32>
    %380 = vector.extract_strided_slice %356 {offsets = [0, 0], sizes = [32, 128], strides = [1, 1]} : vector<128x128xbf16> to vector<32x128xbf16>
    %381 = arith.truncf %379 : vector<32x32xf32> to vector<32x32xbf16>
    %cst_143 = arith.constant dense<0.000000e+00> : vector<32x128xf32>
    %382 = tpu.matmul %381, %380, %cst_143 {dimension_numbers = #tpu.dot_dimension_numbers<[1], [0], [0], [1], [0, 0, 1, 1], [], []>} : vector<32x32xbf16>, vector<32x128xbf16>, vector<32x128xf32> -> vector<32x128xf32>
    %383 = vector.extract_strided_slice %347 {offsets = [0, 32], sizes = [32, 32], strides = [1, 1]} : vector<32x128xf32> to vector<32x32xf32>
    %cst_144 = arith.constant 0.176776692 : f32
    %384 = vector.broadcast %cst_144 : f32 to vector<32x32xf32>
    %385 = arith.mulf %383, %384 : vector<32x32xf32>
    %386 = arith.truncf %385 : vector<32x32xf32> to vector<32x32xbf16>
    %387 = vector.extract_strided_slice %354 {offsets = [0, 32], sizes = [16, 32], strides = [1, 1]} : vector<16x128xf32> to vector<16x32xf32>
    %388 = arith.truncf %387 : vector<16x32xf32> to vector<16x32xbf16>
    %389 = vector.extract_strided_slice %355 {offsets = [0, 32], sizes = [16, 32], strides = [1, 1]} : vector<16x128xf32> to vector<16x32xf32>
    %390 = arith.truncf %389 : vector<16x32xf32> to vector<16x32xbf16>
    %cst_145 = arith.constant dense<0.000000e+00> : vector<32x16xf32>
    %391 = tpu.matmul %386, %388, %cst_145 {dimension_numbers = #tpu.dot_dimension_numbers<[1], [1], [0], [0], [0, 0, 1, 0], [], []>} : vector<32x32xbf16>, vector<16x32xbf16>, vector<32x16xf32> -> vector<32x16xf32>
    %392 = arith.addf %391, %200 : vector<32x16xf32>
    %cst_146 = arith.constant dense<0xFF800000> : vector<32xf32>
    %393 = vector.multi_reduction <maximumf>, %392, %cst_146 [1] : vector<32x16xf32> to vector<32xf32>
    %394 = vector.shape_cast %393 : vector<32xf32> to vector<32x1xf32>
    %395 = vector.broadcast %394 : vector<32x1xf32> to vector<32x16xf32>
    %396 = arith.subf %392, %395 : vector<32x16xf32>
    %397 = math.exp %396 : vector<32x16xf32>
    %cst_147 = arith.constant dense<0.000000e+00> : vector<32xf32>
    %398 = vector.multi_reduction <add>, %397, %cst_147 [1] : vector<32x16xf32> to vector<32xf32>
    %399 = vector.shape_cast %398 : vector<32xf32> to vector<32x1xf32>
    %400 = tpu.reciprocal %399 {approx = true} : vector<32x1xf32> -> vector<32x1xf32>
    %401 = vector.broadcast %400 : vector<32x1xf32> to vector<32x16xf32>
    %402 = arith.mulf %397, %401 : vector<32x16xf32>
    %403 = arith.truncf %402 : vector<32x16xf32> to vector<32x16xbf16>
    %cst_148 = arith.constant dense<0.000000e+00> : vector<32x32xf32>
    %404 = tpu.matmul %403, %390, %cst_148 {dimension_numbers = #tpu.dot_dimension_numbers<[1], [0], [0], [1], [0, 0, 1, 1], [], []>} : vector<32x16xbf16>, vector<16x32xbf16>, vector<32x32xf32> -> vector<32x32xf32>
    %405 = vector.extract_strided_slice %356 {offsets = [32, 0], sizes = [32, 128], strides = [1, 1]} : vector<128x128xbf16> to vector<32x128xbf16>
    %406 = arith.truncf %404 : vector<32x32xf32> to vector<32x32xbf16>
    %cst_149 = arith.constant dense<0.000000e+00> : vector<32x128xf32>
    %407 = tpu.matmul %406, %405, %cst_149 {dimension_numbers = #tpu.dot_dimension_numbers<[1], [0], [0], [1], [0, 0, 1, 1], [], []>} : vector<32x32xbf16>, vector<32x128xbf16>, vector<32x128xf32> -> vector<32x128xf32>
    %408 = arith.addf %382, %407 : vector<32x128xf32>
    %409 = vector.extract_strided_slice %347 {offsets = [0, 64], sizes = [32, 32], strides = [1, 1]} : vector<32x128xf32> to vector<32x32xf32>
    %cst_150 = arith.constant 0.176776692 : f32
    %410 = vector.broadcast %cst_150 : f32 to vector<32x32xf32>
    %411 = arith.mulf %409, %410 : vector<32x32xf32>
    %412 = arith.truncf %411 : vector<32x32xf32> to vector<32x32xbf16>
    %413 = vector.extract_strided_slice %354 {offsets = [0, 64], sizes = [16, 32], strides = [1, 1]} : vector<16x128xf32> to vector<16x32xf32>
    %414 = arith.truncf %413 : vector<16x32xf32> to vector<16x32xbf16>
    %415 = vector.extract_strided_slice %355 {offsets = [0, 64], sizes = [16, 32], strides = [1, 1]} : vector<16x128xf32> to vector<16x32xf32>
    %416 = arith.truncf %415 : vector<16x32xf32> to vector<16x32xbf16>
    %cst_151 = arith.constant dense<0.000000e+00> : vector<32x16xf32>
    %417 = tpu.matmul %412, %414, %cst_151 {dimension_numbers = #tpu.dot_dimension_numbers<[1], [1], [0], [0], [0, 0, 1, 0], [], []>} : vector<32x32xbf16>, vector<16x32xbf16>, vector<32x16xf32> -> vector<32x16xf32>
    %418 = arith.addf %417, %200 : vector<32x16xf32>
    %cst_152 = arith.constant dense<0xFF800000> : vector<32xf32>
    %419 = vector.multi_reduction <maximumf>, %418, %cst_152 [1] : vector<32x16xf32> to vector<32xf32>
    %420 = vector.shape_cast %419 : vector<32xf32> to vector<32x1xf32>
    %421 = vector.broadcast %420 : vector<32x1xf32> to vector<32x16xf32>
    %422 = arith.subf %418, %421 : vector<32x16xf32>
    %423 = math.exp %422 : vector<32x16xf32>
    %cst_153 = arith.constant dense<0.000000e+00> : vector<32xf32>
    %424 = vector.multi_reduction <add>, %423, %cst_153 [1] : vector<32x16xf32> to vector<32xf32>
    %425 = vector.shape_cast %424 : vector<32xf32> to vector<32x1xf32>
    %426 = tpu.reciprocal %425 {approx = true} : vector<32x1xf32> -> vector<32x1xf32>
    %427 = vector.broadcast %426 : vector<32x1xf32> to vector<32x16xf32>
    %428 = arith.mulf %423, %427 : vector<32x16xf32>
    %429 = arith.truncf %428 : vector<32x16xf32> to vector<32x16xbf16>
    %cst_154 = arith.constant dense<0.000000e+00> : vector<32x32xf32>
    %430 = tpu.matmul %429, %416, %cst_154 {dimension_numbers = #tpu.dot_dimension_numbers<[1], [0], [0], [1], [0, 0, 1, 1], [], []>} : vector<32x16xbf16>, vector<16x32xbf16>, vector<32x32xf32> -> vector<32x32xf32>
    %431 = vector.extract_strided_slice %356 {offsets = [64, 0], sizes = [32, 128], strides = [1, 1]} : vector<128x128xbf16> to vector<32x128xbf16>
    %432 = arith.truncf %430 : vector<32x32xf32> to vector<32x32xbf16>
    %cst_155 = arith.constant dense<0.000000e+00> : vector<32x128xf32>
    %433 = tpu.matmul %432, %431, %cst_155 {dimension_numbers = #tpu.dot_dimension_numbers<[1], [0], [0], [1], [0, 0, 1, 1], [], []>} : vector<32x32xbf16>, vector<32x128xbf16>, vector<32x128xf32> -> vector<32x128xf32>
    %434 = arith.addf %408, %433 : vector<32x128xf32>
    %435 = vector.extract_strided_slice %347 {offsets = [0, 96], sizes = [32, 32], strides = [1, 1]} : vector<32x128xf32> to vector<32x32xf32>
    %cst_156 = arith.constant 0.176776692 : f32
    %436 = vector.broadcast %cst_156 : f32 to vector<32x32xf32>
    %437 = arith.mulf %435, %436 : vector<32x32xf32>
    %438 = arith.truncf %437 : vector<32x32xf32> to vector<32x32xbf16>
    %439 = vector.extract_strided_slice %354 {offsets = [0, 96], sizes = [16, 32], strides = [1, 1]} : vector<16x128xf32> to vector<16x32xf32>
    %440 = arith.truncf %439 : vector<16x32xf32> to vector<16x32xbf16>
    %441 = vector.extract_strided_slice %355 {offsets = [0, 96], sizes = [16, 32], strides = [1, 1]} : vector<16x128xf32> to vector<16x32xf32>
    %442 = arith.truncf %441 : vector<16x32xf32> to vector<16x32xbf16>
    %cst_157 = arith.constant dense<0.000000e+00> : vector<32x16xf32>
    %443 = tpu.matmul %438, %440, %cst_157 {dimension_numbers = #tpu.dot_dimension_numbers<[1], [1], [0], [0], [0, 0, 1, 0], [], []>} : vector<32x32xbf16>, vector<16x32xbf16>, vector<32x16xf32> -> vector<32x16xf32>
    %444 = arith.addf %443, %200 : vector<32x16xf32>
    %cst_158 = arith.constant dense<0xFF800000> : vector<32xf32>
    %445 = vector.multi_reduction <maximumf>, %444, %cst_158 [1] : vector<32x16xf32> to vector<32xf32>
    %446 = vector.shape_cast %445 : vector<32xf32> to vector<32x1xf32>
    %447 = vector.broadcast %446 : vector<32x1xf32> to vector<32x16xf32>
    %448 = arith.subf %444, %447 : vector<32x16xf32>
    %449 = math.exp %448 : vector<32x16xf32>
    %cst_159 = arith.constant dense<0.000000e+00> : vector<32xf32>
    %450 = vector.multi_reduction <add>, %449, %cst_159 [1] : vector<32x16xf32> to vector<32xf32>
    %451 = vector.shape_cast %450 : vector<32xf32> to vector<32x1xf32>
    %452 = tpu.reciprocal %451 {approx = true} : vector<32x1xf32> -> vector<32x1xf32>
    %453 = vector.broadcast %452 : vector<32x1xf32> to vector<32x16xf32>
    %454 = arith.mulf %449, %453 : vector<32x16xf32>
    %455 = arith.truncf %454 : vector<32x16xf32> to vector<32x16xbf16>
    %cst_160 = arith.constant dense<0.000000e+00> : vector<32x32xf32>
    %456 = tpu.matmul %455, %442, %cst_160 {dimension_numbers = #tpu.dot_dimension_numbers<[1], [0], [0], [1], [0, 0, 1, 1], [], []>} : vector<32x16xbf16>, vector<16x32xbf16>, vector<32x32xf32> -> vector<32x32xf32>
    %457 = vector.extract_strided_slice %356 {offsets = [96, 0], sizes = [32, 128], strides = [1, 1]} : vector<128x128xbf16> to vector<32x128xbf16>
    %458 = arith.truncf %456 : vector<32x32xf32> to vector<32x32xbf16>
    %cst_161 = arith.constant dense<0.000000e+00> : vector<32x128xf32>
    %459 = tpu.matmul %458, %457, %cst_161 {dimension_numbers = #tpu.dot_dimension_numbers<[1], [0], [0], [1], [0, 0, 1, 1], [], []>} : vector<32x32xbf16>, vector<32x128xbf16>, vector<32x128xf32> -> vector<32x128xf32>
    %460 = arith.addf %434, %459 : vector<32x128xf32>
    %461 = vector.broadcast %357 : vector<1x128xf32> to vector<32x128xf32>
    %462 = arith.addf %460, %461 : vector<32x128xf32>
    %463 = arith.addf %341, %462 : vector<32x128xf32>
    %c0_162 = arith.constant 0 : index
    %c0_163 = arith.constant 0 : index
    %464 = vector.load %arg33[%c0_162, %c0_163] : memref<1x128xf32, #tpu.memory_space<vmem>>, vector<1x128xf32>
    %c0_164 = arith.constant 0 : index
    %c0_165 = arith.constant 0 : index
    %465 = vector.load %arg34[%c0_164, %c0_165] : memref<1x128xf32, #tpu.memory_space<vmem>>, vector<1x128xf32>
    %cst_166 = arith.constant dense<0.000000e+00> : vector<32xf32>
    %466 = vector.multi_reduction <add>, %463, %cst_166 [1] : vector<32x128xf32> to vector<32xf32>
    %467 = vector.shape_cast %466 : vector<32xf32> to vector<32x1xf32>
    %cst_167 = arith.constant 1.280000e+02 : f32
    %468 = vector.broadcast %cst_167 : f32 to vector<32x1xf32>
    %469 = arith.divf %467, %468 : vector<32x1xf32>
    %470 = vector.broadcast %469 : vector<32x1xf32> to vector<32x128xf32>
    %471 = arith.subf %463, %470 : vector<32x128xf32>
    %472 = arith.mulf %471, %471 : vector<32x128xf32>
    %cst_168 = arith.constant dense<0.000000e+00> : vector<32xf32>
    %473 = vector.multi_reduction <add>, %472, %cst_168 [1] : vector<32x128xf32> to vector<32xf32>
    %474 = vector.shape_cast %473 : vector<32xf32> to vector<32x1xf32>
    %cst_169 = arith.constant 1.280000e+02 : f32
    %475 = vector.broadcast %cst_169 : f32 to vector<32x1xf32>
    %476 = arith.divf %474, %475 : vector<32x1xf32>
    %477 = vector.broadcast %469 : vector<32x1xf32> to vector<32x128xf32>
    %478 = arith.subf %463, %477 : vector<32x128xf32>
    %cst_170 = arith.constant 9.99999974E-6 : f32
    %479 = vector.broadcast %cst_170 : f32 to vector<32x1xf32>
    %480 = arith.addf %476, %479 : vector<32x1xf32>
    %481 = math.rsqrt %480 : vector<32x1xf32>
    %482 = vector.broadcast %481 : vector<32x1xf32> to vector<32x128xf32>
    %483 = arith.mulf %478, %482 : vector<32x128xf32>
    %484 = vector.broadcast %464 : vector<1x128xf32> to vector<32x128xf32>
    %485 = arith.mulf %483, %484 : vector<32x128xf32>
    %486 = vector.broadcast %465 : vector<1x128xf32> to vector<32x128xf32>
    %487 = arith.addf %485, %486 : vector<32x128xf32>
    %c0_171 = arith.constant 0 : index
    %c0_172 = arith.constant 0 : index
    %488 = vector.load %arg35[%c0_171, %c0_172] : memref<128x256xbf16, #tpu.memory_space<vmem>>, vector<128x256xbf16>
    %489 = arith.truncf %487 : vector<32x128xf32> to vector<32x128xbf16>
    %cst_173 = arith.constant dense<0.000000e+00> : vector<32x256xf32>
    %490 = tpu.matmul %489, %488, %cst_173 {dimension_numbers = #tpu.dot_dimension_numbers<[1], [0], [0], [1], [0, 0, 1, 1], [], []>} : vector<32x128xbf16>, vector<128x256xbf16>, vector<32x256xf32> -> vector<32x256xf32>
    %c0_174 = arith.constant 0 : index
    %c0_175 = arith.constant 0 : index
    %491 = vector.load %arg36[%c0_174, %c0_175] : memref<1x256xf32, #tpu.memory_space<vmem>>, vector<1x256xf32>
    %492 = vector.broadcast %491 : vector<1x256xf32> to vector<32x256xf32>
    %493 = arith.addf %490, %492 : vector<32x256xf32>
    %cst_176 = arith.constant 0.000000e+00 : f32
    %494 = vector.broadcast %cst_176 : f32 to vector<32x256xf32>
    %495 = arith.maximumf %493, %494 : vector<32x256xf32>
    %c0_177 = arith.constant 0 : index
    %c0_178 = arith.constant 0 : index
    %496 = vector.load %arg37[%c0_177, %c0_178] : memref<256x128xbf16, #tpu.memory_space<vmem>>, vector<256x128xbf16>
    %497 = arith.truncf %495 : vector<32x256xf32> to vector<32x256xbf16>
    %cst_179 = arith.constant dense<0.000000e+00> : vector<32x128xf32>
    %498 = tpu.matmul %497, %496, %cst_179 {dimension_numbers = #tpu.dot_dimension_numbers<[1], [0], [0], [1], [0, 0, 1, 1], [], []>} : vector<32x256xbf16>, vector<256x128xbf16>, vector<32x128xf32> -> vector<32x128xf32>
    %c0_180 = arith.constant 0 : index
    %c0_181 = arith.constant 0 : index
    %499 = vector.load %arg38[%c0_180, %c0_181] : memref<1x128xf32, #tpu.memory_space<vmem>>, vector<1x128xf32>
    %500 = vector.broadcast %499 : vector<1x128xf32> to vector<32x128xf32>
    %501 = arith.addf %498, %500 : vector<32x128xf32>
    %502 = arith.addf %487, %501 : vector<32x128xf32>
    %c0_182 = arith.constant 0 : index
    %c0_183 = arith.constant 0 : index
    %503 = vector.load %arg39[%c0_182, %c0_183] : memref<1x128xf32, #tpu.memory_space<vmem>>, vector<1x128xf32>
    %c0_184 = arith.constant 0 : index
    %c0_185 = arith.constant 0 : index
    %504 = vector.load %arg40[%c0_184, %c0_185] : memref<1x128xf32, #tpu.memory_space<vmem>>, vector<1x128xf32>
    %cst_186 = arith.constant dense<0.000000e+00> : vector<32xf32>
    %505 = vector.multi_reduction <add>, %502, %cst_186 [1] : vector<32x128xf32> to vector<32xf32>
    %506 = vector.shape_cast %505 : vector<32xf32> to vector<32x1xf32>
    %cst_187 = arith.constant 1.280000e+02 : f32
    %507 = vector.broadcast %cst_187 : f32 to vector<32x1xf32>
    %508 = arith.divf %506, %507 : vector<32x1xf32>
    %509 = vector.broadcast %508 : vector<32x1xf32> to vector<32x128xf32>
    %510 = arith.subf %502, %509 : vector<32x128xf32>
    %511 = arith.mulf %510, %510 : vector<32x128xf32>
    %cst_188 = arith.constant dense<0.000000e+00> : vector<32xf32>
    %512 = vector.multi_reduction <add>, %511, %cst_188 [1] : vector<32x128xf32> to vector<32xf32>
    %513 = vector.shape_cast %512 : vector<32xf32> to vector<32x1xf32>
    %cst_189 = arith.constant 1.280000e+02 : f32
    %514 = vector.broadcast %cst_189 : f32 to vector<32x1xf32>
    %515 = arith.divf %513, %514 : vector<32x1xf32>
    %516 = vector.broadcast %508 : vector<32x1xf32> to vector<32x128xf32>
    %517 = arith.subf %502, %516 : vector<32x128xf32>
    %cst_190 = arith.constant 9.99999974E-6 : f32
    %518 = vector.broadcast %cst_190 : f32 to vector<32x1xf32>
    %519 = arith.addf %515, %518 : vector<32x1xf32>
    %520 = math.rsqrt %519 : vector<32x1xf32>
    %521 = vector.broadcast %520 : vector<32x1xf32> to vector<32x128xf32>
    %522 = arith.mulf %517, %521 : vector<32x128xf32>
    %523 = vector.broadcast %503 : vector<1x128xf32> to vector<32x128xf32>
    %524 = arith.mulf %522, %523 : vector<32x128xf32>
    %525 = vector.broadcast %504 : vector<1x128xf32> to vector<32x128xf32>
    %526 = arith.addf %524, %525 : vector<32x128xf32>
    %c0_191 = arith.constant 0 : index
    %c0_192 = arith.constant 0 : index
    %527 = vector.load %arg41[%c0_191, %c0_192] : memref<128x128xbf16, #tpu.memory_space<vmem>>, vector<128x128xbf16>
    %528 = arith.truncf %526 : vector<32x128xf32> to vector<32x128xbf16>
    %cst_193 = arith.constant dense<0.000000e+00> : vector<32x128xf32>
    %529 = tpu.matmul %528, %527, %cst_193 {dimension_numbers = #tpu.dot_dimension_numbers<[1], [0], [0], [1], [0, 0, 1, 1], [], []>} : vector<32x128xbf16>, vector<128x128xbf16>, vector<32x128xf32> -> vector<32x128xf32>
    %c0_194 = arith.constant 0 : index
    %c0_195 = arith.constant 0 : index
    %530 = vector.load %arg42[%c0_194, %c0_195] : memref<1x128xf32, #tpu.memory_space<vmem>>, vector<1x128xf32>
    %531 = vector.broadcast %530 : vector<1x128xf32> to vector<32x128xf32>
    %532 = arith.addf %529, %531 : vector<32x128xf32>
    %c0_196 = arith.constant 0 : index
    %c0_197 = arith.constant 0 : index
    %533 = vector.load %arg44[%c0_196, %c0_197] : memref<32x128xf32, #tpu.memory_space<vmem>>, vector<32x128xf32>
    tpu.vector_store %arg44[%c0_196, %c0_197], %532 {strides = array<i32>} : memref<32x128xf32, #tpu.memory_space<vmem>>, vector<32x128xf32>,
    return
  }
  func.func @transform_0(%arg0: i32) -> (i32, i32) {
    %c0_i32 = arith.constant 0 : i32
    %c0_i32_0 = arith.constant 0 : i32
    %c0_i32_1 = arith.constant 0 : i32
    return %c0_i32, %c0_i32_0 : i32, i32
  }
  func.func @transform_1(%arg0: i32) -> (i32, i32) {
    %c0_i32 = arith.constant 0 : i32
    %c0_i32_0 = arith.constant 0 : i32
    %c0_i32_1 = arith.constant 0 : i32
    return %c0_i32, %c0_i32_0 : i32, i32
  }
  func.func @transform_2(%arg0: i32) -> (i32, i32) {
    %c0_i32 = arith.constant 0 : i32
    %c0_i32_0 = arith.constant 0 : i32
    %c0_i32_1 = arith.constant 0 : i32
    return %c0_i32, %c0_i32_0 : i32, i32
  }
  func.func @transform_3(%arg0: i32) -> (i32, i32) {
    %c0_i32 = arith.constant 0 : i32
    %c0_i32_0 = arith.constant 0 : i32
    %c0_i32_1 = arith.constant 0 : i32
    return %c0_i32, %c0_i32_0 : i32, i32
  }
  func.func @transform_4(%arg0: i32) -> (i32, i32) {
    %c0_i32 = arith.constant 0 : i32
    %c0_i32_0 = arith.constant 0 : i32
    %c0_i32_1 = arith.constant 0 : i32
    return %c0_i32, %c0_i32_0 : i32, i32
  }
  func.func @transform_5(%arg0: i32) -> (i32, i32) {
    %c0_i32 = arith.constant 0 : i32
    %c0_i32_0 = arith.constant 0 : i32
    %c0_i32_1 = arith.constant 0 : i32
    return %c0_i32, %c0_i32_0 : i32, i32
  }
  func.func @transform_6(%arg0: i32) -> (i32, i32) {
    %c0_i32 = arith.constant 0 : i32
    %c0_i32_0 = arith.constant 0 : i32
    %c0_i32_1 = arith.constant 0 : i32
    return %c0_i32, %c0_i32_0 : i32, i32
  }
  func.func @transform_7(%arg0: i32) -> (i32, i32) {
    %c0_i32 = arith.constant 0 : i32
    %c0_i32_0 = arith.constant 0 : i32
    %c0_i32_1 = arith.constant 0 : i32
    return %c0_i32, %c0_i32_0 : i32, i32
  }
  func.func @transform_8(%arg0: i32) -> (i32, i32) {
    %c0_i32 = arith.constant 0 : i32
    %c0_i32_0 = arith.constant 0 : i32
    %c0_i32_1 = arith.constant 0 : i32
    return %c0_i32, %c0_i32_0 : i32, i32
  }
  func.func @transform_9(%arg0: i32) -> (i32, i32) {
    %c0_i32 = arith.constant 0 : i32
    %c0_i32_0 = arith.constant 0 : i32
    %c0_i32_1 = arith.constant 0 : i32
    return %c0_i32, %c0_i32_0 : i32, i32
  }
  func.func @transform_10(%arg0: i32) -> (i32, i32) {
    %c0_i32 = arith.constant 0 : i32
    %c0_i32_0 = arith.constant 0 : i32
    %c0_i32_1 = arith.constant 0 : i32
    return %c0_i32, %c0_i32_0 : i32, i32
  }
  func.func @transform_11(%arg0: i32) -> (i32, i32) {
    %c0_i32 = arith.constant 0 : i32
    %c0_i32_0 = arith.constant 0 : i32
    %c0_i32_1 = arith.constant 0 : i32
    return %c0_i32, %c0_i32_0 : i32, i32
  }
  func.func @transform_12(%arg0: i32) -> (i32, i32) {
    %c0_i32 = arith.constant 0 : i32
    %c0_i32_0 = arith.constant 0 : i32
    %c0_i32_1 = arith.constant 0 : i32
    return %c0_i32, %c0_i32_0 : i32, i32
  }
  func.func @transform_13(%arg0: i32) -> (i32, i32) {
    %c0_i32 = arith.constant 0 : i32
    %c0_i32_0 = arith.constant 0 : i32
    %c0_i32_1 = arith.constant 0 : i32
    return %c0_i32, %c0_i32_0 : i32, i32
  }
  func.func @transform_14(%arg0: i32) -> (i32, i32) {
    %c0_i32 = arith.constant 0 : i32
    %c0_i32_0 = arith.constant 0 : i32
    %c0_i32_1 = arith.constant 0 : i32
    return %c0_i32, %c0_i32_0 : i32, i32
  }
  func.func @transform_15(%arg0: i32) -> (i32, i32) {
    %c0_i32 = arith.constant 0 : i32
    %c0_i32_0 = arith.constant 0 : i32
    %c0_i32_1 = arith.constant 0 : i32
    return %c0_i32, %c0_i32_0 : i32, i32
  }
  func.func @transform_16(%arg0: i32) -> (i32, i32) {
    %c0_i32 = arith.constant 0 : i32
    %c0_i32_0 = arith.constant 0 : i32
    %c0_i32_1 = arith.constant 0 : i32
    return %c0_i32, %c0_i32_0 : i32, i32
  }
  func.func @transform_17(%arg0: i32) -> (i32, i32) {
    %c0_i32 = arith.constant 0 : i32
    %c0_i32_0 = arith.constant 0 : i32
    %c0_i32_1 = arith.constant 0 : i32
    return %c0_i32, %c0_i32_0 : i32, i32
  }
  func.func @transform_18(%arg0: i32) -> (i32, i32) {
    %c0_i32 = arith.constant 0 : i32
    %c0_i32_0 = arith.constant 0 : i32
    %c0_i32_1 = arith.constant 0 : i32
    return %c0_i32, %c0_i32_0 : i32, i32
  }
  func.func @transform_19(%arg0: i32) -> (i32, i32) {
    %c0_i32 = arith.constant 0 : i32
    %c0_i32_0 = arith.constant 0 : i32
    %c0_i32_1 = arith.constant 0 : i32
    return %c0_i32, %c0_i32_0 : i32, i32
  }
  func.func @transform_20(%arg0: i32) -> (i32, i32) {
    %c0_i32 = arith.constant 0 : i32
    %c0_i32_0 = arith.constant 0 : i32
    %c0_i32_1 = arith.constant 0 : i32
    return %c0_i32, %c0_i32_0 : i32, i32
  }
  func.func @transform_21(%arg0: i32) -> (i32, i32) {
    %c0_i32 = arith.constant 0 : i32
    %c0_i32_0 = arith.constant 0 : i32
    %c0_i32_1 = arith.constant 0 : i32
    return %c0_i32, %c0_i32_0 : i32, i32
  }
  func.func @transform_22(%arg0: i32) -> (i32, i32) {
    %c0_i32 = arith.constant 0 : i32
    %c0_i32_0 = arith.constant 0 : i32
    %c0_i32_1 = arith.constant 0 : i32
    return %c0_i32, %c0_i32_0 : i32, i32
  }
  func.func @transform_23(%arg0: i32) -> (i32, i32) {
    %c0_i32 = arith.constant 0 : i32
    %c0_i32_0 = arith.constant 0 : i32
    %c0_i32_1 = arith.constant 0 : i32
    return %c0_i32, %c0_i32_0 : i32, i32
  }
  func.func @transform_24(%arg0: i32) -> (i32, i32) {
    %c0_i32 = arith.constant 0 : i32
    %c0_i32_0 = arith.constant 0 : i32
    %c0_i32_1 = arith.constant 0 : i32
    return %c0_i32, %c0_i32_0 : i32, i32
  }
  func.func @transform_25(%arg0: i32) -> (i32, i32) {
    %c0_i32 = arith.constant 0 : i32
    %c0_i32_0 = arith.constant 0 : i32
    %c0_i32_1 = arith.constant 0 : i32
    return %c0_i32, %c0_i32_0 : i32, i32
  }
  func.func @transform_26(%arg0: i32) -> (i32, i32) {
    %c0_i32 = arith.constant 0 : i32
    %c0_i32_0 = arith.constant 0 : i32
    %c0_i32_1 = arith.constant 0 : i32
    return %c0_i32, %c0_i32_0 : i32, i32
  }
  func.func @transform_27(%arg0: i32) -> (i32, i32) {
    %c0_i32 = arith.constant 0 : i32
    %c0_i32_0 = arith.constant 0 : i32
    %c0_i32_1 = arith.constant 0 : i32
    return %c0_i32, %c0_i32_0 : i32, i32
  }
  func.func @transform_28(%arg0: i32) -> (i32, i32) {
    %c0_i32 = arith.constant 0 : i32
    %c0_i32_0 = arith.constant 0 : i32
    %c0_i32_1 = arith.constant 0 : i32
    return %c0_i32, %c0_i32_0 : i32, i32
  }
  func.func @transform_29(%arg0: i32) -> (i32, i32) {
    %c0_i32 = arith.constant 0 : i32
    %c0_i32_0 = arith.constant 0 : i32
    %c0_i32_1 = arith.constant 0 : i32
    return %c0_i32, %c0_i32_0 : i32, i32
  }
  func.func @transform_30(%arg0: i32) -> (i32, i32) {
    %c0_i32 = arith.constant 0 : i32
    %c0_i32_0 = arith.constant 0 : i32
    %c0_i32_1 = arith.constant 0 : i32
    return %c0_i32, %c0_i32_0 : i32, i32
  }
  func.func @transform_31(%arg0: i32) -> (i32, i32) {
    %c0_i32 = arith.constant 0 : i32
    %c0_i32_0 = arith.constant 0 : i32
    %c0_i32_1 = arith.constant 0 : i32
    return %c0_i32, %c0_i32_0 : i32, i32
  }
  func.func @transform_32(%arg0: i32) -> (i32, i32) {
    %c0_i32 = arith.constant 0 : i32
    %c0_i32_0 = arith.constant 0 : i32
    %c0_i32_1 = arith.constant 0 : i32
    return %c0_i32, %c0_i32_0 : i32, i32
  }
  func.func @transform_33(%arg0: i32) -> (i32, i32) {
    %c0_i32 = arith.constant 0 : i32
    %c0_i32_0 = arith.constant 0 : i32
    %c0_i32_1 = arith.constant 0 : i32
    return %c0_i32, %c0_i32_0 : i32, i32
  }
  func.func @transform_34(%arg0: i32) -> (i32, i32) {
    %c0_i32 = arith.constant 0 : i32
    %c0_i32_0 = arith.constant 0 : i32
    %c0_i32_1 = arith.constant 0 : i32
    return %c0_i32, %c0_i32_0 : i32, i32
  }
  func.func @transform_35(%arg0: i32) -> (i32, i32) {
    %c0_i32 = arith.constant 0 : i32
    %c0_i32_0 = arith.constant 0 : i32
    %c0_i32_1 = arith.constant 0 : i32
    return %c0_i32, %c0_i32_0 : i32, i32
  }
  func.func @transform_36(%arg0: i32) -> (i32, i32) {
    %c0_i32 = arith.constant 0 : i32
    %c0_i32_0 = arith.constant 0 : i32
    %c0_i32_1 = arith.constant 0 : i32
    return %c0_i32, %c0_i32_0 : i32, i32
  }
  func.func @transform_37(%arg0: i32) -> (i32, i32) {
    %c0_i32 = arith.constant 0 : i32
    %c0_i32_0 = arith.constant 0 : i32
    %c0_i32_1 = arith.constant 0 : i32
    return %c0_i32, %c0_i32_0 : i32, i32
  }
  func.func @transform_38(%arg0: i32) -> (i32, i32) {
    %c0_i32 = arith.constant 0 : i32
    %c0_i32_0 = arith.constant 0 : i32
    %c0_i32_1 = arith.constant 0 : i32
    return %c0_i32, %c0_i32_0 : i32, i32
  }
  func.func @transform_39(%arg0: i32) -> (i32, i32) {
    %c0_i32 = arith.constant 0 : i32
    %c0_i32_0 = arith.constant 0 : i32
    %c0_i32_1 = arith.constant 0 : i32
    return %c0_i32, %c0_i32_0 : i32, i32
  }
  func.func @transform_40(%arg0: i32) -> (i32, i32) {
    %c0_i32 = arith.constant 0 : i32
    %c0_i32_0 = arith.constant 0 : i32
    %c0_i32_1 = arith.constant 0 : i32
    return %c0_i32, %c0_i32_0 : i32, i32
  }
  func.func @transform_41(%arg0: i32) -> (i32, i32) {
    %c0_i32 = arith.constant 0 : i32
    %c0_i32_0 = arith.constant 0 : i32
    %c0_i32_1 = arith.constant 0 : i32
    return %c0_i32, %c0_i32_0 : i32, i32
  }
  func.func @transform_42(%arg0: i32) -> (i32, i32) {
    %c0_i32 = arith.constant 0 : i32
    %c0_i32_0 = arith.constant 0 : i32
    %c0_i32_1 = arith.constant 0 : i32
    return %c0_i32, %c0_i32_0 : i32, i32
  }
  func.func @transform_43(%arg0: i32) -> (i32, i32) {
    %c0_i32 = arith.constant 0 : i32
    %c0_i32_0 = arith.constant 0 : i32
    %c0_i32_1 = arith.constant 0 : i32
    return %c0_i32, %c0_i32_0 : i32, i32
  }
}

</mosaic_0001>

<llo_original>
// kernel: transformer_seq2seq_forward.1
$region0: #{transformer_seq2seq_forward.1}
  #allocation0 [shape = 'u32[]', space=smem, size = 0x4, offset = 0x4, fixed_abs, tag = 'smem constant byte address 0x4 - core index']
  #allocation1 [shape = 'u32[144,128]{1,0:T(1,128)}', space=vmem, size = 0x12000, scoped, tag = 'internal scratch']
  %s0 = inlined_call_operand.smem [shape: u32[44], index: -1, kind: input, shape index: {}]
  %s1 = sld [smem:[%s0]]
  %s2 = scalar_lea.smem %s0, 1
  %s3 = sld [smem:[%s2]]
  %s4 = scalar_lea.smem %s0, 2
  %s5 = sld [smem:[%s4]]
  %s6 = scalar_lea.smem %s0, 3
  %s7 = sld [smem:[%s6]]
  %s8 = scalar_lea.smem %s0, 4
  %s9 = sld [smem:[%s8]]
  %s10 = scalar_lea.smem %s0, 5
  %s11 = sld [smem:[%s10]]
  %s12 = scalar_lea.smem %s0, 6
  %s13 = sld [smem:[%s12]]
  %s14 = scalar_lea.smem %s0, 7
  %s15 = sld [smem:[%s14]]
  %s16 = scalar_lea.smem %s0, 8
  %s17 = sld [smem:[%s16]]
  %s18 = scalar_lea.smem %s0, 9
  %s19 = sld [smem:[%s18]]
  %s20 = scalar_lea.smem %s0, 10
  %s21 = sld [smem:[%s20]]
  %s22 = scalar_lea.smem %s0, 11
  %s23 = sld [smem:[%s22]]
  %s24 = scalar_lea.smem %s0, 12
  %s25 = sld [smem:[%s24]]
  %s26 = scalar_lea.smem %s0, 13
  %s27 = sld [smem:[%s26]]
  %s28 = scalar_lea.smem %s0, 14
  %s29 = sld [smem:[%s28]]
  %s30 = scalar_lea.smem %s0, 15
  %s31 = sld [smem:[%s30]]
  %s32 = scalar_lea.smem %s0, 16
  %s33 = sld [smem:[%s32]]
  %s34 = scalar_lea.smem %s0, 17
  %s35 = sld [smem:[%s34]]
  %s36 = scalar_lea.smem %s0, 18
  %s37 = sld [smem:[%s36]]
  %s38 = scalar_lea.smem %s0, 19
  %s39 = sld [smem:[%s38]]
  %s40 = scalar_lea.smem %s0, 20
  %s41 = sld [smem:[%s40]]
  %s42 = scalar_lea.smem %s0, 21
  %s43 = sld [smem:[%s42]]
  %s44 = scalar_lea.smem %s0, 22
  %s45 = sld [smem:[%s44]]
  %s46 = scalar_lea.smem %s0, 23
  %s47 = sld [smem:[%s46]]
  %s48 = scalar_lea.smem %s0, 24
  %s49 = sld [smem:[%s48]]
  %s50 = scalar_lea.smem %s0, 25
  %s51 = sld [smem:[%s50]]
  %s52 = scalar_lea.smem %s0, 26
  %s53 = sld [smem:[%s52]]
  %s54 = scalar_lea.smem %s0, 27
  %s55 = sld [smem:[%s54]]
  %s56 = scalar_lea.smem %s0, 28
  %s57 = sld [smem:[%s56]]
  %s58 = scalar_lea.smem %s0, 29
  %s59 = sld [smem:[%s58]]
  %s60 = scalar_lea.smem %s0, 30
  %s61 = sld [smem:[%s60]]
  %s62 = scalar_lea.smem %s0, 31
  %s63 = sld [smem:[%s62]]
  %s64 = scalar_lea.smem %s0, 32
  %s65 = sld [smem:[%s64]]
  %s66 = scalar_lea.smem %s0, 33
  %s67 = sld [smem:[%s66]]
  %s68 = scalar_lea.smem %s0, 34
  %s69 = sld [smem:[%s68]]
  %s70 = scalar_lea.smem %s0, 35
  %s71 = sld [smem:[%s70]]
  %s72 = scalar_lea.smem %s0, 36
  %s73 = sld [smem:[%s72]]
  %s74 = scalar_lea.smem %s0, 37
  %s75 = sld [smem:[%s74]]
  %s76 = scalar_lea.smem %s0, 38
  %s77 = sld [smem:[%s76]]
  %s78 = scalar_lea.smem %s0, 39
  %s79 = sld [smem:[%s78]]
  %s80 = scalar_lea.smem %s0, 40
  %s81 = sld [smem:[%s80]]
  %s82 = scalar_lea.smem %s0, 41
  %s83 = sld [smem:[%s82]]
  %s84 = scalar_lea.smem %s0, 42
  %s85 = sld [smem:[%s84]]
  %s86 = scalar_lea.smem %s0, 43
  %s87 = sld [smem:[%s86]]
  %88 = xla_tuple %s85, %s87
  %s89 = sld [smem:[#allocation0]]
  $region318: #{transformer_seq2seq_forward.1} parent=0
    _
  %s91 = ssub.s32 1, %s89
  %s92 = scalar_select 0, %s91, %s89
  $region1: #{transformer_seq2seq_forward.1} parent=0
    #allocation2 [shape = 'u8[32768]{0}', space=vmem, size = 0x8000, scoped, tag = 'input window, operand 7, single buffered']
    #allocation3 [shape = 's32[1]{0}', space=sflag, size = 0x4, scoped, tag = 'scoped memory for transformer_seq2seq_forward.1']
    #allocation4 [shape = 's32[1]{0}', space=sflag, size = 0x4, scoped, tag = 'scoped memory for transformer_seq2seq_forward.1']
    #allocation5 [shape = 'u8[512]{0}', space=vmem, size = 0x400, scoped, tag = 'input window, operand 8, single buffered']
    #allocation6 [shape = 's32[1]{0}', space=sflag, size = 0x4, scoped, tag = 'scoped memory for transformer_seq2seq_forward.1']
    #allocation7 [shape = 'u8[512]{0}', space=vmem, size = 0x400, scoped, tag = 'input window, operand 9, single buffered']
    #allocation8 [shape = 'u8[512]{0}', space=vmem, size = 0x400, scoped, tag = 'input window, operand 10, single buffered']
    #allocation9 [shape = 's32[1]{0}', space=sflag, size = 0x4, scoped, tag = 'scoped memory for transformer_seq2seq_forward.1']
    #allocation10 [shape = 'u8[65536]{0}', space=vmem, size = 0x10000, scoped, tag = 'input window, operand 11, single buffered']
    #allocation11 [shape = 'u8[1024]{0}', space=vmem, size = 0x400, scoped, tag = 'input window, operand 12, single buffered']
    #allocation12 [shape = 's32[1]{0}', space=sflag, size = 0x4, scoped, tag = 'scoped memory for transformer_seq2seq_forward.1']
    #allocation13 [shape = 'u8[65536]{0}', space=vmem, size = 0x10000, scoped, tag = 'input window, operand 13, single buffered']
    #allocation14 [shape = 'u8[512]{0}', space=vmem, size = 0x400, scoped, tag = 'input window, operand 14, single buffered']
    #allocation15 [shape = 's32[1]{0}', space=sflag, size = 0x4, scoped, tag = 'scoped memory for transformer_seq2seq_forward.1']
    #allocation16 [shape = 'u8[512]{0}', space=vmem, size = 0x400, scoped, tag = 'input window, operand 15, single buffered']
    #allocation17 [shape = 'u8[512]{0}', space=vmem, size = 0x400, scoped, tag = 'input window, operand 16, single buffered']
    #allocation18 [shape = 's32[1]{0}', space=sflag, size = 0x4, scoped, tag = 'scoped memory for transformer_seq2seq_forward.1']
    #allocation19 [shape = 'u8[32768]{0}', space=vmem, size = 0x8000, scoped, tag = 'input window, operand 17, single buffered']
    #allocation20 [shape = 'u8[512]{0}', space=vmem, size = 0x400, scoped, tag = 'input window, operand 18, single buffered']
    #allocation21 [shape = 's32[1]{0}', space=sflag, size = 0x4, scoped, tag = 'scoped memory for transformer_seq2seq_forward.1']
    #allocation22 [shape = 'u8[32768]{0}', space=vmem, size = 0x8000, scoped, tag = 'input window, operand 19, single buffered']
    #allocation23 [shape = 'u8[98304]{0}', space=vmem, size = 0x18000, scoped, tag = 'input window, operand 20, single buffered']
    #allocation24 [shape = 's32[1]{0}', space=sflag, size = 0x4, scoped, tag = 'scoped memory for transformer_seq2seq_forward.1']
    #allocation25 [shape = 'u8[32768]{0}', space=vmem, size = 0x8000, scoped, tag = 'input window, operand 22, single buffered']
    #allocation26 [shape = 'u8[512]{0}', space=vmem, size = 0x400, scoped, tag = 'input window, operand 23, single buffered']
    #allocation27 [shape = 's32[1]{0}', space=sflag, size = 0x4, scoped, tag = 'scoped memory for transformer_seq2seq_forward.1']
    #allocation28 [shape = 'u8[512]{0}', space=vmem, size = 0x400, scoped, tag = 'input window, operand 24, single buffered']
    #allocation29 [shape = 'u8[512]{0}', space=vmem, size = 0x400, scoped, tag = 'input window, operand 25, single buffered']
    #allocation30 [shape = 's32[1]{0}', space=sflag, size = 0x4, scoped, tag = 'scoped memory for transformer_seq2seq_forward.1']
    #allocation31 [shape = 'u8[32768]{0}', space=vmem, size = 0x8000, scoped, tag = 'input window, operand 26, single buffered']
    #allocation32 [shape = 'u8[512]{0}', space=vmem, size = 0x400, scoped, tag = 'input window, operand 27, single buffered']
    #allocation33 [shape = 's32[1]{0}', space=sflag, size = 0x4, scoped, tag = 'scoped memory for transformer_seq2seq_forward.1']
    #allocation34 [shape = 'u8[65536]{0}', space=vmem, size = 0x10000, scoped, tag = 'input window, operand 28, single buffered']
    #allocation35 [shape = 'u8[1024]{0}', space=vmem, size = 0x400, scoped, tag = 'input window, operand 29, single buffered']
    #allocation36 [shape = 's32[1]{0}', space=sflag, size = 0x4, scoped, tag = 'scoped memory for transformer_seq2seq_forward.1']
    #allocation37 [shape = 'u8[32768]{0}', space=vmem, size = 0x8000, scoped, tag = 'input window, operand 30, single buffered']
    #allocation38 [shape = 'u8[512]{0}', space=vmem, size = 0x400, scoped, tag = 'input window, operand 31, single buffered']
    #allocation39 [shape = 's32[1]{0}', space=sflag, size = 0x4, scoped, tag = 'scoped memory for transformer_seq2seq_forward.1']
    #allocation40 [shape = 'u8[512]{0}', space=vmem, size = 0x400, scoped, tag = 'input window, operand 32, single buffered']
    #allocation41 [shape = 'u8[512]{0}', space=vmem, size = 0x400, scoped, tag = 'input window, operand 33, single buffered']
    #allocation42 [shape = 's32[1]{0}', space=sflag, size = 0x4, scoped, tag = 'scoped memory for transformer_seq2seq_forward.1']
    #allocation43 [shape = 'u8[65536]{0}', space=vmem, size = 0x10000, scoped, tag = 'input window, operand 34, single buffered']
    #allocation44 [shape = 'u8[1024]{0}', space=vmem, size = 0x400, scoped, tag = 'input window, operand 35, single buffered']
    #allocation45 [shape = 's32[1]{0}', space=sflag, size = 0x4, scoped, tag = 'scoped memory for transformer_seq2seq_forward.1']
    #allocation46 [shape = 'u8[65536]{0}', space=vmem, size = 0x10000, scoped, tag = 'input window, operand 36, single buffered']
    #allocation47 [shape = 'u8[512]{0}', space=vmem, size = 0x400, scoped, tag = 'input window, operand 37, single buffered']
    #allocation48 [shape = 's32[1]{0}', space=sflag, size = 0x4, scoped, tag = 'scoped memory for transformer_seq2seq_forward.1']
    #allocation49 [shape = 'u8[512]{0}', space=vmem, size = 0x400, scoped, tag = 'input window, operand 38, single buffered']
    #allocation50 [shape = 'u8[512]{0}', space=vmem, size = 0x400, scoped, tag = 'input window, operand 39, single buffered']
    #allocation51 [shape = 's32[1]{0}', space=sflag, size = 0x4, scoped, tag = 'scoped memory for transformer_seq2seq_forward.1']
    #allocation52 [shape = 'u8[32768]{0}', space=vmem, size = 0x8000, scoped, tag = 'input window, operand 40, single buffered']
    #allocation53 [shape = 'u8[8192]{0}', space=vmem, size = 0x2000, scoped, tag = 'output window, operand 0, single buffered']
    #allocation54 [shape = 'u8[16384]{0}', space=vmem, size = 0x4000, scoped, tag = 'output window, operand 1, single buffered']
    #allocation55 [shape = 's32[1]{0}', space=sflag, size = 0x4, scoped, tag = 'scoped memory for transformer_seq2seq_forward.1']
    %93 = vsyncpa [#allocation3], 0
    %94 = vsyncpa [#allocation6], 0
    %95 = vsyncpa [#allocation9], 0
    %96 = vsyncpa [#allocation12], 0
    %97 = vsyncpa [#allocation15], 0
    %98 = vsyncpa [#allocation18], 0
    %99 = vsyncpa [#allocation21], 0
    %100 = vsyncpa [#allocation24], 0
    %101 = vsyncpa [#allocation27], 0
    %102 = vsyncpa [#allocation30], 0
    %103 = vsyncpa [#allocation33], 0
    %104 = vsyncpa [#allocation36], 0
    %105 = vsyncpa [#allocation39], 0
    %106 = vsyncpa [#allocation42], 0
    %107 = vsyncpa [#allocation45], 0
    %108 = vsyncpa [#allocation48], 0
    %109 = vsyncpa [#allocation51], 0
    %110 = vsyncpa [#allocation4], 0
    %111 = vsyncpa [#allocation55], 0
    // Predicated region
    $region2: #{transformer_seq2seq_forward.1} parent=1 // pred_check
      _
    $region3: #{transformer_seq2seq_forward.1} parent=1 // pred_check_branch
      %113 = sbr.rel (0) target = $region5
    $region4: #{transformer_seq2seq_forward.1} parent=1 // pred_region
      _
    $region5: #{transformer_seq2seq_forward.1} parent=1 // pred_fallthru
      _
    // Predicated region
    $region6: #{transformer_seq2seq_forward.1} parent=1 // pred_check
      _
    $region7: #{transformer_seq2seq_forward.1} parent=1 // pred_check_branch
      %115 = sbr.rel (0) target = $region9
    $region8: #{transformer_seq2seq_forward.1} parent=1 // pred_region
      _
    $region9: #{transformer_seq2seq_forward.1} parent=1 // pred_fallthru
      _
    // Predicated region
    $region10: #{transformer_seq2seq_forward.1} parent=1 // pred_check
      _
    $region11: #{transformer_seq2seq_forward.1} parent=1 // pred_check_branch
      %117 = sbr.rel (0) target = $region13
    $region12: #{transformer_seq2seq_forward.1} parent=1 // pred_region
      _
    $region13: #{transformer_seq2seq_forward.1} parent=1 // pred_fallthru
      _
    // Predicated region
    $region14: #{transformer_seq2seq_forward.1} parent=1 // pred_check
      _
    $region15: #{transformer_seq2seq_forward.1} parent=1 // pred_check_branch
      %119 = sbr.rel (0) target = $region17
    $region16: #{transformer_seq2seq_forward.1} parent=1 // pred_region
      _
    $region17: #{transformer_seq2seq_forward.1} parent=1 // pred_fallthru
      _
    // Predicated region
    $region18: #{transformer_seq2seq_forward.1} parent=1 // pred_check
      _
    $region19: #{transformer_seq2seq_forward.1} parent=1 // pred_check_branch
      %121 = sbr.rel (0) target = $region21
    $region20: #{transformer_seq2seq_forward.1} parent=1 // pred_region
      _
    $region21: #{transformer_seq2seq_forward.1} parent=1 // pred_fallthru
      _
    // Predicated region
    $region22: #{transformer_seq2seq_forward.1} parent=1 // pred_check
      _
    $region23: #{transformer_seq2seq_forward.1} parent=1 // pred_check_branch
      %123 = sbr.rel (0) target = $region25
    $region24: #{transformer_seq2seq_forward.1} parent=1 // pred_region
      _
    $region25: #{transformer_seq2seq_forward.1} parent=1 // pred_fallthru
      _
    // Predicated region
    $region26: #{transformer_seq2seq_forward.1} parent=1 // pred_check
      _
    $region27: #{transformer_seq2seq_forward.1} parent=1 // pred_check_branch
      %125 = sbr.rel (0) target = $region29
    $region28: #{transformer_seq2seq_forward.1} parent=1 // pred_region
      _
    $region29: #{transformer_seq2seq_forward.1} parent=1 // pred_fallthru
      _
    // Predicated region
    $region30: #{transformer_seq2seq_forward.1} parent=1 // pred_check
      _
    $region31: #{transformer_seq2seq_forward.1} parent=1 // pred_check_branch
      %127 = sbr.rel (0) target = $region33
    $region32: #{transformer_seq2seq_forward.1} parent=1 // pred_region
      %s129 = ssub.s32 1024, 1024
      %130 = vsyncadd [#allocation3], %s129
      %s131 = sshll.u32 [#allocation2], 4
      %s132 = int_to_ptr.vmem [resolvable:$true] %s131
      %137 = dma.hbm_to_vmem [thread:$0]  %s15, 1024, %s132, [#allocation3], 64, 64, 4
    $region33: #{transformer_seq2seq_forward.1} parent=1 // pred_fallthru
      _
    // Predicated region
    $region34: #{transformer_seq2seq_forward.1} parent=1 // pred_check
      _
    $region35: #{transformer_seq2seq_forward.1} parent=1 // pred_check_branch
      %139 = sbr.rel (0) target = $region37
    $region36: #{transformer_seq2seq_forward.1} parent=1 // pred_region
      %s141 = ssub.s32 16, 16
      %142 = vsyncadd [#allocation6], %s141
      %s144 = sshll.u32 [#allocation5], 4
      %s145 = int_to_ptr.vmem [resolvable:$true] %s144
      %147 = dma.hbm_to_vmem [thread:$0]  %s17, 16, %s145, [#allocation6]
    $region37: #{transformer_seq2seq_forward.1} parent=1 // pred_fallthru
      _
    // Predicated region
    $region38: #{transformer_seq2seq_forward.1} parent=1 // pred_check
      _
    $region39: #{transformer_seq2seq_forward.1} parent=1 // pred_check_branch
      %149 = sbr.rel (0) target = $region41
    $region40: #{transformer_seq2seq_forward.1} parent=1 // pred_region
      %s151 = ssub.s32 16, 16
      %152 = vsyncadd [#allocation6], %s151
      %s154 = sshll.u32 [#allocation7], 4
      %s155 = int_to_ptr.vmem [resolvable:$true] %s154
      %157 = dma.hbm_to_vmem [thread:$0]  %s19, 16, %s155, [#allocation6]
    $region41: #{transformer_seq2seq_forward.1} parent=1 // pred_fallthru
      _
    // Predicated region
    $region42: #{transformer_seq2seq_forward.1} parent=1 // pred_check
      _
    $region43: #{transformer_seq2seq_forward.1} parent=1 // pred_check_branch
      %159 = sbr.rel (0) target = $region45
    $region44: #{transformer_seq2seq_forward.1} parent=1 // pred_region
      %s161 = ssub.s32 16, 16
      %162 = vsyncadd [#allocation9], %s161
      %s164 = sshll.u32 [#allocation8], 4
      %s165 = int_to_ptr.vmem [resolvable:$true] %s164
      %167 = dma.hbm_to_vmem [thread:$0]  %s21, 16, %s165, [#allocation9]
    $region45: #{transformer_seq2seq_forward.1} parent=1 // pred_fallthru
      _
    // Predicated region
    $region46: #{transformer_seq2seq_forward.1} parent=1 // pred_check
      _
    $region47: #{transformer_seq2seq_forward.1} parent=1 // pred_check_branch
      %169 = sbr.rel (0) target = $region49
    $region48: #{transformer_seq2seq_forward.1} parent=1 // pred_region
      %s171 = ssub.s32 2048, 2048
      %172 = vsyncadd [#allocation9], %s171
      %s173 = sshll.u32 [#allocation10], 4
      %s174 = int_to_ptr.vmem [resolvable:$true] %s173
      %179 = dma.hbm_to_vmem [thread:$0]  %s23, 2048, %s174, [#allocation9], 128, 128, 8
    $region49: #{transformer_seq2seq_forward.1} parent=1 // pred_fallthru
      _
    // Predicated region
    $region50: #{transformer_seq2seq_forward.1} parent=1 // pred_check
      _
    $region51: #{transformer_seq2seq_forward.1} parent=1 // pred_check_branch
      %181 = sbr.rel (0) target = $region53
    $region52: #{transformer_seq2seq_forward.1} parent=1 // pred_region
      %s183 = ssub.s32 32, 32
      %184 = vsyncadd [#allocation12], %s183
      %s186 = sshll.u32 [#allocation11], 4
      %s187 = int_to_ptr.vmem [resolvable:$true] %s186
      %189 = dma.hbm_to_vmem [thread:$0]  %s25, 32, %s187, [#allocation12]
    $region53: #{transformer_seq2seq_forward.1} parent=1 // pred_fallthru
      _
    // Predicated region
    $region54: #{transformer_seq2seq_forward.1} parent=1 // pred_check
      _
    $region55: #{transformer_seq2seq_forward.1} parent=1 // pred_check_branch
      %191 = sbr.rel (0) target = $region57
    $region56: #{transformer_seq2seq_forward.1} parent=1 // pred_region
      %s193 = ssub.s32 2048, 2048
      %194 = vsyncadd [#allocation12], %s193
      %s195 = sshll.u32 [#allocation13], 4
      %s196 = int_to_ptr.vmem [resolvable:$true] %s195
      %201 = dma.hbm_to_vmem [thread:$0]  %s27, 2048, %s196, [#allocation12], 64, 64, 4
    $region57: #{transformer_seq2seq_forward.1} parent=1 // pred_fallthru
      _
    // Predicated region
    $region58: #{transformer_seq2seq_forward.1} parent=1 // pred_check
      _
    $region59: #{transformer_seq2seq_forward.1} parent=1 // pred_check_branch
      %203 = sbr.rel (0) target = $region61
    $region60: #{transformer_seq2seq_forward.1} parent=1 // pred_region
      %s205 = ssub.s32 16, 16
      %206 = vsyncadd [#allocation15], %s205
      %s208 = sshll.u32 [#allocation14], 4
      %s209 = int_to_ptr.vmem [resolvable:$true] %s208
      %211 = dma.hbm_to_vmem [thread:$0]  %s29, 16, %s209, [#allocation15]
    $region61: #{transformer_seq2seq_forward.1} parent=1 // pred_fallthru
      _
    // Predicated region
    $region62: #{transformer_seq2seq_forward.1} parent=1 // pred_check
      _
    $region63: #{transformer_seq2seq_forward.1} parent=1 // pred_check_branch
      %213 = sbr.rel (0) target = $region65
    $region64: #{transformer_seq2seq_forward.1} parent=1 // pred_region
      %s215 = ssub.s32 16, 16
      %216 = vsyncadd [#allocation15], %s215
      %s218 = sshll.u32 [#allocation16], 4
      %s219 = int_to_ptr.vmem [resolvable:$true] %s218
      %221 = dma.hbm_to_vmem [thread:$0]  %s31, 16, %s219, [#allocation15]
    $region65: #{transformer_seq2seq_forward.1} parent=1 // pred_fallthru
      _
    // Predicated region
    $region66: #{transformer_seq2seq_forward.1} parent=1 // pred_check
      _
    $region67: #{transformer_seq2seq_forward.1} parent=1 // pred_check_branch
      %223 = sbr.rel (0) target = $region69
    $region68: #{transformer_seq2seq_forward.1} parent=1 // pred_region
      %s225 = ssub.s32 16, 16
      %226 = vsyncadd [#allocation18], %s225
      %s228 = sshll.u32 [#allocation17], 4
      %s229 = int_to_ptr.vmem [resolvable:$true] %s228
      %231 = dma.hbm_to_vmem [thread:$0]  %s33, 16, %s229, [#allocation18]
    $region69: #{transformer_seq2seq_forward.1} parent=1 // pred_fallthru
      _
    // Predicated region
    $region70: #{transformer_seq2seq_forward.1} parent=1 // pred_check
      _
    $region71: #{transformer_seq2seq_forward.1} parent=1 // pred_check_branch
      %233 = sbr.rel (0) target = $region73
    $region72: #{transformer_seq2seq_forward.1} parent=1 // pred_region
      %s235 = ssub.s32 1024, 1024
      %236 = vsyncadd [#allocation18], %s235
      %s237 = sshll.u32 [#allocation19], 4
      %s238 = int_to_ptr.vmem [resolvable:$true] %s237
      %243 = dma.hbm_to_vmem [thread:$0]  %s35, 1024, %s238, [#allocation18], 64, 64, 4
    $region73: #{transformer_seq2seq_forward.1} parent=1 // pred_fallthru
      _
    // Predicated region
    $region74: #{transformer_seq2seq_forward.1} parent=1 // pred_check
      _
    $region75: #{transformer_seq2seq_forward.1} parent=1 // pred_check_branch
      %245 = sbr.rel (0) target = $region77
    $region76: #{transformer_seq2seq_forward.1} parent=1 // pred_region
      %s247 = ssub.s32 16, 16
      %248 = vsyncadd [#allocation21], %s247
      %s250 = sshll.u32 [#allocation20], 4
      %s251 = int_to_ptr.vmem [resolvable:$true] %s250
      %253 = dma.hbm_to_vmem [thread:$0]  %s37, 16, %s251, [#allocation21]
    $region77: #{transformer_seq2seq_forward.1} parent=1 // pred_fallthru
      _
    // Predicated region
    $region78: #{transformer_seq2seq_forward.1} parent=1 // pred_check
      _
    $region79: #{transformer_seq2seq_forward.1} parent=1 // pred_check_branch
      %255 = sbr.rel (0) target = $region81
    $region80: #{transformer_seq2seq_forward.1} parent=1 // pred_region
      %s257 = ssub.s32 1024, 1024
      %258 = vsyncadd [#allocation21], %s257
      %s259 = sshll.u32 [#allocation22], 4
      %s260 = int_to_ptr.vmem [resolvable:$true] %s259
      %265 = dma.hbm_to_vmem [thread:$0]  %s39, 1024, %s260, [#allocation21], 64, 64, 4
    $region81: #{transformer_seq2seq_forward.1} parent=1 // pred_fallthru
      _
    // Predicated region
    $region82: #{transformer_seq2seq_forward.1} parent=1 // pred_check
      _
    $region83: #{transformer_seq2seq_forward.1} parent=1 // pred_check_branch
      %267 = sbr.rel (0) target = $region85
    $region84: #{transformer_seq2seq_forward.1} parent=1 // pred_region
      %s269 = ssub.s32 3072, 3072
      %270 = vsyncadd [#allocation24], %s269
      %s271 = sshll.u32 [#allocation23], 4
      %s272 = int_to_ptr.vmem [resolvable:$true] %s271
      %277 = dma.hbm_to_vmem [thread:$0]  %s41, 3072, %s272, [#allocation24], 192, 192, 12
    $region85: #{transformer_seq2seq_forward.1} parent=1 // pred_fallthru
      _
    // Predicated region
    $region86: #{transformer_seq2seq_forward.1} parent=1 // pred_check
      _
    $region87: #{transformer_seq2seq_forward.1} parent=1 // pred_check_branch
      %279 = sbr.rel (0) target = $region89
    $region88: #{transformer_seq2seq_forward.1} parent=1 // pred_region
      _
    $region89: #{transformer_seq2seq_forward.1} parent=1 // pred_fallthru
      _
    // Predicated region
    $region90: #{transformer_seq2seq_forward.1} parent=1 // pred_check
      _
    $region91: #{transformer_seq2seq_forward.1} parent=1 // pred_check_branch
      %281 = sbr.rel (0) target = $region93
    $region92: #{transformer_seq2seq_forward.1} parent=1 // pred_region
      %s283 = ssub.s32 1024, 1024
      %284 = vsyncadd [#allocation24], %s283
      %s285 = sshll.u32 [#allocation25], 4
      %s286 = int_to_ptr.vmem [resolvable:$true] %s285
      %291 = dma.hbm_to_vmem [thread:$0]  %s45, 1024, %s286, [#allocation24], 64, 64, 4
    $region93: #{transformer_seq2seq_forward.1} parent=1 // pred_fallthru
      _
    // Predicated region
    $region94: #{transformer_seq2seq_forward.1} parent=1 // pred_check
      _
    $region95: #{transformer_seq2seq_forward.1} parent=1 // pred_check_branch
      %293 = sbr.rel (0) target = $region97
    $region96: #{transformer_seq2seq_forward.1} parent=1 // pred_region
      %s295 = ssub.s32 16, 16
      %296 = vsyncadd [#allocation27], %s295
      %s298 = sshll.u32 [#allocation26], 4
      %s299 = int_to_ptr.vmem [resolvable:$true] %s298
      %301 = dma.hbm_to_vmem [thread:$0]  %s47, 16, %s299, [#allocation27]
    $region97: #{transformer_seq2seq_forward.1} parent=1 // pred_fallthru
      _
    // Predicated region
    $region98: #{transformer_seq2seq_forward.1} parent=1 // pred_check
      _
    $region99: #{transformer_seq2seq_forward.1} parent=1 // pred_check_branch
      %303 = sbr.rel (0) target = $region101
    $region100: #{transformer_seq2seq_forward.1} parent=1 // pred_region
      %s305 = ssub.s32 16, 16
      %306 = vsyncadd [#allocation27], %s305
      %s308 = sshll.u32 [#allocation28], 4
      %s309 = int_to_ptr.vmem [resolvable:$true] %s308
      %311 = dma.hbm_to_vmem [thread:$0]  %s49, 16, %s309, [#allocation27]
    $region101: #{transformer_seq2seq_forward.1} parent=1 // pred_fallthru
      _
    // Predicated region
    $region102: #{transformer_seq2seq_forward.1} parent=1 // pred_check
      _
    $region103: #{transformer_seq2seq_forward.1} parent=1 // pred_check_branch
      %313 = sbr.rel (0) target = $region105
    $region104: #{transformer_seq2seq_forward.1} parent=1 // pred_region
      %s315 = ssub.s32 16, 16
      %316 = vsyncadd [#allocation30], %s315
      %s318 = sshll.u32 [#allocation29], 4
      %s319 = int_to_ptr.vmem [resolvable:$true] %s318
      %321 = dma.hbm_to_vmem [thread:$0]  %s51, 16, %s319, [#allocation30]
    $region105: #{transformer_seq2seq_forward.1} parent=1 // pred_fallthru
      _
    // Predicated region
    $region106: #{transformer_seq2seq_forward.1} parent=1 // pred_check
      _
    $region107: #{transformer_seq2seq_forward.1} parent=1 // pred_check_branch
      %323 = sbr.rel (0) target = $region109
    $region108: #{transformer_seq2seq_forward.1} parent=1 // pred_region
      %s325 = ssub.s32 1024, 1024
      %326 = vsyncadd [#allocation30], %s325
      %s327 = sshll.u32 [#allocation31], 4
      %s328 = int_to_ptr.vmem [resolvable:$true] %s327
      %333 = dma.hbm_to_vmem [thread:$0]  %s53, 1024, %s328, [#allocation30], 64, 64, 4
    $region109: #{transformer_seq2seq_forward.1} parent=1 // pred_fallthru
      _
    // Predicated region
    $region110: #{transformer_seq2seq_forward.1} parent=1 // pred_check
      _
    $region111: #{transformer_seq2seq_forward.1} parent=1 // pred_check_branch
      %335 = sbr.rel (0) target = $region113
    $region112: #{transformer_seq2seq_forward.1} parent=1 // pred_region
      %s337 = ssub.s32 16, 16
      %338 = vsyncadd [#allocation33], %s337
      %s340 = sshll.u32 [#allocation32], 4
      %s341 = int_to_ptr.vmem [resolvable:$true] %s340
      %343 = dma.hbm_to_vmem [thread:$0]  %s55, 16, %s341, [#allocation33]
    $region113: #{transformer_seq2seq_forward.1} parent=1 // pred_fallthru
      _
    // Predicated region
    $region114: #{transformer_seq2seq_forward.1} parent=1 // pred_check
      _
    $region115: #{transformer_seq2seq_forward.1} parent=1 // pred_check_branch
      %345 = sbr.rel (0) target = $region117
    $region116: #{transformer_seq2seq_forward.1} parent=1 // pred_region
      %s347 = ssub.s32 2048, 2048
      %348 = vsyncadd [#allocation33], %s347
      %s349 = sshll.u32 [#allocation34], 4
      %s350 = int_to_ptr.vmem [resolvable:$true] %s349
      %355 = dma.hbm_to_vmem [thread:$0]  %s57, 2048, %s350, [#allocation33], 128, 128, 8
    $region117: #{transformer_seq2seq_forward.1} parent=1 // pred_fallthru
      _
    // Predicated region
    $region118: #{transformer_seq2seq_forward.1} parent=1 // pred_check
      _
    $region119: #{transformer_seq2seq_forward.1} parent=1 // pred_check_branch
      %357 = sbr.rel (0) target = $region121
    $region120: #{transformer_seq2seq_forward.1} parent=1 // pred_region
      %s359 = ssub.s32 32, 32
      %360 = vsyncadd [#allocation36], %s359
      %s362 = sshll.u32 [#allocation35], 4
      %s363 = int_to_ptr.vmem [resolvable:$true] %s362
      %365 = dma.hbm_to_vmem [thread:$0]  %s59, 32, %s363, [#allocation36]
    $region121: #{transformer_seq2seq_forward.1} parent=1 // pred_fallthru
      _
    // Predicated region
    $region122: #{transformer_seq2seq_forward.1} parent=1 // pred_check
      _
    $region123: #{transformer_seq2seq_forward.1} parent=1 // pred_check_branch
      %367 = sbr.rel (0) target = $region125
    $region124: #{transformer_seq2seq_forward.1} parent=1 // pred_region
      %s369 = ssub.s32 1024, 1024
      %370 = vsyncadd [#allocation36], %s369
      %s371 = sshll.u32 [#allocation37], 4
      %s372 = int_to_ptr.vmem [resolvable:$true] %s371
      %377 = dma.hbm_to_vmem [thread:$0]  %s61, 1024, %s372, [#allocation36], 64, 64, 4
    $region125: #{transformer_seq2seq_forward.1} parent=1 // pred_fallthru
      _
    // Predicated region
    $region126: #{transformer_seq2seq_forward.1} parent=1 // pred_check
      _
    $region127: #{transformer_seq2seq_forward.1} parent=1 // pred_check_branch
      %379 = sbr.rel (0) target = $region129
    $region128: #{transformer_seq2seq_forward.1} parent=1 // pred_region
      %s381 = ssub.s32 16, 16
      %382 = vsyncadd [#allocation39], %s381
      %s384 = sshll.u32 [#allocation38], 4
      %s385 = int_to_ptr.vmem [resolvable:$true] %s384
      %387 = dma.hbm_to_vmem [thread:$0]  %s63, 16, %s385, [#allocation39]
    $region129: #{transformer_seq2seq_forward.1} parent=1 // pred_fallthru
      _
    // Predicated region
    $region130: #{transformer_seq2seq_forward.1} parent=1 // pred_check
      _
    $region131: #{transformer_seq2seq_forward.1} parent=1 // pred_check_branch
      %389 = sbr.rel (0) target = $region133
    $region132: #{transformer_seq2seq_forward.1} parent=1 // pred_region
      %s391 = ssub.s32 16, 16
      %392 = vsyncadd [#allocation39], %s391
      %s394 = sshll.u32 [#allocation40], 4
      %s395 = int_to_ptr.vmem [resolvable:$true] %s394
      %397 = dma.hbm_to_vmem [thread:$0]  %s65, 16, %s395, [#allocation39]
    $region133: #{transformer_seq2seq_forward.1} parent=1 // pred_fallthru
      _
    // Predicated region
    $region134: #{transformer_seq2seq_forward.1} parent=1 // pred_check
      _
    $region135: #{transformer_seq2seq_forward.1} parent=1 // pred_check_branch
      %399 = sbr.rel (0) target = $region137
    $region136: #{transformer_seq2seq_forward.1} parent=1 // pred_region
      %s401 = ssub.s32 16, 16
      %402 = vsyncadd [#allocation42], %s401
      %s404 = sshll.u32 [#allocation41], 4
      %s405 = int_to_ptr.vmem [resolvable:$true] %s404
      %407 = dma.hbm_to_vmem [thread:$0]  %s67, 16, %s405, [#allocation42]
    $region137: #{transformer_seq2seq_forward.1} parent=1 // pred_fallthru
      _
    // Predicated region
    $region138: #{transformer_seq2seq_forward.1} parent=1 // pred_check
      _
    $region139: #{transformer_seq2seq_forward.1} parent=1 // pred_check_branch
      %409 = sbr.rel (0) target = $region141
    $region140: #{transformer_seq2seq_forward.1} parent=1 // pred_region
      %s411 = ssub.s32 2048, 2048
      %412 = vsyncadd [#allocation42], %s411
      %s413 = sshll.u32 [#allocation43], 4
      %s414 = int_to_ptr.vmem [resolvable:$true] %s413
      %419 = dma.hbm_to_vmem [thread:$0]  %s69, 2048, %s414, [#allocation42], 128, 128, 8
    $region141: #{transformer_seq2seq_forward.1} parent=1 // pred_fallthru
      _
    // Predicated region
    $region142: #{transformer_seq2seq_forward.1} parent=1 // pred_check
      _
    $region143: #{transformer_seq2seq_forward.1} parent=1 // pred_check_branch
      %421 = sbr.rel (0) target = $region145
    $region144: #{transformer_seq2seq_forward.1} parent=1 // pred_region
      %s423 = ssub.s32 32, 32
      %424 = vsyncadd [#allocation45], %s423
      %s426 = sshll.u32 [#allocation44], 4
      %s427 = int_to_ptr.vmem [resolvable:$true] %s426
      %429 = dma.hbm_to_vmem [thread:$0]  %s71, 32, %s427, [#allocation45]
    $region145: #{transformer_seq2seq_forward.1} parent=1 // pred_fallthru
      _
    // Predicated region
    $region146: #{transformer_seq2seq_forward.1} parent=1 // pred_check
      _
    $region147: #{transformer_seq2seq_forward.1} parent=1 // pred_check_branch
      %431 = sbr.rel (0) target = $region149
    $region148: #{transformer_seq2seq_forward.1} parent=1 // pred_region
      %s433 = ssub.s32 2048, 2048
      %434 = vsyncadd [#allocation45], %s433
      %s435 = sshll.u32 [#allocation46], 4
      %s436 = int_to_ptr.vmem [resolvable:$true] %s435
      %441 = dma.hbm_to_vmem [thread:$0]  %s73, 2048, %s436, [#allocation45], 64, 64, 4
    $region149: #{transformer_seq2seq_forward.1} parent=1 // pred_fallthru
      _
    // Predicated region
    $region150: #{transformer_seq2seq_forward.1} parent=1 // pred_check
      _
    $region151: #{transformer_seq2seq_forward.1} parent=1 // pred_check_branch
      %443 = sbr.rel (0) target = $region153
    $region152: #{transformer_seq2seq_forward.1} parent=1 // pred_region
      %s445 = ssub.s32 16, 16
      %446 = vsyncadd [#allocation48], %s445
      %s448 = sshll.u32 [#allocation47], 4
      %s449 = int_to_ptr.vmem [resolvable:$true] %s448
      %451 = dma.hbm_to_vmem [thread:$0]  %s75, 16, %s449, [#allocation48]
    $region153: #{transformer_seq2seq_forward.1} parent=1 // pred_fallthru
      _
    // Predicated region
    $region154: #{transformer_seq2seq_forward.1} parent=1 // pred_check
      _
    $region155: #{transformer_seq2seq_forward.1} parent=1 // pred_check_branch
      %453 = sbr.rel (0) target = $region157
    $region156: #{transformer_seq2seq_forward.1} parent=1 // pred_region
      %s455 = ssub.s32 16, 16
      %456 = vsyncadd [#allocation48], %s455
      %s458 = sshll.u32 [#allocation49], 4
      %s459 = int_to_ptr.vmem [resolvable:$true] %s458
      %461 = dma.hbm_to_vmem [thread:$0]  %s77, 16, %s459, [#allocation48]
    $region157: #{transformer_seq2seq_forward.1} parent=1 // pred_fallthru
      _
    // Predicated region
    $region158: #{transformer_seq2seq_forward.1} parent=1 // pred_check
      _
    $region159: #{transformer_seq2seq_forward.1} parent=1 // pred_check_branch
      %463 = sbr.rel (0) target = $region161
    $region160: #{transformer_seq2seq_forward.1} parent=1 // pred_region
      %s465 = ssub.s32 16, 16
      %466 = vsyncadd [#allocation51], %s465
      %s468 = sshll.u32 [#allocation50], 4
      %s469 = int_to_ptr.vmem [resolvable:$true] %s468
      %471 = dma.hbm_to_vmem [thread:$0]  %s79, 16, %s469, [#allocation51]
    $region161: #{transformer_seq2seq_forward.1} parent=1 // pred_fallthru
      _
    // Predicated region
    $region162: #{transformer_seq2seq_forward.1} parent=1 // pred_check
      _
    $region163: #{transformer_seq2seq_forward.1} parent=1 // pred_check_branch
      %473 = sbr.rel (0) target = $region165
    $region164: #{transformer_seq2seq_forward.1} parent=1 // pred_region
      %s475 = ssub.s32 1024, 1024
      %476 = vsyncadd [#allocation51], %s475
      %s477 = sshll.u32 [#allocation52], 4
      %s478 = int_to_ptr.vmem [resolvable:$true] %s477
      %483 = dma.hbm_to_vmem [thread:$0]  %s81, 1024, %s478, [#allocation51], 64, 64, 4
    $region165: #{transformer_seq2seq_forward.1} parent=1 // pred_fallthru
      _
    // Predicated region
    $region166: #{transformer_seq2seq_forward.1} parent=1 // pred_check
      _
    $region167: #{transformer_seq2seq_forward.1} parent=1 // pred_check_branch
      %485 = sbr.rel (0) target = $region169
    $region168: #{transformer_seq2seq_forward.1} parent=1 // pred_region
      _
    $region169: #{transformer_seq2seq_forward.1} parent=1 // pred_fallthru
      _
    // Predicated region
    $region170: #{transformer_seq2seq_forward.1} parent=1 // pred_check
      _
    $region171: #{transformer_seq2seq_forward.1} parent=1 // pred_check_branch
      %487 = sbr.rel (0) target = $region173
    $region172: #{transformer_seq2seq_forward.1} parent=1 // pred_region
      %488 = dma.done [#allocation3], 1024
    $region173: #{transformer_seq2seq_forward.1} parent=1 // pred_fallthru
      _
    // Predicated region
    $region174: #{transformer_seq2seq_forward.1} parent=1 // pred_check
      _
    $region175: #{transformer_seq2seq_forward.1} parent=1 // pred_check_branch
      %490 = sbr.rel (0) target = $region177
    $region176: #{transformer_seq2seq_forward.1} parent=1 // pred_region
      %491 = dma.done [#allocation6], 16
    $region177: #{transformer_seq2seq_forward.1} parent=1 // pred_fallthru
      _
    // Predicated region
    $region178: #{transformer_seq2seq_forward.1} parent=1 // pred_check
      _
    $region179: #{transformer_seq2seq_forward.1} parent=1 // pred_check_branch
      %493 = sbr.rel (0) target = $region181
    $region180: #{transformer_seq2seq_forward.1} parent=1 // pred_region
      %494 = dma.done [#allocation6], 16
    $region181: #{transformer_seq2seq_forward.1} parent=1 // pred_fallthru
      _
    // Predicated region
    $region182: #{transformer_seq2seq_forward.1} parent=1 // pred_check
      _
    $region183: #{transformer_seq2seq_forward.1} parent=1 // pred_check_branch
      %496 = sbr.rel (0) target = $region185
    $region184: #{transformer_seq2seq_forward.1} parent=1 // pred_region
      %497 = dma.done [#allocation9], 16
    $region185: #{transformer_seq2seq_forward.1} parent=1 // pred_fallthru
      _
    // Predicated region
    $region186: #{transformer_seq2seq_forward.1} parent=1 // pred_check
      _
    $region187: #{transformer_seq2seq_forward.1} parent=1 // pred_check_branch
      %499 = sbr.rel (0) target = $region189
    $region188: #{transformer_seq2seq_forward.1} parent=1 // pred_region
      %500 = dma.done [#allocation9], 2048
    $region189: #{transformer_seq2seq_forward.1} parent=1 // pred_fallthru
      _
    // Predicated region
    $region190: #{transformer_seq2seq_forward.1} parent=1 // pred_check
      _
    $region191: #{transformer_seq2seq_forward.1} parent=1 // pred_check_branch
      %502 = sbr.rel (0) target = $region193
    $region192: #{transformer_seq2seq_forward.1} parent=1 // pred_region
      %503 = dma.done [#allocation12], 32
    $region193: #{transformer_seq2seq_forward.1} parent=1 // pred_fallthru
      _
    // Predicated region
    $region194: #{transformer_seq2seq_forward.1} parent=1 // pred_check
      _
    $region195: #{transformer_seq2seq_forward.1} parent=1 // pred_check_branch
      %505 = sbr.rel (0) target = $region197
    $region196: #{transformer_seq2seq_forward.1} parent=1 // pred_region
      %506 = dma.done [#allocation12], 2048
    $region197: #{transformer_seq2seq_forward.1} parent=1 // pred_fallthru
      _
    // Predicated region
    $region198: #{transformer_seq2seq_forward.1} parent=1 // pred_check
      _
    $region199: #{transformer_seq2seq_forward.1} parent=1 // pred_check_branch
      %508 = sbr.rel (0) target = $region201
    $region200: #{transformer_seq2seq_forward.1} parent=1 // pred_region
      %509 = dma.done [#allocation15], 16
    $region201: #{transformer_seq2seq_forward.1} parent=1 // pred_fallthru
      _
    // Predicated region
    $region202: #{transformer_seq2seq_forward.1} parent=1 // pred_check
      _
    $region203: #{transformer_seq2seq_forward.1} parent=1 // pred_check_branch
      %511 = sbr.rel (0) target = $region205
    $region204: #{transformer_seq2seq_forward.1} parent=1 // pred_region
      %512 = dma.done [#allocation15], 16
    $region205: #{transformer_seq2seq_forward.1} parent=1 // pred_fallthru
      _
    // Predicated region
    $region206: #{transformer_seq2seq_forward.1} parent=1 // pred_check
      _
    $region207: #{transformer_seq2seq_forward.1} parent=1 // pred_check_branch
      %514 = sbr.rel (0) target = $region209
    $region208: #{transformer_seq2seq_forward.1} parent=1 // pred_region
      %515 = dma.done [#allocation18], 16
    $region209: #{transformer_seq2seq_forward.1} parent=1 // pred_fallthru
      _
    // Predicated region
    $region210: #{transformer_seq2seq_forward.1} parent=1 // pred_check
      _
    $region211: #{transformer_seq2seq_forward.1} parent=1 // pred_check_branch
      %517 = sbr.rel (0) target = $region213
    $region212: #{transformer_seq2seq_forward.1} parent=1 // pred_region
      %518 = dma.done [#allocation18], 1024
    $region213: #{transformer_seq2seq_forward.1} parent=1 // pred_fallthru
      _
    // Predicated region
    $region214: #{transformer_seq2seq_forward.1} parent=1 // pred_check
      _
    $region215: #{transformer_seq2seq_forward.1} parent=1 // pred_check_branch
      %520 = sbr.rel (0) target = $region217
    $region216: #{transformer_seq2seq_forward.1} parent=1 // pred_region
      %521 = dma.done [#allocation21], 16
    $region217: #{transformer_seq2seq_forward.1} parent=1 // pred_fallthru
      _
    // Predicated region
    $region218: #{transformer_seq2seq_forward.1} parent=1 // pred_check
      _
    $region219: #{transformer_seq2seq_forward.1} parent=1 // pred_check_branch
      %523 = sbr.rel (0) target = $region221
    $region220: #{transformer_seq2seq_forward.1} parent=1 // pred_region
      %524 = dma.done [#allocation21], 1024
    $region221: #{transformer_seq2seq_forward.1} parent=1 // pred_fallthru
      _
    // Predicated region
    $region222: #{transformer_seq2seq_forward.1} parent=1 // pred_check
      _
    $region223: #{transformer_seq2seq_forward.1} parent=1 // pred_check_branch
      %526 = sbr.rel (0) target = $region225
    $region224: #{transformer_seq2seq_forward.1} parent=1 // pred_region
      %527 = dma.done [#allocation24], 3072
    $region225: #{transformer_seq2seq_forward.1} parent=1 // pred_fallthru
      _
    // Predicated region
    $region226: #{transformer_seq2seq_forward.1} parent=1 // pred_check
      _
    $region227: #{transformer_seq2seq_forward.1} parent=1 // pred_check_branch
      %529 = sbr.rel (0) target = $region229
    $region228: #{transformer_seq2seq_forward.1} parent=1 // pred_region
      %530 = dma.done [#allocation24], 1024
    $region229: #{transformer_seq2seq_forward.1} parent=1 // pred_fallthru
      _
    // Predicated region
    $region230: #{transformer_seq2seq_forward.1} parent=1 // pred_check
      _
    $region231: #{transformer_seq2seq_forward.1} parent=1 // pred_check_branch
      %532 = sbr.rel (0) target = $region233
    $region232: #{transformer_seq2seq_forward.1} parent=1 // pred_region
      %533 = dma.done [#allocation27], 16
    $region233: #{transformer_seq2seq_forward.1} parent=1 // pred_fallthru
      _
    // Predicated region
    $region234: #{transformer_seq2seq_forward.1} parent=1 // pred_check
      _
    $region235: #{transformer_seq2seq_forward.1} parent=1 // pred_check_branch
      %535 = sbr.rel (0) target = $region237
    $region236: #{transformer_seq2seq_forward.1} parent=1 // pred_region
      %536 = dma.done [#allocation27], 16
    $region237: #{transformer_seq2seq_forward.1} parent=1 // pred_fallthru
      _
    // Predicated region
    $region238: #{transformer_seq2seq_forward.1} parent=1 // pred_check
      _
    $region239: #{transformer_seq2seq_forward.1} parent=1 // pred_check_branch
      %538 = sbr.rel (0) target = $region241
    $region240: #{transformer_seq2seq_forward.1} parent=1 // pred_region
      %539 = dma.done [#allocation30], 16
    $region241: #{transformer_seq2seq_forward.1} parent=1 // pred_fallthru
      _
    // Predicated region
    $region242: #{transformer_seq2seq_forward.1} parent=1 // pred_check
      _
    $region243: #{transformer_seq2seq_forward.1} parent=1 // pred_check_branch
      %541 = sbr.rel (0) target = $region245
    $region244: #{transformer_seq2seq_forward.1} parent=1 // pred_region
      %542 = dma.done [#allocation30], 1024
    $region245: #{transformer_seq2seq_forward.1} parent=1 // pred_fallthru
      _
    // Predicated region
    $region246: #{transformer_seq2seq_forward.1} parent=1 // pred_check
      _
    $region247: #{transformer_seq2seq_forward.1} parent=1 // pred_check_branch
      %544 = sbr.rel (0) target = $region249
    $region248: #{transformer_seq2seq_forward.1} parent=1 // pred_region
      %545 = dma.done [#allocation33], 16
    $region249: #{transformer_seq2seq_forward.1} parent=1 // pred_fallthru
      _
    // Predicated region
    $region250: #{transformer_seq2seq_forward.1} parent=1 // pred_check
      _
    $region251: #{transformer_seq2seq_forward.1} parent=1 // pred_check_branch
      %547 = sbr.rel (0) target = $region253
    $region252: #{transformer_seq2seq_forward.1} parent=1 // pred_region
      %548 = dma.done [#allocation33], 2048
    $region253: #{transformer_seq2seq_forward.1} parent=1 // pred_fallthru
      _
    // Predicated region
    $region254: #{transformer_seq2seq_forward.1} parent=1 // pred_check
      _
    $region255: #{transformer_seq2seq_forward.1} parent=1 // pred_check_branch
      %550 = sbr.rel (0) target = $region257
    $region256: #{transformer_seq2seq_forward.1} parent=1 // pred_region
      %551 = dma.done [#allocation36], 32
    $region257: #{transformer_seq2seq_forward.1} parent=1 // pred_fallthru
      _
    // Predicated region
    $region258: #{transformer_seq2seq_forward.1} parent=1 // pred_check
      _
    $region259: #{transformer_seq2seq_forward.1} parent=1 // pred_check_branch
      %553 = sbr.rel (0) target = $region261
    $region260: #{transformer_seq2seq_forward.1} parent=1 // pred_region
      %554 = dma.done [#allocation36], 1024
    $region261: #{transformer_seq2seq_forward.1} parent=1 // pred_fallthru
      _
    // Predicated region
    $region262: #{transformer_seq2seq_forward.1} parent=1 // pred_check
      _
    $region263: #{transformer_seq2seq_forward.1} parent=1 // pred_check_branch
      %556 = sbr.rel (0) target = $region265
    $region264: #{transformer_seq2seq_forward.1} parent=1 // pred_region
      %557 = dma.done [#allocation39], 16
    $region265: #{transformer_seq2seq_forward.1} parent=1 // pred_fallthru
      _
    // Predicated region
    $region266: #{transformer_seq2seq_forward.1} parent=1 // pred_check
      _
    $region267: #{transformer_seq2seq_forward.1} parent=1 // pred_check_branch
      %559 = sbr.rel (0) target = $region269
    $region268: #{transformer_seq2seq_forward.1} parent=1 // pred_region
      %560 = dma.done [#allocation39], 16
    $region269: #{transformer_seq2seq_forward.1} parent=1 // pred_fallthru
      _
    // Predicated region
    $region270: #{transformer_seq2seq_forward.1} parent=1 // pred_check
      _
    $region271: #{transformer_seq2seq_forward.1} parent=1 // pred_check_branch
      %562 = sbr.rel (0) target = $region273
    $region272: #{transformer_seq2seq_forward.1} parent=1 // pred_region
      %563 = dma.done [#allocation42], 16
    $region273: #{transformer_seq2seq_forward.1} parent=1 // pred_fallthru
      _
    // Predicated region
    $region274: #{transformer_seq2seq_forward.1} parent=1 // pred_check
      _
    $region275: #{transformer_seq2seq_forward.1} parent=1 // pred_check_branch
      %565 = sbr.rel (0) target = $region277
    $region276: #{transformer_seq2seq_forward.1} parent=1 // pred_region
      %566 = dma.done [#allocation42], 2048
    $region277: #{transformer_seq2seq_forward.1} parent=1 // pred_fallthru
      _
    // Predicated region
    $region278: #{transformer_seq2seq_forward.1} parent=1 // pred_check
      _
    $region279: #{transformer_seq2seq_forward.1} parent=1 // pred_check_branch
      %568 = sbr.rel (0) target = $region281
    $region280: #{transformer_seq2seq_forward.1} parent=1 // pred_region
      %569 = dma.done [#allocation45], 32
    $region281: #{transformer_seq2seq_forward.1} parent=1 // pred_fallthru
      _
    // Predicated region
    $region282: #{transformer_seq2seq_forward.1} parent=1 // pred_check
      _
    $region283: #{transformer_seq2seq_forward.1} parent=1 // pred_check_branch
      %571 = sbr.rel (0) target = $region285
    $region284: #{transformer_seq2seq_forward.1} parent=1 // pred_region
      %572 = dma.done [#allocation45], 2048
    $region285: #{transformer_seq2seq_forward.1} parent=1 // pred_fallthru
      _
    // Predicated region
    $region286: #{transformer_seq2seq_forward.1} parent=1 // pred_check
      _
    $region287: #{transformer_seq2seq_forward.1} parent=1 // pred_check_branch
      %574 = sbr.rel (0) target = $region289
    $region288: #{transformer_seq2seq_forward.1} parent=1 // pred_region
      %575 = dma.done [#allocation48], 16
    $region289: #{transformer_seq2seq_forward.1} parent=1 // pred_fallthru
      _
    // Predicated region
    $region290: #{transformer_seq2seq_forward.1} parent=1 // pred_check
      _
    $region291: #{transformer_seq2seq_forward.1} parent=1 // pred_check_branch
      %577 = sbr.rel (0) target = $region293
    $region292: #{transformer_seq2seq_forward.1} parent=1 // pred_region
      %578 = dma.done [#allocation48], 16
    $region293: #{transformer_seq2seq_forward.1} parent=1 // pred_fallthru
      _
    // Predicated region
    $region294: #{transformer_seq2seq_forward.1} parent=1 // pred_check
      _
    $region295: #{transformer_seq2seq_forward.1} parent=1 // pred_check_branch
      %580 = sbr.rel (0) target = $region297
    $region296: #{transformer_seq2seq_forward.1} parent=1 // pred_region
      %581 = dma.done [#allocation51], 16
    $region297: #{transformer_seq2seq_forward.1} parent=1 // pred_fallthru
      _
    // Predicated region
    $region298: #{transformer_seq2seq_forward.1} parent=1 // pred_check
      _
    $region299: #{transformer_seq2seq_forward.1} parent=1 // pred_check_branch
      %583 = sbr.rel (0) target = $region301
    $region300: #{transformer_seq2seq_forward.1} parent=1 // pred_region
      %584 = dma.done [#allocation51], 1024
    $region301: #{transformer_seq2seq_forward.1} parent=1 // pred_fallthru
      _
    %v586 = vld [vmem:[%s1] sm:$0xff]
    %v587 = vld [vmem:[%s1 + $0x8] sm:$0xff]
    %v588 = vld [vmem:[%s5] sm:$0xff]
    %v589 = vld [vmem:[%s5 + $0x8] sm:$0xff]
    %v590 = vld [vmem:[%s11] sm:$0xff]
    %v591 = vld [vmem:[%s11 + $0x8] sm:$0xf]
    %v592 = vld [vmem:[%s11 + $0xc] sm:$0xff]
    %v593 = vld [vmem:[%s11 + $0x14] sm:$0xf]
    %v594 = vld [vmem:[%s11 + $0x18] sm:$0xff]
    %v595 = vld [vmem:[%s11 + $0x20] sm:$0xf]
    %v596 = vld [vmem:[%s11 + $0x24] sm:$0xff]
    %v597 = vld [vmem:[%s11 + $0x2c] sm:$0xf]
    %v598 = vld [vmem:[%s11 + $0x30] sm:$0xff]
    %v599 = vld [vmem:[%s11 + $0x38] sm:$0xf]
    %v600 = vld [vmem:[%s11 + $0x3c] sm:$0xff]
    %v601 = vld [vmem:[%s11 + $0x44] sm:$0xf]
    %v602 = vld [vmem:[%s11 + $0x48] sm:$0xff]
    %v603 = vld [vmem:[%s11 + $0x50] sm:$0xf]
    %v604 = vld [vmem:[%s11 + $0x54] sm:$0xff]
    %v605 = vld [vmem:[%s11 + $0x5c] sm:$0xf]
    %v606 = vld [vmem:[%s11 + $0x60] sm:$0xff]
    %v607 = vld [vmem:[%s11 + $0x68] sm:$0xf]
    %v608 = vld [vmem:[%s11 + $0x6c] sm:$0xff]
    %v609 = vld [vmem:[%s11 + $0x74] sm:$0xf]
    %v610 = vld [vmem:[%s11 + $0x78] sm:$0xff]
    %v611 = vld [vmem:[%s11 + $0x80] sm:$0xf]
    %v612 = vld [vmem:[%s11 + $0x84] sm:$0xff]
    %v613 = vld [vmem:[%s11 + $0x8c] sm:$0xf]
    %v614 = vld [vmem:[%s11 + $0x90] sm:$0xff]
    %v615 = vld [vmem:[%s11 + $0x98] sm:$0xf]
    %v616 = vld [vmem:[%s11 + $0x9c] sm:$0xff]
    %v617 = vld [vmem:[%s11 + $0xa4] sm:$0xf]
    %v618 = vld [vmem:[%s11 + $0xa8] sm:$0xff]
    %v619 = vld [vmem:[%s11 + $0xb0] sm:$0xf]
    %v620 = vld [vmem:[%s11 + $0xb4] sm:$0xff]
    %v621 = vld [vmem:[%s11 + $0xbc] sm:$0xf]
    %v622 = vpack.c.bf16 %v587, %v586
    %v623 = vld [vmem:[%s13] sm:$0x7]
    %v625 = vlaneseq
    %v626 = vshrl.u32 %v625, 7
    %v627 = vsub.s32 0, %v626
    %v628 = vrot.slane %v623, %v627
    %v629 = vlaneseq
    %v630 = vshrl.u32 %v629, 7
    %v631 = vsub.s32 1, %v630
    %v632 = vrot.slane %v623, %v631
    %v633 = vlaneseq
    %v634 = vshrl.u32 %v633, 7
    %v635 = vsub.s32 2, %v634
    %v636 = vrot.slane %v623, %v635
    %v672 = vunpack.c.l.b16 %v590
    %v673 = vunpack.c.h.b16 %v590
    %v674 = vunpack.c.l.b16 %v591
    %v675 = vunpack.c.l.b16 %v592
    %v676 = vunpack.c.h.b16 %v592
    %v677 = vunpack.c.l.b16 %v593
    %v678 = vunpack.c.l.b16 %v594
    %v679 = vunpack.c.h.b16 %v594
    %v680 = vunpack.c.l.b16 %v595
    %v681 = vunpack.c.l.b16 %v596
    %v682 = vunpack.c.h.b16 %v596
    %v683 = vunpack.c.l.b16 %v597
    %v684 = vunpack.c.l.b16 %v598
    %v685 = vunpack.c.h.b16 %v598
    %v686 = vunpack.c.l.b16 %v599
    %v687 = vunpack.c.l.b16 %v600
    %v688 = vunpack.c.h.b16 %v600
    %v689 = vunpack.c.l.b16 %v601
    %v690 = vunpack.c.l.b16 %v602
    %v691 = vunpack.c.h.b16 %v602
    %v692 = vunpack.c.l.b16 %v603
    %v693 = vunpack.c.l.b16 %v604
    %v694 = vunpack.c.h.b16 %v604
    %v695 = vunpack.c.l.b16 %v605
    %v696 = vunpack.c.l.b16 %v606
    %v697 = vunpack.c.h.b16 %v606
    %v698 = vunpack.c.l.b16 %v607
    %v699 = vunpack.c.l.b16 %v608
    %v700 = vunpack.c.h.b16 %v608
    %v701 = vunpack.c.l.b16 %v609
    %v702 = vunpack.c.l.b16 %v610
    %v703 = vunpack.c.h.b16 %v610
    %v704 = vunpack.c.l.b16 %v611
    %v705 = vunpack.c.l.b16 %v612
    %v706 = vunpack.c.h.b16 %v612
    %v707 = vunpack.c.l.b16 %v613
    %v708 = vunpack.c.l.b16 %v614
    %v709 = vunpack.c.h.b16 %v614
    %v710 = vunpack.c.l.b16 %v615
    %v711 = vunpack.c.l.b16 %v616
    %v712 = vunpack.c.h.b16 %v616
    %v713 = vunpack.c.l.b16 %v617
    %v714 = vunpack.c.l.b16 %v618
    %v715 = vunpack.c.h.b16 %v618
    %v716 = vunpack.c.l.b16 %v619
    %v717 = vunpack.c.l.b16 %v620
    %v718 = vunpack.c.h.b16 %v620
    %v719 = vunpack.c.l.b16 %v621
    %v720 = vpack.c.b16 %v675, %v672
    %v721 = vpack.c.b16 %v676, %v673
    %v722 = vpack.c.b16 %v677, %v674
    %v723 = vpack.c.b16 %v681, %v678
    %v724 = vpack.c.b16 %v682, %v679
    %v725 = vpack.c.b16 %v683, %v680
    %v726 = vpack.c.b16 %v687, %v684
    %v727 = vpack.c.b16 %v688, %v685
    %v728 = vpack.c.b16 %v689, %v686
    %v729 = vpack.c.b16 %v693, %v690
    %v730 = vpack.c.b16 %v694, %v691
    %v731 = vpack.c.b16 %v695, %v692
    %v732 = vpack.c.b16 %v699, %v696
    %v733 = vpack.c.b16 %v700, %v697
    %v734 = vpack.c.b16 %v701, %v698
    %v735 = vpack.c.b16 %v705, %v702
    %v736 = vpack.c.b16 %v706, %v703
    %v737 = vpack.c.b16 %v707, %v704
    %v738 = vpack.c.b16 %v711, %v708
    %v739 = vpack.c.b16 %v712, %v709
    %v740 = vpack.c.b16 %v713, %v710
    %v741 = vpack.c.b16 %v717, %v714
    %v742 = vpack.c.b16 %v718, %v715
    %v743 = vpack.c.b16 %v719, %v716
    %768 = vmatprep.subr.bf16.mxu0 %v742
    %769 = vmatpush1.bf16.msra.mxu0 %v741
    %770 = vmatprep.subr.bf16.mxu0 %v739
    %771 = vmatpush1.bf16.msra.mxu0 %v738
    %772 = vmatprep.subr.bf16.mxu0 %v736
    %773 = vmatpush1.bf16.msra.mxu0 %v735
    %774 = vmatprep.subr.bf16.mxu0 %v733
    %775 = vmatpush1.bf16.msra.mxu0 %v732
    %776 = vmatprep.subr.bf16.mxu0 %v730
    %777 = vmatpush1.bf16.msra.mxu0 %v729
    %778 = vmatprep.subr.bf16.mxu0 %v727
    %779 = vmatpush1.bf16.msra.mxu0 %v726
    %780 = vmatprep.subr.bf16.mxu0 %v724
    %781 = vmatpush1.bf16.msra.mxu0 %v723
    %782 = vmatprep.subr.bf16.mxu0 %v721
    %783 = vmatpush1.bf16.msra.mxu0 %v720
    %784 = vmatprep.subr.bf16.mxu0 0
    %785 = vmatpush2.bf16.msra.mxu0 0
    %786 = vmatprep.subr.bf16.mxu0 0
    %787 = vmatpush2.bf16.msra.mxu0 0
    %788 = vmatprep.subr.bf16.mxu0 0
    %789 = vmatpush2.bf16.msra.mxu0 0
    %790 = vmatprep.subr.bf16.mxu0 0
    %791 = vmatpush2.bf16.msra.mxu0 0
    %792 = vmatprep.subr.bf16.mxu0 0
    %793 = vmatpush2.bf16.msra.mxu0 0
    %794 = vmatprep.subr.bf16.mxu0 0
    %795 = vmatpush2.bf16.msra.mxu0 0
    %796 = vmatprep.subr.bf16.mxu0 0
    %797 = vmatpush2.bf16.msra.mxu0 0
    %798 = vmatprep.subr.bf16.mxu0 0
    %799 = vmatpush2.bf16.msra.mxu0 0
    %800 = vmatprep.mubr.bf16.mxu0 0
    %801 = vmatmul.mubr.bf16.gmra.mxu0 %v622
    %v802 = vpop.f32.mrf.mxu0
    %v803 = vadd.f32 %v628, %v802
    %v804 = vpop.f32.mrf.mxu0
    %v805 = vadd.f32 %v632, %v804
    %v806 = vpop.f32.mrf.mxu0
    %v807 = vadd.f32 %v628, %v806
    %v808 = vpop.f32.mrf.mxu0
    %v809 = vadd.f32 %v632, %v808
    %810 = vdwg.mxu0
    %811 = vmatprep.subr.bf16.mxu0 0
    %812 = vmatpush1.bf16.msra.mxu0 %v743
    %813 = vmatprep.subr.bf16.mxu0 0
    %814 = vmatpush1.bf16.msra.mxu0 %v740
    %815 = vmatprep.subr.bf16.mxu0 0
    %816 = vmatpush1.bf16.msra.mxu0 %v737
    %817 = vmatprep.subr.bf16.mxu0 0
    %818 = vmatpush1.bf16.msra.mxu0 %v734
    %819 = vmatprep.subr.bf16.mxu0 0
    %820 = vmatpush1.bf16.msra.mxu0 %v731
    %821 = vmatprep.subr.bf16.mxu0 0
    %822 = vmatpush1.bf16.msra.mxu0 %v728
    %823 = vmatprep.subr.bf16.mxu0 0
    %824 = vmatpush1.bf16.msra.mxu0 %v725
    %825 = vmatprep.subr.bf16.mxu0 0
    %826 = vmatpush1.bf16.msra.mxu0 %v722
    %827 = vmatprep.subr.bf16.mxu0 0
    %828 = vmatpush2.bf16.msra.mxu0 0
    %829 = vmatprep.subr.bf16.mxu0 0
    %830 = vmatpush2.bf16.msra.mxu0 0
    %831 = vmatprep.subr.bf16.mxu0 0
    %832 = vmatpush2.bf16.msra.mxu0 0
    %833 = vmatprep.subr.bf16.mxu0 0
    %834 = vmatpush2.bf16.msra.mxu0 0
    %835 = vmatprep.subr.bf16.mxu0 0
    %836 = vmatpush2.bf16.msra.mxu0 0
    %837 = vmatprep.subr.bf16.mxu0 0
    %838 = vmatpush2.bf16.msra.mxu0 0
    %839 = vmatprep.subr.bf16.mxu0 0
    %840 = vmatpush2.bf16.msra.mxu0 0
    %841 = vmatprep.subr.bf16.mxu0 0
    %842 = vmatpush2.bf16.msra.mxu0 0
    %843 = vmatprep.mubr.bf16.mxu0 0
    %844 = vmatmul.mubr.bf16.gmra.mxu0 %v622
    %v845 = vpop.f32.mrf.mxu0
    %v846 = vadd.f32 %v636, %v845
    %v847 = vpop.f32.mrf.mxu0
    %v848 = vpop.f32.mrf.mxu0
    %v849 = vadd.f32 %v636, %v848
    %v850 = vpop.f32.mrf.mxu0
    %851 = vdwg.mxu0
    %v852 = vld [vmem:[#allocation2] sm:$0xf]
    %v853 = vld [vmem:[#allocation2 + $0x4] sm:$0xf]
    %v854 = vld [vmem:[#allocation2 + $0x8] sm:$0xf]
    %v855 = vld [vmem:[#allocation2 + $0xc] sm:$0xf]
    %v856 = vld [vmem:[#allocation2 + $0x10] sm:$0xf]
    %v857 = vld [vmem:[#allocation2 + $0x14] sm:$0xf]
    %v858 = vld [vmem:[#allocation2 + $0x18] sm:$0xf]
    %v859 = vld [vmem:[#allocation2 + $0x1c] sm:$0xf]
    %v860 = vld [vmem:[#allocation2 + $0x20] sm:$0xf]
    %v861 = vld [vmem:[#allocation2 + $0x24] sm:$0xf]
    %v862 = vld [vmem:[#allocation2 + $0x28] sm:$0xf]
    %v863 = vld [vmem:[#allocation2 + $0x2c] sm:$0xf]
    %v864 = vld [vmem:[#allocation2 + $0x30] sm:$0xf]
    %v865 = vld [vmem:[#allocation2 + $0x34] sm:$0xf]
    %v866 = vld [vmem:[#allocation2 + $0x38] sm:$0xf]
    %v867 = vld [vmem:[#allocation2 + $0x3c] sm:$0xf]
    %v868 = vld [vmem:[#allocation5] sm:$0x1]
    %v869 = vmul.f32 %v803, 0.17677669
    %v870 = vmul.f32 %v807, 0.17677669
    %v871 = vpack.c.bf16 %v870, %v869
    %v872 = vpack.c.bf16 %v809, %v805
    %v873 = vpack.c.bf16 %v849, %v846
    %vm874 = vcmask 261120
    %v876 = vsel %vm874, %v871, 0
    %v879 = vsel %vm874, %v872, 0
    %881 = vmatprep.subr.bf16.mxu0 0
    %882 = vmatpush1.bf16.xpose.msra.mxu0 0
    %883 = vmatprep.subr.bf16.mxu0 0
    %884 = vmatpush1.bf16.xpose.msra.mxu0 0
    %885 = vmatprep.subr.bf16.mxu0 0
    %886 = vmatpush1.bf16.xpose.msra.mxu0 0
    %887 = vmatprep.subr.bf16.mxu0 0
    %888 = vmatpush1.bf16.xpose.msra.mxu0 0
    %889 = vmatprep.subr.bf16.mxu0 0
    %890 = vmatpush1.bf16.xpose.msra.mxu0 0
    %891 = vmatprep.subr.bf16.mxu0 0
    %892 = vmatpush1.bf16.xpose.msra.mxu0 0
    %893 = vmatprep.subr.bf16.mxu0 0
    %894 = vmatpush1.bf16.xpose.msra.mxu0 0
    %895 = vmatprep.subr.bf16.mxu0 0
    %896 = vmatpush1.bf16.xpose.msra.mxu0 %v879
    %897 = vmatprep.subr.bf16.mxu0 0
    %898 = vmatpush2.bf16.xpose.msra.mxu0 0
    %899 = vmatprep.subr.bf16.mxu0 0
    %900 = vmatpush2.bf16.xpose.msra.mxu0 0
    %901 = vmatprep.subr.bf16.mxu0 0
    %902 = vmatpush2.bf16.xpose.msra.mxu0 0
    %903 = vmatprep.subr.bf16.mxu0 0
    %904 = vmatpush2.bf16.xpose.msra.mxu0 0
    %905 = vmatprep.subr.bf16.mxu0 0
    %906 = vmatpush2.bf16.xpose.msra.mxu0 0
    %907 = vmatprep.subr.bf16.mxu0 0
    %908 = vmatpush2.bf16.xpose.msra.mxu0 0
    %909 = vmatprep.subr.bf16.mxu0 0
    %910 = vmatpush2.bf16.xpose.msra.mxu0 0
    %911 = vmatprep.subr.bf16.mxu0 0
    %912 = vmatpush2.bf16.xpose.msra.mxu0 0
    %913 = vmatprep.mubr.bf16.mxu0 0
    %914 = vmatmul.mubr.bf16.gmra.mxu0 %v876
    %v915 = vpop.f32.mrf.mxu0
    %v916 = vadd.f32 %v588, %v915
    %v917 = vpop.f32.mrf.mxu0
    %v918 = vpop.f32.mrf.mxu0
    %v919 = vadd.f32 %v589, %v918
    %v920 = vpop.f32.mrf.mxu0
    %921 = vdwg.mxu0
    %vm922 = vcmask 130048
    %v923 = vsel %vm922, %v916, -inf
    %924 = vmax.xlane.f32.xlu0 %v923
    %v925 = vpop.xlane.xlu0 %924
    %v926 = vsel %vm922, %v919, -inf
    %927 = vmax.xlane.f32.xlu0 %v926
    %v928 = vpop.xlane.xlu0 %927
    %v929 = vsub.f32 %v916, %v925
    %v930 = vsub.f32 %v919, %v928
    %v931 = vmul.f32 %v929, 1.442695
    %v932 = vpow.pop %v931
    %v933 = vmul.f32 %v930, 1.442695
    %v934 = vpow.pop %v933
    %v935 = vsel %vm922, %v932, 0.0
    %936 = vadd.xlane.f32.xlu0 %v935
    %v937 = vpop.xlane.xlu0 %936
    %v938 = vsel %vm922, %v934, 0.0
    %939 = vadd.xlane.f32.xlu0 %v938
    %v940 = vpop.xlane.xlu0 %939
    %v941 = vrcp.pop %v937
    %v942 = vrcp.pop %v940
    %v943 = vmul.f32 %v932, %v941
    %v944 = vmul.f32 %v934, %v942
    %v945 = vpack.c.bf16 %v944, %v943
    %v947 = vsel %vm922, %v945, 0
    %949 = vmatprep.subr.bf16.mxu0 0
    %950 = vmatpush1.bf16.msra.mxu0 0
    %951 = vmatprep.subr.bf16.mxu0 0
    %952 = vmatpush1.bf16.msra.mxu0 0
    %953 = vmatprep.subr.bf16.mxu0 0
    %954 = vmatpush1.bf16.msra.mxu0 0
    %955 = vmatprep.subr.bf16.mxu0 0
    %956 = vmatpush1.bf16.msra.mxu0 0
    %957 = vmatprep.subr.bf16.mxu0 0
    %958 = vmatpush1.bf16.msra.mxu0 0
    %959 = vmatprep.subr.bf16.mxu0 0
    %960 = vmatpush1.bf16.msra.mxu0 0
    %961 = vmatprep.subr.bf16.mxu0 0
    %962 = vmatpush1.bf16.msra.mxu0 0
    %963 = vmatprep.subr.bf16.mxu0 0
    %964 = vmatpush1.bf16.msra.mxu0 %v873
    %965 = vmatprep.subr.bf16.mxu0 0
    %966 = vmatpush2.bf16.msra.mxu0 0
    %967 = vmatprep.subr.bf16.mxu0 0
    %968 = vmatpush2.bf16.msra.mxu0 0
    %969 = vmatprep.subr.bf16.mxu0 0
    %970 = vmatpush2.bf16.msra.mxu0 0
    %971 = vmatprep.subr.bf16.mxu0 0
    %972 = vmatpush2.bf16.msra.mxu0 0
    %973 = vmatprep.subr.bf16.mxu0 0
    %974 = vmatpush2.bf16.msra.mxu0 0
    %975 = vmatprep.subr.bf16.mxu0 0
    %976 = vmatpush2.bf16.msra.mxu0 0
    %977 = vmatprep.subr.bf16.mxu0 0
    %978 = vmatpush2.bf16.msra.mxu0 0
    %979 = vmatprep.subr.bf16.mxu0 0
    %980 = vmatpush2.bf16.msra.mxu0 0
    %981 = vmatprep.mubr.bf16.mxu0 0
    %982 = vmatmul.mubr.bf16.gmra.mxu0 %v947
    %v983 = vpop.f32.mrf.mxu0
    %v984 = vadd.f32 0.0, %v983
    %v985 = vpop.f32.mrf.mxu0
    %v986 = vpop.f32.mrf.mxu0
    %v987 = vadd.f32 0.0, %v986
    %v988 = vpop.f32.mrf.mxu0
    %989 = vdwg.mxu0
    %v990 = vpack.c.bf16 %v987, %v984
    %992 = vrot.lane.b32.xlu0 %v871, 96
    %v993 = vpop.permute.xlu0 %992
    %995 = vrot.lane.b32.xlu0 %v872, 96
    %v996 = vpop.permute.xlu0 %995
    %v998 = vsel %vm874, %v993, 0
    %v1001 = vsel %vm874, %v996, 0
    %1003 = vmatprep.subr.bf16.mxu0 0
    %1004 = vmatpush1.bf16.xpose.msra.mxu0 0
    %1005 = vmatprep.subr.bf16.mxu0 0
    %1006 = vmatpush1.bf16.xpose.msra.mxu0 0
    %1007 = vmatprep.subr.bf16.mxu0 0
    %1008 = vmatpush1.bf16.xpose.msra.mxu0 0
    %1009 = vmatprep.subr.bf16.mxu0 0
    %1010 = vmatpush1.bf16.xpose.msra.mxu0 0
    %1011 = vmatprep.subr.bf16.mxu0 0
    %1012 = vmatpush1.bf16.xpose.msra.mxu0 0
    %1013 = vmatprep.subr.bf16.mxu0 0
    %1014 = vmatpush1.bf16.xpose.msra.mxu0 0
    %1015 = vmatprep.subr.bf16.mxu0 0
    %1016 = vmatpush1.bf16.xpose.msra.mxu0 0
    %1017 = vmatprep.subr.bf16.mxu0 0
    %1018 = vmatpush1.bf16.xpose.msra.mxu0 %v1001
    %1019 = vmatprep.subr.bf16.mxu0 0
    %1020 = vmatpush2.bf16.xpose.msra.mxu0 0
    %1021 = vmatprep.subr.bf16.mxu0 0
    %1022 = vmatpush2.bf16.xpose.msra.mxu0 0
    %1023 = vmatprep.subr.bf16.mxu0 0
    %1024 = vmatpush2.bf16.xpose.msra.mxu0 0
    %1025 = vmatprep.subr.bf16.mxu0 0
    %1026 = vmatpush2.bf16.xpose.msra.mxu0 0
    %1027 = vmatprep.subr.bf16.mxu0 0
    %1028 = vmatpush2.bf16.xpose.msra.mxu0 0
    %1029 = vmatprep.subr.bf16.mxu0 0
    %1030 = vmatpush2.bf16.xpose.msra.mxu0 0
    %1031 = vmatprep.subr.bf16.mxu0 0
    %1032 = vmatpush2.bf16.xpose.msra.mxu0 0
    %1033 = vmatprep.subr.bf16.mxu0 0
    %1034 = vmatpush2.bf16.xpose.msra.mxu0 0
    %1035 = vmatprep.mubr.bf16.mxu0 0
    %1036 = vmatmul.mubr.bf16.gmra.mxu0 %v998
    %v1037 = vpop.f32.mrf.mxu0
    %v1038 = vadd.f32 %v588, %v1037
    %v1039 = vpop.f32.mrf.mxu0
    %v1040 = vpop.f32.mrf.mxu0
    %v1041 = vadd.f32 %v589, %v1040
    %v1042 = vpop.f32.mrf.mxu0
    %1043 = vdwg.mxu0
    %v1044 = vsel %vm922, %v1038, -inf
    %1045 = vmax.xlane.f32.xlu0 %v1044
    %v1046 = vpop.xlane.xlu0 %1045
    %v1047 = vsel %vm922, %v1041, -inf
    %1048 = vmax.xlane.f32.xlu0 %v1047
    %v1049 = vpop.xlane.xlu0 %1048
    %v1050 = vsub.f32 %v1038, %v1046
    %v1051 = vsub.f32 %v1041, %v1049
    %v1052 = vmul.f32 %v1050, 1.442695
    %v1053 = vpow.pop %v1052
    %v1054 = vmul.f32 %v1051, 1.442695
    %v1055 = vpow.pop %v1054
    %v1056 = vsel %vm922, %v1053, 0.0
    %1057 = vadd.xlane.f32.xlu0 %v1056
    %v1058 = vpop.xlane.xlu0 %1057
    %v1059 = vsel %vm922, %v1055, 0.0
    %1060 = vadd.xlane.f32.xlu0 %v1059
    %v1061 = vpop.xlane.xlu0 %1060
    %v1062 = vrcp.pop %v1058
    %v1063 = vrcp.pop %v1061
    %v1064 = vmul.f32 %v1053, %v1062
    %v1065 = vmul.f32 %v1055, %v1063
    %v1066 = vpack.c.bf16 %v1065, %v1064
    %1068 = vrot.lane.b32.xlu0 %v873, 96
    %v1069 = vpop.permute.xlu0 %1068
    %v1072 = vsel %vm922, %v1066, 0
    %1074 = vmatprep.subr.bf16.mxu0 0
    %1075 = vmatpush1.bf16.msra.mxu0 0
    %1076 = vmatprep.subr.bf16.mxu0 0
    %1077 = vmatpush1.bf16.msra.mxu0 0
    %1078 = vmatprep.subr.bf16.mxu0 0
    %1079 = vmatpush1.bf16.msra.mxu0 0
    %1080 = vmatprep.subr.bf16.mxu0 0
    %1081 = vmatpush1.bf16.msra.mxu0 0
    %1082 = vmatprep.subr.bf16.mxu0 0
    %1083 = vmatpush1.bf16.msra.mxu0 0
    %1084 = vmatprep.subr.bf16.mxu0 0
    %1085 = vmatpush1.bf16.msra.mxu0 0
    %1086 = vmatprep.subr.bf16.mxu0 0
    %1087 = vmatpush1.bf16.msra.mxu0 0
    %1088 = vmatprep.subr.bf16.mxu0 0
    %1089 = vmatpush1.bf16.msra.mxu0 %v1069
    %1090 = vmatprep.subr.bf16.mxu0 0
    %1091 = vmatpush2.bf16.msra.mxu0 0
    %1092 = vmatprep.subr.bf16.mxu0 0
    %1093 = vmatpush2.bf16.msra.mxu0 0
    %1094 = vmatprep.subr.bf16.mxu0 0
    %1095 = vmatpush2.bf16.msra.mxu0 0
    %1096 = vmatprep.subr.bf16.mxu0 0
    %1097 = vmatpush2.bf16.msra.mxu0 0
    %1098 = vmatprep.subr.bf16.mxu0 0
    %1099 = vmatpush2.bf16.msra.mxu0 0
    %1100 = vmatprep.subr.bf16.mxu0 0
    %1101 = vmatpush2.bf16.msra.mxu0 0
    %1102 = vmatprep.subr.bf16.mxu0 0
    %1103 = vmatpush2.bf16.msra.mxu0 0
    %1104 = vmatprep.subr.bf16.mxu0 0
    %1105 = vmatpush2.bf16.msra.mxu0 0
    %1106 = vmatprep.mubr.bf16.mxu0 0
    %1107 = vmatmul.mubr.bf16.gmra.mxu0 %v1072
    %v1108 = vpop.f32.mrf.mxu0
    %v1109 = vadd.f32 0.0, %v1108
    %v1110 = vpop.f32.mrf.mxu0
    %v1111 = vpop.f32.mrf.mxu0
    %v1112 = vadd.f32 0.0, %v1111
    %v1113 = vpop.f32.mrf.mxu0
    %1114 = vdwg.mxu0
    %v1115 = vpack.c.bf16 %v1112, %v1109
    %v1120 = vunpack.c.l.b16 %v856
    %v1121 = vunpack.c.l.b16 %v857
    %v1122 = vunpack.c.l.b16 %v858
    %v1123 = vunpack.c.l.b16 %v859
    %v1124 = vpack.c.b16 %v1121, %v1120
    %v1125 = vpack.c.b16 %v1123, %v1122
    %v1129 = vsel %vm874, %v1115, 0
    %1131 = vmatprep.subr.bf16.mxu0 0
    %1132 = vmatpush1.bf16.msra.mxu0 0
    %1133 = vmatprep.subr.bf16.mxu0 0
    %1134 = vmatpush1.bf16.msra.mxu0 0
    %1135 = vmatprep.subr.bf16.mxu0 0
    %1136 = vmatpush1.bf16.msra.mxu0 0
    %1137 = vmatprep.subr.bf16.mxu0 0
    %1138 = vmatpush1.bf16.msra.mxu0 0
    %1139 = vmatprep.subr.bf16.mxu0 0
    %1140 = vmatpush1.bf16.msra.mxu0 0
    %1141 = vmatprep.subr.bf16.mxu0 0
    %1142 = vmatpush1.bf16.msra.mxu0 0
    %1143 = vmatprep.subr.bf16.mxu0 0
    %1144 = vmatpush1.bf16.msra.mxu0 %v1125
    %1145 = vmatprep.subr.bf16.mxu0 0
    %1146 = vmatpush1.bf16.msra.mxu0 %v1124
    %1147 = vmatprep.subr.bf16.mxu0 0
    %1148 = vmatpush2.bf16.msra.mxu0 0
    %1149 = vmatprep.subr.bf16.mxu0 0
    %1150 = vmatpush2.bf16.msra.mxu0 0
    %1151 = vmatprep.subr.bf16.mxu0 0
    %1152 = vmatpush2.bf16.msra.mxu0 0
    %1153 = vmatprep.subr.bf16.mxu0 0
    %1154 = vmatpush2.bf16.msra.mxu0 0
    %1155 = vmatprep.subr.bf16.mxu0 0
    %1156 = vmatpush2.bf16.msra.mxu0 0
    %1157 = vmatprep.subr.bf16.mxu0 0
    %1158 = vmatpush2.bf16.msra.mxu0 0
    %1159 = vmatprep.subr.bf16.mxu0 0
    %1160 = vmatpush2.bf16.msra.mxu0 0
    %1161 = vmatprep.subr.bf16.mxu0 0
    %1162 = vmatpush2.bf16.msra.mxu0 0
    %1163 = vmatprep.mubr.bf16.mxu0 0
    %1164 = vmatmul.mubr.bf16.gmra.mxu0 %v1129
    %v1165 = vpop.f32.mrf.mxu0
    %v1166 = vadd.f32 0.0, %v1165
    %v1167 = vpop.f32.mrf.mxu0
    %v1168 = vpop.f32.mrf.mxu0
    %v1169 = vadd.f32 0.0, %v1168
    %v1170 = vpop.f32.mrf.mxu0
    %1171 = vdwg.mxu0
    %v1176 = vunpack.c.l.b16 %v852
    %v1177 = vunpack.c.l.b16 %v853
    %v1178 = vunpack.c.l.b16 %v854
    %v1179 = vunpack.c.l.b16 %v855
    %v1180 = vpack.c.b16 %v1177, %v1176
    %v1181 = vpack.c.b16 %v1179, %v1178
    %v1185 = vsel %vm874, %v990, 0
    %1187 = vmatprep.subr.bf16.mxu0 0
    %1188 = vmatpush1.bf16.msra.mxu0 0
    %1189 = vmatprep.subr.bf16.mxu0 0
    %1190 = vmatpush1.bf16.msra.mxu0 0
    %1191 = vmatprep.subr.bf16.mxu0 0
    %1192 = vmatpush1.bf16.msra.mxu0 0
    %1193 = vmatprep.subr.bf16.mxu0 0
    %1194 = vmatpush1.bf16.msra.mxu0 0
    %1195 = vmatprep.subr.bf16.mxu0 0
    %1196 = vmatpush1.bf16.msra.mxu0 0
    %1197 = vmatprep.subr.bf16.mxu0 0
    %1198 = vmatpush1.bf16.msra.mxu0 0
    %1199 = vmatprep.subr.bf16.mxu0 0
    %1200 = vmatpush1.bf16.msra.mxu0 %v1181
    %1201 = vmatprep.subr.bf16.mxu0 0
    %1202 = vmatpush1.bf16.msra.mxu0 %v1180
    %1203 = vmatprep.subr.bf16.mxu0 0
    %1204 = vmatpush2.bf16.msra.mxu0 0
    %1205 = vmatprep.subr.bf16.mxu0 0
    %1206 = vmatpush2.bf16.msra.mxu0 0
    %1207 = vmatprep.subr.bf16.mxu0 0
    %1208 = vmatpush2.bf16.msra.mxu0 0
    %1209 = vmatprep.subr.bf16.mxu0 0
    %1210 = vmatpush2.bf16.msra.mxu0 0
    %1211 = vmatprep.subr.bf16.mxu0 0
    %1212 = vmatpush2.bf16.msra.mxu0 0
    %1213 = vmatprep.subr.bf16.mxu0 0
    %1214 = vmatpush2.bf16.msra.mxu0 0
    %1215 = vmatprep.subr.bf16.mxu0 0
    %1216 = vmatpush2.bf16.msra.mxu0 0
    %1217 = vmatprep.subr.bf16.mxu0 0
    %1218 = vmatpush2.bf16.msra.mxu0 0
    %1219 = vmatprep.mubr.bf16.mxu0 0
    %1220 = vmatmul.mubr.bf16.gmra.mxu0 %v1185
    %v1221 = vpop.f32.mrf.mxu0
    %v1222 = vadd.f32 %v1166, %v1221
    %v1223 = vpop.f32.mrf.mxu0
    %v1224 = vpop.f32.mrf.mxu0
    %v1225 = vadd.f32 %v1169, %v1224
    %v1226 = vpop.f32.mrf.mxu0
    %1227 = vdwg.mxu0
    %1228 = vrot.lane.b32.xlu0 %v871, 64
    %v1229 = vpop.permute.xlu0 %1228
    %1230 = vrot.lane.b32.xlu0 %v872, 64
    %v1231 = vpop.permute.xlu0 %1230
    %v1233 = vsel %vm874, %v1229, 0
    %v1236 = vsel %vm874, %v1231, 0
    %1238 = vmatprep.subr.bf16.mxu0 0
    %1239 = vmatpush1.bf16.xpose.msra.mxu0 0
    %1240 = vmatprep.subr.bf16.mxu0 0
    %1241 = vmatpush1.bf16.xpose.msra.mxu0 0
    %1242 = vmatprep.subr.bf16.mxu0 0
    %1243 = vmatpush1.bf16.xpose.msra.mxu0 0
    %1244 = vmatprep.subr.bf16.mxu0 0
    %1245 = vmatpush1.bf16.xpose.msra.mxu0 0
    %1246 = vmatprep.subr.bf16.mxu0 0
    %1247 = vmatpush1.bf16.xpose.msra.mxu0 0
    %1248 = vmatprep.subr.bf16.mxu0 0
    %1249 = vmatpush1.bf16.xpose.msra.mxu0 0
    %1250 = vmatprep.subr.bf16.mxu0 0
    %1251 = vmatpush1.bf16.xpose.msra.mxu0 0
    %1252 = vmatprep.subr.bf16.mxu0 0
    %1253 = vmatpush1.bf16.xpose.msra.mxu0 %v1236
    %1254 = vmatprep.subr.bf16.mxu0 0
    %1255 = vmatpush2.bf16.xpose.msra.mxu0 0
    %1256 = vmatprep.subr.bf16.mxu0 0
    %1257 = vmatpush2.bf16.xpose.msra.mxu0 0
    %1258 = vmatprep.subr.bf16.mxu0 0
    %1259 = vmatpush2.bf16.xpose.msra.mxu0 0
    %1260 = vmatprep.subr.bf16.mxu0 0
    %1261 = vmatpush2.bf16.xpose.msra.mxu0 0
    %1262 = vmatprep.subr.bf16.mxu0 0
    %1263 = vmatpush2.bf16.xpose.msra.mxu0 0
    %1264 = vmatprep.subr.bf16.mxu0 0
    %1265 = vmatpush2.bf16.xpose.msra.mxu0 0
    %1266 = vmatprep.subr.bf16.mxu0 0
    %1267 = vmatpush2.bf16.xpose.msra.mxu0 0
    %1268 = vmatprep.subr.bf16.mxu0 0
    %1269 = vmatpush2.bf16.xpose.msra.mxu0 0
    %1270 = vmatprep.mubr.bf16.mxu0 0
    %1271 = vmatmul.mubr.bf16.gmra.mxu0 %v1233
    %v1272 = vpop.f32.mrf.mxu0
    %v1273 = vadd.f32 %v588, %v1272
    %v1274 = vpop.f32.mrf.mxu0
    %v1275 = vpop.f32.mrf.mxu0
    %v1276 = vadd.f32 %v589, %v1275
    %v1277 = vpop.f32.mrf.mxu0
    %1278 = vdwg.mxu0
    %v1279 = vsel %vm922, %v1273, -inf
    %1280 = vmax.xlane.f32.xlu0 %v1279
    %v1281 = vpop.xlane.xlu0 %1280
    %v1282 = vsel %vm922, %v1276, -inf
    %1283 = vmax.xlane.f32.xlu0 %v1282
    %v1284 = vpop.xlane.xlu0 %1283
    %v1285 = vsub.f32 %v1273, %v1281
    %v1286 = vsub.f32 %v1276, %v1284
    %v1287 = vmul.f32 %v1285, 1.442695
    %v1288 = vpow.pop %v1287
    %v1289 = vmul.f32 %v1286, 1.442695
    %v1290 = vpow.pop %v1289
    %v1291 = vsel %vm922, %v1288, 0.0
    %1292 = vadd.xlane.f32.xlu0 %v1291
    %v1293 = vpop.xlane.xlu0 %1292
    %v1294 = vsel %vm922, %v1290, 0.0
    %1295 = vadd.xlane.f32.xlu0 %v1294
    %v1296 = vpop.xlane.xlu0 %1295
    %v1297 = vrcp.pop %v1293
    %v1298 = vrcp.pop %v1296
    %v1299 = vmul.f32 %v1288, %v1297
    %v1300 = vmul.f32 %v1290, %v1298
    %v1301 = vpack.c.bf16 %v1300, %v1299
    %1302 = vrot.lane.b32.xlu0 %v873, 64
    %v1303 = vpop.permute.xlu0 %1302
    %v1306 = vsel %vm922, %v1301, 0
    %1308 = vmatprep.subr.bf16.mxu0 0
    %1309 = vmatpush1.bf16.msra.mxu0 0
    %1310 = vmatprep.subr.bf16.mxu0 0
    %1311 = vmatpush1.bf16.msra.mxu0 0
    %1312 = vmatprep.subr.bf16.mxu0 0
    %1313 = vmatpush1.bf16.msra.mxu0 0
    %1314 = vmatprep.subr.bf16.mxu0 0
    %1315 = vmatpush1.bf16.msra.mxu0 0
    %1316 = vmatprep.subr.bf16.mxu0 0
    %1317 = vmatpush1.bf16.msra.mxu0 0
    %1318 = vmatprep.subr.bf16.mxu0 0
    %1319 = vmatpush1.bf16.msra.mxu0 0
    %1320 = vmatprep.subr.bf16.mxu0 0
    %1321 = vmatpush1.bf16.msra.mxu0 0
    %1322 = vmatprep.subr.bf16.mxu0 0
    %1323 = vmatpush1.bf16.msra.mxu0 %v1303
    %1324 = vmatprep.subr.bf16.mxu0 0
    %1325 = vmatpush2.bf16.msra.mxu0 0
    %1326 = vmatprep.subr.bf16.mxu0 0
    %1327 = vmatpush2.bf16.msra.mxu0 0
    %1328 = vmatprep.subr.bf16.mxu0 0
    %1329 = vmatpush2.bf16.msra.mxu0 0
    %1330 = vmatprep.subr.bf16.mxu0 0
    %1331 = vmatpush2.bf16.msra.mxu0 0
    %1332 = vmatprep.subr.bf16.mxu0 0
    %1333 = vmatpush2.bf16.msra.mxu0 0
    %1334 = vmatprep.subr.bf16.mxu0 0
    %1335 = vmatpush2.bf16.msra.mxu0 0
    %1336 = vmatprep.subr.bf16.mxu0 0
    %1337 = vmatpush2.bf16.msra.mxu0 0
    %1338 = vmatprep.subr.bf16.mxu0 0
    %1339 = vmatpush2.bf16.msra.mxu0 0
    %1340 = vmatprep.mubr.bf16.mxu0 0
    %1341 = vmatmul.mubr.bf16.gmra.mxu0 %v1306
    %v1342 = vpop.f32.mrf.mxu0
    %v1343 = vadd.f32 0.0, %v1342
    %v1344 = vpop.f32.mrf.mxu0
    %v1345 = vpop.f32.mrf.mxu0
    %v1346 = vadd.f32 0.0, %v1345
    %v1347 = vpop.f32.mrf.mxu0
    %1348 = vdwg.mxu0
    %v1349 = vpack.c.bf16 %v1346, %v1343
    %v1354 = vunpack.c.l.b16 %v860
    %v1355 = vunpack.c.l.b16 %v861
    %v1356 = vunpack.c.l.b16 %v862
    %v1357 = vunpack.c.l.b16 %v863
    %v1358 = vpack.c.b16 %v1355, %v1354
    %v1359 = vpack.c.b16 %v1357, %v1356
    %v1363 = vsel %vm874, %v1349, 0
    %1365 = vmatprep.subr.bf16.mxu0 0
    %1366 = vmatpush1.bf16.msra.mxu0 0
    %1367 = vmatprep.subr.bf16.mxu0 0
    %1368 = vmatpush1.bf16.msra.mxu0 0
    %1369 = vmatprep.subr.bf16.mxu0 0
    %1370 = vmatpush1.bf16.msra.mxu0 0
    %1371 = vmatprep.subr.bf16.mxu0 0
    %1372 = vmatpush1.bf16.msra.mxu0 0
    %1373 = vmatprep.subr.bf16.mxu0 0
    %1374 = vmatpush1.bf16.msra.mxu0 0
    %1375 = vmatprep.subr.bf16.mxu0 0
    %1376 = vmatpush1.bf16.msra.mxu0 0
    %1377 = vmatprep.subr.bf16.mxu0 0
    %1378 = vmatpush1.bf16.msra.mxu0 %v1359
    %1379 = vmatprep.subr.bf16.mxu0 0
    %1380 = vmatpush1.bf16.msra.mxu0 %v1358
    %1381 = vmatprep.subr.bf16.mxu0 0
    %1382 = vmatpush2.bf16.msra.mxu0 0
    %1383 = vmatprep.subr.bf16.mxu0 0
    %1384 = vmatpush2.bf16.msra.mxu0 0
    %1385 = vmatprep.subr.bf16.mxu0 0
    %1386 = vmatpush2.bf16.msra.mxu0 0
    %1387 = vmatprep.subr.bf16.mxu0 0
    %1388 = vmatpush2.bf16.msra.mxu0 0
    %1389 = vmatprep.subr.bf16.mxu0 0
    %1390 = vmatpush2.bf16.msra.mxu0 0
    %1391 = vmatprep.subr.bf16.mxu0 0
    %1392 = vmatpush2.bf16.msra.mxu0 0
    %1393 = vmatprep.subr.bf16.mxu0 0
    %1394 = vmatpush2.bf16.msra.mxu0 0
    %1395 = vmatprep.subr.bf16.mxu0 0
    %1396 = vmatpush2.bf16.msra.mxu0 0
    %1397 = vmatprep.mubr.bf16.mxu0 0
    %1398 = vmatmul.mubr.bf16.gmra.mxu0 %v1363
    %v1399 = vpop.f32.mrf.mxu0
    %v1400 = vadd.f32 0.0, %v1399
    %v1401 = vpop.f32.mrf.mxu0
    %v1402 = vpop.f32.mrf.mxu0
    %v1403 = vadd.f32 0.0, %v1402
    %v1404 = vpop.f32.mrf.mxu0
    %1405 = vdwg.mxu0
    %v1406 = vadd.f32 %v1222, %v1400
    %v1407 = vadd.f32 %v1225, %v1403
    %1408 = vrot.lane.b32.xlu0 %v871, 32
    %v1409 = vpop.permute.xlu0 %1408
    %1410 = vrot.lane.b32.xlu0 %v872, 32
    %v1411 = vpop.permute.xlu0 %1410
    %v1413 = vsel %vm874, %v1409, 0
    %v1416 = vsel %vm874, %v1411, 0
    %1418 = vmatprep.subr.bf16.mxu0 0
    %1419 = vmatpush1.bf16.xpose.msra.mxu0 0
    %1420 = vmatprep.subr.bf16.mxu0 0
    %1421 = vmatpush1.bf16.xpose.msra.mxu0 0
    %1422 = vmatprep.subr.bf16.mxu0 0
    %1423 = vmatpush1.bf16.xpose.msra.mxu0 0
    %1424 = vmatprep.subr.bf16.mxu0 0
    %1425 = vmatpush1.bf16.xpose.msra.mxu0 0
    %1426 = vmatprep.subr.bf16.mxu0 0
    %1427 = vmatpush1.bf16.xpose.msra.mxu0 0
    %1428 = vmatprep.subr.bf16.mxu0 0
    %1429 = vmatpush1.bf16.xpose.msra.mxu0 0
    %1430 = vmatprep.subr.bf16.mxu0 0
    %1431 = vmatpush1.bf16.xpose.msra.mxu0 0
    %1432 = vmatprep.subr.bf16.mxu0 0
    %1433 = vmatpush1.bf16.xpose.msra.mxu0 %v1416
    %1434 = vmatprep.subr.bf16.mxu0 0
    %1435 = vmatpush2.bf16.xpose.msra.mxu0 0
    %1436 = vmatprep.subr.bf16.mxu0 0
    %1437 = vmatpush2.bf16.xpose.msra.mxu0 0
    %1438 = vmatprep.subr.bf16.mxu0 0
    %1439 = vmatpush2.bf16.xpose.msra.mxu0 0
    %1440 = vmatprep.subr.bf16.mxu0 0
    %1441 = vmatpush2.bf16.xpose.msra.mxu0 0
    %1442 = vmatprep.subr.bf16.mxu0 0
    %1443 = vmatpush2.bf16.xpose.msra.mxu0 0
    %1444 = vmatprep.subr.bf16.mxu0 0
    %1445 = vmatpush2.bf16.xpose.msra.mxu0 0
    %1446 = vmatprep.subr.bf16.mxu0 0
    %1447 = vmatpush2.bf16.xpose.msra.mxu0 0
    %1448 = vmatprep.subr.bf16.mxu0 0
    %1449 = vmatpush2.bf16.xpose.msra.mxu0 0
    %1450 = vmatprep.mubr.bf16.mxu0 0
    %1451 = vmatmul.mubr.bf16.gmra.mxu0 %v1413
    %v1452 = vpop.f32.mrf.mxu0
    %v1453 = vadd.f32 %v588, %v1452
    %v1454 = vpop.f32.mrf.mxu0
    %v1455 = vpop.f32.mrf.mxu0
    %v1456 = vadd.f32 %v589, %v1455
    %v1457 = vpop.f32.mrf.mxu0
    %1458 = vdwg.mxu0
    %v1459 = vsel %vm922, %v1453, -inf
    %1460 = vmax.xlane.f32.xlu0 %v1459
    %v1461 = vpop.xlane.xlu0 %1460
    %v1462 = vsel %vm922, %v1456, -inf
    %1463 = vmax.xlane.f32.xlu0 %v1462
    %v1464 = vpop.xlane.xlu0 %1463
    %v1465 = vsub.f32 %v1453, %v1461
    %v1466 = vsub.f32 %v1456, %v1464
    %v1467 = vmul.f32 %v1465, 1.442695
    %v1468 = vpow.pop %v1467
    %v1469 = vmul.f32 %v1466, 1.442695
    %v1470 = vpow.pop %v1469
    %v1471 = vsel %vm922, %v1468, 0.0
    %1472 = vadd.xlane.f32.xlu0 %v1471
    %v1473 = vpop.xlane.xlu0 %1472
    %v1474 = vsel %vm922, %v1470, 0.0
    %1475 = vadd.xlane.f32.xlu0 %v1474
    %v1476 = vpop.xlane.xlu0 %1475
    %v1477 = vrcp.pop %v1473
    %v1478 = vrcp.pop %v1476
    %v1479 = vmul.f32 %v1468, %v1477
    %v1480 = vmul.f32 %v1470, %v1478
    %v1481 = vpack.c.bf16 %v1480, %v1479
    %1482 = vrot.lane.b32.xlu0 %v873, 32
    %v1483 = vpop.permute.xlu0 %1482
    %v1486 = vsel %vm922, %v1481, 0
    %1488 = vmatprep.subr.bf16.mxu0 0
    %1489 = vmatpush1.bf16.msra.mxu0 0
    %1490 = vmatprep.subr.bf16.mxu0 0
    %1491 = vmatpush1.bf16.msra.mxu0 0
    %1492 = vmatprep.subr.bf16.mxu0 0
    %1493 = vmatpush1.bf16.msra.mxu0 0
    %1494 = vmatprep.subr.bf16.mxu0 0
    %1495 = vmatpush1.bf16.msra.mxu0 0
    %1496 = vmatprep.subr.bf16.mxu0 0
    %1497 = vmatpush1.bf16.msra.mxu0 0
    %1498 = vmatprep.subr.bf16.mxu0 0
    %1499 = vmatpush1.bf16.msra.mxu0 0
    %1500 = vmatprep.subr.bf16.mxu0 0
    %1501 = vmatpush1.bf16.msra.mxu0 0
    %1502 = vmatprep.subr.bf16.mxu0 0
    %1503 = vmatpush1.bf16.msra.mxu0 %v1483
    %1504 = vmatprep.subr.bf16.mxu0 0
    %1505 = vmatpush2.bf16.msra.mxu0 0
    %1506 = vmatprep.subr.bf16.mxu0 0
    %1507 = vmatpush2.bf16.msra.mxu0 0
    %1508 = vmatprep.subr.bf16.mxu0 0
    %1509 = vmatpush2.bf16.msra.mxu0 0
    %1510 = vmatprep.subr.bf16.mxu0 0
    %1511 = vmatpush2.bf16.msra.mxu0 0
    %1512 = vmatprep.subr.bf16.mxu0 0
    %1513 = vmatpush2.bf16.msra.mxu0 0
    %1514 = vmatprep.subr.bf16.mxu0 0
    %1515 = vmatpush2.bf16.msra.mxu0 0
    %1516 = vmatprep.subr.bf16.mxu0 0
    %1517 = vmatpush2.bf16.msra.mxu0 0
    %1518 = vmatprep.subr.bf16.mxu0 0
    %1519 = vmatpush2.bf16.msra.mxu0 0
    %1520 = vmatprep.mubr.bf16.mxu0 0
    %1521 = vmatmul.mubr.bf16.gmra.mxu0 %v1486
    %v1522 = vpop.f32.mrf.mxu0
    %v1523 = vadd.f32 0.0, %v1522
    %v1524 = vpop.f32.mrf.mxu0
    %v1525 = vpop.f32.mrf.mxu0
    %v1526 = vadd.f32 0.0, %v1525
    %v1527 = vpop.f32.mrf.mxu0
    %1528 = vdwg.mxu0
    %v1529 = vpack.c.bf16 %v1526, %v1523
    %v1534 = vunpack.c.l.b16 %v864
    %v1535 = vunpack.c.l.b16 %v865
    %v1536 = vunpack.c.l.b16 %v866
    %v1537 = vunpack.c.l.b16 %v867
    %v1538 = vpack.c.b16 %v1535, %v1534
    %v1539 = vpack.c.b16 %v1537, %v1536
    %v1543 = vsel %vm874, %v1529, 0
    %1545 = vmatprep.subr.bf16.mxu0 0
    %1546 = vmatpush1.bf16.msra.mxu0 0
    %1547 = vmatprep.subr.bf16.mxu0 0
    %1548 = vmatpush1.bf16.msra.mxu0 0
    %1549 = vmatprep.subr.bf16.mxu0 0
    %1550 = vmatpush1.bf16.msra.mxu0 0
    %1551 = vmatprep.subr.bf16.mxu0 0
    %1552 = vmatpush1.bf16.msra.mxu0 0
    %1553 = vmatprep.subr.bf16.mxu0 0
    %1554 = vmatpush1.bf16.msra.mxu0 0
    %1555 = vmatprep.subr.bf16.mxu0 0
    %1556 = vmatpush1.bf16.msra.mxu0 0
    %1557 = vmatprep.subr.bf16.mxu0 0
    %1558 = vmatpush1.bf16.msra.mxu0 %v1539
    %1559 = vmatprep.subr.bf16.mxu0 0
    %1560 = vmatpush1.bf16.msra.mxu0 %v1538
    %1561 = vmatprep.subr.bf16.mxu0 0
    %1562 = vmatpush2.bf16.msra.mxu0 0
    %1563 = vmatprep.subr.bf16.mxu0 0
    %1564 = vmatpush2.bf16.msra.mxu0 0
    %1565 = vmatprep.subr.bf16.mxu0 0
    %1566 = vmatpush2.bf16.msra.mxu0 0
    %1567 = vmatprep.subr.bf16.mxu0 0
    %1568 = vmatpush2.bf16.msra.mxu0 0
    %1569 = vmatprep.subr.bf16.mxu0 0
    %1570 = vmatpush2.bf16.msra.mxu0 0
    %1571 = vmatprep.subr.bf16.mxu0 0
    %1572 = vmatpush2.bf16.msra.mxu0 0
    %1573 = vmatprep.subr.bf16.mxu0 0
    %1574 = vmatpush2.bf16.msra.mxu0 0
    %1575 = vmatprep.subr.bf16.mxu0 0
    %1576 = vmatpush2.bf16.msra.mxu0 0
    %1577 = vmatprep.mubr.bf16.mxu0 0
    %1578 = vmatmul.mubr.bf16.gmra.mxu0 %v1543
    %v1579 = vpop.f32.mrf.mxu0
    %v1580 = vadd.f32 0.0, %v1579
    %v1581 = vpop.f32.mrf.mxu0
    %v1582 = vpop.f32.mrf.mxu0
    %v1583 = vadd.f32 0.0, %v1582
    %v1584 = vpop.f32.mrf.mxu0
    %1585 = vdwg.mxu0
    %v1586 = vadd.f32 %v1406, %v1580
    %v1587 = vadd.f32 %v1407, %v1583
    %v1589 = vlaneseq
    %v1590 = vshrl.u32 %v1589, 7
    %v1591 = vsub.s32 0, %v1590
    %v1592 = vrot.slane %v868, %v1591
    %v1594 = vadd.f32 %v1586, %v1592
    %v1595 = vadd.f32 %v1587, %v1592
    %v1596 = vadd.f32 %v586, %v1594
    %v1597 = vadd.f32 %v587, %v1595
    %v1598 = vld [vmem:[#allocation7] sm:$0x1]
    %v1599 = vld [vmem:[#allocation8] sm:$0x1]
    %1600 = vadd.xlane.f32.xlu0 %v1596
    %v1601 = vpop.xlane.xlu0 %1600
    %1602 = vadd.xlane.f32.xlu0 %v1597
    %v1603 = vpop.xlane.xlu0 %1602
    %v1604 = vrcp.pop 128.0
    %v1605 = vmul.f32 %v1601, %v1604
    %v1606 = vmul.f32 %v1603, %v1604
    %v1607 = vsub.f32 %v1596, %v1605
    %v1608 = vsub.f32 %v1597, %v1606
    %v1609 = vmul.f32 %v1607, %v1607
    %v1610 = vmul.f32 %v1608, %v1608
    %1611 = vadd.xlane.f32.xlu0 %v1609
    %v1612 = vpop.xlane.xlu0 %1611
    %1613 = vadd.xlane.f32.xlu0 %v1610
    %v1614 = vpop.xlane.xlu0 %1613
    %v1615 = vmul.f32 %v1612, %v1604
    %v1616 = vmul.f32 %v1614, %v1604
    %v1617 = vadd.f32 %v1615, 1e-05
    %v1618 = vadd.f32 %v1616, 1e-05
    %v1619 = vrsqrt.pop %v1617
    %v1620 = vrsqrt.pop %v1618
    %v1621 = vmul.f32 %v1607, %v1619
    %v1622 = vmul.f32 %v1608, %v1620
    %v1624 = vlaneseq
    %v1625 = vshrl.u32 %v1624, 7
    %v1626 = vsub.s32 0, %v1625
    %v1627 = vrot.slane %v1598, %v1626
    %v1629 = vmul.f32 %v1621, %v1627
    %v1630 = vmul.f32 %v1622, %v1627
    %v1632 = vlaneseq
    %v1633 = vshrl.u32 %v1632, 7
    %v1634 = vsub.s32 0, %v1633
    %v1635 = vrot.slane %v1599, %v1634
    %v1637 = vadd.f32 %v1629, %v1635
    %v1638 = vadd.f32 %v1630, %v1635
    %v1639 = vld [vmem:[#allocation10] sm:$0xff]
    %v1640 = vld [vmem:[#allocation10 + $0x8] sm:$0xff]
    %v1641 = vld [vmem:[#allocation10 + $0x10] sm:$0xff]
    %v1642 = vld [vmem:[#allocation10 + $0x18] sm:$0xff]
    %v1643 = vld [vmem:[#allocation10 + $0x20] sm:$0xff]
    %v1644 = vld [vmem:[#allocation10 + $0x28] sm:$0xff]
    %v1645 = vld [vmem:[#allocation10 + $0x30] sm:$0xff]
    %v1646 = vld [vmem:[#allocation10 + $0x38] sm:$0xff]
    %v1647 = vld [vmem:[#allocation10 + $0x40] sm:$0xff]
    %v1648 = vld [vmem:[#allocation10 + $0x48] sm:$0xff]
    %v1649 = vld [vmem:[#allocation10 + $0x50] sm:$0xff]
    %v1650 = vld [vmem:[#allocation10 + $0x58] sm:$0xff]
    %v1651 = vld [vmem:[#allocation10 + $0x60] sm:$0xff]
    %v1652 = vld [vmem:[#allocation10 + $0x68] sm:$0xff]
    %v1653 = vld [vmem:[#allocation10 + $0x70] sm:$0xff]
    %v1654 = vld [vmem:[#allocation10 + $0x78] sm:$0xff]
    %v1655 = vpack.c.bf16 %v1638, %v1637
    %v1656 = vld [vmem:[#allocation11] sm:$0x3]
    %v1658 = vlaneseq
    %v1659 = vshrl.u32 %v1658, 7
    %v1660 = vsub.s32 0, %v1659
    %v1661 = vrot.slane %v1656, %v1660
    %v1662 = vlaneseq
    %v1663 = vshrl.u32 %v1662, 7
    %v1664 = vsub.s32 1, %v1663
    %v1665 = vrot.slane %v1656, %v1664
    %v1684 = vunpack.c.l.b16 %v1639
    %v1685 = vunpack.c.h.b16 %v1639
    %v1686 = vunpack.c.l.b16 %v1640
    %v1687 = vunpack.c.h.b16 %v1640
    %v1688 = vunpack.c.l.b16 %v1641
    %v1689 = vunpack.c.h.b16 %v1641
    %v1690 = vunpack.c.l.b16 %v1642
    %v1691 = vunpack.c.h.b16 %v1642
    %v1692 = vunpack.c.l.b16 %v1643
    %v1693 = vunpack.c.h.b16 %v1643
    %v1694 = vunpack.c.l.b16 %v1644
    %v1695 = vunpack.c.h.b16 %v1644
    %v1696 = vunpack.c.l.b16 %v1645
    %v1697 = vunpack.c.h.b16 %v1645
    %v1698 = vunpack.c.l.b16 %v1646
    %v1699 = vunpack.c.h.b16 %v1646
    %v1700 = vunpack.c.l.b16 %v1647
    %v1701 = vunpack.c.h.b16 %v1647
    %v1702 = vunpack.c.l.b16 %v1648
    %v1703 = vunpack.c.h.b16 %v1648
    %v1704 = vunpack.c.l.b16 %v1649
    %v1705 = vunpack.c.h.b16 %v1649
    %v1706 = vunpack.c.l.b16 %v1650
    %v1707 = vunpack.c.h.b16 %v1650
    %v1708 = vunpack.c.l.b16 %v1651
    %v1709 = vunpack.c.h.b16 %v1651
    %v1710 = vunpack.c.l.b16 %v1652
    %v1711 = vunpack.c.h.b16 %v1652
    %v1712 = vunpack.c.l.b16 %v1653
    %v1713 = vunpack.c.h.b16 %v1653
    %v1714 = vunpack.c.l.b16 %v1654
    %v1715 = vunpack.c.h.b16 %v1654
    %v1716 = vpack.c.b16 %v1686, %v1684
    %v1717 = vpack.c.b16 %v1687, %v1685
    %v1718 = vpack.c.b16 %v1690, %v1688
    %v1719 = vpack.c.b16 %v1691, %v1689
    %v1720 = vpack.c.b16 %v1694, %v1692
    %v1721 = vpack.c.b16 %v1695, %v1693
    %v1722 = vpack.c.b16 %v1698, %v1696
    %v1723 = vpack.c.b16 %v1699, %v1697
    %v1724 = vpack.c.b16 %v1702, %v1700
    %v1725 = vpack.c.b16 %v1703, %v1701
    %v1726 = vpack.c.b16 %v1706, %v1704
    %v1727 = vpack.c.b16 %v1707, %v1705
    %v1728 = vpack.c.b16 %v1710, %v1708
    %v1729 = vpack.c.b16 %v1711, %v1709
    %v1730 = vpack.c.b16 %v1714, %v1712
    %v1731 = vpack.c.b16 %v1715, %v1713
    %1748 = vmatprep.subr.bf16.mxu0 %v1731
    %1749 = vmatpush1.bf16.msra.mxu0 %v1730
    %1750 = vmatprep.subr.bf16.mxu0 %v1729
    %1751 = vmatpush1.bf16.msra.mxu0 %v1728
    %1752 = vmatprep.subr.bf16.mxu0 %v1727
    %1753 = vmatpush1.bf16.msra.mxu0 %v1726
    %1754 = vmatprep.subr.bf16.mxu0 %v1725
    %1755 = vmatpush1.bf16.msra.mxu0 %v1724
    %1756 = vmatprep.subr.bf16.mxu0 %v1723
    %1757 = vmatpush1.bf16.msra.mxu0 %v1722
    %1758 = vmatprep.subr.bf16.mxu0 %v1721
    %1759 = vmatpush1.bf16.msra.mxu0 %v1720
    %1760 = vmatprep.subr.bf16.mxu0 %v1719
    %1761 = vmatpush1.bf16.msra.mxu0 %v1718
    %1762 = vmatprep.subr.bf16.mxu0 %v1717
    %1763 = vmatpush1.bf16.msra.mxu0 %v1716
    %1764 = vmatprep.subr.bf16.mxu0 0
    %1765 = vmatpush2.bf16.msra.mxu0 0
    %1766 = vmatprep.subr.bf16.mxu0 0
    %1767 = vmatpush2.bf16.msra.mxu0 0
    %1768 = vmatprep.subr.bf16.mxu0 0
    %1769 = vmatpush2.bf16.msra.mxu0 0
    %1770 = vmatprep.subr.bf16.mxu0 0
    %1771 = vmatpush2.bf16.msra.mxu0 0
    %1772 = vmatprep.subr.bf16.mxu0 0
    %1773 = vmatpush2.bf16.msra.mxu0 0
    %1774 = vmatprep.subr.bf16.mxu0 0
    %1775 = vmatpush2.bf16.msra.mxu0 0
    %1776 = vmatprep.subr.bf16.mxu0 0
    %1777 = vmatpush2.bf16.msra.mxu0 0
    %1778 = vmatprep.subr.bf16.mxu0 0
    %1779 = vmatpush2.bf16.msra.mxu0 0
    %1780 = vmatprep.mubr.bf16.mxu0 0
    %1781 = vmatmul.mubr.bf16.gmra.mxu0 %v1655
    %v1782 = vpop.f32.mrf.mxu0
    %v1783 = vadd.f32 %v1661, %v1782
    %v1784 = vpop.f32.mrf.mxu0
    %v1785 = vadd.f32 %v1665, %v1784
    %v1786 = vpop.f32.mrf.mxu0
    %v1787 = vadd.f32 %v1661, %v1786
    %v1788 = vpop.f32.mrf.mxu0
    %v1789 = vadd.f32 %v1665, %v1788
    %1790 = vdwg.mxu0
    %v1791 = vmax.f32 %v1783, 0.0
    %v1792 = vmax.f32 %v1785, 0.0
    %v1793 = vmax.f32 %v1787, 0.0
    %v1794 = vmax.f32 %v1789, 0.0
    %v1795 = vld [vmem:[#allocation13] sm:$0xf]
    %v1796 = vld [vmem:[#allocation13 + $0x4] sm:$0xf]
    %v1797 = vld [vmem:[#allocation13 + $0x8] sm:$0xf]
    %v1798 = vld [vmem:[#allocation13 + $0xc] sm:$0xf]
    %v1799 = vld [vmem:[#allocation13 + $0x10] sm:$0xf]
    %v1800 = vld [vmem:[#allocation13 + $0x14] sm:$0xf]
    %v1801 = vld [vmem:[#allocation13 + $0x18] sm:$0xf]
    %v1802 = vld [vmem:[#allocation13 + $0x1c] sm:$0xf]
    %v1803 = vld [vmem:[#allocation13 + $0x20] sm:$0xf]
    %v1804 = vld [vmem:[#allocation13 + $0x24] sm:$0xf]
    %v1805 = vld [vmem:[#allocation13 + $0x28] sm:$0xf]
    %v1806 = vld [vmem:[#allocation13 + $0x2c] sm:$0xf]
    %v1807 = vld [vmem:[#allocation13 + $0x30] sm:$0xf]
    %v1808 = vld [vmem:[#allocation13 + $0x34] sm:$0xf]
    %v1809 = vld [vmem:[#allocation13 + $0x38] sm:$0xf]
    %v1810 = vld [vmem:[#allocation13 + $0x3c] sm:$0xf]
    %v1811 = vld [vmem:[#allocation13 + $0x40] sm:$0xf]
    %v1812 = vld [vmem:[#allocation13 + $0x44] sm:$0xf]
    %v1813 = vld [vmem:[#allocation13 + $0x48] sm:$0xf]
    %v1814 = vld [vmem:[#allocation13 + $0x4c] sm:$0xf]
    %v1815 = vld [vmem:[#allocation13 + $0x50] sm:$0xf]
    %v1816 = vld [vmem:[#allocation13 + $0x54] sm:$0xf]
    %v1817 = vld [vmem:[#allocation13 + $0x58] sm:$0xf]
    %v1818 = vld [vmem:[#allocation13 + $0x5c] sm:$0xf]
    %v1819 = vld [vmem:[#allocation13 + $0x60] sm:$0xf]
    %v1820 = vld [vmem:[#allocation13 + $0x64] sm:$0xf]
    %v1821 = vld [vmem:[#allocation13 + $0x68] sm:$0xf]
    %v1822 = vld [vmem:[#allocation13 + $0x6c] sm:$0xf]
    %v1823 = vld [vmem:[#allocation13 + $0x70] sm:$0xf]
    %v1824 = vld [vmem:[#allocation13 + $0x74] sm:$0xf]
    %v1825 = vld [vmem:[#allocation13 + $0x78] sm:$0xf]
    %v1826 = vld [vmem:[#allocation13 + $0x7c] sm:$0xf]
    %v1827 = vpack.c.bf16 %v1793, %v1791
    %v1828 = vpack.c.bf16 %v1794, %v1792
    %v1829 = vld [vmem:[#allocation14] sm:$0x1]
    %v1831 = vlaneseq
    %v1832 = vshrl.u32 %v1831, 7
    %v1833 = vsub.s32 0, %v1832
    %v1834 = vrot.slane %v1829, %v1833
    %v1868 = vunpack.c.l.b16 %v1795
    %v1869 = vunpack.c.l.b16 %v1796
    %v1870 = vunpack.c.l.b16 %v1797
    %v1871 = vunpack.c.l.b16 %v1798
    %v1872 = vunpack.c.l.b16 %v1799
    %v1873 = vunpack.c.l.b16 %v1800
    %v1874 = vunpack.c.l.b16 %v1801
    %v1875 = vunpack.c.l.b16 %v1802
    %v1876 = vunpack.c.l.b16 %v1803
    %v1877 = vunpack.c.l.b16 %v1804
    %v1878 = vunpack.c.l.b16 %v1805
    %v1879 = vunpack.c.l.b16 %v1806
    %v1880 = vunpack.c.l.b16 %v1807
    %v1881 = vunpack.c.l.b16 %v1808
    %v1882 = vunpack.c.l.b16 %v1809
    %v1883 = vunpack.c.l.b16 %v1810
    %v1884 = vunpack.c.l.b16 %v1811
    %v1885 = vunpack.c.l.b16 %v1812
    %v1886 = vunpack.c.l.b16 %v1813
    %v1887 = vunpack.c.l.b16 %v1814
    %v1888 = vunpack.c.l.b16 %v1815
    %v1889 = vunpack.c.l.b16 %v1816
    %v1890 = vunpack.c.l.b16 %v1817
    %v1891 = vunpack.c.l.b16 %v1818
    %v1892 = vunpack.c.l.b16 %v1819
    %v1893 = vunpack.c.l.b16 %v1820
    %v1894 = vunpack.c.l.b16 %v1821
    %v1895 = vunpack.c.l.b16 %v1822
    %v1896 = vunpack.c.l.b16 %v1823
    %v1897 = vunpack.c.l.b16 %v1824
    %v1898 = vunpack.c.l.b16 %v1825
    %v1899 = vunpack.c.l.b16 %v1826
    %v1900 = vpack.c.b16 %v1869, %v1868
    %v1901 = vpack.c.b16 %v1871, %v1870
    %v1902 = vpack.c.b16 %v1873, %v1872
    %v1903 = vpack.c.b16 %v1875, %v1874
    %v1904 = vpack.c.b16 %v1877, %v1876
    %v1905 = vpack.c.b16 %v1879, %v1878
    %v1906 = vpack.c.b16 %v1881, %v1880
    %v1907 = vpack.c.b16 %v1883, %v1882
    %v1908 = vpack.c.b16 %v1885, %v1884
    %v1909 = vpack.c.b16 %v1887, %v1886
    %v1910 = vpack.c.b16 %v1889, %v1888
    %v1911 = vpack.c.b16 %v1891, %v1890
    %v1912 = vpack.c.b16 %v1893, %v1892
    %v1913 = vpack.c.b16 %v1895, %v1894
    %v1914 = vpack.c.b16 %v1897, %v1896
    %v1915 = vpack.c.b16 %v1899, %v1898
    %1932 = vmatprep.subr.bf16.mxu0 0
    %1933 = vmatpush1.bf16.msra.mxu0 %v1907
    %1934 = vmatprep.subr.bf16.mxu0 0
    %1935 = vmatpush1.bf16.msra.mxu0 %v1906
    %1936 = vmatprep.subr.bf16.mxu0 0
    %1937 = vmatpush1.bf16.msra.mxu0 %v1905
    %1938 = vmatprep.subr.bf16.mxu0 0
    %1939 = vmatpush1.bf16.msra.mxu0 %v1904
    %1940 = vmatprep.subr.bf16.mxu0 0
    %1941 = vmatpush1.bf16.msra.mxu0 %v1903
    %1942 = vmatprep.subr.bf16.mxu0 0
    %1943 = vmatpush1.bf16.msra.mxu0 %v1902
    %1944 = vmatprep.subr.bf16.mxu0 0
    %1945 = vmatpush1.bf16.msra.mxu0 %v1901
    %1946 = vmatprep.subr.bf16.mxu0 0
    %1947 = vmatpush1.bf16.msra.mxu0 %v1900
    %1948 = vmatprep.subr.bf16.mxu0 0
    %1949 = vmatpush2.bf16.msra.mxu0 %v1915
    %1950 = vmatprep.subr.bf16.mxu0 0
    %1951 = vmatpush2.bf16.msra.mxu0 %v1914
    %1952 = vmatprep.subr.bf16.mxu0 0
    %1953 = vmatpush2.bf16.msra.mxu0 %v1913
    %1954 = vmatprep.subr.bf16.mxu0 0
    %1955 = vmatpush2.bf16.msra.mxu0 %v1912
    %1956 = vmatprep.subr.bf16.mxu0 0
    %1957 = vmatpush2.bf16.msra.mxu0 %v1911
    %1958 = vmatprep.subr.bf16.mxu0 0
    %1959 = vmatpush2.bf16.msra.mxu0 %v1910
    %1960 = vmatprep.subr.bf16.mxu0 0
    %1961 = vmatpush2.bf16.msra.mxu0 %v1909
    %1962 = vmatprep.subr.bf16.mxu0 0
    %1963 = vmatpush2.bf16.msra.mxu0 %v1908
    %1964 = vmatprep.mubr.bf16.mxu0 %v1828
    %1965 = vmatmul.mubr.bf16.gmra.mxu0 %v1827
    %v1966 = vpop.f32.mrf.mxu0
    %v1967 = vadd.f32 %v1834, %v1966
    %v1968 = vpop.f32.mrf.mxu0
    %v1969 = vpop.f32.mrf.mxu0
    %v1970 = vadd.f32 %v1834, %v1969
    %v1971 = vpop.f32.mrf.mxu0
    %1972 = vdwg.mxu0
    %v1973 = vadd.f32 %v1637, %v1967
    %v1974 = vadd.f32 %v1638, %v1970
    %v1975 = vld [vmem:[#allocation16] sm:$0x1]
    %v1976 = vld [vmem:[#allocation17] sm:$0x1]
    %1977 = vadd.xlane.f32.xlu0 %v1973
    %v1978 = vpop.xlane.xlu0 %1977
    %1979 = vadd.xlane.f32.xlu0 %v1974
    %v1980 = vpop.xlane.xlu0 %1979
    %v1981 = vmul.f32 %v1978, %v1604
    %v1982 = vmul.f32 %v1980, %v1604
    %v1983 = vsub.f32 %v1973, %v1981
    %v1984 = vsub.f32 %v1974, %v1982
    %v1985 = vmul.f32 %v1983, %v1983
    %v1986 = vmul.f32 %v1984, %v1984
    %1987 = vadd.xlane.f32.xlu0 %v1985
    %v1988 = vpop.xlane.xlu0 %1987
    %1989 = vadd.xlane.f32.xlu0 %v1986
    %v1990 = vpop.xlane.xlu0 %1989
    %v1991 = vmul.f32 %v1988, %v1604
    %v1992 = vmul.f32 %v1990, %v1604
    %v1993 = vadd.f32 %v1991, 1e-05
    %v1994 = vadd.f32 %v1992, 1e-05
    %v1995 = vrsqrt.pop %v1993
    %v1996 = vrsqrt.pop %v1994
    %v1997 = vmul.f32 %v1983, %v1995
    %v1998 = vmul.f32 %v1984, %v1996
    %v2000 = vlaneseq
    %v2001 = vshrl.u32 %v2000, 7
    %v2002 = vsub.s32 0, %v2001
    %v2003 = vrot.slane %v1975, %v2002
    %v2005 = vmul.f32 %v1997, %v2003
    %v2006 = vmul.f32 %v1998, %v2003
    %v2008 = vlaneseq
    %v2009 = vshrl.u32 %v2008, 7
    %v2010 = vsub.s32 0, %v2009
    %v2011 = vrot.slane %v1976, %v2010
    %v2013 = vadd.f32 %v2005, %v2011
    %v2014 = vadd.f32 %v2006, %v2011
    %v2015 = vld [vmem:[#allocation19] sm:$0xf]
    %v2016 = vld [vmem:[#allocation19 + $0x4] sm:$0xf]
    %v2017 = vld [vmem:[#allocation19 + $0x8] sm:$0xf]
    %v2018 = vld [vmem:[#allocation19 + $0xc] sm:$0xf]
    %v2019 = vld [vmem:[#allocation19 + $0x10] sm:$0xf]
    %v2020 = vld [vmem:[#allocation19 + $0x14] sm:$0xf]
    %v2021 = vld [vmem:[#allocation19 + $0x18] sm:$0xf]
    %v2022 = vld [vmem:[#allocation19 + $0x1c] sm:$0xf]
    %v2023 = vld [vmem:[#allocation19 + $0x20] sm:$0xf]
    %v2024 = vld [vmem:[#allocation19 + $0x24] sm:$0xf]
    %v2025 = vld [vmem:[#allocation19 + $0x28] sm:$0xf]
    %v2026 = vld [vmem:[#allocation19 + $0x2c] sm:$0xf]
    %v2027 = vld [vmem:[#allocation19 + $0x30] sm:$0xf]
    %v2028 = vld [vmem:[#allocation19 + $0x34] sm:$0xf]
    %v2029 = vld [vmem:[#allocation19 + $0x38] sm:$0xf]
    %v2030 = vld [vmem:[#allocation19 + $0x3c] sm:$0xf]
    %v2031 = vpack.c.bf16 %v2014, %v2013
    %v2032 = vld [vmem:[#allocation20] sm:$0x1]
    %v2034 = vlaneseq
    %v2035 = vshrl.u32 %v2034, 7
    %v2036 = vsub.s32 0, %v2035
    %v2037 = vrot.slane %v2032, %v2036
    %v2055 = vunpack.c.l.b16 %v2015
    %v2056 = vunpack.c.l.b16 %v2016
    %v2057 = vunpack.c.l.b16 %v2017
    %v2058 = vunpack.c.l.b16 %v2018
    %v2059 = vunpack.c.l.b16 %v2019
    %v2060 = vunpack.c.l.b16 %v2020
    %v2061 = vunpack.c.l.b16 %v2021
    %v2062 = vunpack.c.l.b16 %v2022
    %v2063 = vunpack.c.l.b16 %v2023
    %v2064 = vunpack.c.l.b16 %v2024
    %v2065 = vunpack.c.l.b16 %v2025
    %v2066 = vunpack.c.l.b16 %v2026
    %v2067 = vunpack.c.l.b16 %v2027
    %v2068 = vunpack.c.l.b16 %v2028
    %v2069 = vunpack.c.l.b16 %v2029
    %v2070 = vunpack.c.l.b16 %v2030
    %v2071 = vpack.c.b16 %v2056, %v2055
    %v2072 = vpack.c.b16 %v2058, %v2057
    %v2073 = vpack.c.b16 %v2060, %v2059
    %v2074 = vpack.c.b16 %v2062, %v2061
    %v2075 = vpack.c.b16 %v2064, %v2063
    %v2076 = vpack.c.b16 %v2066, %v2065
    %v2077 = vpack.c.b16 %v2068, %v2067
    %v2078 = vpack.c.b16 %v2070, %v2069
    %2087 = vmatprep.subr.bf16.mxu0 0
    %2088 = vmatpush1.bf16.msra.mxu0 %v2078
    %2089 = vmatprep.subr.bf16.mxu0 0
    %2090 = vmatpush1.bf16.msra.mxu0 %v2077
    %2091 = vmatprep.subr.bf16.mxu0 0
    %2092 = vmatpush1.bf16.msra.mxu0 %v2076
    %2093 = vmatprep.subr.bf16.mxu0 0
    %2094 = vmatpush1.bf16.msra.mxu0 %v2075
    %2095 = vmatprep.subr.bf16.mxu0 0
    %2096 = vmatpush1.bf16.msra.mxu0 %v2074
    %2097 = vmatprep.subr.bf16.mxu0 0
    %2098 = vmatpush1.bf16.msra.mxu0 %v2073
    %2099 = vmatprep.subr.bf16.mxu0 0
    %2100 = vmatpush1.bf16.msra.mxu0 %v2072
    %2101 = vmatprep.subr.bf16.mxu0 0
    %2102 = vmatpush1.bf16.msra.mxu0 %v2071
    %2103 = vmatprep.subr.bf16.mxu0 0
    %2104 = vmatpush2.bf16.msra.mxu0 0
    %2105 = vmatprep.subr.bf16.mxu0 0
    %2106 = vmatpush2.bf16.msra.mxu0 0
    %2107 = vmatprep.subr.bf16.mxu0 0
    %2108 = vmatpush2.bf16.msra.mxu0 0
    %2109 = vmatprep.subr.bf16.mxu0 0
    %2110 = vmatpush2.bf16.msra.mxu0 0
    %2111 = vmatprep.subr.bf16.mxu0 0
    %2112 = vmatpush2.bf16.msra.mxu0 0
    %2113 = vmatprep.subr.bf16.mxu0 0
    %2114 = vmatpush2.bf16.msra.mxu0 0
    %2115 = vmatprep.subr.bf16.mxu0 0
    %2116 = vmatpush2.bf16.msra.mxu0 0
    %2117 = vmatprep.subr.bf16.mxu0 0
    %2118 = vmatpush2.bf16.msra.mxu0 0
    %2119 = vmatprep.mubr.bf16.mxu0 0
    %2120 = vmatmul.mubr.bf16.gmra.mxu0 %v2031
    %v2121 = vpop.f32.mrf.mxu0
    %v2122 = vadd.f32 %v2037, %v2121
    %v2123 = vpop.f32.mrf.mxu0
    %v2124 = vpop.f32.mrf.mxu0
    %v2125 = vadd.f32 %v2037, %v2124
    %v2126 = vpop.f32.mrf.mxu0
    %2127 = vdwg.mxu0
    %2128 = vst [vmem:[#allocation53] sm:$0xff] %v2122
    %2129 = vst [vmem:[#allocation53 + $0x8] sm:$0xff] %v2125
    %v2130 = vld [vmem:[%s3] sm:$0xff]
    %v2131 = vld [vmem:[%s3 + $0x8] sm:$0xff]
    %v2132 = vld [vmem:[%s3 + $0x10] sm:$0xff]
    %v2133 = vld [vmem:[%s3 + $0x18] sm:$0xff]
    %v2134 = vlaneseq
    %v2135 = vand.u32 %v2134, 127
    %2136 = vset.pattern.permute.xlu0 0
    %2137 = vperm.xlu0 %2136, %v2130
    %v2138 = vpop.permute.xlu0 %2137
    %2139 = vset.pattern.permute.xlu0 0
    %2140 = vperm.xlu0 %2139, %v2131
    %v2141 = vpop.permute.xlu0 %2140
    %2142 = vset.pattern.permute.xlu0 0
    %2143 = vperm.xlu0 %2142, %v2132
    %v2144 = vpop.permute.xlu0 %2143
    %2145 = vset.pattern.permute.xlu0 0
    %2146 = vperm.xlu0 %2145, %v2133
    %v2147 = vpop.permute.xlu0 %2146
    %vm2148 = vcmp.eq.s32.totalorder %v2138, %v2135
    %vm2149 = vcmp.eq.s32.totalorder %v2141, %v2135
    %vm2150 = vcmp.eq.s32.totalorder %v2144, %v2135
    %vm2151 = vcmp.eq.s32.totalorder %v2147, %v2135
    %v2152 = vsel %vm2148, 1.0, 0.0
    %v2153 = vsel %vm2149, 1.0, 0.0
    %v2154 = vsel %vm2150, 1.0, 0.0
    %v2155 = vsel %vm2151, 1.0, 0.0
    %v2156 = vld [vmem:[#allocation22] sm:$0xf]
    %v2157 = vld [vmem:[#allocation22 + $0x4] sm:$0xf]
    %v2158 = vld [vmem:[#allocation22 + $0x8] sm:$0xf]
    %v2159 = vld [vmem:[#allocation22 + $0xc] sm:$0xf]
    %v2160 = vld [vmem:[#allocation22 + $0x10] sm:$0xf]
    %v2161 = vld [vmem:[#allocation22 + $0x14] sm:$0xf]
    %v2162 = vld [vmem:[#allocation22 + $0x18] sm:$0xf]
    %v2163 = vld [vmem:[#allocation22 + $0x1c] sm:$0xf]
    %v2164 = vld [vmem:[#allocation22 + $0x20] sm:$0xf]
    %v2165 = vld [vmem:[#allocation22 + $0x24] sm:$0xf]
    %v2166 = vld [vmem:[#allocation22 + $0x28] sm:$0xf]
    %v2167 = vld [vmem:[#allocation22 + $0x2c] sm:$0xf]
    %v2168 = vld [vmem:[#allocation22 + $0x30] sm:$0xf]
    %v2169 = vld [vmem:[#allocation22 + $0x34] sm:$0xf]
    %v2170 = vld [vmem:[#allocation22 + $0x38] sm:$0xf]
    %v2171 = vld [vmem:[#allocation22 + $0x3c] sm:$0xf]
    %v2172 = vpack.c.bf16 %v2153, %v2152
    %v2173 = vpack.c.bf16 %v2155, %v2154
    %v2190 = vunpack.c.l.b16 %v2156
    %v2191 = vunpack.c.l.b16 %v2157
    %v2192 = vunpack.c.l.b16 %v2158
    %v2193 = vunpack.c.l.b16 %v2159
    %v2194 = vunpack.c.l.b16 %v2160
    %v2195 = vunpack.c.l.b16 %v2161
    %v2196 = vunpack.c.l.b16 %v2162
    %v2197 = vunpack.c.l.b16 %v2163
    %v2198 = vunpack.c.l.b16 %v2164
    %v2199 = vunpack.c.l.b16 %v2165
    %v2200 = vunpack.c.l.b16 %v2166
    %v2201 = vunpack.c.l.b16 %v2167
    %v2202 = vunpack.c.l.b16 %v2168
    %v2203 = vunpack.c.l.b16 %v2169
    %v2204 = vunpack.c.l.b16 %v2170
    %v2205 = vunpack.c.l.b16 %v2171
    %v2206 = vpack.c.b16 %v2191, %v2190
    %v2207 = vpack.c.b16 %v2193, %v2192
    %v2208 = vpack.c.b16 %v2195, %v2194
    %v2209 = vpack.c.b16 %v2197, %v2196
    %v2210 = vpack.c.b16 %v2199, %v2198
    %v2211 = vpack.c.b16 %v2201, %v2200
    %v2212 = vpack.c.b16 %v2203, %v2202
    %v2213 = vpack.c.b16 %v2205, %v2204
    %2222 = vmatprep.subr.bf16.mxu0 0
    %2223 = vmatpush1.bf16.msra.mxu0 %v2213
    %2224 = vmatprep.subr.bf16.mxu0 0
    %2225 = vmatpush1.bf16.msra.mxu0 %v2212
    %2226 = vmatprep.subr.bf16.mxu0 0
    %2227 = vmatpush1.bf16.msra.mxu0 %v2211
    %2228 = vmatprep.subr.bf16.mxu0 0
    %2229 = vmatpush1.bf16.msra.mxu0 %v2210
    %2230 = vmatprep.subr.bf16.mxu0 0
    %2231 = vmatpush1.bf16.msra.mxu0 %v2209
    %2232 = vmatprep.subr.bf16.mxu0 0
    %2233 = vmatpush1.bf16.msra.mxu0 %v2208
    %2234 = vmatprep.subr.bf16.mxu0 0
    %2235 = vmatpush1.bf16.msra.mxu0 %v2207
    %2236 = vmatprep.subr.bf16.mxu0 0
    %2237 = vmatpush1.bf16.msra.mxu0 %v2206
    %2238 = vmatprep.subr.bf16.mxu0 0
    %2239 = vmatpush2.bf16.msra.mxu0 0
    %2240 = vmatprep.subr.bf16.mxu0 0
    %2241 = vmatpush2.bf16.msra.mxu0 0
    %2242 = vmatprep.subr.bf16.mxu0 0
    %2243 = vmatpush2.bf16.msra.mxu0 0
    %2244 = vmatprep.subr.bf16.mxu0 0
    %2245 = vmatpush2.bf16.msra.mxu0 0
    %2246 = vmatprep.subr.bf16.mxu0 0
    %2247 = vmatpush2.bf16.msra.mxu0 0
    %2248 = vmatprep.subr.bf16.mxu0 0
    %2249 = vmatpush2.bf16.msra.mxu0 0
    %2250 = vmatprep.subr.bf16.mxu0 0
    %2251 = vmatpush2.bf16.msra.mxu0 0
    %2252 = vmatprep.subr.bf16.mxu0 0
    %2253 = vmatpush2.bf16.msra.mxu0 0
    %2254 = vmatprep.mubr.bf16.mxu0 0
    %2255 = vmatmul.mubr.bf16.gmra.mxu0 %v2172
    %v2256 = vpop.f32.mrf.mxu0
    %v2257 = vadd.f32 0.0, %v2256
    %v2258 = vpop.f32.mrf.mxu0
    %v2259 = vpop.f32.mrf.mxu0
    %v2260 = vadd.f32 0.0, %v2259
    %v2261 = vpop.f32.mrf.mxu0
    %2262 = vmatprep.mubr.bf16.mxu0 0
    %2263 = vmatmul.mubr.bf16.gmra.mxu0 %v2173
    %v2264 = vpop.f32.mrf.mxu0
    %v2265 = vadd.f32 0.0, %v2264
    %v2266 = vpop.f32.mrf.mxu0
    %v2267 = vpop.f32.mrf.mxu0
    %v2268 = vadd.f32 0.0, %v2267
    %v2269 = vpop.f32.mrf.mxu0
    %2270 = vdwg.mxu0
    %v2271 = vld [vmem:[%s7] sm:$0xff]
    %v2272 = vld [vmem:[%s7 + $0x8] sm:$0xff]
    %v2273 = vld [vmem:[%s7 + $0x10] sm:$0xff]
    %v2274 = vld [vmem:[%s7 + $0x18] sm:$0xff]
    %v2275 = vld [vmem:[%s9] sm:$0xff]
    %v2276 = vld [vmem:[%s9 + $0x8] sm:$0xff]
    %v2277 = vld [vmem:[%s9 + $0x10] sm:$0xff]
    %v2278 = vld [vmem:[%s9 + $0x18] sm:$0xff]
    %v2279 = vld [vmem:[#allocation23] sm:$0xff]
    %v2280 = vld [vmem:[#allocation23 + $0x8] sm:$0xf]
    %v2281 = vld [vmem:[#allocation23 + $0xc] sm:$0xff]
    %v2282 = vld [vmem:[#allocation23 + $0x14] sm:$0xf]
    %v2283 = vld [vmem:[#allocation23 + $0x18] sm:$0xff]
    %v2284 = vld [vmem:[#allocation23 + $0x20] sm:$0xf]
    %v2285 = vld [vmem:[#allocation23 + $0x24] sm:$0xff]
    %v2286 = vld [vmem:[#allocation23 + $0x2c] sm:$0xf]
    %v2287 = vld [vmem:[#allocation23 + $0x30] sm:$0xff]
    %v2288 = vld [vmem:[#allocation23 + $0x38] sm:$0xf]
    %v2289 = vld [vmem:[#allocation23 + $0x3c] sm:$0xff]
    %v2290 = vld [vmem:[#allocation23 + $0x44] sm:$0xf]
    %v2291 = vld [vmem:[#allocation23 + $0x48] sm:$0xff]
    %v2292 = vld [vmem:[#allocation23 + $0x50] sm:$0xf]
    %v2293 = vld [vmem:[#allocation23 + $0x54] sm:$0xff]
    %v2294 = vld [vmem:[#allocation23 + $0x5c] sm:$0xf]
    %v2295 = vld [vmem:[#allocation23 + $0x60] sm:$0xff]
    %v2296 = vld [vmem:[#allocation23 + $0x68] sm:$0xf]
    %v2297 = vld [vmem:[#allocation23 + $0x6c] sm:$0xff]
    %v2298 = vld [vmem:[#allocation23 + $0x74] sm:$0xf]
    %v2299 = vld [vmem:[#allocation23 + $0x78] sm:$0xff]
    %v2300 = vld [vmem:[#allocation23 + $0x80] sm:$0xf]
    %v2301 = vld [vmem:[#allocation23 + $0x84] sm:$0xff]
    %v2302 = vld [vmem:[#allocation23 + $0x8c] sm:$0xf]
    %v2303 = vld [vmem:[#allocation23 + $0x90] sm:$0xff]
    %v2304 = vld [vmem:[#allocation23 + $0x98] sm:$0xf]
    %v2305 = vld [vmem:[#allocation23 + $0x9c] sm:$0xff]
    %v2306 = vld [vmem:[#allocation23 + $0xa4] sm:$0xf]
    %v2307 = vld [vmem:[#allocation23 + $0xa8] sm:$0xff]
    %v2308 = vld [vmem:[#allocation23 + $0xb0] sm:$0xf]
    %v2309 = vld [vmem:[#allocation23 + $0xb4] sm:$0xff]
    %v2310 = vld [vmem:[#allocation23 + $0xbc] sm:$0xf]
    %v2311 = vpack.c.bf16 %v2260, %v2257
    %v2312 = vpack.c.bf16 %v2268, %v2265
    %v2313 = vld [vmem:[%s43] sm:$0x7]
    %v2315 = vlaneseq
    %v2316 = vshrl.u32 %v2315, 7
    %v2317 = vsub.s32 0, %v2316
    %v2318 = vrot.slane %v2313, %v2317
    %v2319 = vlaneseq
    %v2320 = vshrl.u32 %v2319, 7
    %v2321 = vsub.s32 1, %v2320
    %v2322 = vrot.slane %v2313, %v2321
    %v2323 = vlaneseq
    %v2324 = vshrl.u32 %v2323, 7
    %v2325 = vsub.s32 2, %v2324
    %v2326 = vrot.slane %v2313, %v2325
    %v2362 = vunpack.c.l.b16 %v2279
    %v2363 = vunpack.c.h.b16 %v2279
    %v2364 = vunpack.c.l.b16 %v2280
    %v2365 = vunpack.c.l.b16 %v2281
    %v2366 = vunpack.c.h.b16 %v2281
    %v2367 = vunpack.c.l.b16 %v2282
    %v2368 = vunpack.c.l.b16 %v2283
    %v2369 = vunpack.c.h.b16 %v2283
    %v2370 = vunpack.c.l.b16 %v2284
    %v2371 = vunpack.c.l.b16 %v2285
    %v2372 = vunpack.c.h.b16 %v2285
    %v2373 = vunpack.c.l.b16 %v2286
    %v2374 = vunpack.c.l.b16 %v2287
    %v2375 = vunpack.c.h.b16 %v2287
    %v2376 = vunpack.c.l.b16 %v2288
    %v2377 = vunpack.c.l.b16 %v2289
    %v2378 = vunpack.c.h.b16 %v2289
    %v2379 = vunpack.c.l.b16 %v2290
    %v2380 = vunpack.c.l.b16 %v2291
    %v2381 = vunpack.c.h.b16 %v2291
    %v2382 = vunpack.c.l.b16 %v2292
    %v2383 = vunpack.c.l.b16 %v2293
    %v2384 = vunpack.c.h.b16 %v2293
    %v2385 = vunpack.c.l.b16 %v2294
    %v2386 = vunpack.c.l.b16 %v2295
    %v2387 = vunpack.c.h.b16 %v2295
    %v2388 = vunpack.c.l.b16 %v2296
    %v2389 = vunpack.c.l.b16 %v2297
    %v2390 = vunpack.c.h.b16 %v2297
    %v2391 = vunpack.c.l.b16 %v2298
    %v2392 = vunpack.c.l.b16 %v2299
    %v2393 = vunpack.c.h.b16 %v2299
    %v2394 = vunpack.c.l.b16 %v2300
    %v2395 = vunpack.c.l.b16 %v2301
    %v2396 = vunpack.c.h.b16 %v2301
    %v2397 = vunpack.c.l.b16 %v2302
    %v2398 = vunpack.c.l.b16 %v2303
    %v2399 = vunpack.c.h.b16 %v2303
    %v2400 = vunpack.c.l.b16 %v2304
    %v2401 = vunpack.c.l.b16 %v2305
    %v2402 = vunpack.c.h.b16 %v2305
    %v2403 = vunpack.c.l.b16 %v2306
    %v2404 = vunpack.c.l.b16 %v2307
    %v2405 = vunpack.c.h.b16 %v2307
    %v2406 = vunpack.c.l.b16 %v2308
    %v2407 = vunpack.c.l.b16 %v2309
    %v2408 = vunpack.c.h.b16 %v2309
    %v2409 = vunpack.c.l.b16 %v2310
    %v2410 = vpack.c.b16 %v2365, %v2362
    %v2411 = vpack.c.b16 %v2366, %v2363
    %v2412 = vpack.c.b16 %v2367, %v2364
    %v2413 = vpack.c.b16 %v2371, %v2368
    %v2414 = vpack.c.b16 %v2372, %v2369
    %v2415 = vpack.c.b16 %v2373, %v2370
    %v2416 = vpack.c.b16 %v2377, %v2374
    %v2417 = vpack.c.b16 %v2378, %v2375
    %v2418 = vpack.c.b16 %v2379, %v2376
    %v2419 = vpack.c.b16 %v2383, %v2380
    %v2420 = vpack.c.b16 %v2384, %v2381
    %v2421 = vpack.c.b16 %v2385, %v2382
    %v2422 = vpack.c.b16 %v2389, %v2386
    %v2423 = vpack.c.b16 %v2390, %v2387
    %v2424 = vpack.c.b16 %v2391, %v2388
    %v2425 = vpack.c.b16 %v2395, %v2392
    %v2426 = vpack.c.b16 %v2396, %v2393
    %v2427 = vpack.c.b16 %v2397, %v2394
    %v2428 = vpack.c.b16 %v2401, %v2398
    %v2429 = vpack.c.b16 %v2402, %v2399
    %v2430 = vpack.c.b16 %v2403, %v2400
    %v2431 = vpack.c.b16 %v2407, %v2404
    %v2432 = vpack.c.b16 %v2408, %v2405
    %v2433 = vpack.c.b16 %v2409, %v2406
    %2458 = vmatprep.subr.bf16.mxu0 %v2432
    %2459 = vmatpush1.bf16.msra.mxu0 %v2431
    %2460 = vmatprep.subr.bf16.mxu0 %v2429
    %2461 = vmatpush1.bf16.msra.mxu0 %v2428
    %2462 = vmatprep.subr.bf16.mxu0 %v2426
    %2463 = vmatpush1.bf16.msra.mxu0 %v2425
    %2464 = vmatprep.subr.bf16.mxu0 %v2423
    %2465 = vmatpush1.bf16.msra.mxu0 %v2422
    %2466 = vmatprep.subr.bf16.mxu0 %v2420
    %2467 = vmatpush1.bf16.msra.mxu0 %v2419
    %2468 = vmatprep.subr.bf16.mxu0 %v2417
    %2469 = vmatpush1.bf16.msra.mxu0 %v2416
    %2470 = vmatprep.subr.bf16.mxu0 %v2414
    %2471 = vmatpush1.bf16.msra.mxu0 %v2413
    %2472 = vmatprep.subr.bf16.mxu0 %v2411
    %2473 = vmatpush1.bf16.msra.mxu0 %v2410
    %2474 = vmatprep.subr.bf16.mxu0 0
    %2475 = vmatpush2.bf16.msra.mxu0 0
    %2476 = vmatprep.subr.bf16.mxu0 0
    %2477 = vmatpush2.bf16.msra.mxu0 0
    %2478 = vmatprep.subr.bf16.mxu0 0
    %2479 = vmatpush2.bf16.msra.mxu0 0
    %2480 = vmatprep.subr.bf16.mxu0 0
    %2481 = vmatpush2.bf16.msra.mxu0 0
    %2482 = vmatprep.subr.bf16.mxu0 0
    %2483 = vmatpush2.bf16.msra.mxu0 0
    %2484 = vmatprep.subr.bf16.mxu0 0
    %2485 = vmatpush2.bf16.msra.mxu0 0
    %2486 = vmatprep.subr.bf16.mxu0 0
    %2487 = vmatpush2.bf16.msra.mxu0 0
    %2488 = vmatprep.subr.bf16.mxu0 0
    %2489 = vmatpush2.bf16.msra.mxu0 0
    %2490 = vmatprep.mubr.bf16.mxu0 0
    %2491 = vmatmul.mubr.bf16.gmra.mxu0 %v2311
    %v2492 = vpop.f32.mrf.mxu0
    %v2493 = vadd.f32 %v2318, %v2492
    %v2494 = vpop.f32.mrf.mxu0
    %v2495 = vadd.f32 %v2322, %v2494
    %v2496 = vpop.f32.mrf.mxu0
    %v2497 = vadd.f32 %v2318, %v2496
    %v2498 = vpop.f32.mrf.mxu0
    %v2499 = vadd.f32 %v2322, %v2498
    %2500 = vmatprep.mubr.bf16.mxu0 0
    %2501 = vmatmul.mubr.bf16.gmra.mxu0 %v2312
    %v2502 = vpop.f32.mrf.mxu0
    %v2503 = vadd.f32 %v2318, %v2502
    %v2504 = vpop.f32.mrf.mxu0
    %v2505 = vadd.f32 %v2322, %v2504
    %v2506 = vpop.f32.mrf.mxu0
    %v2507 = vadd.f32 %v2318, %v2506
    %v2508 = vpop.f32.mrf.mxu0
    %v2509 = vadd.f32 %v2322, %v2508
    %2510 = vdwg.mxu0
    %2511 = vmatprep.subr.bf16.mxu0 0
    %2512 = vmatpush1.bf16.msra.mxu0 %v2433
    %2513 = vmatprep.subr.bf16.mxu0 0
    %2514 = vmatpush1.bf16.msra.mxu0 %v2430
    %2515 = vmatprep.subr.bf16.mxu0 0
    %2516 = vmatpush1.bf16.msra.mxu0 %v2427
    %2517 = vmatprep.subr.bf16.mxu0 0
    %2518 = vmatpush1.bf16.msra.mxu0 %v2424
    %2519 = vmatprep.subr.bf16.mxu0 0
    %2520 = vmatpush1.bf16.msra.mxu0 %v2421
    %2521 = vmatprep.subr.bf16.mxu0 0
    %2522 = vmatpush1.bf16.msra.mxu0 %v2418
    %2523 = vmatprep.subr.bf16.mxu0 0
    %2524 = vmatpush1.bf16.msra.mxu0 %v2415
    %2525 = vmatprep.subr.bf16.mxu0 0
    %2526 = vmatpush1.bf16.msra.mxu0 %v2412
    %2527 = vmatprep.subr.bf16.mxu0 0
    %2528 = vmatpush2.bf16.msra.mxu0 0
    %2529 = vmatprep.subr.bf16.mxu0 0
    %2530 = vmatpush2.bf16.msra.mxu0 0
    %2531 = vmatprep.subr.bf16.mxu0 0
    %2532 = vmatpush2.bf16.msra.mxu0 0
    %2533 = vmatprep.subr.bf16.mxu0 0
    %2534 = vmatpush2.bf16.msra.mxu0 0
    %2535 = vmatprep.subr.bf16.mxu0 0
    %2536 = vmatpush2.bf16.msra.mxu0 0
    %2537 = vmatprep.subr.bf16.mxu0 0
    %2538 = vmatpush2.bf16.msra.mxu0 0
    %2539 = vmatprep.subr.bf16.mxu0 0
    %2540 = vmatpush2.bf16.msra.mxu0 0
    %2541 = vmatprep.subr.bf16.mxu0 0
    %2542 = vmatpush2.bf16.msra.mxu0 0
    %2543 = vmatprep.mubr.bf16.mxu0 0
    %2544 = vmatmul.mubr.bf16.gmra.mxu0 %v2311
    %v2545 = vpop.f32.mrf.mxu0
    %v2546 = vadd.f32 %v2326, %v2545
    %v2547 = vpop.f32.mrf.mxu0
    %v2548 = vpop.f32.mrf.mxu0
    %v2549 = vadd.f32 %v2326, %v2548
    %v2550 = vpop.f32.mrf.mxu0
    %2551 = vmatprep.mubr.bf16.mxu0 0
    %2552 = vmatmul.mubr.bf16.gmra.mxu0 %v2312
    %v2553 = vpop.f32.mrf.mxu0
    %v2554 = vadd.f32 %v2326, %v2553
    %v2555 = vpop.f32.mrf.mxu0
    %v2556 = vpop.f32.mrf.mxu0
    %v2557 = vadd.f32 %v2326, %v2556
    %v2558 = vpop.f32.mrf.mxu0
    %2559 = vdwg.mxu0
    %v2560 = vld [vmem:[#allocation25] sm:$0xf]
    %v2561 = vld [vmem:[#allocation25 + $0x4] sm:$0xf]
    %v2562 = vld [vmem:[#allocation25 + $0x8] sm:$0xf]
    %v2563 = vld [vmem:[#allocation25 + $0xc] sm:$0xf]
    %v2564 = vld [vmem:[#allocation25 + $0x10] sm:$0xf]
    %v2565 = vld [vmem:[#allocation25 + $0x14] sm:$0xf]
    %v2566 = vld [vmem:[#allocation25 + $0x18] sm:$0xf]
    %v2567 = vld [vmem:[#allocation25 + $0x1c] sm:$0xf]
    %v2568 = vld [vmem:[#allocation25 + $0x20] sm:$0xf]
    %v2569 = vld [vmem:[#allocation25 + $0x24] sm:$0xf]
    %v2570 = vld [vmem:[#allocation25 + $0x28] sm:$0xf]
    %v2571 = vld [vmem:[#allocation25 + $0x2c] sm:$0xf]
    %v2572 = vld [vmem:[#allocation25 + $0x30] sm:$0xf]
    %v2573 = vld [vmem:[#allocation25 + $0x34] sm:$0xf]
    %v2574 = vld [vmem:[#allocation25 + $0x38] sm:$0xf]
    %v2575 = vld [vmem:[#allocation25 + $0x3c] sm:$0xf]
    %v2576 = vld [vmem:[#allocation26] sm:$0x1]
    %v2577 = vmul.f32 %v2493, 0.17677669
    %v2578 = vmul.f32 %v2497, 0.17677669
    %v2579 = vmul.f32 %v2503, 0.17677669
    %v2580 = vmul.f32 %v2507, 0.17677669
    %v2581 = vpack.c.bf16 %v2578, %v2577
    %v2582 = vpack.c.bf16 %v2580, %v2579
    %v2583 = vpack.c.bf16 %v2499, %v2495
    %v2584 = vpack.c.bf16 %v2509, %v2505
    %v2585 = vpack.c.bf16 %v2549, %v2546
    %v2586 = vpack.c.bf16 %v2557, %v2554
    %v2588 = vsel %vm874, %v2581, 0
    %v2591 = vsel %vm874, %v2582, 0
    %v2594 = vsel %vm874, %v2583, 0
    %v2597 = vsel %vm874, %v2584, 0
    %2599 = vmatprep.subr.bf16.mxu0 0
    %2600 = vmatpush1.bf16.xpose.msra.mxu0 0
    %2601 = vmatprep.subr.bf16.mxu0 0
    %2602 = vmatpush1.bf16.xpose.msra.mxu0 0
    %2603 = vmatprep.subr.bf16.mxu0 0
    %2604 = vmatpush1.bf16.xpose.msra.mxu0 0
    %2605 = vmatprep.subr.bf16.mxu0 0
    %2606 = vmatpush1.bf16.xpose.msra.mxu0 0
    %2607 = vmatprep.subr.bf16.mxu0 0
    %2608 = vmatpush1.bf16.xpose.msra.mxu0 0
    %2609 = vmatprep.subr.bf16.mxu0 0
    %2610 = vmatpush1.bf16.xpose.msra.mxu0 0
    %2611 = vmatprep.subr.bf16.mxu0 0
    %2612 = vmatpush1.bf16.xpose.msra.mxu0 %v2597
    %2613 = vmatprep.subr.bf16.mxu0 0
    %2614 = vmatpush1.bf16.xpose.msra.mxu0 %v2594
    %2615 = vmatprep.subr.bf16.mxu0 0
    %2616 = vmatpush2.bf16.xpose.msra.mxu0 0
    %2617 = vmatprep.subr.bf16.mxu0 0
    %2618 = vmatpush2.bf16.xpose.msra.mxu0 0
    %2619 = vmatprep.subr.bf16.mxu0 0
    %2620 = vmatpush2.bf16.xpose.msra.mxu0 0
    %2621 = vmatprep.subr.bf16.mxu0 0
    %2622 = vmatpush2.bf16.xpose.msra.mxu0 0
    %2623 = vmatprep.subr.bf16.mxu0 0
    %2624 = vmatpush2.bf16.xpose.msra.mxu0 0
    %2625 = vmatprep.subr.bf16.mxu0 0
    %2626 = vmatpush2.bf16.xpose.msra.mxu0 0
    %2627 = vmatprep.subr.bf16.mxu0 0
    %2628 = vmatpush2.bf16.xpose.msra.mxu0 0
    %2629 = vmatprep.subr.bf16.mxu0 0
    %2630 = vmatpush2.bf16.xpose.msra.mxu0 0
    %2631 = vmatprep.mubr.bf16.mxu0 0
    %2632 = vmatmul.mubr.bf16.gmra.mxu0 %v2588
    %v2633 = vpop.f32.mrf.mxu0
    %v2634 = vadd.f32 %v2271, %v2633
    %v2635 = vpop.f32.mrf.mxu0
    %v2636 = vpop.f32.mrf.mxu0
    %v2637 = vadd.f32 %v2272, %v2636
    %v2638 = vpop.f32.mrf.mxu0
    %2639 = vmatprep.mubr.bf16.mxu0 0
    %2640 = vmatmul.mubr.bf16.gmra.mxu0 %v2591
    %v2641 = vpop.f32.mrf.mxu0
    %v2642 = vadd.f32 %v2273, %v2641
    %v2643 = vpop.f32.mrf.mxu0
    %v2644 = vpop.f32.mrf.mxu0
    %v2645 = vadd.f32 %v2274, %v2644
    %v2646 = vpop.f32.mrf.mxu0
    %2647 = vdwg.mxu0
    %v2648 = vsel %vm874, %v2634, -inf
    %2649 = vmax.xlane.f32.xlu0 %v2648
    %v2650 = vpop.xlane.xlu0 %2649
    %v2651 = vsel %vm874, %v2637, -inf
    %2652 = vmax.xlane.f32.xlu0 %v2651
    %v2653 = vpop.xlane.xlu0 %2652
    %v2654 = vsel %vm874, %v2642, -inf
    %2655 = vmax.xlane.f32.xlu0 %v2654
    %v2656 = vpop.xlane.xlu0 %2655
    %v2657 = vsel %vm874, %v2645, -inf
    %2658 = vmax.xlane.f32.xlu0 %v2657
    %v2659 = vpop.xlane.xlu0 %2658
    %v2660 = vsub.f32 %v2634, %v2650
    %v2661 = vsub.f32 %v2637, %v2653
    %v2662 = vsub.f32 %v2642, %v2656
    %v2663 = vsub.f32 %v2645, %v2659
    %v2664 = vmul.f32 %v2660, 1.442695
    %v2665 = vpow.pop %v2664
    %v2666 = vmul.f32 %v2661, 1.442695
    %v2667 = vpow.pop %v2666
    %v2668 = vmul.f32 %v2662, 1.442695
    %v2669 = vpow.pop %v2668
    %v2670 = vmul.f32 %v2663, 1.442695
    %v2671 = vpow.pop %v2670
    %v2672 = vsel %vm874, %v2665, 0.0
    %2673 = vadd.xlane.f32.xlu0 %v2672
    %v2674 = vpop.xlane.xlu0 %2673
    %v2675 = vsel %vm874, %v2667, 0.0
    %2676 = vadd.xlane.f32.xlu0 %v2675
    %v2677 = vpop.xlane.xlu0 %2676
    %v2678 = vsel %vm874, %v2669, 0.0
    %2679 = vadd.xlane.f32.xlu0 %v2678
    %v2680 = vpop.xlane.xlu0 %2679
    %v2681 = vsel %vm874, %v2671, 0.0
    %2682 = vadd.xlane.f32.xlu0 %v2681
    %v2683 = vpop.xlane.xlu0 %2682
    %v2684 = vrcp.pop %v2674
    %v2685 = vrcp.pop %v2677
    %v2686 = vrcp.pop %v2680
    %v2687 = vrcp.pop %v2683
    %v2688 = vmul.f32 %v2665, %v2684
    %v2689 = vmul.f32 %v2667, %v2685
    %v2690 = vmul.f32 %v2669, %v2686
    %v2691 = vmul.f32 %v2671, %v2687
    %v2692 = vpack.c.bf16 %v2689, %v2688
    %v2693 = vpack.c.bf16 %v2691, %v2690
    %v2695 = vsel %vm874, %v2692, 0
    %v2698 = vsel %vm874, %v2693, 0
    %2700 = vmatprep.subr.bf16.mxu0 0
    %2701 = vmatpush1.bf16.msra.mxu0 0
    %2702 = vmatprep.subr.bf16.mxu0 0
    %2703 = vmatpush1.bf16.msra.mxu0 0
    %2704 = vmatprep.subr.bf16.mxu0 0
    %2705 = vmatpush1.bf16.msra.mxu0 0
    %2706 = vmatprep.subr.bf16.mxu0 0
    %2707 = vmatpush1.bf16.msra.mxu0 0
    %2708 = vmatprep.subr.bf16.mxu0 0
    %2709 = vmatpush1.bf16.msra.mxu0 0
    %2710 = vmatprep.subr.bf16.mxu0 0
    %2711 = vmatpush1.bf16.msra.mxu0 0
    %2712 = vmatprep.subr.bf16.mxu0 0
    %2713 = vmatpush1.bf16.msra.mxu0 %v2586
    %2714 = vmatprep.subr.bf16.mxu0 0
    %2715 = vmatpush1.bf16.msra.mxu0 %v2585
    %2716 = vmatprep.subr.bf16.mxu0 0
    %2717 = vmatpush2.bf16.msra.mxu0 0
    %2718 = vmatprep.subr.bf16.mxu0 0
    %2719 = vmatpush2.bf16.msra.mxu0 0
    %2720 = vmatprep.subr.bf16.mxu0 0
    %2721 = vmatpush2.bf16.msra.mxu0 0
    %2722 = vmatprep.subr.bf16.mxu0 0
    %2723 = vmatpush2.bf16.msra.mxu0 0
    %2724 = vmatprep.subr.bf16.mxu0 0
    %2725 = vmatpush2.bf16.msra.mxu0 0
    %2726 = vmatprep.subr.bf16.mxu0 0
    %2727 = vmatpush2.bf16.msra.mxu0 0
    %2728 = vmatprep.subr.bf16.mxu0 0
    %2729 = vmatpush2.bf16.msra.mxu0 0
    %2730 = vmatprep.subr.bf16.mxu0 0
    %2731 = vmatpush2.bf16.msra.mxu0 0
    %2732 = vmatprep.mubr.bf16.mxu0 0
    %2733 = vmatmul.mubr.bf16.gmra.mxu0 %v2695
    %v2734 = vpop.f32.mrf.mxu0
    %v2735 = vadd.f32 0.0, %v2734
    %v2736 = vpop.f32.mrf.mxu0
    %v2737 = vpop.f32.mrf.mxu0
    %v2738 = vadd.f32 0.0, %v2737
    %v2739 = vpop.f32.mrf.mxu0
    %2740 = vmatprep.mubr.bf16.mxu0 0
    %2741 = vmatmul.mubr.bf16.gmra.mxu0 %v2698
    %v2742 = vpop.f32.mrf.mxu0
    %v2743 = vadd.f32 0.0, %v2742
    %v2744 = vpop.f32.mrf.mxu0
    %v2745 = vpop.f32.mrf.mxu0
    %v2746 = vadd.f32 0.0, %v2745
    %v2747 = vpop.f32.mrf.mxu0
    %2748 = vdwg.mxu0
    %v2749 = vpack.c.bf16 %v2738, %v2735
    %v2750 = vpack.c.bf16 %v2746, %v2743
    %2753 = vrot.lane.b32.xlu0 %v2581, 96
    %v2754 = vpop.permute.xlu0 %2753
    %2755 = vrot.lane.b32.xlu0 %v2582, 96
    %v2756 = vpop.permute.xlu0 %2755
    %2759 = vrot.lane.b32.xlu0 %v2583, 96
    %v2760 = vpop.permute.xlu0 %2759
    %2761 = vrot.lane.b32.xlu0 %v2584, 96
    %v2762 = vpop.permute.xlu0 %2761
    %v2764 = vsel %vm874, %v2754, 0
    %v2767 = vsel %vm874, %v2756, 0
    %v2770 = vsel %vm874, %v2760, 0
    %v2773 = vsel %vm874, %v2762, 0
    %2775 = vmatprep.subr.bf16.mxu0 0
    %2776 = vmatpush1.bf16.xpose.msra.mxu0 0
    %2777 = vmatprep.subr.bf16.mxu0 0
    %2778 = vmatpush1.bf16.xpose.msra.mxu0 0
    %2779 = vmatprep.subr.bf16.mxu0 0
    %2780 = vmatpush1.bf16.xpose.msra.mxu0 0
    %2781 = vmatprep.subr.bf16.mxu0 0
    %2782 = vmatpush1.bf16.xpose.msra.mxu0 0
    %2783 = vmatprep.subr.bf16.mxu0 0
    %2784 = vmatpush1.bf16.xpose.msra.mxu0 0
    %2785 = vmatprep.subr.bf16.mxu0 0
    %2786 = vmatpush1.bf16.xpose.msra.mxu0 0
    %2787 = vmatprep.subr.bf16.mxu0 0
    %2788 = vmatpush1.bf16.xpose.msra.mxu0 %v2773
    %2789 = vmatprep.subr.bf16.mxu0 0
    %2790 = vmatpush1.bf16.xpose.msra.mxu0 %v2770
    %2791 = vmatprep.subr.bf16.mxu0 0
    %2792 = vmatpush2.bf16.xpose.msra.mxu0 0
    %2793 = vmatprep.subr.bf16.mxu0 0
    %2794 = vmatpush2.bf16.xpose.msra.mxu0 0
    %2795 = vmatprep.subr.bf16.mxu0 0
    %2796 = vmatpush2.bf16.xpose.msra.mxu0 0
    %2797 = vmatprep.subr.bf16.mxu0 0
    %2798 = vmatpush2.bf16.xpose.msra.mxu0 0
    %2799 = vmatprep.subr.bf16.mxu0 0
    %2800 = vmatpush2.bf16.xpose.msra.mxu0 0
    %2801 = vmatprep.subr.bf16.mxu0 0
    %2802 = vmatpush2.bf16.xpose.msra.mxu0 0
    %2803 = vmatprep.subr.bf16.mxu0 0
    %2804 = vmatpush2.bf16.xpose.msra.mxu0 0
    %2805 = vmatprep.subr.bf16.mxu0 0
    %2806 = vmatpush2.bf16.xpose.msra.mxu0 0
    %2807 = vmatprep.mubr.bf16.mxu0 0
    %2808 = vmatmul.mubr.bf16.gmra.mxu0 %v2764
    %v2809 = vpop.f32.mrf.mxu0
    %v2810 = vadd.f32 %v2271, %v2809
    %v2811 = vpop.f32.mrf.mxu0
    %v2812 = vpop.f32.mrf.mxu0
    %v2813 = vadd.f32 %v2272, %v2812
    %v2814 = vpop.f32.mrf.mxu0
    %2815 = vmatprep.mubr.bf16.mxu0 0
    %2816 = vmatmul.mubr.bf16.gmra.mxu0 %v2767
    %v2817 = vpop.f32.mrf.mxu0
    %v2818 = vadd.f32 %v2273, %v2817
    %v2819 = vpop.f32.mrf.mxu0
    %v2820 = vpop.f32.mrf.mxu0
    %v2821 = vadd.f32 %v2274, %v2820
    %v2822 = vpop.f32.mrf.mxu0
    %2823 = vdwg.mxu0
    %v2824 = vsel %vm874, %v2810, -inf
    %2825 = vmax.xlane.f32.xlu0 %v2824
    %v2826 = vpop.xlane.xlu0 %2825
    %v2827 = vsel %vm874, %v2813, -inf
    %2828 = vmax.xlane.f32.xlu0 %v2827
    %v2829 = vpop.xlane.xlu0 %2828
    %v2830 = vsel %vm874, %v2818, -inf
    %2831 = vmax.xlane.f32.xlu0 %v2830
    %v2832 = vpop.xlane.xlu0 %2831
    %v2833 = vsel %vm874, %v2821, -inf
    %2834 = vmax.xlane.f32.xlu0 %v2833
    %v2835 = vpop.xlane.xlu0 %2834
    %v2836 = vsub.f32 %v2810, %v2826
    %v2837 = vsub.f32 %v2813, %v2829
    %v2838 = vsub.f32 %v2818, %v2832
    %v2839 = vsub.f32 %v2821, %v2835
    %v2840 = vmul.f32 %v2836, 1.442695
    %v2841 = vpow.pop %v2840
    %v2842 = vmul.f32 %v2837, 1.442695
    %v2843 = vpow.pop %v2842
    %v2844 = vmul.f32 %v2838, 1.442695
    %v2845 = vpow.pop %v2844
    %v2846 = vmul.f32 %v2839, 1.442695
    %v2847 = vpow.pop %v2846
    %v2848 = vsel %vm874, %v2841, 0.0
    %2849 = vadd.xlane.f32.xlu0 %v2848
    %v2850 = vpop.xlane.xlu0 %2849
    %v2851 = vsel %vm874, %v2843, 0.0
    %2852 = vadd.xlane.f32.xlu0 %v2851
    %v2853 = vpop.xlane.xlu0 %2852
    %v2854 = vsel %vm874, %v2845, 0.0
    %2855 = vadd.xlane.f32.xlu0 %v2854
    %v2856 = vpop.xlane.xlu0 %2855
    %v2857 = vsel %vm874, %v2847, 0.0
    %2858 = vadd.xlane.f32.xlu0 %v2857
    %v2859 = vpop.xlane.xlu0 %2858
    %v2860 = vrcp.pop %v2850
    %v2861 = vrcp.pop %v2853
    %v2862 = vrcp.pop %v2856
    %v2863 = vrcp.pop %v2859
    %v2864 = vmul.f32 %v2841, %v2860
    %v2865 = vmul.f32 %v2843, %v2861
    %v2866 = vmul.f32 %v2845, %v2862
    %v2867 = vmul.f32 %v2847, %v2863
    %v2868 = vpack.c.bf16 %v2865, %v2864
    %v2869 = vpack.c.bf16 %v2867, %v2866
    %2872 = vrot.lane.b32.xlu0 %v2585, 96
    %v2873 = vpop.permute.xlu0 %2872
    %2874 = vrot.lane.b32.xlu0 %v2586, 96
    %v2875 = vpop.permute.xlu0 %2874
    %v2879 = vsel %vm874, %v2868, 0
    %v2882 = vsel %vm874, %v2869, 0
    %2884 = vmatprep.subr.bf16.mxu0 0
    %2885 = vmatpush1.bf16.msra.mxu0 0
    %2886 = vmatprep.subr.bf16.mxu0 0
    %2887 = vmatpush1.bf16.msra.mxu0 0
    %2888 = vmatprep.subr.bf16.mxu0 0
    %2889 = vmatpush1.bf16.msra.mxu0 0
    %2890 = vmatprep.subr.bf16.mxu0 0
    %2891 = vmatpush1.bf16.msra.mxu0 0
    %2892 = vmatprep.subr.bf16.mxu0 0
    %2893 = vmatpush1.bf16.msra.mxu0 0
    %2894 = vmatprep.subr.bf16.mxu0 0
    %2895 = vmatpush1.bf16.msra.mxu0 0
    %2896 = vmatprep.subr.bf16.mxu0 0
    %2897 = vmatpush1.bf16.msra.mxu0 %v2875
    %2898 = vmatprep.subr.bf16.mxu0 0
    %2899 = vmatpush1.bf16.msra.mxu0 %v2873
    %2900 = vmatprep.subr.bf16.mxu0 0
    %2901 = vmatpush2.bf16.msra.mxu0 0
    %2902 = vmatprep.subr.bf16.mxu0 0
    %2903 = vmatpush2.bf16.msra.mxu0 0
    %2904 = vmatprep.subr.bf16.mxu0 0
    %2905 = vmatpush2.bf16.msra.mxu0 0
    %2906 = vmatprep.subr.bf16.mxu0 0
    %2907 = vmatpush2.bf16.msra.mxu0 0
    %2908 = vmatprep.subr.bf16.mxu0 0
    %2909 = vmatpush2.bf16.msra.mxu0 0
    %2910 = vmatprep.subr.bf16.mxu0 0
    %2911 = vmatpush2.bf16.msra.mxu0 0
    %2912 = vmatprep.subr.bf16.mxu0 0
    %2913 = vmatpush2.bf16.msra.mxu0 0
    %2914 = vmatprep.subr.bf16.mxu0 0
    %2915 = vmatpush2.bf16.msra.mxu0 0
    %2916 = vmatprep.mubr.bf16.mxu0 0
    %2917 = vmatmul.mubr.bf16.gmra.mxu0 %v2879
    %v2918 = vpop.f32.mrf.mxu0
    %v2919 = vadd.f32 0.0, %v2918
    %v2920 = vpop.f32.mrf.mxu0
    %v2921 = vpop.f32.mrf.mxu0
    %v2922 = vadd.f32 0.0, %v2921
    %v2923 = vpop.f32.mrf.mxu0
    %2924 = vmatprep.mubr.bf16.mxu0 0
    %2925 = vmatmul.mubr.bf16.gmra.mxu0 %v2882
    %v2926 = vpop.f32.mrf.mxu0
    %v2927 = vadd.f32 0.0, %v2926
    %v2928 = vpop.f32.mrf.mxu0
    %v2929 = vpop.f32.mrf.mxu0
    %v2930 = vadd.f32 0.0, %v2929
    %v2931 = vpop.f32.mrf.mxu0
    %2932 = vdwg.mxu0
    %v2933 = vpack.c.bf16 %v2922, %v2919
    %v2934 = vpack.c.bf16 %v2930, %v2927
    %v2939 = vunpack.c.l.b16 %v2564
    %v2940 = vunpack.c.l.b16 %v2565
    %v2941 = vunpack.c.l.b16 %v2566
    %v2942 = vunpack.c.l.b16 %v2567
    %v2943 = vpack.c.b16 %v2940, %v2939
    %v2944 = vpack.c.b16 %v2942, %v2941
    %v2948 = vsel %vm874, %v2933, 0
    %v2951 = vsel %vm874, %v2934, 0
    %2953 = vmatprep.subr.bf16.mxu0 0
    %2954 = vmatpush1.bf16.msra.mxu0 0
    %2955 = vmatprep.subr.bf16.mxu0 0
    %2956 = vmatpush1.bf16.msra.mxu0 0
    %2957 = vmatprep.subr.bf16.mxu0 0
    %2958 = vmatpush1.bf16.msra.mxu0 0
    %2959 = vmatprep.subr.bf16.mxu0 0
    %2960 = vmatpush1.bf16.msra.mxu0 0
    %2961 = vmatprep.subr.bf16.mxu0 0
    %2962 = vmatpush1.bf16.msra.mxu0 0
    %2963 = vmatprep.subr.bf16.mxu0 0
    %2964 = vmatpush1.bf16.msra.mxu0 0
    %2965 = vmatprep.subr.bf16.mxu0 0
    %2966 = vmatpush1.bf16.msra.mxu0 %v2944
    %2967 = vmatprep.subr.bf16.mxu0 0
    %2968 = vmatpush1.bf16.msra.mxu0 %v2943
    %2969 = vmatprep.subr.bf16.mxu0 0
    %2970 = vmatpush2.bf16.msra.mxu0 0
    %2971 = vmatprep.subr.bf16.mxu0 0
    %2972 = vmatpush2.bf16.msra.mxu0 0
    %2973 = vmatprep.subr.bf16.mxu0 0
    %2974 = vmatpush2.bf16.msra.mxu0 0
    %2975 = vmatprep.subr.bf16.mxu0 0
    %2976 = vmatpush2.bf16.msra.mxu0 0
    %2977 = vmatprep.subr.bf16.mxu0 0
    %2978 = vmatpush2.bf16.msra.mxu0 0
    %2979 = vmatprep.subr.bf16.mxu0 0
    %2980 = vmatpush2.bf16.msra.mxu0 0
    %2981 = vmatprep.subr.bf16.mxu0 0
    %2982 = vmatpush2.bf16.msra.mxu0 0
    %2983 = vmatprep.subr.bf16.mxu0 0
    %2984 = vmatpush2.bf16.msra.mxu0 0
    %2985 = vmatprep.mubr.bf16.mxu0 0
    %2986 = vmatmul.mubr.bf16.gmra.mxu0 %v2948
    %v2987 = vpop.f32.mrf.mxu0
    %v2988 = vadd.f32 0.0, %v2987
    %v2989 = vpop.f32.mrf.mxu0
    %v2990 = vpop.f32.mrf.mxu0
    %v2991 = vadd.f32 0.0, %v2990
    %v2992 = vpop.f32.mrf.mxu0
    %2993 = vmatprep.mubr.bf16.mxu0 0
    %2994 = vmatmul.mubr.bf16.gmra.mxu0 %v2951
    %v2995 = vpop.f32.mrf.mxu0
    %v2996 = vadd.f32 0.0, %v2995
    %v2997 = vpop.f32.mrf.mxu0
    %v2998 = vpop.f32.mrf.mxu0
    %v2999 = vadd.f32 0.0, %v2998
    %v3000 = vpop.f32.mrf.mxu0
    %3001 = vdwg.mxu0
    %v3006 = vunpack.c.l.b16 %v2560
    %v3007 = vunpack.c.l.b16 %v2561
    %v3008 = vunpack.c.l.b16 %v2562
    %v3009 = vunpack.c.l.b16 %v2563
    %v3010 = vpack.c.b16 %v3007, %v3006
    %v3011 = vpack.c.b16 %v3009, %v3008
    %v3015 = vsel %vm874, %v2749, 0
    %v3018 = vsel %vm874, %v2750, 0
    %3020 = vmatprep.subr.bf16.mxu0 0
    %3021 = vmatpush1.bf16.msra.mxu0 0
    %3022 = vmatprep.subr.bf16.mxu0 0
    %3023 = vmatpush1.bf16.msra.mxu0 0
    %3024 = vmatprep.subr.bf16.mxu0 0
    %3025 = vmatpush1.bf16.msra.mxu0 0
    %3026 = vmatprep.subr.bf16.mxu0 0
    %3027 = vmatpush1.bf16.msra.mxu0 0
    %3028 = vmatprep.subr.bf16.mxu0 0
    %3029 = vmatpush1.bf16.msra.mxu0 0
    %3030 = vmatprep.subr.bf16.mxu0 0
    %3031 = vmatpush1.bf16.msra.mxu0 0
    %3032 = vmatprep.subr.bf16.mxu0 0
    %3033 = vmatpush1.bf16.msra.mxu0 %v3011
    %3034 = vmatprep.subr.bf16.mxu0 0
    %3035 = vmatpush1.bf16.msra.mxu0 %v3010
    %3036 = vmatprep.subr.bf16.mxu0 0
    %3037 = vmatpush2.bf16.msra.mxu0 0
    %3038 = vmatprep.subr.bf16.mxu0 0
    %3039 = vmatpush2.bf16.msra.mxu0 0
    %3040 = vmatprep.subr.bf16.mxu0 0
    %3041 = vmatpush2.bf16.msra.mxu0 0
    %3042 = vmatprep.subr.bf16.mxu0 0
    %3043 = vmatpush2.bf16.msra.mxu0 0
    %3044 = vmatprep.subr.bf16.mxu0 0
    %3045 = vmatpush2.bf16.msra.mxu0 0
    %3046 = vmatprep.subr.bf16.mxu0 0
    %3047 = vmatpush2.bf16.msra.mxu0 0
    %3048 = vmatprep.subr.bf16.mxu0 0
    %3049 = vmatpush2.bf16.msra.mxu0 0
    %3050 = vmatprep.subr.bf16.mxu0 0
    %3051 = vmatpush2.bf16.msra.mxu0 0
    %3052 = vmatprep.mubr.bf16.mxu0 0
    %3053 = vmatmul.mubr.bf16.gmra.mxu0 %v3015
    %v3054 = vpop.f32.mrf.mxu0
    %v3055 = vadd.f32 %v2988, %v3054
    %v3056 = vpop.f32.mrf.mxu0
    %v3057 = vpop.f32.mrf.mxu0
    %v3058 = vadd.f32 %v2991, %v3057
    %v3059 = vpop.f32.mrf.mxu0
    %3060 = vmatprep.mubr.bf16.mxu0 0
    %3061 = vmatmul.mubr.bf16.gmra.mxu0 %v3018
    %v3062 = vpop.f32.mrf.mxu0
    %v3063 = vadd.f32 %v2996, %v3062
    %v3064 = vpop.f32.mrf.mxu0
    %v3065 = vpop.f32.mrf.mxu0
    %v3066 = vadd.f32 %v2999, %v3065
    %v3067 = vpop.f32.mrf.mxu0
    %3068 = vdwg.mxu0
    %3069 = vrot.lane.b32.xlu0 %v2581, 64
    %v3070 = vpop.permute.xlu0 %3069
    %3071 = vrot.lane.b32.xlu0 %v2582, 64
    %v3072 = vpop.permute.xlu0 %3071
    %3073 = vrot.lane.b32.xlu0 %v2583, 64
    %v3074 = vpop.permute.xlu0 %3073
    %3075 = vrot.lane.b32.xlu0 %v2584, 64
    %v3076 = vpop.permute.xlu0 %3075
    %v3078 = vsel %vm874, %v3070, 0
    %v3081 = vsel %vm874, %v3072, 0
    %v3084 = vsel %vm874, %v3074, 0
    %v3087 = vsel %vm874, %v3076, 0
    %3089 = vmatprep.subr.bf16.mxu0 0
    %3090 = vmatpush1.bf16.xpose.msra.mxu0 0
    %3091 = vmatprep.subr.bf16.mxu0 0
    %3092 = vmatpush1.bf16.xpose.msra.mxu0 0
    %3093 = vmatprep.subr.bf16.mxu0 0
    %3094 = vmatpush1.bf16.xpose.msra.mxu0 0
    %3095 = vmatprep.subr.bf16.mxu0 0
    %3096 = vmatpush1.bf16.xpose.msra.mxu0 0
    %3097 = vmatprep.subr.bf16.mxu0 0
    %3098 = vmatpush1.bf16.xpose.msra.mxu0 0
    %3099 = vmatprep.subr.bf16.mxu0 0
    %3100 = vmatpush1.bf16.xpose.msra.mxu0 0
    %3101 = vmatprep.subr.bf16.mxu0 0
    %3102 = vmatpush1.bf16.xpose.msra.mxu0 %v3087
    %3103 = vmatprep.subr.bf16.mxu0 0
    %3104 = vmatpush1.bf16.xpose.msra.mxu0 %v3084
    %3105 = vmatprep.subr.bf16.mxu0 0
    %3106 = vmatpush2.bf16.xpose.msra.mxu0 0
    %3107 = vmatprep.subr.bf16.mxu0 0
    %3108 = vmatpush2.bf16.xpose.msra.mxu0 0
    %3109 = vmatprep.subr.bf16.mxu0 0
    %3110 = vmatpush2.bf16.xpose.msra.mxu0 0
    %3111 = vmatprep.subr.bf16.mxu0 0
    %3112 = vmatpush2.bf16.xpose.msra.mxu0 0
    %3113 = vmatprep.subr.bf16.mxu0 0
    %3114 = vmatpush2.bf16.xpose.msra.mxu0 0
    %3115 = vmatprep.subr.bf16.mxu0 0
    %3116 = vmatpush2.bf16.xpose.msra.mxu0 0
    %3117 = vmatprep.subr.bf16.mxu0 0
    %3118 = vmatpush2.bf16.xpose.msra.mxu0 0
    %3119 = vmatprep.subr.bf16.mxu0 0
    %3120 = vmatpush2.bf16.xpose.msra.mxu0 0
    %3121 = vmatprep.mubr.bf16.mxu0 0
    %3122 = vmatmul.mubr.bf16.gmra.mxu0 %v3078
    %v3123 = vpop.f32.mrf.mxu0
    %v3124 = vadd.f32 %v2271, %v3123
    %v3125 = vpop.f32.mrf.mxu0
    %v3126 = vpop.f32.mrf.mxu0
    %v3127 = vadd.f32 %v2272, %v3126
    %v3128 = vpop.f32.mrf.mxu0
    %3129 = vmatprep.mubr.bf16.mxu0 0
    %3130 = vmatmul.mubr.bf16.gmra.mxu0 %v3081
    %v3131 = vpop.f32.mrf.mxu0
    %v3132 = vadd.f32 %v2273, %v3131
    %v3133 = vpop.f32.mrf.mxu0
    %v3134 = vpop.f32.mrf.mxu0
    %v3135 = vadd.f32 %v2274, %v3134
    %v3136 = vpop.f32.mrf.mxu0
    %3137 = vdwg.mxu0
    %v3138 = vsel %vm874, %v3124, -inf
    %3139 = vmax.xlane.f32.xlu0 %v3138
    %v3140 = vpop.xlane.xlu0 %3139
    %v3141 = vsel %vm874, %v3127, -inf
    %3142 = vmax.xlane.f32.xlu0 %v3141
    %v3143 = vpop.xlane.xlu0 %3142
    %v3144 = vsel %vm874, %v3132, -inf
    %3145 = vmax.xlane.f32.xlu0 %v3144
    %v3146 = vpop.xlane.xlu0 %3145
    %v3147 = vsel %vm874, %v3135, -inf
    %3148 = vmax.xlane.f32.xlu0 %v3147
    %v3149 = vpop.xlane.xlu0 %3148
    %v3150 = vsub.f32 %v3124, %v3140
    %v3151 = vsub.f32 %v3127, %v3143
    %v3152 = vsub.f32 %v3132, %v3146
    %v3153 = vsub.f32 %v3135, %v3149
    %v3154 = vmul.f32 %v3150, 1.442695
    %v3155 = vpow.pop %v3154
    %v3156 = vmul.f32 %v3151, 1.442695
    %v3157 = vpow.pop %v3156
    %v3158 = vmul.f32 %v3152, 1.442695
    %v3159 = vpow.pop %v3158
    %v3160 = vmul.f32 %v3153, 1.442695
    %v3161 = vpow.pop %v3160
    %v3162 = vsel %vm874, %v3155, 0.0
    %3163 = vadd.xlane.f32.xlu0 %v3162
    %v3164 = vpop.xlane.xlu0 %3163
    %v3165 = vsel %vm874, %v3157, 0.0
    %3166 = vadd.xlane.f32.xlu0 %v3165
    %v3167 = vpop.xlane.xlu0 %3166
    %v3168 = vsel %vm874, %v3159, 0.0
    %3169 = vadd.xlane.f32.xlu0 %v3168
    %v3170 = vpop.xlane.xlu0 %3169
    %v3171 = vsel %vm874, %v3161, 0.0
    %3172 = vadd.xlane.f32.xlu0 %v3171
    %v3173 = vpop.xlane.xlu0 %3172
    %v3174 = vrcp.pop %v3164
    %v3175 = vrcp.pop %v3167
    %v3176 = vrcp.pop %v3170
    %v3177 = vrcp.pop %v3173
    %v3178 = vmul.f32 %v3155, %v3174
    %v3179 = vmul.f32 %v3157, %v3175
    %v3180 = vmul.f32 %v3159, %v3176
    %v3181 = vmul.f32 %v3161, %v3177
    %v3182 = vpack.c.bf16 %v3179, %v3178
    %v3183 = vpack.c.bf16 %v3181, %v3180
    %3184 = vrot.lane.b32.xlu0 %v2585, 64
    %v3185 = vpop.permute.xlu0 %3184
    %3186 = vrot.lane.b32.xlu0 %v2586, 64
    %v3187 = vpop.permute.xlu0 %3186
    %v3191 = vsel %vm874, %v3182, 0
    %v3194 = vsel %vm874, %v3183, 0
    %3196 = vmatprep.subr.bf16.mxu0 0
    %3197 = vmatpush1.bf16.msra.mxu0 0
    %3198 = vmatprep.subr.bf16.mxu0 0
    %3199 = vmatpush1.bf16.msra.mxu0 0
    %3200 = vmatprep.subr.bf16.mxu0 0
    %3201 = vmatpush1.bf16.msra.mxu0 0
    %3202 = vmatprep.subr.bf16.mxu0 0
    %3203 = vmatpush1.bf16.msra.mxu0 0
    %3204 = vmatprep.subr.bf16.mxu0 0
    %3205 = vmatpush1.bf16.msra.mxu0 0
    %3206 = vmatprep.subr.bf16.mxu0 0
    %3207 = vmatpush1.bf16.msra.mxu0 0
    %3208 = vmatprep.subr.bf16.mxu0 0
    %3209 = vmatpush1.bf16.msra.mxu0 %v3187
    %3210 = vmatprep.subr.bf16.mxu0 0
    %3211 = vmatpush1.bf16.msra.mxu0 %v3185
    %3212 = vmatprep.subr.bf16.mxu0 0
    %3213 = vmatpush2.bf16.msra.mxu0 0
    %3214 = vmatprep.subr.bf16.mxu0 0
    %3215 = vmatpush2.bf16.msra.mxu0 0
    %3216 = vmatprep.subr.bf16.mxu0 0
    %3217 = vmatpush2.bf16.msra.mxu0 0
    %3218 = vmatprep.subr.bf16.mxu0 0
    %3219 = vmatpush2.bf16.msra.mxu0 0
    %3220 = vmatprep.subr.bf16.mxu0 0
    %3221 = vmatpush2.bf16.msra.mxu0 0
    %3222 = vmatprep.subr.bf16.mxu0 0
    %3223 = vmatpush2.bf16.msra.mxu0 0
    %3224 = vmatprep.subr.bf16.mxu0 0
    %3225 = vmatpush2.bf16.msra.mxu0 0
    %3226 = vmatprep.subr.bf16.mxu0 0
    %3227 = vmatpush2.bf16.msra.mxu0 0
    %3228 = vmatprep.mubr.bf16.mxu0 0
    %3229 = vmatmul.mubr.bf16.gmra.mxu0 %v3191
    %v3230 = vpop.f32.mrf.mxu0
    %v3231 = vadd.f32 0.0, %v3230
    %v3232 = vpop.f32.mrf.mxu0
    %v3233 = vpop.f32.mrf.mxu0
    %v3234 = vadd.f32 0.0, %v3233
    %v3235 = vpop.f32.mrf.mxu0
    %3236 = vmatprep.mubr.bf16.mxu0 0
    %3237 = vmatmul.mubr.bf16.gmra.mxu0 %v3194
    %v3238 = vpop.f32.mrf.mxu0
    %v3239 = vadd.f32 0.0, %v3238
    %v3240 = vpop.f32.mrf.mxu0
    %v3241 = vpop.f32.mrf.mxu0
    %v3242 = vadd.f32 0.0, %v3241
    %v3243 = vpop.f32.mrf.mxu0
    %3244 = vdwg.mxu0
    %v3245 = vpack.c.bf16 %v3234, %v3231
    %v3246 = vpack.c.bf16 %v3242, %v3239
    %v3251 = vunpack.c.l.b16 %v2568
    %v3252 = vunpack.c.l.b16 %v2569
    %v3253 = vunpack.c.l.b16 %v2570
    %v3254 = vunpack.c.l.b16 %v2571
    %v3255 = vpack.c.b16 %v3252, %v3251
    %v3256 = vpack.c.b16 %v3254, %v3253
    %v3260 = vsel %vm874, %v3245, 0
    %v3263 = vsel %vm874, %v3246, 0
    %3265 = vmatprep.subr.bf16.mxu0 0
    %3266 = vmatpush1.bf16.msra.mxu0 0
    %3267 = vmatprep.subr.bf16.mxu0 0
    %3268 = vmatpush1.bf16.msra.mxu0 0
    %3269 = vmatprep.subr.bf16.mxu0 0
    %3270 = vmatpush1.bf16.msra.mxu0 0
    %3271 = vmatprep.subr.bf16.mxu0 0
    %3272 = vmatpush1.bf16.msra.mxu0 0
    %3273 = vmatprep.subr.bf16.mxu0 0
    %3274 = vmatpush1.bf16.msra.mxu0 0
    %3275 = vmatprep.subr.bf16.mxu0 0
    %3276 = vmatpush1.bf16.msra.mxu0 0
    %3277 = vmatprep.subr.bf16.mxu0 0
    %3278 = vmatpush1.bf16.msra.mxu0 %v3256
    %3279 = vmatprep.subr.bf16.mxu0 0
    %3280 = vmatpush1.bf16.msra.mxu0 %v3255
    %3281 = vmatprep.subr.bf16.mxu0 0
    %3282 = vmatpush2.bf16.msra.mxu0 0
    %3283 = vmatprep.subr.bf16.mxu0 0
    %3284 = vmatpush2.bf16.msra.mxu0 0
    %3285 = vmatprep.subr.bf16.mxu0 0
    %3286 = vmatpush2.bf16.msra.mxu0 0
    %3287 = vmatprep.subr.bf16.mxu0 0
    %3288 = vmatpush2.bf16.msra.mxu0 0
    %3289 = vmatprep.subr.bf16.mxu0 0
    %3290 = vmatpush2.bf16.msra.mxu0 0
    %3291 = vmatprep.subr.bf16.mxu0 0
    %3292 = vmatpush2.bf16.msra.mxu0 0
    %3293 = vmatprep.subr.bf16.mxu0 0
    %3294 = vmatpush2.bf16.msra.mxu0 0
    %3295 = vmatprep.subr.bf16.mxu0 0
    %3296 = vmatpush2.bf16.msra.mxu0 0
    %3297 = vmatprep.mubr.bf16.mxu0 0
    %3298 = vmatmul.mubr.bf16.gmra.mxu0 %v3260
    %v3299 = vpop.f32.mrf.mxu0
    %v3300 = vadd.f32 0.0, %v3299
    %v3301 = vpop.f32.mrf.mxu0
    %v3302 = vpop.f32.mrf.mxu0
    %v3303 = vadd.f32 0.0, %v3302
    %v3304 = vpop.f32.mrf.mxu0
    %3305 = vmatprep.mubr.bf16.mxu0 0
    %3306 = vmatmul.mubr.bf16.gmra.mxu0 %v3263
    %v3307 = vpop.f32.mrf.mxu0
    %v3308 = vadd.f32 0.0, %v3307
    %v3309 = vpop.f32.mrf.mxu0
    %v3310 = vpop.f32.mrf.mxu0
    %v3311 = vadd.f32 0.0, %v3310
    %v3312 = vpop.f32.mrf.mxu0
    %3313 = vdwg.mxu0
    %v3314 = vadd.f32 %v3055, %v3300
    %v3315 = vadd.f32 %v3058, %v3303
    %v3316 = vadd.f32 %v3063, %v3308
    %v3317 = vadd.f32 %v3066, %v3311
    %3318 = vrot.lane.b32.xlu0 %v2581, 32
    %v3319 = vpop.permute.xlu0 %3318
    %3320 = vrot.lane.b32.xlu0 %v2582, 32
    %v3321 = vpop.permute.xlu0 %3320
    %3322 = vrot.lane.b32.xlu0 %v2583, 32
    %v3323 = vpop.permute.xlu0 %3322
    %3324 = vrot.lane.b32.xlu0 %v2584, 32
    %v3325 = vpop.permute.xlu0 %3324
    %v3327 = vsel %vm874, %v3319, 0
    %v3330 = vsel %vm874, %v3321, 0
    %v3333 = vsel %vm874, %v3323, 0
    %v3336 = vsel %vm874, %v3325, 0
    %3338 = vmatprep.subr.bf16.mxu0 0
    %3339 = vmatpush1.bf16.xpose.msra.mxu0 0
    %3340 = vmatprep.subr.bf16.mxu0 0
    %3341 = vmatpush1.bf16.xpose.msra.mxu0 0
    %3342 = vmatprep.subr.bf16.mxu0 0
    %3343 = vmatpush1.bf16.xpose.msra.mxu0 0
    %3344 = vmatprep.subr.bf16.mxu0 0
    %3345 = vmatpush1.bf16.xpose.msra.mxu0 0
    %3346 = vmatprep.subr.bf16.mxu0 0
    %3347 = vmatpush1.bf16.xpose.msra.mxu0 0
    %3348 = vmatprep.subr.bf16.mxu0 0
    %3349 = vmatpush1.bf16.xpose.msra.mxu0 0
    %3350 = vmatprep.subr.bf16.mxu0 0
    %3351 = vmatpush1.bf16.xpose.msra.mxu0 %v3336
    %3352 = vmatprep.subr.bf16.mxu0 0
    %3353 = vmatpush1.bf16.xpose.msra.mxu0 %v3333
    %3354 = vmatprep.subr.bf16.mxu0 0
    %3355 = vmatpush2.bf16.xpose.msra.mxu0 0
    %3356 = vmatprep.subr.bf16.mxu0 0
    %3357 = vmatpush2.bf16.xpose.msra.mxu0 0
    %3358 = vmatprep.subr.bf16.mxu0 0
    %3359 = vmatpush2.bf16.xpose.msra.mxu0 0
    %3360 = vmatprep.subr.bf16.mxu0 0
    %3361 = vmatpush2.bf16.xpose.msra.mxu0 0
    %3362 = vmatprep.subr.bf16.mxu0 0
    %3363 = vmatpush2.bf16.xpose.msra.mxu0 0
    %3364 = vmatprep.subr.bf16.mxu0 0
    %3365 = vmatpush2.bf16.xpose.msra.mxu0 0
    %3366 = vmatprep.subr.bf16.mxu0 0
    %3367 = vmatpush2.bf16.xpose.msra.mxu0 0
    %3368 = vmatprep.subr.bf16.mxu0 0
    %3369 = vmatpush2.bf16.xpose.msra.mxu0 0
    %3370 = vmatprep.mubr.bf16.mxu0 0
    %3371 = vmatmul.mubr.bf16.gmra.mxu0 %v3327
    %v3372 = vpop.f32.mrf.mxu0
    %v3373 = vadd.f32 %v2271, %v3372
    %v3374 = vpop.f32.mrf.mxu0
    %v3375 = vpop.f32.mrf.mxu0
    %v3376 = vadd.f32 %v2272, %v3375
    %v3377 = vpop.f32.mrf.mxu0
    %3378 = vmatprep.mubr.bf16.mxu0 0
    %3379 = vmatmul.mubr.bf16.gmra.mxu0 %v3330
    %v3380 = vpop.f32.mrf.mxu0
    %v3381 = vadd.f32 %v2273, %v3380
    %v3382 = vpop.f32.mrf.mxu0
    %v3383 = vpop.f32.mrf.mxu0
    %v3384 = vadd.f32 %v2274, %v3383
    %v3385 = vpop.f32.mrf.mxu0
    %3386 = vdwg.mxu0
    %v3387 = vsel %vm874, %v3373, -inf
    %3388 = vmax.xlane.f32.xlu0 %v3387
    %v3389 = vpop.xlane.xlu0 %3388
    %v3390 = vsel %vm874, %v3376, -inf
    %3391 = vmax.xlane.f32.xlu0 %v3390
    %v3392 = vpop.xlane.xlu0 %3391
    %v3393 = vsel %vm874, %v3381, -inf
    %3394 = vmax.xlane.f32.xlu0 %v3393
    %v3395 = vpop.xlane.xlu0 %3394
    %v3396 = vsel %vm874, %v3384, -inf
    %3397 = vmax.xlane.f32.xlu0 %v3396
    %v3398 = vpop.xlane.xlu0 %3397
    %v3399 = vsub.f32 %v3373, %v3389
    %v3400 = vsub.f32 %v3376, %v3392
    %v3401 = vsub.f32 %v3381, %v3395
    %v3402 = vsub.f32 %v3384, %v3398
    %v3403 = vmul.f32 %v3399, 1.442695
    %v3404 = vpow.pop %v3403
    %v3405 = vmul.f32 %v3400, 1.442695
    %v3406 = vpow.pop %v3405
    %v3407 = vmul.f32 %v3401, 1.442695
    %v3408 = vpow.pop %v3407
    %v3409 = vmul.f32 %v3402, 1.442695
    %v3410 = vpow.pop %v3409
    %v3411 = vsel %vm874, %v3404, 0.0
    %3412 = vadd.xlane.f32.xlu0 %v3411
    %v3413 = vpop.xlane.xlu0 %3412
    %v3414 = vsel %vm874, %v3406, 0.0
    %3415 = vadd.xlane.f32.xlu0 %v3414
    %v3416 = vpop.xlane.xlu0 %3415
    %v3417 = vsel %vm874, %v3408, 0.0
    %3418 = vadd.xlane.f32.xlu0 %v3417
    %v3419 = vpop.xlane.xlu0 %3418
    %v3420 = vsel %vm874, %v3410, 0.0
    %3421 = vadd.xlane.f32.xlu0 %v3420
    %v3422 = vpop.xlane.xlu0 %3421
    %v3423 = vrcp.pop %v3413
    %v3424 = vrcp.pop %v3416
    %v3425 = vrcp.pop %v3419
    %v3426 = vrcp.pop %v3422
    %v3427 = vmul.f32 %v3404, %v3423
    %v3428 = vmul.f32 %v3406, %v3424
    %v3429 = vmul.f32 %v3408, %v3425
    %v3430 = vmul.f32 %v3410, %v3426
    %v3431 = vpack.c.bf16 %v3428, %v3427
    %v3432 = vpack.c.bf16 %v3430, %v3429
    %3433 = vrot.lane.b32.xlu0 %v2585, 32
    %v3434 = vpop.permute.xlu0 %3433
    %3435 = vrot.lane.b32.xlu0 %v2586, 32
    %v3436 = vpop.permute.xlu0 %3435
    %v3440 = vsel %vm874, %v3431, 0
    %v3443 = vsel %vm874, %v3432, 0
    %3445 = vmatprep.subr.bf16.mxu0 0
    %3446 = vmatpush1.bf16.msra.mxu0 0
    %3447 = vmatprep.subr.bf16.mxu0 0
    %3448 = vmatpush1.bf16.msra.mxu0 0
    %3449 = vmatprep.subr.bf16.mxu0 0
    %3450 = vmatpush1.bf16.msra.mxu0 0
    %3451 = vmatprep.subr.bf16.mxu0 0
    %3452 = vmatpush1.bf16.msra.mxu0 0
    %3453 = vmatprep.subr.bf16.mxu0 0
    %3454 = vmatpush1.bf16.msra.mxu0 0
    %3455 = vmatprep.subr.bf16.mxu0 0
    %3456 = vmatpush1.bf16.msra.mxu0 0
    %3457 = vmatprep.subr.bf16.mxu0 0
    %3458 = vmatpush1.bf16.msra.mxu0 %v3436
    %3459 = vmatprep.subr.bf16.mxu0 0
    %3460 = vmatpush1.bf16.msra.mxu0 %v3434
    %3461 = vmatprep.subr.bf16.mxu0 0
    %3462 = vmatpush2.bf16.msra.mxu0 0
    %3463 = vmatprep.subr.bf16.mxu0 0
    %3464 = vmatpush2.bf16.msra.mxu0 0
    %3465 = vmatprep.subr.bf16.mxu0 0
    %3466 = vmatpush2.bf16.msra.mxu0 0
    %3467 = vmatprep.subr.bf16.mxu0 0
    %3468 = vmatpush2.bf16.msra.mxu0 0
    %3469 = vmatprep.subr.bf16.mxu0 0
    %3470 = vmatpush2.bf16.msra.mxu0 0
    %3471 = vmatprep.subr.bf16.mxu0 0
    %3472 = vmatpush2.bf16.msra.mxu0 0
    %3473 = vmatprep.subr.bf16.mxu0 0
    %3474 = vmatpush2.bf16.msra.mxu0 0
    %3475 = vmatprep.subr.bf16.mxu0 0
    %3476 = vmatpush2.bf16.msra.mxu0 0
    %3477 = vmatprep.mubr.bf16.mxu0 0
    %3478 = vmatmul.mubr.bf16.gmra.mxu0 %v3440
    %v3479 = vpop.f32.mrf.mxu0
    %v3480 = vadd.f32 0.0, %v3479
    %v3481 = vpop.f32.mrf.mxu0
    %v3482 = vpop.f32.mrf.mxu0
    %v3483 = vadd.f32 0.0, %v3482
    %v3484 = vpop.f32.mrf.mxu0
    %3485 = vmatprep.mubr.bf16.mxu0 0
    %3486 = vmatmul.mubr.bf16.gmra.mxu0 %v3443
    %v3487 = vpop.f32.mrf.mxu0
    %v3488 = vadd.f32 0.0, %v3487
    %v3489 = vpop.f32.mrf.mxu0
    %v3490 = vpop.f32.mrf.mxu0
    %v3491 = vadd.f32 0.0, %v3490
    %v3492 = vpop.f32.mrf.mxu0
    %3493 = vdwg.mxu0
    %v3494 = vpack.c.bf16 %v3483, %v3480
    %v3495 = vpack.c.bf16 %v3491, %v3488
    %v3500 = vunpack.c.l.b16 %v2572
    %v3501 = vunpack.c.l.b16 %v2573
    %v3502 = vunpack.c.l.b16 %v2574
    %v3503 = vunpack.c.l.b16 %v2575
    %v3504 = vpack.c.b16 %v3501, %v3500
    %v3505 = vpack.c.b16 %v3503, %v3502
    %v3509 = vsel %vm874, %v3494, 0
    %v3512 = vsel %vm874, %v3495, 0
    %3514 = vmatprep.subr.bf16.mxu0 0
    %3515 = vmatpush1.bf16.msra.mxu0 0
    %3516 = vmatprep.subr.bf16.mxu0 0
    %3517 = vmatpush1.bf16.msra.mxu0 0
    %3518 = vmatprep.subr.bf16.mxu0 0
    %3519 = vmatpush1.bf16.msra.mxu0 0
    %3520 = vmatprep.subr.bf16.mxu0 0
    %3521 = vmatpush1.bf16.msra.mxu0 0
    %3522 = vmatprep.subr.bf16.mxu0 0
    %3523 = vmatpush1.bf16.msra.mxu0 0
    %3524 = vmatprep.subr.bf16.mxu0 0
    %3525 = vmatpush1.bf16.msra.mxu0 0
    %3526 = vmatprep.subr.bf16.mxu0 0
    %3527 = vmatpush1.bf16.msra.mxu0 %v3505
    %3528 = vmatprep.subr.bf16.mxu0 0
    %3529 = vmatpush1.bf16.msra.mxu0 %v3504
    %3530 = vmatprep.subr.bf16.mxu0 0
    %3531 = vmatpush2.bf16.msra.mxu0 0
    %3532 = vmatprep.subr.bf16.mxu0 0
    %3533 = vmatpush2.bf16.msra.mxu0 0
    %3534 = vmatprep.subr.bf16.mxu0 0
    %3535 = vmatpush2.bf16.msra.mxu0 0
    %3536 = vmatprep.subr.bf16.mxu0 0
    %3537 = vmatpush2.bf16.msra.mxu0 0
    %3538 = vmatprep.subr.bf16.mxu0 0
    %3539 = vmatpush2.bf16.msra.mxu0 0
    %3540 = vmatprep.subr.bf16.mxu0 0
    %3541 = vmatpush2.bf16.msra.mxu0 0
    %3542 = vmatprep.subr.bf16.mxu0 0
    %3543 = vmatpush2.bf16.msra.mxu0 0
    %3544 = vmatprep.subr.bf16.mxu0 0
    %3545 = vmatpush2.bf16.msra.mxu0 0
    %3546 = vmatprep.mubr.bf16.mxu0 0
    %3547 = vmatmul.mubr.bf16.gmra.mxu0 %v3509
    %v3548 = vpop.f32.mrf.mxu0
    %v3549 = vadd.f32 0.0, %v3548
    %v3550 = vpop.f32.mrf.mxu0
    %v3551 = vpop.f32.mrf.mxu0
    %v3552 = vadd.f32 0.0, %v3551
    %v3553 = vpop.f32.mrf.mxu0
    %3554 = vmatprep.mubr.bf16.mxu0 0
    %3555 = vmatmul.mubr.bf16.gmra.mxu0 %v3512
    %v3556 = vpop.f32.mrf.mxu0
    %v3557 = vadd.f32 0.0, %v3556
    %v3558 = vpop.f32.mrf.mxu0
    %v3559 = vpop.f32.mrf.mxu0
    %v3560 = vadd.f32 0.0, %v3559
    %v3561 = vpop.f32.mrf.mxu0
    %3562 = vdwg.mxu0
    %v3563 = vadd.f32 %v3314, %v3549
    %v3564 = vadd.f32 %v3315, %v3552
    %v3565 = vadd.f32 %v3316, %v3557
    %v3566 = vadd.f32 %v3317, %v3560
    %v3568 = vlaneseq
    %v3569 = vshrl.u32 %v3568, 7
    %v3570 = vsub.s32 0, %v3569
    %v3571 = vrot.slane %v2576, %v3570
    %v3573 = vadd.f32 %v3563, %v3571
    %v3574 = vadd.f32 %v3564, %v3571
    %v3575 = vadd.f32 %v3565, %v3571
    %v3576 = vadd.f32 %v3566, %v3571
    %v3577 = vadd.f32 %v2257, %v3573
    %v3578 = vadd.f32 %v2260, %v3574
    %v3579 = vadd.f32 %v2265, %v3575
    %v3580 = vadd.f32 %v2268, %v3576
    %v3581 = vld [vmem:[#allocation28] sm:$0x1]
    %v3582 = vld [vmem:[#allocation29] sm:$0x1]
    %3583 = vadd.xlane.f32.xlu0 %v3577
    %v3584 = vpop.xlane.xlu0 %3583
    %3585 = vadd.xlane.f32.xlu0 %v3578
    %v3586 = vpop.xlane.xlu0 %3585
    %3587 = vadd.xlane.f32.xlu0 %v3579
    %v3588 = vpop.xlane.xlu0 %3587
    %3589 = vadd.xlane.f32.xlu0 %v3580
    %v3590 = vpop.xlane.xlu0 %3589
    %v3591 = vmul.f32 %v3584, %v1604
    %v3592 = vmul.f32 %v3586, %v1604
    %v3593 = vmul.f32 %v3588, %v1604
    %v3594 = vmul.f32 %v3590, %v1604
    %v3595 = vsub.f32 %v3577, %v3591
    %v3596 = vsub.f32 %v3578, %v3592
    %v3597 = vsub.f32 %v3579, %v3593
    %v3598 = vsub.f32 %v3580, %v3594
    %v3599 = vmul.f32 %v3595, %v3595
    %v3600 = vmul.f32 %v3596, %v3596
    %v3601 = vmul.f32 %v3597, %v3597
    %v3602 = vmul.f32 %v3598, %v3598
    %3603 = vadd.xlane.f32.xlu0 %v3599
    %v3604 = vpop.xlane.xlu0 %3603
    %3605 = vadd.xlane.f32.xlu0 %v3600
    %v3606 = vpop.xlane.xlu0 %3605
    %3607 = vadd.xlane.f32.xlu0 %v3601
    %v3608 = vpop.xlane.xlu0 %3607
    %3609 = vadd.xlane.f32.xlu0 %v3602
    %v3610 = vpop.xlane.xlu0 %3609
    %v3611 = vmul.f32 %v3604, %v1604
    %v3612 = vmul.f32 %v3606, %v1604
    %v3613 = vmul.f32 %v3608, %v1604
    %v3614 = vmul.f32 %v3610, %v1604
    %v3615 = vadd.f32 %v3611, 1e-05
    %v3616 = vadd.f32 %v3612, 1e-05
    %v3617 = vadd.f32 %v3613, 1e-05
    %v3618 = vadd.f32 %v3614, 1e-05
    %v3619 = vrsqrt.pop %v3615
    %v3620 = vrsqrt.pop %v3616
    %v3621 = vrsqrt.pop %v3617
    %v3622 = vrsqrt.pop %v3618
    %v3623 = vmul.f32 %v3595, %v3619
    %v3624 = vmul.f32 %v3596, %v3620
    %v3625 = vmul.f32 %v3597, %v3621
    %v3626 = vmul.f32 %v3598, %v3622
    %v3628 = vlaneseq
    %v3629 = vshrl.u32 %v3628, 7
    %v3630 = vsub.s32 0, %v3629
    %v3631 = vrot.slane %v3581, %v3630
    %v3633 = vmul.f32 %v3623, %v3631
    %v3634 = vmul.f32 %v3624, %v3631
    %v3635 = vmul.f32 %v3625, %v3631
    %v3636 = vmul.f32 %v3626, %v3631
    %v3638 = vlaneseq
    %v3639 = vshrl.u32 %v3638, 7
    %v3640 = vsub.s32 0, %v3639
    %v3641 = vrot.slane %v3582, %v3640
    %v3643 = vadd.f32 %v3633, %v3641
    %v3644 = vadd.f32 %v3634, %v3641
    %v3645 = vadd.f32 %v3635, %v3641
    %v3646 = vadd.f32 %v3636, %v3641
    %v3647 = vld [vmem:[#allocation31] sm:$0xf]
    %v3648 = vld [vmem:[#allocation31 + $0x4] sm:$0xf]
    %v3649 = vld [vmem:[#allocation31 + $0x8] sm:$0xf]
    %v3650 = vld [vmem:[#allocation31 + $0xc] sm:$0xf]
    %v3651 = vld [vmem:[#allocation31 + $0x10] sm:$0xf]
    %v3652 = vld [vmem:[#allocation31 + $0x14] sm:$0xf]
    %v3653 = vld [vmem:[#allocation31 + $0x18] sm:$0xf]
    %v3654 = vld [vmem:[#allocation31 + $0x1c] sm:$0xf]
    %v3655 = vld [vmem:[#allocation31 + $0x20] sm:$0xf]
    %v3656 = vld [vmem:[#allocation31 + $0x24] sm:$0xf]
    %v3657 = vld [vmem:[#allocation31 + $0x28] sm:$0xf]
    %v3658 = vld [vmem:[#allocation31 + $0x2c] sm:$0xf]
    %v3659 = vld [vmem:[#allocation31 + $0x30] sm:$0xf]
    %v3660 = vld [vmem:[#allocation31 + $0x34] sm:$0xf]
    %v3661 = vld [vmem:[#allocation31 + $0x38] sm:$0xf]
    %v3662 = vld [vmem:[#allocation31 + $0x3c] sm:$0xf]
    %v3663 = vpack.c.bf16 %v3644, %v3643
    %v3664 = vpack.c.bf16 %v3646, %v3645
    %v3665 = vld [vmem:[#allocation32] sm:$0x1]
    %v3667 = vlaneseq
    %v3668 = vshrl.u32 %v3667, 7
    %v3669 = vsub.s32 0, %v3668
    %v3670 = vrot.slane %v3665, %v3669
    %v3688 = vunpack.c.l.b16 %v3647
    %v3689 = vunpack.c.l.b16 %v3648
    %v3690 = vunpack.c.l.b16 %v3649
    %v3691 = vunpack.c.l.b16 %v3650
    %v3692 = vunpack.c.l.b16 %v3651
    %v3693 = vunpack.c.l.b16 %v3652
    %v3694 = vunpack.c.l.b16 %v3653
    %v3695 = vunpack.c.l.b16 %v3654
    %v3696 = vunpack.c.l.b16 %v3655
    %v3697 = vunpack.c.l.b16 %v3656
    %v3698 = vunpack.c.l.b16 %v3657
    %v3699 = vunpack.c.l.b16 %v3658
    %v3700 = vunpack.c.l.b16 %v3659
    %v3701 = vunpack.c.l.b16 %v3660
    %v3702 = vunpack.c.l.b16 %v3661
    %v3703 = vunpack.c.l.b16 %v3662
    %v3704 = vpack.c.b16 %v3689, %v3688
    %v3705 = vpack.c.b16 %v3691, %v3690
    %v3706 = vpack.c.b16 %v3693, %v3692
    %v3707 = vpack.c.b16 %v3695, %v3694
    %v3708 = vpack.c.b16 %v3697, %v3696
    %v3709 = vpack.c.b16 %v3699, %v3698
    %v3710 = vpack.c.b16 %v3701, %v3700
    %v3711 = vpack.c.b16 %v3703, %v3702
    %3720 = vmatprep.subr.bf16.mxu0 0
    %3721 = vmatpush1.bf16.msra.mxu0 %v3711
    %3722 = vmatprep.subr.bf16.mxu0 0
    %3723 = vmatpush1.bf16.msra.mxu0 %v3710
    %3724 = vmatprep.subr.bf16.mxu0 0
    %3725 = vmatpush1.bf16.msra.mxu0 %v3709
    %3726 = vmatprep.subr.bf16.mxu0 0
    %3727 = vmatpush1.bf16.msra.mxu0 %v3708
    %3728 = vmatprep.subr.bf16.mxu0 0
    %3729 = vmatpush1.bf16.msra.mxu0 %v3707
    %3730 = vmatprep.subr.bf16.mxu0 0
    %3731 = vmatpush1.bf16.msra.mxu0 %v3706
    %3732 = vmatprep.subr.bf16.mxu0 0
    %3733 = vmatpush1.bf16.msra.mxu0 %v3705
    %3734 = vmatprep.subr.bf16.mxu0 0
    %3735 = vmatpush1.bf16.msra.mxu0 %v3704
    %3736 = vmatprep.subr.bf16.mxu0 0
    %3737 = vmatpush2.bf16.msra.mxu0 0
    %3738 = vmatprep.subr.bf16.mxu0 0
    %3739 = vmatpush2.bf16.msra.mxu0 0
    %3740 = vmatprep.subr.bf16.mxu0 0
    %3741 = vmatpush2.bf16.msra.mxu0 0
    %3742 = vmatprep.subr.bf16.mxu0 0
    %3743 = vmatpush2.bf16.msra.mxu0 0
    %3744 = vmatprep.subr.bf16.mxu0 0
    %3745 = vmatpush2.bf16.msra.mxu0 0
    %3746 = vmatprep.subr.bf16.mxu0 0
    %3747 = vmatpush2.bf16.msra.mxu0 0
    %3748 = vmatprep.subr.bf16.mxu0 0
    %3749 = vmatpush2.bf16.msra.mxu0 0
    %3750 = vmatprep.subr.bf16.mxu0 0
    %3751 = vmatpush2.bf16.msra.mxu0 0
    %3752 = vmatprep.mubr.bf16.mxu0 0
    %3753 = vmatmul.mubr.bf16.gmra.mxu0 %v3663
    %v3754 = vpop.f32.mrf.mxu0
    %v3755 = vadd.f32 %v3670, %v3754
    %v3756 = vpop.f32.mrf.mxu0
    %v3757 = vpop.f32.mrf.mxu0
    %v3758 = vadd.f32 %v3670, %v3757
    %v3759 = vpop.f32.mrf.mxu0
    %3760 = vmatprep.mubr.bf16.mxu0 0
    %3761 = vmatmul.mubr.bf16.gmra.mxu0 %v3664
    %v3762 = vpop.f32.mrf.mxu0
    %v3763 = vadd.f32 %v3670, %v3762
    %v3764 = vpop.f32.mrf.mxu0
    %v3765 = vpop.f32.mrf.mxu0
    %v3766 = vadd.f32 %v3670, %v3765
    %v3767 = vpop.f32.mrf.mxu0
    %3768 = vdwg.mxu0
    %v3769 = vld [vmem:[#allocation34] sm:$0xff]
    %v3770 = vld [vmem:[#allocation34 + $0x8] sm:$0xff]
    %v3771 = vld [vmem:[#allocation34 + $0x10] sm:$0xff]
    %v3772 = vld [vmem:[#allocation34 + $0x18] sm:$0xff]
    %v3773 = vld [vmem:[#allocation34 + $0x20] sm:$0xff]
    %v3774 = vld [vmem:[#allocation34 + $0x28] sm:$0xff]
    %v3775 = vld [vmem:[#allocation34 + $0x30] sm:$0xff]
    %v3776 = vld [vmem:[#allocation34 + $0x38] sm:$0xff]
    %v3777 = vld [vmem:[#allocation34 + $0x40] sm:$0xff]
    %v3778 = vld [vmem:[#allocation34 + $0x48] sm:$0xff]
    %v3779 = vld [vmem:[#allocation34 + $0x50] sm:$0xff]
    %v3780 = vld [vmem:[#allocation34 + $0x58] sm:$0xff]
    %v3781 = vld [vmem:[#allocation34 + $0x60] sm:$0xff]
    %v3782 = vld [vmem:[#allocation34 + $0x68] sm:$0xff]
    %v3783 = vld [vmem:[#allocation34 + $0x70] sm:$0xff]
    %v3784 = vld [vmem:[#allocation34 + $0x78] sm:$0xff]
    %v3785 = vld [vmem:[#allocation35] sm:$0x3]
    %v3787 = vlaneseq
    %v3788 = vshrl.u32 %v3787, 7
    %v3789 = vsub.s32 0, %v3788
    %v3790 = vrot.slane %v3785, %v3789
    %v3791 = vlaneseq
    %v3792 = vshrl.u32 %v3791, 7
    %v3793 = vsub.s32 1, %v3792
    %v3794 = vrot.slane %v3785, %v3793
    %v3813 = vunpack.c.l.b16 %v3769
    %v3814 = vunpack.c.h.b16 %v3769
    %v3815 = vunpack.c.l.b16 %v3770
    %v3816 = vunpack.c.h.b16 %v3770
    %v3817 = vunpack.c.l.b16 %v3771
    %v3818 = vunpack.c.h.b16 %v3771
    %v3819 = vunpack.c.l.b16 %v3772
    %v3820 = vunpack.c.h.b16 %v3772
    %v3821 = vunpack.c.l.b16 %v3773
    %v3822 = vunpack.c.h.b16 %v3773
    %v3823 = vunpack.c.l.b16 %v3774
    %v3824 = vunpack.c.h.b16 %v3774
    %v3825 = vunpack.c.l.b16 %v3775
    %v3826 = vunpack.c.h.b16 %v3775
    %v3827 = vunpack.c.l.b16 %v3776
    %v3828 = vunpack.c.h.b16 %v3776
    %v3829 = vunpack.c.l.b16 %v3777
    %v3830 = vunpack.c.h.b16 %v3777
    %v3831 = vunpack.c.l.b16 %v3778
    %v3832 = vunpack.c.h.b16 %v3778
    %v3833 = vunpack.c.l.b16 %v3779
    %v3834 = vunpack.c.h.b16 %v3779
    %v3835 = vunpack.c.l.b16 %v3780
    %v3836 = vunpack.c.h.b16 %v3780
    %v3837 = vunpack.c.l.b16 %v3781
    %v3838 = vunpack.c.h.b16 %v3781
    %v3839 = vunpack.c.l.b16 %v3782
    %v3840 = vunpack.c.h.b16 %v3782
    %v3841 = vunpack.c.l.b16 %v3783
    %v3842 = vunpack.c.h.b16 %v3783
    %v3843 = vunpack.c.l.b16 %v3784
    %v3844 = vunpack.c.h.b16 %v3784
    %v3845 = vpack.c.b16 %v3815, %v3813
    %v3846 = vpack.c.b16 %v3816, %v3814
    %v3847 = vpack.c.b16 %v3819, %v3817
    %v3848 = vpack.c.b16 %v3820, %v3818
    %v3849 = vpack.c.b16 %v3823, %v3821
    %v3850 = vpack.c.b16 %v3824, %v3822
    %v3851 = vpack.c.b16 %v3827, %v3825
    %v3852 = vpack.c.b16 %v3828, %v3826
    %v3853 = vpack.c.b16 %v3831, %v3829
    %v3854 = vpack.c.b16 %v3832, %v3830
    %v3855 = vpack.c.b16 %v3835, %v3833
    %v3856 = vpack.c.b16 %v3836, %v3834
    %v3857 = vpack.c.b16 %v3839, %v3837
    %v3858 = vpack.c.b16 %v3840, %v3838
    %v3859 = vpack.c.b16 %v3843, %v3841
    %v3860 = vpack.c.b16 %v3844, %v3842
    %3877 = vmatprep.subr.bf16.mxu0 %v3860
    %3878 = vmatpush1.bf16.msra.mxu0 %v3859
    %3879 = vmatprep.subr.bf16.mxu0 %v3858
    %3880 = vmatpush1.bf16.msra.mxu0 %v3857
    %3881 = vmatprep.subr.bf16.mxu0 %v3856
    %3882 = vmatpush1.bf16.msra.mxu0 %v3855
    %3883 = vmatprep.subr.bf16.mxu0 %v3854
    %3884 = vmatpush1.bf16.msra.mxu0 %v3853
    %3885 = vmatprep.subr.bf16.mxu0 %v3852
    %3886 = vmatpush1.bf16.msra.mxu0 %v3851
    %3887 = vmatprep.subr.bf16.mxu0 %v3850
    %3888 = vmatpush1.bf16.msra.mxu0 %v3849
    %3889 = vmatprep.subr.bf16.mxu0 %v3848
    %3890 = vmatpush1.bf16.msra.mxu0 %v3847
    %3891 = vmatprep.subr.bf16.mxu0 %v3846
    %3892 = vmatpush1.bf16.msra.mxu0 %v3845
    %3893 = vmatprep.subr.bf16.mxu0 0
    %3894 = vmatpush2.bf16.msra.mxu0 0
    %3895 = vmatprep.subr.bf16.mxu0 0
    %3896 = vmatpush2.bf16.msra.mxu0 0
    %3897 = vmatprep.subr.bf16.mxu0 0
    %3898 = vmatpush2.bf16.msra.mxu0 0
    %3899 = vmatprep.subr.bf16.mxu0 0
    %3900 = vmatpush2.bf16.msra.mxu0 0
    %3901 = vmatprep.subr.bf16.mxu0 0
    %3902 = vmatpush2.bf16.msra.mxu0 0
    %3903 = vmatprep.subr.bf16.mxu0 0
    %3904 = vmatpush2.bf16.msra.mxu0 0
    %3905 = vmatprep.subr.bf16.mxu0 0
    %3906 = vmatpush2.bf16.msra.mxu0 0
    %3907 = vmatprep.subr.bf16.mxu0 0
    %3908 = vmatpush2.bf16.msra.mxu0 0
    %3909 = vmatprep.mubr.bf16.mxu0 0
    %3910 = vmatmul.mubr.bf16.gmra.mxu0 %v2031
    %v3911 = vpop.f32.mrf.mxu0
    %v3912 = vadd.f32 %v3790, %v3911
    %v3913 = vpop.f32.mrf.mxu0
    %v3914 = vadd.f32 %v3794, %v3913
    %v3915 = vpop.f32.mrf.mxu0
    %v3916 = vadd.f32 %v3790, %v3915
    %v3917 = vpop.f32.mrf.mxu0
    %v3918 = vadd.f32 %v3794, %v3917
    %3919 = vdwg.mxu0
    %v3920 = vld [vmem:[#allocation37] sm:$0xf]
    %v3921 = vld [vmem:[#allocation37 + $0x4] sm:$0xf]
    %v3922 = vld [vmem:[#allocation37 + $0x8] sm:$0xf]
    %v3923 = vld [vmem:[#allocation37 + $0xc] sm:$0xf]
    %v3924 = vld [vmem:[#allocation37 + $0x10] sm:$0xf]
    %v3925 = vld [vmem:[#allocation37 + $0x14] sm:$0xf]
    %v3926 = vld [vmem:[#allocation37 + $0x18] sm:$0xf]
    %v3927 = vld [vmem:[#allocation37 + $0x1c] sm:$0xf]
    %v3928 = vld [vmem:[#allocation37 + $0x20] sm:$0xf]
    %v3929 = vld [vmem:[#allocation37 + $0x24] sm:$0xf]
    %v3930 = vld [vmem:[#allocation37 + $0x28] sm:$0xf]
    %v3931 = vld [vmem:[#allocation37 + $0x2c] sm:$0xf]
    %v3932 = vld [vmem:[#allocation37 + $0x30] sm:$0xf]
    %v3933 = vld [vmem:[#allocation37 + $0x34] sm:$0xf]
    %v3934 = vld [vmem:[#allocation37 + $0x38] sm:$0xf]
    %v3935 = vld [vmem:[#allocation37 + $0x3c] sm:$0xf]
    %v3936 = vld [vmem:[#allocation38] sm:$0x1]
    %v3937 = vmul.f32 %v3755, 0.17677669
    %v3938 = vmul.f32 %v3758, 0.17677669
    %v3939 = vmul.f32 %v3763, 0.17677669
    %v3940 = vmul.f32 %v3766, 0.17677669
    %v3941 = vpack.c.bf16 %v3938, %v3937
    %v3942 = vpack.c.bf16 %v3940, %v3939
    %v3943 = vpack.c.bf16 %v3916, %v3912
    %v3944 = vpack.c.bf16 %v3918, %v3914
    %v3946 = vsel %vm874, %v3941, 0
    %v3949 = vsel %vm874, %v3942, 0
    %v3952 = vsel %vm874, %v3943, 0
    %3954 = vmatprep.subr.bf16.mxu0 0
    %3955 = vmatpush1.bf16.xpose.msra.mxu0 0
    %3956 = vmatprep.subr.bf16.mxu0 0
    %3957 = vmatpush1.bf16.xpose.msra.mxu0 0
    %3958 = vmatprep.subr.bf16.mxu0 0
    %3959 = vmatpush1.bf16.xpose.msra.mxu0 0
    %3960 = vmatprep.subr.bf16.mxu0 0
    %3961 = vmatpush1.bf16.xpose.msra.mxu0 0
    %3962 = vmatprep.subr.bf16.mxu0 0
    %3963 = vmatpush1.bf16.xpose.msra.mxu0 0
    %3964 = vmatprep.subr.bf16.mxu0 0
    %3965 = vmatpush1.bf16.xpose.msra.mxu0 0
    %3966 = vmatprep.subr.bf16.mxu0 0
    %3967 = vmatpush1.bf16.xpose.msra.mxu0 0
    %3968 = vmatprep.subr.bf16.mxu0 0
    %3969 = vmatpush1.bf16.xpose.msra.mxu0 %v3952
    %3970 = vmatprep.subr.bf16.mxu0 0
    %3971 = vmatpush2.bf16.xpose.msra.mxu0 0
    %3972 = vmatprep.subr.bf16.mxu0 0
    %3973 = vmatpush2.bf16.xpose.msra.mxu0 0
    %3974 = vmatprep.subr.bf16.mxu0 0
    %3975 = vmatpush2.bf16.xpose.msra.mxu0 0
    %3976 = vmatprep.subr.bf16.mxu0 0
    %3977 = vmatpush2.bf16.xpose.msra.mxu0 0
    %3978 = vmatprep.subr.bf16.mxu0 0
    %3979 = vmatpush2.bf16.xpose.msra.mxu0 0
    %3980 = vmatprep.subr.bf16.mxu0 0
    %3981 = vmatpush2.bf16.xpose.msra.mxu0 0
    %3982 = vmatprep.subr.bf16.mxu0 0
    %3983 = vmatpush2.bf16.xpose.msra.mxu0 0
    %3984 = vmatprep.subr.bf16.mxu0 0
    %3985 = vmatpush2.bf16.xpose.msra.mxu0 0
    %3986 = vmatprep.mubr.bf16.mxu0 0
    %3987 = vmatmul.mubr.bf16.gmra.mxu0 %v3946
    %v3988 = vpop.f32.mrf.mxu0
    %v3989 = vadd.f32 %v2275, %v3988
    %v3990 = vpop.f32.mrf.mxu0
    %v3991 = vpop.f32.mrf.mxu0
    %v3992 = vadd.f32 %v2276, %v3991
    %v3993 = vpop.f32.mrf.mxu0
    %3994 = vmatprep.mubr.bf16.mxu0 0
    %3995 = vmatmul.mubr.bf16.gmra.mxu0 %v3949
    %v3996 = vpop.f32.mrf.mxu0
    %v3997 = vadd.f32 %v2277, %v3996
    %v3998 = vpop.f32.mrf.mxu0
    %v3999 = vpop.f32.mrf.mxu0
    %v4000 = vadd.f32 %v2278, %v3999
    %v4001 = vpop.f32.mrf.mxu0
    %4002 = vdwg.mxu0
    %v4003 = vsel %vm922, %v3989, -inf
    %4004 = vmax.xlane.f32.xlu0 %v4003
    %v4005 = vpop.xlane.xlu0 %4004
    %v4006 = vsel %vm922, %v3992, -inf
    %4007 = vmax.xlane.f32.xlu0 %v4006
    %v4008 = vpop.xlane.xlu0 %4007
    %v4009 = vsel %vm922, %v3997, -inf
    %4010 = vmax.xlane.f32.xlu0 %v4009
    %v4011 = vpop.xlane.xlu0 %4010
    %v4012 = vsel %vm922, %v4000, -inf
    %4013 = vmax.xlane.f32.xlu0 %v4012
    %v4014 = vpop.xlane.xlu0 %4013
    %v4015 = vsub.f32 %v3989, %v4005
    %v4016 = vsub.f32 %v3992, %v4008
    %v4017 = vsub.f32 %v3997, %v4011
    %v4018 = vsub.f32 %v4000, %v4014
    %v4019 = vmul.f32 %v4015, 1.442695
    %v4020 = vpow.pop %v4019
    %v4021 = vmul.f32 %v4016, 1.442695
    %v4022 = vpow.pop %v4021
    %v4023 = vmul.f32 %v4017, 1.442695
    %v4024 = vpow.pop %v4023
    %v4025 = vmul.f32 %v4018, 1.442695
    %v4026 = vpow.pop %v4025
    %v4027 = vsel %vm922, %v4020, 0.0
    %4028 = vadd.xlane.f32.xlu0 %v4027
    %v4029 = vpop.xlane.xlu0 %4028
    %v4030 = vsel %vm922, %v4022, 0.0
    %4031 = vadd.xlane.f32.xlu0 %v4030
    %v4032 = vpop.xlane.xlu0 %4031
    %v4033 = vsel %vm922, %v4024, 0.0
    %4034 = vadd.xlane.f32.xlu0 %v4033
    %v4035 = vpop.xlane.xlu0 %4034
    %v4036 = vsel %vm922, %v4026, 0.0
    %4037 = vadd.xlane.f32.xlu0 %v4036
    %v4038 = vpop.xlane.xlu0 %4037
    %v4039 = vrcp.pop %v4029
    %v4040 = vrcp.pop %v4032
    %v4041 = vrcp.pop %v4035
    %v4042 = vrcp.pop %v4038
    %v4043 = vmul.f32 %v4020, %v4039
    %v4044 = vmul.f32 %v4022, %v4040
    %v4045 = vmul.f32 %v4024, %v4041
    %v4046 = vmul.f32 %v4026, %v4042
    %v4047 = vpack.c.bf16 %v4044, %v4043
    %v4048 = vpack.c.bf16 %v4046, %v4045
    %v4050 = vsel %vm922, %v4047, 0
    %v4053 = vsel %vm922, %v4048, 0
    %4055 = vmatprep.subr.bf16.mxu0 0
    %4056 = vmatpush1.bf16.msra.mxu0 0
    %4057 = vmatprep.subr.bf16.mxu0 0
    %4058 = vmatpush1.bf16.msra.mxu0 0
    %4059 = vmatprep.subr.bf16.mxu0 0
    %4060 = vmatpush1.bf16.msra.mxu0 0
    %4061 = vmatprep.subr.bf16.mxu0 0
    %4062 = vmatpush1.bf16.msra.mxu0 0
    %4063 = vmatprep.subr.bf16.mxu0 0
    %4064 = vmatpush1.bf16.msra.mxu0 0
    %4065 = vmatprep.subr.bf16.mxu0 0
    %4066 = vmatpush1.bf16.msra.mxu0 0
    %4067 = vmatprep.subr.bf16.mxu0 0
    %4068 = vmatpush1.bf16.msra.mxu0 0
    %4069 = vmatprep.subr.bf16.mxu0 0
    %4070 = vmatpush1.bf16.msra.mxu0 %v3944
    %4071 = vmatprep.subr.bf16.mxu0 0
    %4072 = vmatpush2.bf16.msra.mxu0 0
    %4073 = vmatprep.subr.bf16.mxu0 0
    %4074 = vmatpush2.bf16.msra.mxu0 0
    %4075 = vmatprep.subr.bf16.mxu0 0
    %4076 = vmatpush2.bf16.msra.mxu0 0
    %4077 = vmatprep.subr.bf16.mxu0 0
    %4078 = vmatpush2.bf16.msra.mxu0 0
    %4079 = vmatprep.subr.bf16.mxu0 0
    %4080 = vmatpush2.bf16.msra.mxu0 0
    %4081 = vmatprep.subr.bf16.mxu0 0
    %4082 = vmatpush2.bf16.msra.mxu0 0
    %4083 = vmatprep.subr.bf16.mxu0 0
    %4084 = vmatpush2.bf16.msra.mxu0 0
    %4085 = vmatprep.subr.bf16.mxu0 0
    %4086 = vmatpush2.bf16.msra.mxu0 0
    %4087 = vmatprep.mubr.bf16.mxu0 0
    %4088 = vmatmul.mubr.bf16.gmra.mxu0 %v4050
    %v4089 = vpop.f32.mrf.mxu0
    %v4090 = vadd.f32 0.0, %v4089
    %v4091 = vpop.f32.mrf.mxu0
    %v4092 = vpop.f32.mrf.mxu0
    %v4093 = vadd.f32 0.0, %v4092
    %v4094 = vpop.f32.mrf.mxu0
    %4095 = vmatprep.mubr.bf16.mxu0 0
    %4096 = vmatmul.mubr.bf16.gmra.mxu0 %v4053
    %v4097 = vpop.f32.mrf.mxu0
    %v4098 = vadd.f32 0.0, %v4097
    %v4099 = vpop.f32.mrf.mxu0
    %v4100 = vpop.f32.mrf.mxu0
    %v4101 = vadd.f32 0.0, %v4100
    %v4102 = vpop.f32.mrf.mxu0
    %4103 = vdwg.mxu0
    %v4104 = vpack.c.bf16 %v4093, %v4090
    %v4105 = vpack.c.bf16 %v4101, %v4098
    %4108 = vrot.lane.b32.xlu0 %v3941, 96
    %v4109 = vpop.permute.xlu0 %4108
    %4110 = vrot.lane.b32.xlu0 %v3942, 96
    %v4111 = vpop.permute.xlu0 %4110
    %4113 = vrot.lane.b32.xlu0 %v3943, 96
    %v4114 = vpop.permute.xlu0 %4113
    %v4116 = vsel %vm874, %v4109, 0
    %v4119 = vsel %vm874, %v4111, 0
    %v4122 = vsel %vm874, %v4114, 0
    %4124 = vmatprep.subr.bf16.mxu0 0
    %4125 = vmatpush1.bf16.xpose.msra.mxu0 0
    %4126 = vmatprep.subr.bf16.mxu0 0
    %4127 = vmatpush1.bf16.xpose.msra.mxu0 0
    %4128 = vmatprep.subr.bf16.mxu0 0
    %4129 = vmatpush1.bf16.xpose.msra.mxu0 0
    %4130 = vmatprep.subr.bf16.mxu0 0
    %4131 = vmatpush1.bf16.xpose.msra.mxu0 0
    %4132 = vmatprep.subr.bf16.mxu0 0
    %4133 = vmatpush1.bf16.xpose.msra.mxu0 0
    %4134 = vmatprep.subr.bf16.mxu0 0
    %4135 = vmatpush1.bf16.xpose.msra.mxu0 0
    %4136 = vmatprep.subr.bf16.mxu0 0
    %4137 = vmatpush1.bf16.xpose.msra.mxu0 0
    %4138 = vmatprep.subr.bf16.mxu0 0
    %4139 = vmatpush1.bf16.xpose.msra.mxu0 %v4122
    %4140 = vmatprep.subr.bf16.mxu0 0
    %4141 = vmatpush2.bf16.xpose.msra.mxu0 0
    %4142 = vmatprep.subr.bf16.mxu0 0
    %4143 = vmatpush2.bf16.xpose.msra.mxu0 0
    %4144 = vmatprep.subr.bf16.mxu0 0
    %4145 = vmatpush2.bf16.xpose.msra.mxu0 0
    %4146 = vmatprep.subr.bf16.mxu0 0
    %4147 = vmatpush2.bf16.xpose.msra.mxu0 0
    %4148 = vmatprep.subr.bf16.mxu0 0
    %4149 = vmatpush2.bf16.xpose.msra.mxu0 0
    %4150 = vmatprep.subr.bf16.mxu0 0
    %4151 = vmatpush2.bf16.xpose.msra.mxu0 0
    %4152 = vmatprep.subr.bf16.mxu0 0
    %4153 = vmatpush2.bf16.xpose.msra.mxu0 0
    %4154 = vmatprep.subr.bf16.mxu0 0
    %4155 = vmatpush2.bf16.xpose.msra.mxu0 0
    %4156 = vmatprep.mubr.bf16.mxu0 0
    %4157 = vmatmul.mubr.bf16.gmra.mxu0 %v4116
    %v4158 = vpop.f32.mrf.mxu0
    %v4159 = vadd.f32 %v2275, %v4158
    %v4160 = vpop.f32.mrf.mxu0
    %v4161 = vpop.f32.mrf.mxu0
    %v4162 = vadd.f32 %v2276, %v4161
    %v4163 = vpop.f32.mrf.mxu0
    %4164 = vmatprep.mubr.bf16.mxu0 0
    %4165 = vmatmul.mubr.bf16.gmra.mxu0 %v4119
    %v4166 = vpop.f32.mrf.mxu0
    %v4167 = vadd.f32 %v2277, %v4166
    %v4168 = vpop.f32.mrf.mxu0
    %v4169 = vpop.f32.mrf.mxu0
    %v4170 = vadd.f32 %v2278, %v4169
    %v4171 = vpop.f32.mrf.mxu0
    %4172 = vdwg.mxu0
    %v4173 = vsel %vm922, %v4159, -inf
    %4174 = vmax.xlane.f32.xlu0 %v4173
    %v4175 = vpop.xlane.xlu0 %4174
    %v4176 = vsel %vm922, %v4162, -inf
    %4177 = vmax.xlane.f32.xlu0 %v4176
    %v4178 = vpop.xlane.xlu0 %4177
    %v4179 = vsel %vm922, %v4167, -inf
    %4180 = vmax.xlane.f32.xlu0 %v4179
    %v4181 = vpop.xlane.xlu0 %4180
    %v4182 = vsel %vm922, %v4170, -inf
    %4183 = vmax.xlane.f32.xlu0 %v4182
    %v4184 = vpop.xlane.xlu0 %4183
    %v4185 = vsub.f32 %v4159, %v4175
    %v4186 = vsub.f32 %v4162, %v4178
    %v4187 = vsub.f32 %v4167, %v4181
    %v4188 = vsub.f32 %v4170, %v4184
    %v4189 = vmul.f32 %v4185, 1.442695
    %v4190 = vpow.pop %v4189
    %v4191 = vmul.f32 %v4186, 1.442695
    %v4192 = vpow.pop %v4191
    %v4193 = vmul.f32 %v4187, 1.442695
    %v4194 = vpow.pop %v4193
    %v4195 = vmul.f32 %v4188, 1.442695
    %v4196 = vpow.pop %v4195
    %v4197 = vsel %vm922, %v4190, 0.0
    %4198 = vadd.xlane.f32.xlu0 %v4197
    %v4199 = vpop.xlane.xlu0 %4198
    %v4200 = vsel %vm922, %v4192, 0.0
    %4201 = vadd.xlane.f32.xlu0 %v4200
    %v4202 = vpop.xlane.xlu0 %4201
    %v4203 = vsel %vm922, %v4194, 0.0
    %4204 = vadd.xlane.f32.xlu0 %v4203
    %v4205 = vpop.xlane.xlu0 %4204
    %v4206 = vsel %vm922, %v4196, 0.0
    %4207 = vadd.xlane.f32.xlu0 %v4206
    %v4208 = vpop.xlane.xlu0 %4207
    %v4209 = vrcp.pop %v4199
    %v4210 = vrcp.pop %v4202
    %v4211 = vrcp.pop %v4205
    %v4212 = vrcp.pop %v4208
    %v4213 = vmul.f32 %v4190, %v4209
    %v4214 = vmul.f32 %v4192, %v4210
    %v4215 = vmul.f32 %v4194, %v4211
    %v4216 = vmul.f32 %v4196, %v4212
    %v4217 = vpack.c.bf16 %v4214, %v4213
    %v4218 = vpack.c.bf16 %v4216, %v4215
    %4220 = vrot.lane.b32.xlu0 %v3944, 96
    %v4221 = vpop.permute.xlu0 %4220
    %v4224 = vsel %vm922, %v4217, 0
    %v4227 = vsel %vm922, %v4218, 0
    %4229 = vmatprep.subr.bf16.mxu0 0
    %4230 = vmatpush1.bf16.msra.mxu0 0
    %4231 = vmatprep.subr.bf16.mxu0 0
    %4232 = vmatpush1.bf16.msra.mxu0 0
    %4233 = vmatprep.subr.bf16.mxu0 0
    %4234 = vmatpush1.bf16.msra.mxu0 0
    %4235 = vmatprep.subr.bf16.mxu0 0
    %4236 = vmatpush1.bf16.msra.mxu0 0
    %4237 = vmatprep.subr.bf16.mxu0 0
    %4238 = vmatpush1.bf16.msra.mxu0 0
    %4239 = vmatprep.subr.bf16.mxu0 0
    %4240 = vmatpush1.bf16.msra.mxu0 0
    %4241 = vmatprep.subr.bf16.mxu0 0
    %4242 = vmatpush1.bf16.msra.mxu0 0
    %4243 = vmatprep.subr.bf16.mxu0 0
    %4244 = vmatpush1.bf16.msra.mxu0 %v4221
    %4245 = vmatprep.subr.bf16.mxu0 0
    %4246 = vmatpush2.bf16.msra.mxu0 0
    %4247 = vmatprep.subr.bf16.mxu0 0
    %4248 = vmatpush2.bf16.msra.mxu0 0
    %4249 = vmatprep.subr.bf16.mxu0 0
    %4250 = vmatpush2.bf16.msra.mxu0 0
    %4251 = vmatprep.subr.bf16.mxu0 0
    %4252 = vmatpush2.bf16.msra.mxu0 0
    %4253 = vmatprep.subr.bf16.mxu0 0
    %4254 = vmatpush2.bf16.msra.mxu0 0
    %4255 = vmatprep.subr.bf16.mxu0 0
    %4256 = vmatpush2.bf16.msra.mxu0 0
    %4257 = vmatprep.subr.bf16.mxu0 0
    %4258 = vmatpush2.bf16.msra.mxu0 0
    %4259 = vmatprep.subr.bf16.mxu0 0
    %4260 = vmatpush2.bf16.msra.mxu0 0
    %4261 = vmatprep.mubr.bf16.mxu0 0
    %4262 = vmatmul.mubr.bf16.gmra.mxu0 %v4224
    %v4263 = vpop.f32.mrf.mxu0
    %v4264 = vadd.f32 0.0, %v4263
    %v4265 = vpop.f32.mrf.mxu0
    %v4266 = vpop.f32.mrf.mxu0
    %v4267 = vadd.f32 0.0, %v4266
    %v4268 = vpop.f32.mrf.mxu0
    %4269 = vmatprep.mubr.bf16.mxu0 0
    %4270 = vmatmul.mubr.bf16.gmra.mxu0 %v4227
    %v4271 = vpop.f32.mrf.mxu0
    %v4272 = vadd.f32 0.0, %v4271
    %v4273 = vpop.f32.mrf.mxu0
    %v4274 = vpop.f32.mrf.mxu0
    %v4275 = vadd.f32 0.0, %v4274
    %v4276 = vpop.f32.mrf.mxu0
    %4277 = vdwg.mxu0
    %v4278 = vpack.c.bf16 %v4267, %v4264
    %v4279 = vpack.c.bf16 %v4275, %v4272
    %v4284 = vunpack.c.l.b16 %v3924
    %v4285 = vunpack.c.l.b16 %v3925
    %v4286 = vunpack.c.l.b16 %v3926
    %v4287 = vunpack.c.l.b16 %v3927
    %v4288 = vpack.c.b16 %v4285, %v4284
    %v4289 = vpack.c.b16 %v4287, %v4286
    %v4293 = vsel %vm874, %v4278, 0
    %v4296 = vsel %vm874, %v4279, 0
    %4298 = vmatprep.subr.bf16.mxu0 0
    %4299 = vmatpush1.bf16.msra.mxu0 0
    %4300 = vmatprep.subr.bf16.mxu0 0
    %4301 = vmatpush1.bf16.msra.mxu0 0
    %4302 = vmatprep.subr.bf16.mxu0 0
    %4303 = vmatpush1.bf16.msra.mxu0 0
    %4304 = vmatprep.subr.bf16.mxu0 0
    %4305 = vmatpush1.bf16.msra.mxu0 0
    %4306 = vmatprep.subr.bf16.mxu0 0
    %4307 = vmatpush1.bf16.msra.mxu0 0
    %4308 = vmatprep.subr.bf16.mxu0 0
    %4309 = vmatpush1.bf16.msra.mxu0 0
    %4310 = vmatprep.subr.bf16.mxu0 0
    %4311 = vmatpush1.bf16.msra.mxu0 %v4289
    %4312 = vmatprep.subr.bf16.mxu0 0
    %4313 = vmatpush1.bf16.msra.mxu0 %v4288
    %4314 = vmatprep.subr.bf16.mxu0 0
    %4315 = vmatpush2.bf16.msra.mxu0 0
    %4316 = vmatprep.subr.bf16.mxu0 0
    %4317 = vmatpush2.bf16.msra.mxu0 0
    %4318 = vmatprep.subr.bf16.mxu0 0
    %4319 = vmatpush2.bf16.msra.mxu0 0
    %4320 = vmatprep.subr.bf16.mxu0 0
    %4321 = vmatpush2.bf16.msra.mxu0 0
    %4322 = vmatprep.subr.bf16.mxu0 0
    %4323 = vmatpush2.bf16.msra.mxu0 0
    %4324 = vmatprep.subr.bf16.mxu0 0
    %4325 = vmatpush2.bf16.msra.mxu0 0
    %4326 = vmatprep.subr.bf16.mxu0 0
    %4327 = vmatpush2.bf16.msra.mxu0 0
    %4328 = vmatprep.subr.bf16.mxu0 0
    %4329 = vmatpush2.bf16.msra.mxu0 0
    %4330 = vmatprep.mubr.bf16.mxu0 0
    %4331 = vmatmul.mubr.bf16.gmra.mxu0 %v4293
    %v4332 = vpop.f32.mrf.mxu0
    %v4333 = vadd.f32 0.0, %v4332
    %v4334 = vpop.f32.mrf.mxu0
    %v4335 = vpop.f32.mrf.mxu0
    %v4336 = vadd.f32 0.0, %v4335
    %v4337 = vpop.f32.mrf.mxu0
    %4338 = vmatprep.mubr.bf16.mxu0 0
    %4339 = vmatmul.mubr.bf16.gmra.mxu0 %v4296
    %v4340 = vpop.f32.mrf.mxu0
    %v4341 = vadd.f32 0.0, %v4340
    %v4342 = vpop.f32.mrf.mxu0
    %v4343 = vpop.f32.mrf.mxu0
    %v4344 = vadd.f32 0.0, %v4343
    %v4345 = vpop.f32.mrf.mxu0
    %4346 = vdwg.mxu0
    %v4351 = vunpack.c.l.b16 %v3920
    %v4352 = vunpack.c.l.b16 %v3921
    %v4353 = vunpack.c.l.b16 %v3922
    %v4354 = vunpack.c.l.b16 %v3923
    %v4355 = vpack.c.b16 %v4352, %v4351
    %v4356 = vpack.c.b16 %v4354, %v4353
    %v4360 = vsel %vm874, %v4104, 0
    %v4363 = vsel %vm874, %v4105, 0
    %4365 = vmatprep.subr.bf16.mxu0 0
    %4366 = vmatpush1.bf16.msra.mxu0 0
    %4367 = vmatprep.subr.bf16.mxu0 0
    %4368 = vmatpush1.bf16.msra.mxu0 0
    %4369 = vmatprep.subr.bf16.mxu0 0
    %4370 = vmatpush1.bf16.msra.mxu0 0
    %4371 = vmatprep.subr.bf16.mxu0 0
    %4372 = vmatpush1.bf16.msra.mxu0 0
    %4373 = vmatprep.subr.bf16.mxu0 0
    %4374 = vmatpush1.bf16.msra.mxu0 0
    %4375 = vmatprep.subr.bf16.mxu0 0
    %4376 = vmatpush1.bf16.msra.mxu0 0
    %4377 = vmatprep.subr.bf16.mxu0 0
    %4378 = vmatpush1.bf16.msra.mxu0 %v4356
    %4379 = vmatprep.subr.bf16.mxu0 0
    %4380 = vmatpush1.bf16.msra.mxu0 %v4355
    %4381 = vmatprep.subr.bf16.mxu0 0
    %4382 = vmatpush2.bf16.msra.mxu0 0
    %4383 = vmatprep.subr.bf16.mxu0 0
    %4384 = vmatpush2.bf16.msra.mxu0 0
    %4385 = vmatprep.subr.bf16.mxu0 0
    %4386 = vmatpush2.bf16.msra.mxu0 0
    %4387 = vmatprep.subr.bf16.mxu0 0
    %4388 = vmatpush2.bf16.msra.mxu0 0
    %4389 = vmatprep.subr.bf16.mxu0 0
    %4390 = vmatpush2.bf16.msra.mxu0 0
    %4391 = vmatprep.subr.bf16.mxu0 0
    %4392 = vmatpush2.bf16.msra.mxu0 0
    %4393 = vmatprep.subr.bf16.mxu0 0
    %4394 = vmatpush2.bf16.msra.mxu0 0
    %4395 = vmatprep.subr.bf16.mxu0 0
    %4396 = vmatpush2.bf16.msra.mxu0 0
    %4397 = vmatprep.mubr.bf16.mxu0 0
    %4398 = vmatmul.mubr.bf16.gmra.mxu0 %v4360
    %v4399 = vpop.f32.mrf.mxu0
    %v4400 = vadd.f32 %v4333, %v4399
    %v4401 = vpop.f32.mrf.mxu0
    %v4402 = vpop.f32.mrf.mxu0
    %v4403 = vadd.f32 %v4336, %v4402
    %v4404 = vpop.f32.mrf.mxu0
    %4405 = vmatprep.mubr.bf16.mxu0 0
    %4406 = vmatmul.mubr.bf16.gmra.mxu0 %v4363
    %v4407 = vpop.f32.mrf.mxu0
    %v4408 = vadd.f32 %v4341, %v4407
    %v4409 = vpop.f32.mrf.mxu0
    %v4410 = vpop.f32.mrf.mxu0
    %v4411 = vadd.f32 %v4344, %v4410
    %v4412 = vpop.f32.mrf.mxu0
    %4413 = vdwg.mxu0
    %4414 = vrot.lane.b32.xlu0 %v3941, 64
    %v4415 = vpop.permute.xlu0 %4414
    %4416 = vrot.lane.b32.xlu0 %v3942, 64
    %v4417 = vpop.permute.xlu0 %4416
    %4418 = vrot.lane.b32.xlu0 %v3943, 64
    %v4419 = vpop.permute.xlu0 %4418
    %v4421 = vsel %vm874, %v4415, 0
    %v4424 = vsel %vm874, %v4417, 0
    %v4427 = vsel %vm874, %v4419, 0
    %4429 = vmatprep.subr.bf16.mxu0 0
    %4430 = vmatpush1.bf16.xpose.msra.mxu0 0
    %4431 = vmatprep.subr.bf16.mxu0 0
    %4432 = vmatpush1.bf16.xpose.msra.mxu0 0
    %4433 = vmatprep.subr.bf16.mxu0 0
    %4434 = vmatpush1.bf16.xpose.msra.mxu0 0
    %4435 = vmatprep.subr.bf16.mxu0 0
    %4436 = vmatpush1.bf16.xpose.msra.mxu0 0
    %4437 = vmatprep.subr.bf16.mxu0 0
    %4438 = vmatpush1.bf16.xpose.msra.mxu0 0
    %4439 = vmatprep.subr.bf16.mxu0 0
    %4440 = vmatpush1.bf16.xpose.msra.mxu0 0
    %4441 = vmatprep.subr.bf16.mxu0 0
    %4442 = vmatpush1.bf16.xpose.msra.mxu0 0
    %4443 = vmatprep.subr.bf16.mxu0 0
    %4444 = vmatpush1.bf16.xpose.msra.mxu0 %v4427
    %4445 = vmatprep.subr.bf16.mxu0 0
    %4446 = vmatpush2.bf16.xpose.msra.mxu0 0
    %4447 = vmatprep.subr.bf16.mxu0 0
    %4448 = vmatpush2.bf16.xpose.msra.mxu0 0
    %4449 = vmatprep.subr.bf16.mxu0 0
    %4450 = vmatpush2.bf16.xpose.msra.mxu0 0
    %4451 = vmatprep.subr.bf16.mxu0 0
    %4452 = vmatpush2.bf16.xpose.msra.mxu0 0
    %4453 = vmatprep.subr.bf16.mxu0 0
    %4454 = vmatpush2.bf16.xpose.msra.mxu0 0
    %4455 = vmatprep.subr.bf16.mxu0 0
    %4456 = vmatpush2.bf16.xpose.msra.mxu0 0
    %4457 = vmatprep.subr.bf16.mxu0 0
    %4458 = vmatpush2.bf16.xpose.msra.mxu0 0
    %4459 = vmatprep.subr.bf16.mxu0 0
    %4460 = vmatpush2.bf16.xpose.msra.mxu0 0
    %4461 = vmatprep.mubr.bf16.mxu0 0
    %4462 = vmatmul.mubr.bf16.gmra.mxu0 %v4421
    %v4463 = vpop.f32.mrf.mxu0
    %v4464 = vadd.f32 %v2275, %v4463
    %v4465 = vpop.f32.mrf.mxu0
    %v4466 = vpop.f32.mrf.mxu0
    %v4467 = vadd.f32 %v2276, %v4466
    %v4468 = vpop.f32.mrf.mxu0
    %4469 = vmatprep.mubr.bf16.mxu0 0
    %4470 = vmatmul.mubr.bf16.gmra.mxu0 %v4424
    %v4471 = vpop.f32.mrf.mxu0
    %v4472 = vadd.f32 %v2277, %v4471
    %v4473 = vpop.f32.mrf.mxu0
    %v4474 = vpop.f32.mrf.mxu0
    %v4475 = vadd.f32 %v2278, %v4474
    %v4476 = vpop.f32.mrf.mxu0
    %4477 = vdwg.mxu0
    %v4478 = vsel %vm922, %v4464, -inf
    %4479 = vmax.xlane.f32.xlu0 %v4478
    %v4480 = vpop.xlane.xlu0 %4479
    %v4481 = vsel %vm922, %v4467, -inf
    %4482 = vmax.xlane.f32.xlu0 %v4481
    %v4483 = vpop.xlane.xlu0 %4482
    %v4484 = vsel %vm922, %v4472, -inf
    %4485 = vmax.xlane.f32.xlu0 %v4484
    %v4486 = vpop.xlane.xlu0 %4485
    %v4487 = vsel %vm922, %v4475, -inf
    %4488 = vmax.xlane.f32.xlu0 %v4487
    %v4489 = vpop.xlane.xlu0 %4488
    %v4490 = vsub.f32 %v4464, %v4480
    %v4491 = vsub.f32 %v4467, %v4483
    %v4492 = vsub.f32 %v4472, %v4486
    %v4493 = vsub.f32 %v4475, %v4489
    %v4494 = vmul.f32 %v4490, 1.442695
    %v4495 = vpow.pop %v4494
    %v4496 = vmul.f32 %v4491, 1.442695
    %v4497 = vpow.pop %v4496
    %v4498 = vmul.f32 %v4492, 1.442695
    %v4499 = vpow.pop %v4498
    %v4500 = vmul.f32 %v4493, 1.442695
    %v4501 = vpow.pop %v4500
    %v4502 = vsel %vm922, %v4495, 0.0
    %4503 = vadd.xlane.f32.xlu0 %v4502
    %v4504 = vpop.xlane.xlu0 %4503
    %v4505 = vsel %vm922, %v4497, 0.0
    %4506 = vadd.xlane.f32.xlu0 %v4505
    %v4507 = vpop.xlane.xlu0 %4506
    %v4508 = vsel %vm922, %v4499, 0.0
    %4509 = vadd.xlane.f32.xlu0 %v4508
    %v4510 = vpop.xlane.xlu0 %4509
    %v4511 = vsel %vm922, %v4501, 0.0
    %4512 = vadd.xlane.f32.xlu0 %v4511
    %v4513 = vpop.xlane.xlu0 %4512
    %v4514 = vrcp.pop %v4504
    %v4515 = vrcp.pop %v4507
    %v4516 = vrcp.pop %v4510
    %v4517 = vrcp.pop %v4513
    %v4518 = vmul.f32 %v4495, %v4514
    %v4519 = vmul.f32 %v4497, %v4515
    %v4520 = vmul.f32 %v4499, %v4516
    %v4521 = vmul.f32 %v4501, %v4517
    %v4522 = vpack.c.bf16 %v4519, %v4518
    %v4523 = vpack.c.bf16 %v4521, %v4520
    %4524 = vrot.lane.b32.xlu0 %v3944, 64
    %v4525 = vpop.permute.xlu0 %4524
    %v4528 = vsel %vm922, %v4522, 0
    %v4531 = vsel %vm922, %v4523, 0
    %4533 = vmatprep.subr.bf16.mxu0 0
    %4534 = vmatpush1.bf16.msra.mxu0 0
    %4535 = vmatprep.subr.bf16.mxu0 0
    %4536 = vmatpush1.bf16.msra.mxu0 0
    %4537 = vmatprep.subr.bf16.mxu0 0
    %4538 = vmatpush1.bf16.msra.mxu0 0
    %4539 = vmatprep.subr.bf16.mxu0 0
    %4540 = vmatpush1.bf16.msra.mxu0 0
    %4541 = vmatprep.subr.bf16.mxu0 0
    %4542 = vmatpush1.bf16.msra.mxu0 0
    %4543 = vmatprep.subr.bf16.mxu0 0
    %4544 = vmatpush1.bf16.msra.mxu0 0
    %4545 = vmatprep.subr.bf16.mxu0 0
    %4546 = vmatpush1.bf16.msra.mxu0 0
    %4547 = vmatprep.subr.bf16.mxu0 0
    %4548 = vmatpush1.bf16.msra.mxu0 %v4525
    %4549 = vmatprep.subr.bf16.mxu0 0
    %4550 = vmatpush2.bf16.msra.mxu0 0
    %4551 = vmatprep.subr.bf16.mxu0 0
    %4552 = vmatpush2.bf16.msra.mxu0 0
    %4553 = vmatprep.subr.bf16.mxu0 0
    %4554 = vmatpush2.bf16.msra.mxu0 0
    %4555 = vmatprep.subr.bf16.mxu0 0
    %4556 = vmatpush2.bf16.msra.mxu0 0
    %4557 = vmatprep.subr.bf16.mxu0 0
    %4558 = vmatpush2.bf16.msra.mxu0 0
    %4559 = vmatprep.subr.bf16.mxu0 0
    %4560 = vmatpush2.bf16.msra.mxu0 0
    %4561 = vmatprep.subr.bf16.mxu0 0
    %4562 = vmatpush2.bf16.msra.mxu0 0
    %4563 = vmatprep.subr.bf16.mxu0 0
    %4564 = vmatpush2.bf16.msra.mxu0 0
    %4565 = vmatprep.mubr.bf16.mxu0 0
    %4566 = vmatmul.mubr.bf16.gmra.mxu0 %v4528
    %v4567 = vpop.f32.mrf.mxu0
    %v4568 = vadd.f32 0.0, %v4567
    %v4569 = vpop.f32.mrf.mxu0
    %v4570 = vpop.f32.mrf.mxu0
    %v4571 = vadd.f32 0.0, %v4570
    %v4572 = vpop.f32.mrf.mxu0
    %4573 = vmatprep.mubr.bf16.mxu0 0
    %4574 = vmatmul.mubr.bf16.gmra.mxu0 %v4531
    %v4575 = vpop.f32.mrf.mxu0
    %v4576 = vadd.f32 0.0, %v4575
    %v4577 = vpop.f32.mrf.mxu0
    %v4578 = vpop.f32.mrf.mxu0
    %v4579 = vadd.f32 0.0, %v4578
    %v4580 = vpop.f32.mrf.mxu0
    %4581 = vdwg.mxu0
    %v4582 = vpack.c.bf16 %v4571, %v4568
    %v4583 = vpack.c.bf16 %v4579, %v4576
    %v4588 = vunpack.c.l.b16 %v3928
    %v4589 = vunpack.c.l.b16 %v3929
    %v4590 = vunpack.c.l.b16 %v3930
    %v4591 = vunpack.c.l.b16 %v3931
    %v4592 = vpack.c.b16 %v4589, %v4588
    %v4593 = vpack.c.b16 %v4591, %v4590
    %v4597 = vsel %vm874, %v4582, 0
    %v4600 = vsel %vm874, %v4583, 0
    %4602 = vmatprep.subr.bf16.mxu0 0
    %4603 = vmatpush1.bf16.msra.mxu0 0
    %4604 = vmatprep.subr.bf16.mxu0 0
    %4605 = vmatpush1.bf16.msra.mxu0 0
    %4606 = vmatprep.subr.bf16.mxu0 0
    %4607 = vmatpush1.bf16.msra.mxu0 0
    %4608 = vmatprep.subr.bf16.mxu0 0
    %4609 = vmatpush1.bf16.msra.mxu0 0
    %4610 = vmatprep.subr.bf16.mxu0 0
    %4611 = vmatpush1.bf16.msra.mxu0 0
    %4612 = vmatprep.subr.bf16.mxu0 0
    %4613 = vmatpush1.bf16.msra.mxu0 0
    %4614 = vmatprep.subr.bf16.mxu0 0
    %4615 = vmatpush1.bf16.msra.mxu0 %v4593
    %4616 = vmatprep.subr.bf16.mxu0 0
    %4617 = vmatpush1.bf16.msra.mxu0 %v4592
    %4618 = vmatprep.subr.bf16.mxu0 0
    %4619 = vmatpush2.bf16.msra.mxu0 0
    %4620 = vmatprep.subr.bf16.mxu0 0
    %4621 = vmatpush2.bf16.msra.mxu0 0
    %4622 = vmatprep.subr.bf16.mxu0 0
    %4623 = vmatpush2.bf16.msra.mxu0 0
    %4624 = vmatprep.subr.bf16.mxu0 0
    %4625 = vmatpush2.bf16.msra.mxu0 0
    %4626 = vmatprep.subr.bf16.mxu0 0
    %4627 = vmatpush2.bf16.msra.mxu0 0
    %4628 = vmatprep.subr.bf16.mxu0 0
    %4629 = vmatpush2.bf16.msra.mxu0 0
    %4630 = vmatprep.subr.bf16.mxu0 0
    %4631 = vmatpush2.bf16.msra.mxu0 0
    %4632 = vmatprep.subr.bf16.mxu0 0
    %4633 = vmatpush2.bf16.msra.mxu0 0
    %4634 = vmatprep.mubr.bf16.mxu0 0
    %4635 = vmatmul.mubr.bf16.gmra.mxu0 %v4597
    %v4636 = vpop.f32.mrf.mxu0
    %v4637 = vadd.f32 0.0, %v4636
    %v4638 = vpop.f32.mrf.mxu0
    %v4639 = vpop.f32.mrf.mxu0
    %v4640 = vadd.f32 0.0, %v4639
    %v4641 = vpop.f32.mrf.mxu0
    %4642 = vmatprep.mubr.bf16.mxu0 0
    %4643 = vmatmul.mubr.bf16.gmra.mxu0 %v4600
    %v4644 = vpop.f32.mrf.mxu0
    %v4645 = vadd.f32 0.0, %v4644
    %v4646 = vpop.f32.mrf.mxu0
    %v4647 = vpop.f32.mrf.mxu0
    %v4648 = vadd.f32 0.0, %v4647
    %v4649 = vpop.f32.mrf.mxu0
    %4650 = vdwg.mxu0
    %v4651 = vadd.f32 %v4400, %v4637
    %v4652 = vadd.f32 %v4403, %v4640
    %v4653 = vadd.f32 %v4408, %v4645
    %v4654 = vadd.f32 %v4411, %v4648
    %4655 = vrot.lane.b32.xlu0 %v3941, 32
    %v4656 = vpop.permute.xlu0 %4655
    %4657 = vrot.lane.b32.xlu0 %v3942, 32
    %v4658 = vpop.permute.xlu0 %4657
    %4659 = vrot.lane.b32.xlu0 %v3943, 32
    %v4660 = vpop.permute.xlu0 %4659
    %v4662 = vsel %vm874, %v4656, 0
    %v4665 = vsel %vm874, %v4658, 0
    %v4668 = vsel %vm874, %v4660, 0
    %4670 = vmatprep.subr.bf16.mxu0 0
    %4671 = vmatpush1.bf16.xpose.msra.mxu0 0
    %4672 = vmatprep.subr.bf16.mxu0 0
    %4673 = vmatpush1.bf16.xpose.msra.mxu0 0
    %4674 = vmatprep.subr.bf16.mxu0 0
    %4675 = vmatpush1.bf16.xpose.msra.mxu0 0
    %4676 = vmatprep.subr.bf16.mxu0 0
    %4677 = vmatpush1.bf16.xpose.msra.mxu0 0
    %4678 = vmatprep.subr.bf16.mxu0 0
    %4679 = vmatpush1.bf16.xpose.msra.mxu0 0
    %4680 = vmatprep.subr.bf16.mxu0 0
    %4681 = vmatpush1.bf16.xpose.msra.mxu0 0
    %4682 = vmatprep.subr.bf16.mxu0 0
    %4683 = vmatpush1.bf16.xpose.msra.mxu0 0
    %4684 = vmatprep.subr.bf16.mxu0 0
    %4685 = vmatpush1.bf16.xpose.msra.mxu0 %v4668
    %4686 = vmatprep.subr.bf16.mxu0 0
    %4687 = vmatpush2.bf16.xpose.msra.mxu0 0
    %4688 = vmatprep.subr.bf16.mxu0 0
    %4689 = vmatpush2.bf16.xpose.msra.mxu0 0
    %4690 = vmatprep.subr.bf16.mxu0 0
    %4691 = vmatpush2.bf16.xpose.msra.mxu0 0
    %4692 = vmatprep.subr.bf16.mxu0 0
    %4693 = vmatpush2.bf16.xpose.msra.mxu0 0
    %4694 = vmatprep.subr.bf16.mxu0 0
    %4695 = vmatpush2.bf16.xpose.msra.mxu0 0
    %4696 = vmatprep.subr.bf16.mxu0 0
    %4697 = vmatpush2.bf16.xpose.msra.mxu0 0
    %4698 = vmatprep.subr.bf16.mxu0 0
    %4699 = vmatpush2.bf16.xpose.msra.mxu0 0
    %4700 = vmatprep.subr.bf16.mxu0 0
    %4701 = vmatpush2.bf16.xpose.msra.mxu0 0
    %4702 = vmatprep.mubr.bf16.mxu0 0
    %4703 = vmatmul.mubr.bf16.gmra.mxu0 %v4662
    %v4704 = vpop.f32.mrf.mxu0
    %v4705 = vadd.f32 %v2275, %v4704
    %v4706 = vpop.f32.mrf.mxu0
    %v4707 = vpop.f32.mrf.mxu0
    %v4708 = vadd.f32 %v2276, %v4707
    %v4709 = vpop.f32.mrf.mxu0
    %4710 = vmatprep.mubr.bf16.mxu0 0
    %4711 = vmatmul.mubr.bf16.gmra.mxu0 %v4665
    %v4712 = vpop.f32.mrf.mxu0
    %v4713 = vadd.f32 %v2277, %v4712
    %v4714 = vpop.f32.mrf.mxu0
    %v4715 = vpop.f32.mrf.mxu0
    %v4716 = vadd.f32 %v2278, %v4715
    %v4717 = vpop.f32.mrf.mxu0
    %4718 = vdwg.mxu0
    %v4719 = vsel %vm922, %v4705, -inf
    %4720 = vmax.xlane.f32.xlu0 %v4719
    %v4721 = vpop.xlane.xlu0 %4720
    %v4722 = vsel %vm922, %v4708, -inf
    %4723 = vmax.xlane.f32.xlu0 %v4722
    %v4724 = vpop.xlane.xlu0 %4723
    %v4725 = vsel %vm922, %v4713, -inf
    %4726 = vmax.xlane.f32.xlu0 %v4725
    %v4727 = vpop.xlane.xlu0 %4726
    %v4728 = vsel %vm922, %v4716, -inf
    %4729 = vmax.xlane.f32.xlu0 %v4728
    %v4730 = vpop.xlane.xlu0 %4729
    %v4731 = vsub.f32 %v4705, %v4721
    %v4732 = vsub.f32 %v4708, %v4724
    %v4733 = vsub.f32 %v4713, %v4727
    %v4734 = vsub.f32 %v4716, %v4730
    %v4735 = vmul.f32 %v4731, 1.442695
    %v4736 = vpow.pop %v4735
    %v4737 = vmul.f32 %v4732, 1.442695
    %v4738 = vpow.pop %v4737
    %v4739 = vmul.f32 %v4733, 1.442695
    %v4740 = vpow.pop %v4739
    %v4741 = vmul.f32 %v4734, 1.442695
    %v4742 = vpow.pop %v4741
    %v4743 = vsel %vm922, %v4736, 0.0
    %4744 = vadd.xlane.f32.xlu0 %v4743
    %v4745 = vpop.xlane.xlu0 %4744
    %v4746 = vsel %vm922, %v4738, 0.0
    %4747 = vadd.xlane.f32.xlu0 %v4746
    %v4748 = vpop.xlane.xlu0 %4747
    %v4749 = vsel %vm922, %v4740, 0.0
    %4750 = vadd.xlane.f32.xlu0 %v4749
    %v4751 = vpop.xlane.xlu0 %4750
    %v4752 = vsel %vm922, %v4742, 0.0
    %4753 = vadd.xlane.f32.xlu0 %v4752
    %v4754 = vpop.xlane.xlu0 %4753
    %v4755 = vrcp.pop %v4745
    %v4756 = vrcp.pop %v4748
    %v4757 = vrcp.pop %v4751
    %v4758 = vrcp.pop %v4754
    %v4759 = vmul.f32 %v4736, %v4755
    %v4760 = vmul.f32 %v4738, %v4756
    %v4761 = vmul.f32 %v4740, %v4757
    %v4762 = vmul.f32 %v4742, %v4758
    %v4763 = vpack.c.bf16 %v4760, %v4759
    %v4764 = vpack.c.bf16 %v4762, %v4761
    %4765 = vrot.lane.b32.xlu0 %v3944, 32
    %v4766 = vpop.permute.xlu0 %4765
    %v4769 = vsel %vm922, %v4763, 0
    %v4772 = vsel %vm922, %v4764, 0
    %4774 = vmatprep.subr.bf16.mxu0 0
    %4775 = vmatpush1.bf16.msra.mxu0 0
    %4776 = vmatprep.subr.bf16.mxu0 0
    %4777 = vmatpush1.bf16.msra.mxu0 0
    %4778 = vmatprep.subr.bf16.mxu0 0
    %4779 = vmatpush1.bf16.msra.mxu0 0
    %4780 = vmatprep.subr.bf16.mxu0 0
    %4781 = vmatpush1.bf16.msra.mxu0 0
    %4782 = vmatprep.subr.bf16.mxu0 0
    %4783 = vmatpush1.bf16.msra.mxu0 0
    %4784 = vmatprep.subr.bf16.mxu0 0
    %4785 = vmatpush1.bf16.msra.mxu0 0
    %4786 = vmatprep.subr.bf16.mxu0 0
    %4787 = vmatpush1.bf16.msra.mxu0 0
    %4788 = vmatprep.subr.bf16.mxu0 0
    %4789 = vmatpush1.bf16.msra.mxu0 %v4766
    %4790 = vmatprep.subr.bf16.mxu0 0
    %4791 = vmatpush2.bf16.msra.mxu0 0
    %4792 = vmatprep.subr.bf16.mxu0 0
    %4793 = vmatpush2.bf16.msra.mxu0 0
    %4794 = vmatprep.subr.bf16.mxu0 0
    %4795 = vmatpush2.bf16.msra.mxu0 0
    %4796 = vmatprep.subr.bf16.mxu0 0
    %4797 = vmatpush2.bf16.msra.mxu0 0
    %4798 = vmatprep.subr.bf16.mxu0 0
    %4799 = vmatpush2.bf16.msra.mxu0 0
    %4800 = vmatprep.subr.bf16.mxu0 0
    %4801 = vmatpush2.bf16.msra.mxu0 0
    %4802 = vmatprep.subr.bf16.mxu0 0
    %4803 = vmatpush2.bf16.msra.mxu0 0
    %4804 = vmatprep.subr.bf16.mxu0 0
    %4805 = vmatpush2.bf16.msra.mxu0 0
    %4806 = vmatprep.mubr.bf16.mxu0 0
    %4807 = vmatmul.mubr.bf16.gmra.mxu0 %v4769
    %v4808 = vpop.f32.mrf.mxu0
    %v4809 = vadd.f32 0.0, %v4808
    %v4810 = vpop.f32.mrf.mxu0
    %v4811 = vpop.f32.mrf.mxu0
    %v4812 = vadd.f32 0.0, %v4811
    %v4813 = vpop.f32.mrf.mxu0
    %4814 = vmatprep.mubr.bf16.mxu0 0
    %4815 = vmatmul.mubr.bf16.gmra.mxu0 %v4772
    %v4816 = vpop.f32.mrf.mxu0
    %v4817 = vadd.f32 0.0, %v4816
    %v4818 = vpop.f32.mrf.mxu0
    %v4819 = vpop.f32.mrf.mxu0
    %v4820 = vadd.f32 0.0, %v4819
    %v4821 = vpop.f32.mrf.mxu0
    %4822 = vdwg.mxu0
    %v4823 = vpack.c.bf16 %v4812, %v4809
    %v4824 = vpack.c.bf16 %v4820, %v4817
    %v4829 = vunpack.c.l.b16 %v3932
    %v4830 = vunpack.c.l.b16 %v3933
    %v4831 = vunpack.c.l.b16 %v3934
    %v4832 = vunpack.c.l.b16 %v3935
    %v4833 = vpack.c.b16 %v4830, %v4829
    %v4834 = vpack.c.b16 %v4832, %v4831
    %v4838 = vsel %vm874, %v4823, 0
    %v4841 = vsel %vm874, %v4824, 0
    %4843 = vmatprep.subr.bf16.mxu0 0
    %4844 = vmatpush1.bf16.msra.mxu0 0
    %4845 = vmatprep.subr.bf16.mxu0 0
    %4846 = vmatpush1.bf16.msra.mxu0 0
    %4847 = vmatprep.subr.bf16.mxu0 0
    %4848 = vmatpush1.bf16.msra.mxu0 0
    %4849 = vmatprep.subr.bf16.mxu0 0
    %4850 = vmatpush1.bf16.msra.mxu0 0
    %4851 = vmatprep.subr.bf16.mxu0 0
    %4852 = vmatpush1.bf16.msra.mxu0 0
    %4853 = vmatprep.subr.bf16.mxu0 0
    %4854 = vmatpush1.bf16.msra.mxu0 0
    %4855 = vmatprep.subr.bf16.mxu0 0
    %4856 = vmatpush1.bf16.msra.mxu0 %v4834
    %4857 = vmatprep.subr.bf16.mxu0 0
    %4858 = vmatpush1.bf16.msra.mxu0 %v4833
    %4859 = vmatprep.subr.bf16.mxu0 0
    %4860 = vmatpush2.bf16.msra.mxu0 0
    %4861 = vmatprep.subr.bf16.mxu0 0
    %4862 = vmatpush2.bf16.msra.mxu0 0
    %4863 = vmatprep.subr.bf16.mxu0 0
    %4864 = vmatpush2.bf16.msra.mxu0 0
    %4865 = vmatprep.subr.bf16.mxu0 0
    %4866 = vmatpush2.bf16.msra.mxu0 0
    %4867 = vmatprep.subr.bf16.mxu0 0
    %4868 = vmatpush2.bf16.msra.mxu0 0
    %4869 = vmatprep.subr.bf16.mxu0 0
    %4870 = vmatpush2.bf16.msra.mxu0 0
    %4871 = vmatprep.subr.bf16.mxu0 0
    %4872 = vmatpush2.bf16.msra.mxu0 0
    %4873 = vmatprep.subr.bf16.mxu0 0
    %4874 = vmatpush2.bf16.msra.mxu0 0
    %4875 = vmatprep.mubr.bf16.mxu0 0
    %4876 = vmatmul.mubr.bf16.gmra.mxu0 %v4838
    %v4877 = vpop.f32.mrf.mxu0
    %v4878 = vadd.f32 0.0, %v4877
    %v4879 = vpop.f32.mrf.mxu0
    %v4880 = vpop.f32.mrf.mxu0
    %v4881 = vadd.f32 0.0, %v4880
    %v4882 = vpop.f32.mrf.mxu0
    %4883 = vmatprep.mubr.bf16.mxu0 0
    %4884 = vmatmul.mubr.bf16.gmra.mxu0 %v4841
    %v4885 = vpop.f32.mrf.mxu0
    %v4886 = vadd.f32 0.0, %v4885
    %v4887 = vpop.f32.mrf.mxu0
    %v4888 = vpop.f32.mrf.mxu0
    %v4889 = vadd.f32 0.0, %v4888
    %v4890 = vpop.f32.mrf.mxu0
    %4891 = vdwg.mxu0
    %v4892 = vadd.f32 %v4651, %v4878
    %v4893 = vadd.f32 %v4652, %v4881
    %v4894 = vadd.f32 %v4653, %v4886
    %v4895 = vadd.f32 %v4654, %v4889
    %v4897 = vlaneseq
    %v4898 = vshrl.u32 %v4897, 7
    %v4899 = vsub.s32 0, %v4898
    %v4900 = vrot.slane %v3936, %v4899
    %v4902 = vadd.f32 %v4892, %v4900
    %v4903 = vadd.f32 %v4893, %v4900
    %v4904 = vadd.f32 %v4894, %v4900
    %v4905 = vadd.f32 %v4895, %v4900
    %v4906 = vadd.f32 %v3643, %v4902
    %v4907 = vadd.f32 %v3644, %v4903
    %v4908 = vadd.f32 %v3645, %v4904
    %v4909 = vadd.f32 %v3646, %v4905
    %v4910 = vld [vmem:[#allocation40] sm:$0x1]
    %v4911 = vld [vmem:[#allocation41] sm:$0x1]
    %4912 = vadd.xlane.f32.xlu0 %v4906
    %v4913 = vpop.xlane.xlu0 %4912
    %4914 = vadd.xlane.f32.xlu0 %v4907
    %v4915 = vpop.xlane.xlu0 %4914
    %4916 = vadd.xlane.f32.xlu0 %v4908
    %v4917 = vpop.xlane.xlu0 %4916
    %4918 = vadd.xlane.f32.xlu0 %v4909
    %v4919 = vpop.xlane.xlu0 %4918
    %v4920 = vmul.f32 %v4913, %v1604
    %v4921 = vmul.f32 %v4915, %v1604
    %v4922 = vmul.f32 %v4917, %v1604
    %v4923 = vmul.f32 %v4919, %v1604
    %v4924 = vsub.f32 %v4906, %v4920
    %v4925 = vsub.f32 %v4907, %v4921
    %v4926 = vsub.f32 %v4908, %v4922
    %v4927 = vsub.f32 %v4909, %v4923
    %v4928 = vmul.f32 %v4924, %v4924
    %v4929 = vmul.f32 %v4925, %v4925
    %v4930 = vmul.f32 %v4926, %v4926
    %v4931 = vmul.f32 %v4927, %v4927
    %4932 = vadd.xlane.f32.xlu0 %v4928
    %v4933 = vpop.xlane.xlu0 %4932
    %4934 = vadd.xlane.f32.xlu0 %v4929
    %v4935 = vpop.xlane.xlu0 %4934
    %4936 = vadd.xlane.f32.xlu0 %v4930
    %v4937 = vpop.xlane.xlu0 %4936
    %4938 = vadd.xlane.f32.xlu0 %v4931
    %v4939 = vpop.xlane.xlu0 %4938
    %v4940 = vmul.f32 %v4933, %v1604
    %v4941 = vmul.f32 %v4935, %v1604
    %v4942 = vmul.f32 %v4937, %v1604
    %v4943 = vmul.f32 %v4939, %v1604
    %v4944 = vadd.f32 %v4940, 1e-05
    %v4945 = vadd.f32 %v4941, 1e-05
    %v4946 = vadd.f32 %v4942, 1e-05
    %v4947 = vadd.f32 %v4943, 1e-05
    %v4948 = vrsqrt.pop %v4944
    %v4949 = vrsqrt.pop %v4945
    %v4950 = vrsqrt.pop %v4946
    %v4951 = vrsqrt.pop %v4947
    %v4952 = vmul.f32 %v4924, %v4948
    %v4953 = vmul.f32 %v4925, %v4949
    %v4954 = vmul.f32 %v4926, %v4950
    %v4955 = vmul.f32 %v4927, %v4951
    %v4957 = vlaneseq
    %v4958 = vshrl.u32 %v4957, 7
    %v4959 = vsub.s32 0, %v4958
    %v4960 = vrot.slane %v4910, %v4959
    %v4962 = vmul.f32 %v4952, %v4960
    %v4963 = vmul.f32 %v4953, %v4960
    %v4964 = vmul.f32 %v4954, %v4960
    %v4965 = vmul.f32 %v4955, %v4960
    %v4967 = vlaneseq
    %v4968 = vshrl.u32 %v4967, 7
    %v4969 = vsub.s32 0, %v4968
    %v4970 = vrot.slane %v4911, %v4969
    %v4972 = vadd.f32 %v4962, %v4970
    %v4973 = vadd.f32 %v4963, %v4970
    %v4974 = vadd.f32 %v4964, %v4970
    %v4975 = vadd.f32 %v4965, %v4970
    %v4976 = vld [vmem:[#allocation43] sm:$0xff]
    %v4977 = vld [vmem:[#allocation43 + $0x8] sm:$0xff]
    %v4978 = vld [vmem:[#allocation43 + $0x10] sm:$0xff]
    %v4979 = vld [vmem:[#allocation43 + $0x18] sm:$0xff]
    %v4980 = vld [vmem:[#allocation43 + $0x20] sm:$0xff]
    %v4981 = vld [vmem:[#allocation43 + $0x28] sm:$0xff]
    %v4982 = vld [vmem:[#allocation43 + $0x30] sm:$0xff]
    %v4983 = vld [vmem:[#allocation43 + $0x38] sm:$0xff]
    %v4984 = vld [vmem:[#allocation43 + $0x40] sm:$0xff]
    %v4985 = vld [vmem:[#allocation43 + $0x48] sm:$0xff]
    %v4986 = vld [vmem:[#allocation43 + $0x50] sm:$0xff]
    %v4987 = vld [vmem:[#allocation43 + $0x58] sm:$0xff]
    %v4988 = vld [vmem:[#allocation43 + $0x60] sm:$0xff]
    %v4989 = vld [vmem:[#allocation43 + $0x68] sm:$0xff]
    %v4990 = vld [vmem:[#allocation43 + $0x70] sm:$0xff]
    %v4991 = vld [vmem:[#allocation43 + $0x78] sm:$0xff]
    %v4992 = vpack.c.bf16 %v4973, %v4972
    %v4993 = vpack.c.bf16 %v4975, %v4974
    %v4994 = vld [vmem:[#allocation44] sm:$0x3]
    %v4996 = vlaneseq
    %v4997 = vshrl.u32 %v4996, 7
    %v4998 = vsub.s32 0, %v4997
    %v4999 = vrot.slane %v4994, %v4998
    %v5000 = vlaneseq
    %v5001 = vshrl.u32 %v5000, 7
    %v5002 = vsub.s32 1, %v5001
    %v5003 = vrot.slane %v4994, %v5002
    %v5022 = vunpack.c.l.b16 %v4976
    %v5023 = vunpack.c.h.b16 %v4976
    %v5024 = vunpack.c.l.b16 %v4977
    %v5025 = vunpack.c.h.b16 %v4977
    %v5026 = vunpack.c.l.b16 %v4978
    %v5027 = vunpack.c.h.b16 %v4978
    %v5028 = vunpack.c.l.b16 %v4979
    %v5029 = vunpack.c.h.b16 %v4979
    %v5030 = vunpack.c.l.b16 %v4980
    %v5031 = vunpack.c.h.b16 %v4980
    %v5032 = vunpack.c.l.b16 %v4981
    %v5033 = vunpack.c.h.b16 %v4981
    %v5034 = vunpack.c.l.b16 %v4982
    %v5035 = vunpack.c.h.b16 %v4982
    %v5036 = vunpack.c.l.b16 %v4983
    %v5037 = vunpack.c.h.b16 %v4983
    %v5038 = vunpack.c.l.b16 %v4984
    %v5039 = vunpack.c.h.b16 %v4984
    %v5040 = vunpack.c.l.b16 %v4985
    %v5041 = vunpack.c.h.b16 %v4985
    %v5042 = vunpack.c.l.b16 %v4986
    %v5043 = vunpack.c.h.b16 %v4986
    %v5044 = vunpack.c.l.b16 %v4987
    %v5045 = vunpack.c.h.b16 %v4987
    %v5046 = vunpack.c.l.b16 %v4988
    %v5047 = vunpack.c.h.b16 %v4988
    %v5048 = vunpack.c.l.b16 %v4989
    %v5049 = vunpack.c.h.b16 %v4989
    %v5050 = vunpack.c.l.b16 %v4990
    %v5051 = vunpack.c.h.b16 %v4990
    %v5052 = vunpack.c.l.b16 %v4991
    %v5053 = vunpack.c.h.b16 %v4991
    %v5054 = vpack.c.b16 %v5024, %v5022
    %v5055 = vpack.c.b16 %v5025, %v5023
    %v5056 = vpack.c.b16 %v5028, %v5026
    %v5057 = vpack.c.b16 %v5029, %v5027
    %v5058 = vpack.c.b16 %v5032, %v5030
    %v5059 = vpack.c.b16 %v5033, %v5031
    %v5060 = vpack.c.b16 %v5036, %v5034
    %v5061 = vpack.c.b16 %v5037, %v5035
    %v5062 = vpack.c.b16 %v5040, %v5038
    %v5063 = vpack.c.b16 %v5041, %v5039
    %v5064 = vpack.c.b16 %v5044, %v5042
    %v5065 = vpack.c.b16 %v5045, %v5043
    %v5066 = vpack.c.b16 %v5048, %v5046
    %v5067 = vpack.c.b16 %v5049, %v5047
    %v5068 = vpack.c.b16 %v5052, %v5050
    %v5069 = vpack.c.b16 %v5053, %v5051
    %5086 = vmatprep.subr.bf16.mxu0 %v5069
    %5087 = vmatpush1.bf16.msra.mxu0 %v5068
    %5088 = vmatprep.subr.bf16.mxu0 %v5067
    %5089 = vmatpush1.bf16.msra.mxu0 %v5066
    %5090 = vmatprep.subr.bf16.mxu0 %v5065
    %5091 = vmatpush1.bf16.msra.mxu0 %v5064
    %5092 = vmatprep.subr.bf16.mxu0 %v5063
    %5093 = vmatpush1.bf16.msra.mxu0 %v5062
    %5094 = vmatprep.subr.bf16.mxu0 %v5061
    %5095 = vmatpush1.bf16.msra.mxu0 %v5060
    %5096 = vmatprep.subr.bf16.mxu0 %v5059
    %5097 = vmatpush1.bf16.msra.mxu0 %v5058
    %5098 = vmatprep.subr.bf16.mxu0 %v5057
    %5099 = vmatpush1.bf16.msra.mxu0 %v5056
    %5100 = vmatprep.subr.bf16.mxu0 %v5055
    %5101 = vmatpush1.bf16.msra.mxu0 %v5054
    %5102 = vmatprep.subr.bf16.mxu0 0
    %5103 = vmatpush2.bf16.msra.mxu0 0
    %5104 = vmatprep.subr.bf16.mxu0 0
    %5105 = vmatpush2.bf16.msra.mxu0 0
    %5106 = vmatprep.subr.bf16.mxu0 0
    %5107 = vmatpush2.bf16.msra.mxu0 0
    %5108 = vmatprep.subr.bf16.mxu0 0
    %5109 = vmatpush2.bf16.msra.mxu0 0
    %5110 = vmatprep.subr.bf16.mxu0 0
    %5111 = vmatpush2.bf16.msra.mxu0 0
    %5112 = vmatprep.subr.bf16.mxu0 0
    %5113 = vmatpush2.bf16.msra.mxu0 0
    %5114 = vmatprep.subr.bf16.mxu0 0
    %5115 = vmatpush2.bf16.msra.mxu0 0
    %5116 = vmatprep.subr.bf16.mxu0 0
    %5117 = vmatpush2.bf16.msra.mxu0 0
    %5118 = vmatprep.mubr.bf16.mxu0 0
    %5119 = vmatmul.mubr.bf16.gmra.mxu0 %v4992
    %v5120 = vpop.f32.mrf.mxu0
    %v5121 = vadd.f32 %v4999, %v5120
    %v5122 = vpop.f32.mrf.mxu0
    %v5123 = vadd.f32 %v5003, %v5122
    %v5124 = vpop.f32.mrf.mxu0
    %v5125 = vadd.f32 %v4999, %v5124
    %v5126 = vpop.f32.mrf.mxu0
    %v5127 = vadd.f32 %v5003, %v5126
    %5128 = vmatprep.mubr.bf16.mxu0 0
    %5129 = vmatmul.mubr.bf16.gmra.mxu0 %v4993
    %v5130 = vpop.f32.mrf.mxu0
    %v5131 = vadd.f32 %v4999, %v5130
    %v5132 = vpop.f32.mrf.mxu0
    %v5133 = vadd.f32 %v5003, %v5132
    %v5134 = vpop.f32.mrf.mxu0
    %v5135 = vadd.f32 %v4999, %v5134
    %v5136 = vpop.f32.mrf.mxu0
    %v5137 = vadd.f32 %v5003, %v5136
    %5138 = vdwg.mxu0
    %v5139 = vmax.f32 %v5121, 0.0
    %v5140 = vmax.f32 %v5123, 0.0
    %v5141 = vmax.f32 %v5125, 0.0
    %v5142 = vmax.f32 %v5127, 0.0
    %v5143 = vmax.f32 %v5131, 0.0
    %v5144 = vmax.f32 %v5133, 0.0
    %v5145 = vmax.f32 %v5135, 0.0
    %v5146 = vmax.f32 %v5137, 0.0
    %v5147 = vld [vmem:[#allocation46] sm:$0xf]
    %v5148 = vld [vmem:[#allocation46 + $0x4] sm:$0xf]
    %v5149 = vld [vmem:[#allocation46 + $0x8] sm:$0xf]
    %v5150 = vld [vmem:[#allocation46 + $0xc] sm:$0xf]
    %v5151 = vld [vmem:[#allocation46 + $0x10] sm:$0xf]
    %v5152 = vld [vmem:[#allocation46 + $0x14] sm:$0xf]
    %v5153 = vld [vmem:[#allocation46 + $0x18] sm:$0xf]
    %v5154 = vld [vmem:[#allocation46 + $0x1c] sm:$0xf]
    %v5155 = vld [vmem:[#allocation46 + $0x20] sm:$0xf]
    %v5156 = vld [vmem:[#allocation46 + $0x24] sm:$0xf]
    %v5157 = vld [vmem:[#allocation46 + $0x28] sm:$0xf]
    %v5158 = vld [vmem:[#allocation46 + $0x2c] sm:$0xf]
    %v5159 = vld [vmem:[#allocation46 + $0x30] sm:$0xf]
    %v5160 = vld [vmem:[#allocation46 + $0x34] sm:$0xf]
    %v5161 = vld [vmem:[#allocation46 + $0x38] sm:$0xf]
    %v5162 = vld [vmem:[#allocation46 + $0x3c] sm:$0xf]
    %v5163 = vld [vmem:[#allocation46 + $0x40] sm:$0xf]
    %v5164 = vld [vmem:[#allocation46 + $0x44] sm:$0xf]
    %v5165 = vld [vmem:[#allocation46 + $0x48] sm:$0xf]
    %v5166 = vld [vmem:[#allocation46 + $0x4c] sm:$0xf]
    %v5167 = vld [vmem:[#allocation46 + $0x50] sm:$0xf]
    %v5168 = vld [vmem:[#allocation46 + $0x54] sm:$0xf]
    %v5169 = vld [vmem:[#allocation46 + $0x58] sm:$0xf]
    %v5170 = vld [vmem:[#allocation46 + $0x5c] sm:$0xf]
    %v5171 = vld [vmem:[#allocation46 + $0x60] sm:$0xf]
    %v5172 = vld [vmem:[#allocation46 + $0x64] sm:$0xf]
    %v5173 = vld [vmem:[#allocation46 + $0x68] sm:$0xf]
    %v5174 = vld [vmem:[#allocation46 + $0x6c] sm:$0xf]
    %v5175 = vld [vmem:[#allocation46 + $0x70] sm:$0xf]
    %v5176 = vld [vmem:[#allocation46 + $0x74] sm:$0xf]
    %v5177 = vld [vmem:[#allocation46 + $0x78] sm:$0xf]
    %v5178 = vld [vmem:[#allocation46 + $0x7c] sm:$0xf]
    %v5179 = vpack.c.bf16 %v5141, %v5139
    %v5180 = vpack.c.bf16 %v5142, %v5140
    %v5181 = vpack.c.bf16 %v5145, %v5143
    %v5182 = vpack.c.bf16 %v5146, %v5144
    %v5183 = vld [vmem:[#allocation47] sm:$0x1]
    %v5185 = vlaneseq
    %v5186 = vshrl.u32 %v5185, 7
    %v5187 = vsub.s32 0, %v5186
    %v5188 = vrot.slane %v5183, %v5187
    %v5222 = vunpack.c.l.b16 %v5147
    %v5223 = vunpack.c.l.b16 %v5148
    %v5224 = vunpack.c.l.b16 %v5149
    %v5225 = vunpack.c.l.b16 %v5150
    %v5226 = vunpack.c.l.b16 %v5151
    %v5227 = vunpack.c.l.b16 %v5152
    %v5228 = vunpack.c.l.b16 %v5153
    %v5229 = vunpack.c.l.b16 %v5154
    %v5230 = vunpack.c.l.b16 %v5155
    %v5231 = vunpack.c.l.b16 %v5156
    %v5232 = vunpack.c.l.b16 %v5157
    %v5233 = vunpack.c.l.b16 %v5158
    %v5234 = vunpack.c.l.b16 %v5159
    %v5235 = vunpack.c.l.b16 %v5160
    %v5236 = vunpack.c.l.b16 %v5161
    %v5237 = vunpack.c.l.b16 %v5162
    %v5238 = vunpack.c.l.b16 %v5163
    %v5239 = vunpack.c.l.b16 %v5164
    %v5240 = vunpack.c.l.b16 %v5165
    %v5241 = vunpack.c.l.b16 %v5166
    %v5242 = vunpack.c.l.b16 %v5167
    %v5243 = vunpack.c.l.b16 %v5168
    %v5244 = vunpack.c.l.b16 %v5169
    %v5245 = vunpack.c.l.b16 %v5170
    %v5246 = vunpack.c.l.b16 %v5171
    %v5247 = vunpack.c.l.b16 %v5172
    %v5248 = vunpack.c.l.b16 %v5173
    %v5249 = vunpack.c.l.b16 %v5174
    %v5250 = vunpack.c.l.b16 %v5175
    %v5251 = vunpack.c.l.b16 %v5176
    %v5252 = vunpack.c.l.b16 %v5177
    %v5253 = vunpack.c.l.b16 %v5178
    %v5254 = vpack.c.b16 %v5223, %v5222
    %v5255 = vpack.c.b16 %v5225, %v5224
    %v5256 = vpack.c.b16 %v5227, %v5226
    %v5257 = vpack.c.b16 %v5229, %v5228
    %v5258 = vpack.c.b16 %v5231, %v5230
    %v5259 = vpack.c.b16 %v5233, %v5232
    %v5260 = vpack.c.b16 %v5235, %v5234
    %v5261 = vpack.c.b16 %v5237, %v5236
    %v5262 = vpack.c.b16 %v5239, %v5238
    %v5263 = vpack.c.b16 %v5241, %v5240
    %v5264 = vpack.c.b16 %v5243, %v5242
    %v5265 = vpack.c.b16 %v5245, %v5244
    %v5266 = vpack.c.b16 %v5247, %v5246
    %v5267 = vpack.c.b16 %v5249, %v5248
    %v5268 = vpack.c.b16 %v5251, %v5250
    %v5269 = vpack.c.b16 %v5253, %v5252
    %5286 = vmatprep.subr.bf16.mxu0 0
    %5287 = vmatpush1.bf16.msra.mxu0 %v5261
    %5288 = vmatprep.subr.bf16.mxu0 0
    %5289 = vmatpush1.bf16.msra.mxu0 %v5260
    %5290 = vmatprep.subr.bf16.mxu0 0
    %5291 = vmatpush1.bf16.msra.mxu0 %v5259
    %5292 = vmatprep.subr.bf16.mxu0 0
    %5293 = vmatpush1.bf16.msra.mxu0 %v5258
    %5294 = vmatprep.subr.bf16.mxu0 0
    %5295 = vmatpush1.bf16.msra.mxu0 %v5257
    %5296 = vmatprep.subr.bf16.mxu0 0
    %5297 = vmatpush1.bf16.msra.mxu0 %v5256
    %5298 = vmatprep.subr.bf16.mxu0 0
    %5299 = vmatpush1.bf16.msra.mxu0 %v5255
    %5300 = vmatprep.subr.bf16.mxu0 0
    %5301 = vmatpush1.bf16.msra.mxu0 %v5254
    %5302 = vmatprep.subr.bf16.mxu0 0
    %5303 = vmatpush2.bf16.msra.mxu0 %v5269
    %5304 = vmatprep.subr.bf16.mxu0 0
    %5305 = vmatpush2.bf16.msra.mxu0 %v5268
    %5306 = vmatprep.subr.bf16.mxu0 0
    %5307 = vmatpush2.bf16.msra.mxu0 %v5267
    %5308 = vmatprep.subr.bf16.mxu0 0
    %5309 = vmatpush2.bf16.msra.mxu0 %v5266
    %5310 = vmatprep.subr.bf16.mxu0 0
    %5311 = vmatpush2.bf16.msra.mxu0 %v5265
    %5312 = vmatprep.subr.bf16.mxu0 0
    %5313 = vmatpush2.bf16.msra.mxu0 %v5264
    %5314 = vmatprep.subr.bf16.mxu0 0
    %5315 = vmatpush2.bf16.msra.mxu0 %v5263
    %5316 = vmatprep.subr.bf16.mxu0 0
    %5317 = vmatpush2.bf16.msra.mxu0 %v5262
    %5318 = vmatprep.mubr.bf16.mxu0 %v5180
    %5319 = vmatmul.mubr.bf16.gmra.mxu0 %v5179
    %v5320 = vpop.f32.mrf.mxu0
    %v5321 = vadd.f32 %v5188, %v5320
    %v5322 = vpop.f32.mrf.mxu0
    %v5323 = vpop.f32.mrf.mxu0
    %v5324 = vadd.f32 %v5188, %v5323
    %v5325 = vpop.f32.mrf.mxu0
    %5326 = vmatprep.mubr.bf16.mxu0 %v5182
    %5327 = vmatmul.mubr.bf16.gmra.mxu0 %v5181
    %v5328 = vpop.f32.mrf.mxu0
    %v5329 = vadd.f32 %v5188, %v5328
    %v5330 = vpop.f32.mrf.mxu0
    %v5331 = vpop.f32.mrf.mxu0
    %v5332 = vadd.f32 %v5188, %v5331
    %v5333 = vpop.f32.mrf.mxu0
    %5334 = vdwg.mxu0
    %v5335 = vadd.f32 %v4972, %v5321
    %v5336 = vadd.f32 %v4973, %v5324
    %v5337 = vadd.f32 %v4974, %v5329
    %v5338 = vadd.f32 %v4975, %v5332
    %v5339 = vld [vmem:[#allocation49] sm:$0x1]
    %v5340 = vld [vmem:[#allocation50] sm:$0x1]
    %5341 = vadd.xlane.f32.xlu0 %v5335
    %v5342 = vpop.xlane.xlu0 %5341
    %5343 = vadd.xlane.f32.xlu0 %v5336
    %v5344 = vpop.xlane.xlu0 %5343
    %5345 = vadd.xlane.f32.xlu0 %v5337
    %v5346 = vpop.xlane.xlu0 %5345
    %5347 = vadd.xlane.f32.xlu0 %v5338
    %v5348 = vpop.xlane.xlu0 %5347
    %v5349 = vmul.f32 %v5342, %v1604
    %v5350 = vmul.f32 %v5344, %v1604
    %v5351 = vmul.f32 %v5346, %v1604
    %v5352 = vmul.f32 %v5348, %v1604
    %v5353 = vsub.f32 %v5335, %v5349
    %v5354 = vsub.f32 %v5336, %v5350
    %v5355 = vsub.f32 %v5337, %v5351
    %v5356 = vsub.f32 %v5338, %v5352
    %v5357 = vmul.f32 %v5353, %v5353
    %v5358 = vmul.f32 %v5354, %v5354
    %v5359 = vmul.f32 %v5355, %v5355
    %v5360 = vmul.f32 %v5356, %v5356
    %5361 = vadd.xlane.f32.xlu0 %v5357
    %v5362 = vpop.xlane.xlu0 %5361
    %5363 = vadd.xlane.f32.xlu0 %v5358
    %v5364 = vpop.xlane.xlu0 %5363
    %5365 = vadd.xlane.f32.xlu0 %v5359
    %v5366 = vpop.xlane.xlu0 %5365
    %5367 = vadd.xlane.f32.xlu0 %v5360
    %v5368 = vpop.xlane.xlu0 %5367
    %v5369 = vmul.f32 %v5362, %v1604
    %v5370 = vmul.f32 %v5364, %v1604
    %v5371 = vmul.f32 %v5366, %v1604
    %v5372 = vmul.f32 %v5368, %v1604
    %v5373 = vadd.f32 %v5369, 1e-05
    %v5374 = vadd.f32 %v5370, 1e-05
    %v5375 = vadd.f32 %v5371, 1e-05
    %v5376 = vadd.f32 %v5372, 1e-05
    %v5377 = vrsqrt.pop %v5373
    %v5378 = vrsqrt.pop %v5374
    %v5379 = vrsqrt.pop %v5375
    %v5380 = vrsqrt.pop %v5376
    %v5381 = vmul.f32 %v5353, %v5377
    %v5382 = vmul.f32 %v5354, %v5378
    %v5383 = vmul.f32 %v5355, %v5379
    %v5384 = vmul.f32 %v5356, %v5380
    %v5386 = vlaneseq
    %v5387 = vshrl.u32 %v5386, 7
    %v5388 = vsub.s32 0, %v5387
    %v5389 = vrot.slane %v5339, %v5388
    %v5391 = vmul.f32 %v5381, %v5389
    %v5392 = vmul.f32 %v5382, %v5389
    %v5393 = vmul.f32 %v5383, %v5389
    %v5394 = vmul.f32 %v5384, %v5389
    %v5396 = vlaneseq
    %v5397 = vshrl.u32 %v5396, 7
    %v5398 = vsub.s32 0, %v5397
    %v5399 = vrot.slane %v5340, %v5398
    %v5401 = vadd.f32 %v5391, %v5399
    %v5402 = vadd.f32 %v5392, %v5399
    %v5403 = vadd.f32 %v5393, %v5399
    %v5404 = vadd.f32 %v5394, %v5399
    %v5405 = vld [vmem:[#allocation52] sm:$0xf]
    %v5406 = vld [vmem:[#allocation52 + $0x4] sm:$0xf]
    %v5407 = vld [vmem:[#allocation52 + $0x8] sm:$0xf]
    %v5408 = vld [vmem:[#allocation52 + $0xc] sm:$0xf]
    %v5409 = vld [vmem:[#allocation52 + $0x10] sm:$0xf]
    %v5410 = vld [vmem:[#allocation52 + $0x14] sm:$0xf]
    %v5411 = vld [vmem:[#allocation52 + $0x18] sm:$0xf]
    %v5412 = vld [vmem:[#allocation52 + $0x1c] sm:$0xf]
    %v5413 = vld [vmem:[#allocation52 + $0x20] sm:$0xf]
    %v5414 = vld [vmem:[#allocation52 + $0x24] sm:$0xf]
    %v5415 = vld [vmem:[#allocation52 + $0x28] sm:$0xf]
    %v5416 = vld [vmem:[#allocation52 + $0x2c] sm:$0xf]
    %v5417 = vld [vmem:[#allocation52 + $0x30] sm:$0xf]
    %v5418 = vld [vmem:[#allocation52 + $0x34] sm:$0xf]
    %v5419 = vld [vmem:[#allocation52 + $0x38] sm:$0xf]
    %v5420 = vld [vmem:[#allocation52 + $0x3c] sm:$0xf]
    %v5421 = vpack.c.bf16 %v5402, %v5401
    %v5422 = vpack.c.bf16 %v5404, %v5403
    %v5423 = vld [vmem:[%s83] sm:$0x1]
    %v5425 = vlaneseq
    %v5426 = vshrl.u32 %v5425, 7
    %v5427 = vsub.s32 0, %v5426
    %v5428 = vrot.slane %v5423, %v5427
    %v5446 = vunpack.c.l.b16 %v5405
    %v5447 = vunpack.c.l.b16 %v5406
    %v5448 = vunpack.c.l.b16 %v5407
    %v5449 = vunpack.c.l.b16 %v5408
    %v5450 = vunpack.c.l.b16 %v5409
    %v5451 = vunpack.c.l.b16 %v5410
    %v5452 = vunpack.c.l.b16 %v5411
    %v5453 = vunpack.c.l.b16 %v5412
    %v5454 = vunpack.c.l.b16 %v5413
    %v5455 = vunpack.c.l.b16 %v5414
    %v5456 = vunpack.c.l.b16 %v5415
    %v5457 = vunpack.c.l.b16 %v5416
    %v5458 = vunpack.c.l.b16 %v5417
    %v5459 = vunpack.c.l.b16 %v5418
    %v5460 = vunpack.c.l.b16 %v5419
    %v5461 = vunpack.c.l.b16 %v5420
    %v5462 = vpack.c.b16 %v5447, %v5446
    %v5463 = vpack.c.b16 %v5449, %v5448
    %v5464 = vpack.c.b16 %v5451, %v5450
    %v5465 = vpack.c.b16 %v5453, %v5452
    %v5466 = vpack.c.b16 %v5455, %v5454
    %v5467 = vpack.c.b16 %v5457, %v5456
    %v5468 = vpack.c.b16 %v5459, %v5458
    %v5469 = vpack.c.b16 %v5461, %v5460
    %5478 = vmatprep.subr.bf16.mxu0 0
    %5479 = vmatpush1.bf16.msra.mxu0 %v5469
    %5480 = vmatprep.subr.bf16.mxu0 0
    %5481 = vmatpush1.bf16.msra.mxu0 %v5468
    %5482 = vmatprep.subr.bf16.mxu0 0
    %5483 = vmatpush1.bf16.msra.mxu0 %v5467
    %5484 = vmatprep.subr.bf16.mxu0 0
    %5485 = vmatpush1.bf16.msra.mxu0 %v5466
    %5486 = vmatprep.subr.bf16.mxu0 0
    %5487 = vmatpush1.bf16.msra.mxu0 %v5465
    %5488 = vmatprep.subr.bf16.mxu0 0
    %5489 = vmatpush1.bf16.msra.mxu0 %v5464
    %5490 = vmatprep.subr.bf16.mxu0 0
    %5491 = vmatpush1.bf16.msra.mxu0 %v5463
    %5492 = vmatprep.subr.bf16.mxu0 0
    %5493 = vmatpush1.bf16.msra.mxu0 %v5462
    %5494 = vmatprep.subr.bf16.mxu0 0
    %5495 = vmatpush2.bf16.msra.mxu0 0
    %5496 = vmatprep.subr.bf16.mxu0 0
    %5497 = vmatpush2.bf16.msra.mxu0 0
    %5498 = vmatprep.subr.bf16.mxu0 0
    %5499 = vmatpush2.bf16.msra.mxu0 0
    %5500 = vmatprep.subr.bf16.mxu0 0
    %5501 = vmatpush2.bf16.msra.mxu0 0
    %5502 = vmatprep.subr.bf16.mxu0 0
    %5503 = vmatpush2.bf16.msra.mxu0 0
    %5504 = vmatprep.subr.bf16.mxu0 0
    %5505 = vmatpush2.bf16.msra.mxu0 0
    %5506 = vmatprep.subr.bf16.mxu0 0
    %5507 = vmatpush2.bf16.msra.mxu0 0
    %5508 = vmatprep.subr.bf16.mxu0 0
    %5509 = vmatpush2.bf16.msra.mxu0 0
    %5510 = vmatprep.mubr.bf16.mxu0 0
    %5511 = vmatmul.mubr.bf16.gmra.mxu0 %v5421
    %v5512 = vpop.f32.mrf.mxu0
    %v5513 = vadd.f32 %v5428, %v5512
    %v5514 = vpop.f32.mrf.mxu0
    %v5515 = vpop.f32.mrf.mxu0
    %v5516 = vadd.f32 %v5428, %v5515
    %v5517 = vpop.f32.mrf.mxu0
    %5518 = vmatprep.mubr.bf16.mxu0 0
    %5519 = vmatmul.mubr.bf16.gmra.mxu0 %v5422
    %v5520 = vpop.f32.mrf.mxu0
    %v5521 = vadd.f32 %v5428, %v5520
    %v5522 = vpop.f32.mrf.mxu0
    %v5523 = vpop.f32.mrf.mxu0
    %v5524 = vadd.f32 %v5428, %v5523
    %v5525 = vpop.f32.mrf.mxu0
    %5526 = vdwg.mxu0
    %5527 = vst [vmem:[#allocation54] sm:$0xff] %v5513
    %5528 = vst [vmem:[#allocation54 + $0x8] sm:$0xff] %v5516
    %5529 = vst [vmem:[#allocation54 + $0x10] sm:$0xff] %v5521
    %5530 = vst [vmem:[#allocation54 + $0x18] sm:$0xff] %v5524
    // Predicated region
    $region302: #{transformer_seq2seq_forward.1} parent=1 // pred_check
      _
    $region303: #{transformer_seq2seq_forward.1} parent=1 // pred_check_branch
      %5532 = sbr.rel (0) target = $region305
    $region304: #{transformer_seq2seq_forward.1} parent=1 // pred_region
      %s5534 = ssub.s32 256, 256
      %5535 = vsyncadd [#allocation4], %s5534
      %s5536 = sshll.u32 [#allocation53], 4
      %s5537 = int_to_ptr.vmem [resolvable:$true] %s5536
      %5542 = dma.vmem_to_hbm [thread:$0]  %s5537, 256, %s85, [#allocation4], 128, 128, 8
    $region305: #{transformer_seq2seq_forward.1} parent=1 // pred_fallthru
      _
    // Predicated region
    $region306: #{transformer_seq2seq_forward.1} parent=1 // pred_check
      _
    $region307: #{transformer_seq2seq_forward.1} parent=1 // pred_check_branch
      %5544 = sbr.rel (0) target = $region309
    $region308: #{transformer_seq2seq_forward.1} parent=1 // pred_region
      %s5546 = ssub.s32 512, 512
      %5547 = vsyncadd [#allocation55], %s5546
      %s5548 = sshll.u32 [#allocation54], 4
      %s5549 = int_to_ptr.vmem [resolvable:$true] %s5548
      %5554 = dma.vmem_to_hbm [thread:$0]  %s5549, 512, %s87, [#allocation55], 128, 128, 8
    $region309: #{transformer_seq2seq_forward.1} parent=1 // pred_fallthru
      _
    // Predicated region
    $region310: #{transformer_seq2seq_forward.1} parent=1 // pred_check
      _
    $region311: #{transformer_seq2seq_forward.1} parent=1 // pred_check_branch
      %5556 = sbr.rel (0) target = $region313
    $region312: #{transformer_seq2seq_forward.1} parent=1 // pred_region
      %5557 = dma.done [#allocation4], 256
    $region313: #{transformer_seq2seq_forward.1} parent=1 // pred_fallthru
      _
    // Predicated region
    $region314: #{transformer_seq2seq_forward.1} parent=1 // pred_check
      _
    $region315: #{transformer_seq2seq_forward.1} parent=1 // pred_check_branch
      %5559 = sbr.rel (0) target = $region317
    $region316: #{transformer_seq2seq_forward.1} parent=1 // pred_region
      %5560 = dma.done [#allocation55], 512
    $region317: #{transformer_seq2seq_forward.1} parent=1 // pred_fallthru
      _
    %5561 = vsyncpa [#allocation3], 1
    %5562 = vsyncpa [#allocation6], 1
    %5563 = vsyncpa [#allocation9], 1
    %5564 = vsyncpa [#allocation12], 1
    %5565 = vsyncpa [#allocation15], 1
    %5566 = vsyncpa [#allocation18], 1
    %5567 = vsyncpa [#allocation21], 1
    %5568 = vsyncpa [#allocation24], 1
    %5569 = vsyncpa [#allocation27], 1
    %5570 = vsyncpa [#allocation30], 1
    %5571 = vsyncpa [#allocation33], 1
    %5572 = vsyncpa [#allocation36], 1
    %5573 = vsyncpa [#allocation39], 1
    %5574 = vsyncpa [#allocation42], 1
    %5575 = vsyncpa [#allocation45], 1
    %5576 = vsyncpa [#allocation48], 1
    %5577 = vsyncpa [#allocation51], 1
    %5578 = vsyncpa [#allocation4], 1
    %5579 = vsyncpa [#allocation55], 1

</llo_original>
